<compile_context>
chip_gen: v7x
topology: tpu7x:2x2x1
jax: 0.10.0
libtpu: 0.0.40
codegen_flags: <defaults>
</compile_context>

<pallas_src>
import functools

import jax
import jax.numpy as jnp
from jax.experimental import pallas as pl
from jax.experimental.pallas import tpu as pltpu

# AE dims from the PyTorch module
D_IN = 28 * 28          # 784
D_H1 = 512
D_H2 = 256
D_LAT = 32

# lane-dense padded dims used only on the output side of the kernel
D_IN_P = 896            # 7 * 128
D_LAT_P = 128


def _ae_kernel(x_ref,
               w1_ref, b1_ref, w2_ref, b2_ref, w3_ref, b3_ref,
               w4_ref, b4_ref, w5_ref, b5_ref, w6_ref, b6_ref,
               enc_ref, dec_ref):
    """Fused forward pass: encoder (3 linears, ReLU between) + decoder.

    Weights are bf16 (in, out); biases are f32 (1, out). Matmuls run on the MXU
    with f32 accumulation; bias add / ReLU stay in f32 (v5e-safe).
    """

    def linear(a_bf16, w_ref, b_ref):
        return jnp.dot(a_bf16, w_ref[...],
                       preferred_element_type=jnp.float32) + b_ref[...]

    # Cast f32 -> bf16 in-kernel (VPU slot has slack here); avoids a separate
    # wrapper-side XLA cast/pad pass that doubles input HBM traffic.
    x = x_ref[...].astype(jnp.bfloat16)                       # (bb, 784)

    # ---- encoder ----
    h = jnp.maximum(linear(x, w1_ref, b1_ref), 0.0)           # f32 (bb, 512)
    h = jnp.maximum(linear(h.astype(jnp.bfloat16), w2_ref, b2_ref), 0.0)
    enc = linear(h.astype(jnp.bfloat16), w3_ref, b3_ref)      # f32 (bb, 128)
    enc_ref[...] = enc.astype(enc_ref.dtype)

    # ---- decoder ----
    h = jnp.maximum(linear(enc.astype(jnp.bfloat16), w4_ref, b4_ref), 0.0)
    h = jnp.maximum(linear(h.astype(jnp.bfloat16), w5_ref, b5_ref), 0.0)
    dec = linear(h.astype(jnp.bfloat16), w6_ref, b6_ref)      # f32 (bb, 896)
    dec_ref[...] = dec.astype(dec_ref.dtype)


def _pad_to(a, shape):
    return jnp.pad(a, [(0, t - s) for s, t in zip(a.shape, shape)])


def prepare_params(params):
    """Cast weights to bf16 and zero-pad only output-facing dims to lane-dense widths.

    Input: flat tuple (w1,b1,...,w6,b6) with weights stored (in, out), biases (1, out).
    Zero padding is numerically exact for this network (padded rows/cols contribute 0).
    """
    w1, b1, w2, b2, w3, b3, w4, b4, w5, b5, w6, b6 = params
    w1p = w1.astype(jnp.bfloat16)                              # (784, 512), K=784 is MXU-fine
    w2p = w2.astype(jnp.bfloat16)
    w3p = _pad_to(w3, (D_H2, D_LAT_P)).astype(jnp.bfloat16)    # latent out padded 32->128
    w4p = _pad_to(w4, (D_LAT_P, D_H2)).astype(jnp.bfloat16)    # matching K padding (zeros)
    w5p = w5.astype(jnp.bfloat16)
    w6p = _pad_to(w6, (D_H1, D_IN_P)).astype(jnp.bfloat16)     # dec out padded 784->896
    b1p = b1.astype(jnp.float32)
    b2p = b2.astype(jnp.float32)
    b3p = _pad_to(b3, (1, D_LAT_P)).astype(jnp.float32)
    b4p = b4.astype(jnp.float32)
    b5p = b5.astype(jnp.float32)
    b6p = _pad_to(b6, (1, D_IN_P)).astype(jnp.float32)
    return (w1p, b1p, w2p, b2p, w3p, b3p, w4p, b4p, w5p, b5p, w6p, b6p)


def _choose_block_b(B, block_b):
    """Pick the per-step batch tile.

    - single block when the batch is tiny (block equal to full dim is allowed
      by the (8,128) rule even if not a multiple of 8);
    - otherwise at least 2 blocks (so the parallel batch axis can use both
      TensorCores on v7x), rounded to 128-row granularity for full MXU tiles,
      and never larger than the requested block_b.
    """
    if B <= 128:
        return B
    half = ((pl.cdiv(B, 2) + 127) // 128) * 128
    return min(block_b, half)


@functools.partial(jax.jit, static_argnames=("block_b", "out_dtype"))
def ae_forward(x, prepared, block_b=512, out_dtype=jnp.bfloat16):
    """x: (B, 784) float32. prepared: output of prepare_params().

    Returns (encoded (B, 32), decoded (B, 784)) in out_dtype (bf16 by default;
    pass out_dtype=jnp.float32 if exact-f32 outputs are required).
    B need not be a multiple of the batch tile; the partial last block's
    out-of-bounds rows are masked on store and never reach HBM.
    """
    B = x.shape[0]
    bb = _choose_block_b(B, block_b)
    n_blocks = pl.cdiv(B, bb)

    def x_map(i):
        return (i, 0)

    def param_map(i):
        return (0, 0)

    param_specs = [pl.BlockSpec(p.shape, param_map) for p in prepared]

    flops = 2 * B * (D_IN * D_H1 + D_H1 * D_H2 + D_H2 * D_LAT_P
                     + D_LAT_P * D_H2 + D_H2 * D_H1 + D_H1 * D_IN_P)
    weight_bytes = sum(int(p.size) * p.dtype.itemsize for p in prepared)
    out_itemsize = jnp.dtype(out_dtype).itemsize
    bytes_accessed = int(B * D_IN * 4                          # x in (f32)
                         + B * (D_IN_P + D_LAT_P) * out_itemsize  # dec + enc out
                         + weight_bytes)                       # resident params (once)

    enc_p, dec_p = pl.pallas_call(
        _ae_kernel,
        out_shape=(jax.ShapeDtypeStruct((B, D_LAT_P), out_dtype),
                   jax.ShapeDtypeStruct((B, D_IN_P), out_dtype)),
        grid_spec=pltpu.PrefetchScalarGridSpec(
            num_scalar_prefetch=0,
            grid=(n_blocks,),
            in_specs=[pl.BlockSpec((bb, D_IN), x_map)] + param_specs,
            out_specs=[pl.BlockSpec((bb, D_LAT_P), x_map),
                       pl.BlockSpec((bb, D_IN_P), x_map)],
        ),
        compiler_params=pltpu.CompilerParams(
            dimension_semantics=("parallel",),
            # ~15 MiB actually used at block_b=512 (double-buffered x/outs +
            # resident weights + intermediates).  32 MiB raises v5e's 16 MiB
            # default scoped limit and stays well inside v7x's 64 MiB physical.
            vmem_limit_bytes=32 * 1024 * 1024,
        ),
        cost_estimate=pl.CostEstimate(flops=flops, transcendentals=0,
                                      bytes_accessed=bytes_accessed),
    )(x, *prepared)

    return enc_p[:, :D_LAT], dec_p[:, :D_IN]


def init_params(key):
    """Deterministic init mirroring nn.Linear shapes (weights stored (in, out))."""
    dims = [(D_IN, D_H1), (D_H1, D_H2), (D_H2, D_LAT),
            (D_LAT, D_H2), (D_H2, D_H1), (D_H1, D_IN)]
    params = []
    for (din, dout) in dims:
        key, kw, kb = jax.random.split(key, 3)
        bound = 1.0 / jnp.sqrt(din)
        w = jax.random.uniform(kw, (din, dout), jnp.float32, -bound, bound)
        b = jax.random.uniform(kb, (1, dout), jnp.float32, -bound, bound)
        params.extend([w, b])
    return tuple(params)


def ae_reference_f32(x, params):
    """Pure f32 reference (matches the PyTorch module semantics)."""
    w1, b1, w2, b2, w3, b3, w4, b4, w5, b5, w6, b6 = params
    h = jax.nn.relu(x @ w1 + b1)
    h = jax.nn.relu(h @ w2 + b2)
    enc = h @ w3 + b3
    h = jax.nn.relu(enc @ w4 + b4)
    h = jax.nn.relu(h @ w5 + b5)
    dec = h @ w6 + b6
    return enc, dec


def ae_reference_mixed(x, params):
    """Mirror of the kernel arithmetic: bf16 matmul inputs, f32 accumulate/bias/ReLU."""
    def lin(a, w, b):
        return jnp.dot(a.astype(jnp.bfloat16), w.astype(jnp.bfloat16),
                       preferred_element_type=jnp.float32) + b
    w1, b1, w2, b2, w3, b3, w4, b4, w5, b5, w6, b6 = params
    h = jax.nn.relu(lin(x, w1, b1))
    h = jax.nn.relu(lin(h, w2, b2))
    enc = lin(h, w3, b3)
    h = jax.nn.relu(lin(enc, w4, b4))
    h = jax.nn.relu(lin(h, w5, b5))
    dec = lin(h, w6, b6)
    return enc, dec


if __name__ == "__main__":
    key = jax.random.PRNGKey(0)
    kx, kp = jax.random.split(key)

    B = 200  # not a multiple of the batch tile: exercises the partial last block
    x = jax.random.normal(kx, (B, D_IN), dtype=jnp.float32)
    params = init_params(kp)
    prepared = prepare_params(params)

    enc, dec = ae_forward(x, prepared)          # bf16 outputs by default
    jax.block_until_ready((enc, dec))

    assert enc.shape == (B, D_LAT) and dec.shape == (B, D_IN)

    enc32 = enc.astype(jnp.float32)
    dec32 = dec.astype(jnp.float32)

    # Tight check against a reference mirroring the kernel arithmetic
    # (bf16 matmul inputs, f32 accumulation), rounded to the same bf16 output.
    enc_m, dec_m = ae_reference_mixed(x, params)
    enc_m = enc_m.astype(jnp.bfloat16).astype(jnp.float32)
    dec_m = dec_m.astype(jnp.bfloat16).astype(jnp.float32)
    assert jnp.allclose(enc32, enc_m, atol=1e-2, rtol=1e-2)
    assert jnp.allclose(dec32, dec_m, atol=1e-2, rtol=1e-2)

    # Coarser check against the pure-f32 PyTorch-equivalent reference
    # (bf16 matmul inputs + bf16 outputs introduce ~1% relative error).
    enc_f, dec_f = ae_reference_f32(x, params)
    assert jnp.allclose(enc32, enc_f, atol=6e-2, rtol=6e-2)
    assert jnp.allclose(dec32, dec_f, atol=6e-2, rtol=6e-2)

    # Also exercise the exact-f32 output path for callers that require it.
    enc_f32o, dec_f32o = ae_forward(x, prepared, out_dtype=jnp.float32)
    jax.block_until_ready((enc_f32o, dec_f32o))
    assert enc_f32o.dtype == jnp.float32 and dec_f32o.dtype == jnp.float32
    assert jnp.allclose(enc_f32o, enc_f, atol=6e-2, rtol=6e-2)
    assert jnp.allclose(dec_f32o, dec_f, atol=6e-2, rtol=6e-2)

    print("KERNEL_OK")
</pallas_src>

<mosaic_0001>
module attributes {stable_mosaic.version = 11 : i64} {
  func.func @_ae_kernel(%arg0: i32, %arg1: memref<128x784xf32, #tpu.memory_space<vmem>>, %arg2: memref<784x512xbf16, #tpu.memory_space<vmem>>, %arg3: memref<1x512xf32, #tpu.memory_space<vmem>>, %arg4: memref<512x256xbf16, #tpu.memory_space<vmem>>, %arg5: memref<1x256xf32, #tpu.memory_space<vmem>>, %arg6: memref<256x128xbf16, #tpu.memory_space<vmem>>, %arg7: memref<1x128xf32, #tpu.memory_space<vmem>>, %arg8: memref<128x256xbf16, #tpu.memory_space<vmem>>, %arg9: memref<1x256xf32, #tpu.memory_space<vmem>>, %arg10: memref<256x512xbf16, #tpu.memory_space<vmem>>, %arg11: memref<1x512xf32, #tpu.memory_space<vmem>>, %arg12: memref<512x896xbf16, #tpu.memory_space<vmem>>, %arg13: memref<1x896xf32, #tpu.memory_space<vmem>>, %arg14: memref<128x128xbf16, #tpu.memory_space<vmem>>, %arg15: memref<128x896xbf16, #tpu.memory_space<vmem>>) attributes {dimension_semantics = [#tpu.dimension_semantics<parallel>], iteration_bounds = array<i64: 2>, scalar_prefetch = 0 : i64, scratch_operands = 0 : i64, tpu.core_type = #tpu.core_type<tc>, window_params = [{transform_indices = @transform_0, window_bounds = array<i64: 128, 784>}, {pipeline_mode = #tpu.pipeline_mode<synchronous>, transform_indices = @transform_1, window_bounds = array<i64: 784, 512>}, {pipeline_mode = #tpu.pipeline_mode<synchronous>, transform_indices = @transform_2, window_bounds = array<i64: 1, 512>}, {pipeline_mode = #tpu.pipeline_mode<synchronous>, transform_indices = @transform_3, window_bounds = array<i64: 512, 256>}, {pipeline_mode = #tpu.pipeline_mode<synchronous>, transform_indices = @transform_4, window_bounds = array<i64: 1, 256>}, {pipeline_mode = #tpu.pipeline_mode<synchronous>, transform_indices = @transform_5, window_bounds = array<i64: 256, 128>}, {pipeline_mode = #tpu.pipeline_mode<synchronous>, transform_indices = @transform_6, window_bounds = array<i64: 1, 128>}, {pipeline_mode = #tpu.pipeline_mode<synchronous>, transform_indices = @transform_7, window_bounds = array<i64: 128, 256>}, {pipeline_mode = #tpu.pipeline_mode<synchronous>, transform_indices = @transform_8, window_bounds = array<i64: 1, 256>}, {pipeline_mode = #tpu.pipeline_mode<synchronous>, transform_indices = @transform_9, window_bounds = array<i64: 256, 512>}, {pipeline_mode = #tpu.pipeline_mode<synchronous>, transform_indices = @transform_10, window_bounds = array<i64: 1, 512>}, {pipeline_mode = #tpu.pipeline_mode<synchronous>, transform_indices = @transform_11, window_bounds = array<i64: 512, 896>}, {pipeline_mode = #tpu.pipeline_mode<synchronous>, transform_indices = @transform_12, window_bounds = array<i64: 1, 896>}, {transform_indices = @transform_13, window_bounds = array<i64: 128, 128>}, {transform_indices = @transform_14, window_bounds = array<i64: 128, 896>}]} {
    %c0 = arith.constant 0 : index
    %c0_0 = arith.constant 0 : index
    %0 = vector.load %arg1[%c0, %c0_0] : memref<128x784xf32, #tpu.memory_space<vmem>>, vector<128x784xf32>
    %1 = arith.truncf %0 : vector<128x784xf32> to vector<128x784xbf16>
    %c0_1 = arith.constant 0 : index
    %c0_2 = arith.constant 0 : index
    %2 = vector.load %arg2[%c0_1, %c0_2] : memref<784x512xbf16, #tpu.memory_space<vmem>>, vector<784x512xbf16>
    %cst = arith.constant dense<0.000000e+00> : vector<128x512xf32>
    %3 = tpu.matmul %1, %2, %cst {dimension_numbers = #tpu.dot_dimension_numbers<[1], [0], [0], [1], [0, 0, 1, 1], [], []>} : vector<128x784xbf16>, vector<784x512xbf16>, vector<128x512xf32> -> vector<128x512xf32>
    %c0_3 = arith.constant 0 : index
    %c0_4 = arith.constant 0 : index
    %4 = vector.load %arg3[%c0_3, %c0_4] : memref<1x512xf32, #tpu.memory_space<vmem>>, vector<1x512xf32>
    %5 = vector.broadcast %4 : vector<1x512xf32> to vector<128x512xf32>
    %6 = arith.addf %3, %5 : vector<128x512xf32>
    %cst_5 = arith.constant 0.000000e+00 : f32
    %7 = vector.broadcast %cst_5 : f32 to vector<128x512xf32>
    %8 = arith.maximumf %6, %7 : vector<128x512xf32>
    %9 = arith.truncf %8 : vector<128x512xf32> to vector<128x512xbf16>
    %c0_6 = arith.constant 0 : index
    %c0_7 = arith.constant 0 : index
    %10 = vector.load %arg4[%c0_6, %c0_7] : memref<512x256xbf16, #tpu.memory_space<vmem>>, vector<512x256xbf16>
    %cst_8 = arith.constant dense<0.000000e+00> : vector<128x256xf32>
    %11 = tpu.matmul %9, %10, %cst_8 {dimension_numbers = #tpu.dot_dimension_numbers<[1], [0], [0], [1], [0, 0, 1, 1], [], []>} : vector<128x512xbf16>, vector<512x256xbf16>, vector<128x256xf32> -> vector<128x256xf32>
    %c0_9 = arith.constant 0 : index
    %c0_10 = arith.constant 0 : index
    %12 = vector.load %arg5[%c0_9, %c0_10] : memref<1x256xf32, #tpu.memory_space<vmem>>, vector<1x256xf32>
    %13 = vector.broadcast %12 : vector<1x256xf32> to vector<128x256xf32>
    %14 = arith.addf %11, %13 : vector<128x256xf32>
    %cst_11 = arith.constant 0.000000e+00 : f32
    %15 = vector.broadcast %cst_11 : f32 to vector<128x256xf32>
    %16 = arith.maximumf %14, %15 : vector<128x256xf32>
    %17 = arith.truncf %16 : vector<128x256xf32> to vector<128x256xbf16>
    %c0_12 = arith.constant 0 : index
    %c0_13 = arith.constant 0 : index
    %18 = vector.load %arg6[%c0_12, %c0_13] : memref<256x128xbf16, #tpu.memory_space<vmem>>, vector<256x128xbf16>
    %cst_14 = arith.constant dense<0.000000e+00> : vector<128x128xf32>
    %19 = tpu.matmul %17, %18, %cst_14 {dimension_numbers = #tpu.dot_dimension_numbers<[1], [0], [0], [1], [0, 0, 1, 1], [], []>} : vector<128x256xbf16>, vector<256x128xbf16>, vector<128x128xf32> -> vector<128x128xf32>
    %c0_15 = arith.constant 0 : index
    %c0_16 = arith.constant 0 : index
    %20 = vector.load %arg7[%c0_15, %c0_16] : memref<1x128xf32, #tpu.memory_space<vmem>>, vector<1x128xf32>
    %21 = vector.broadcast %20 : vector<1x128xf32> to vector<128x128xf32>
    %22 = arith.addf %19, %21 : vector<128x128xf32>
    %23 = arith.truncf %22 : vector<128x128xf32> to vector<128x128xbf16>
    %c0_17 = arith.constant 0 : index
    %c0_18 = arith.constant 0 : index
    %24 = vector.load %arg14[%c0_17, %c0_18] : memref<128x128xbf16, #tpu.memory_space<vmem>>, vector<128x128xbf16>
    tpu.vector_store %arg14[%c0_17, %c0_18], %23 {strides = array<i32>} : memref<128x128xbf16, #tpu.memory_space<vmem>>, vector<128x128xbf16>,
    %25 = arith.truncf %22 : vector<128x128xf32> to vector<128x128xbf16>
    %c0_19 = arith.constant 0 : index
    %c0_20 = arith.constant 0 : index
    %26 = vector.load %arg8[%c0_19, %c0_20] : memref<128x256xbf16, #tpu.memory_space<vmem>>, vector<128x256xbf16>
    %cst_21 = arith.constant dense<0.000000e+00> : vector<128x256xf32>
    %27 = tpu.matmul %25, %26, %cst_21 {dimension_numbers = #tpu.dot_dimension_numbers<[1], [0], [0], [1], [0, 0, 1, 1], [], []>} : vector<128x128xbf16>, vector<128x256xbf16>, vector<128x256xf32> -> vector<128x256xf32>
    %c0_22 = arith.constant 0 : index
    %c0_23 = arith.constant 0 : index
    %28 = vector.load %arg9[%c0_22, %c0_23] : memref<1x256xf32, #tpu.memory_space<vmem>>, vector<1x256xf32>
    %29 = vector.broadcast %28 : vector<1x256xf32> to vector<128x256xf32>
    %30 = arith.addf %27, %29 : vector<128x256xf32>
    %cst_24 = arith.constant 0.000000e+00 : f32
    %31 = vector.broadcast %cst_24 : f32 to vector<128x256xf32>
    %32 = arith.maximumf %30, %31 : vector<128x256xf32>
    %33 = arith.truncf %32 : vector<128x256xf32> to vector<128x256xbf16>
    %c0_25 = arith.constant 0 : index
    %c0_26 = arith.constant 0 : index
    %34 = vector.load %arg10[%c0_25, %c0_26] : memref<256x512xbf16, #tpu.memory_space<vmem>>, vector<256x512xbf16>
    %cst_27 = arith.constant dense<0.000000e+00> : vector<128x512xf32>
    %35 = tpu.matmul %33, %34, %cst_27 {dimension_numbers = #tpu.dot_dimension_numbers<[1], [0], [0], [1], [0, 0, 1, 1], [], []>} : vector<128x256xbf16>, vector<256x512xbf16>, vector<128x512xf32> -> vector<128x512xf32>
    %c0_28 = arith.constant 0 : index
    %c0_29 = arith.constant 0 : index
    %36 = vector.load %arg11[%c0_28, %c0_29] : memref<1x512xf32, #tpu.memory_space<vmem>>, vector<1x512xf32>
    %37 = vector.broadcast %36 : vector<1x512xf32> to vector<128x512xf32>
    %38 = arith.addf %35, %37 : vector<128x512xf32>
    %cst_30 = arith.constant 0.000000e+00 : f32
    %39 = vector.broadcast %cst_30 : f32 to vector<128x512xf32>
    %40 = arith.maximumf %38, %39 : vector<128x512xf32>
    %41 = arith.truncf %40 : vector<128x512xf32> to vector<128x512xbf16>
    %c0_31 = arith.constant 0 : index
    %c0_32 = arith.constant 0 : index
    %42 = vector.load %arg12[%c0_31, %c0_32] : memref<512x896xbf16, #tpu.memory_space<vmem>>, vector<512x896xbf16>
    %cst_33 = arith.constant dense<0.000000e+00> : vector<128x896xf32>
    %43 = tpu.matmul %41, %42, %cst_33 {dimension_numbers = #tpu.dot_dimension_numbers<[1], [0], [0], [1], [0, 0, 1, 1], [], []>} : vector<128x512xbf16>, vector<512x896xbf16>, vector<128x896xf32> -> vector<128x896xf32>
    %c0_34 = arith.constant 0 : index
    %c0_35 = arith.constant 0 : index
    %44 = vector.load %arg13[%c0_34, %c0_35] : memref<1x896xf32, #tpu.memory_space<vmem>>, vector<1x896xf32>
    %45 = vector.broadcast %44 : vector<1x896xf32> to vector<128x896xf32>
    %46 = arith.addf %43, %45 : vector<128x896xf32>
    %47 = arith.truncf %46 : vector<128x896xf32> to vector<128x896xbf16>
    %c0_36 = arith.constant 0 : index
    %c0_37 = arith.constant 0 : index
    %48 = vector.load %arg15[%c0_36, %c0_37] : memref<128x896xbf16, #tpu.memory_space<vmem>>, vector<128x896xbf16>
    tpu.vector_store %arg15[%c0_36, %c0_37], %47 {strides = array<i32>} : memref<128x896xbf16, #tpu.memory_space<vmem>>, vector<128x896xbf16>,
    return
  }
  func.func @transform_0(%arg0: i32) -> (i32, i32) {
    %c0_i32 = arith.constant 0 : i32
    %c0_i32_0 = arith.constant 0 : i32
    return %arg0, %c0_i32 : i32, i32
  }
  func.func @transform_1(%arg0: i32) -> (i32, i32) {
    %c0_i32 = arith.constant 0 : i32
    %c0_i32_0 = arith.constant 0 : i32
    %c0_i32_1 = arith.constant 0 : i32
    return %c0_i32, %c0_i32_0 : i32, i32
  }
  func.func @transform_2(%arg0: i32) -> (i32, i32) {
    %c0_i32 = arith.constant 0 : i32
    %c0_i32_0 = arith.constant 0 : i32
    %c0_i32_1 = arith.constant 0 : i32
    return %c0_i32, %c0_i32_0 : i32, i32
  }
  func.func @transform_3(%arg0: i32) -> (i32, i32) {
    %c0_i32 = arith.constant 0 : i32
    %c0_i32_0 = arith.constant 0 : i32
    %c0_i32_1 = arith.constant 0 : i32
    return %c0_i32, %c0_i32_0 : i32, i32
  }
  func.func @transform_4(%arg0: i32) -> (i32, i32) {
    %c0_i32 = arith.constant 0 : i32
    %c0_i32_0 = arith.constant 0 : i32
    %c0_i32_1 = arith.constant 0 : i32
    return %c0_i32, %c0_i32_0 : i32, i32
  }
  func.func @transform_5(%arg0: i32) -> (i32, i32) {
    %c0_i32 = arith.constant 0 : i32
    %c0_i32_0 = arith.constant 0 : i32
    %c0_i32_1 = arith.constant 0 : i32
    return %c0_i32, %c0_i32_0 : i32, i32
  }
  func.func @transform_6(%arg0: i32) -> (i32, i32) {
    %c0_i32 = arith.constant 0 : i32
    %c0_i32_0 = arith.constant 0 : i32
    %c0_i32_1 = arith.constant 0 : i32
    return %c0_i32, %c0_i32_0 : i32, i32
  }
  func.func @transform_7(%arg0: i32) -> (i32, i32) {
    %c0_i32 = arith.constant 0 : i32
    %c0_i32_0 = arith.constant 0 : i32
    %c0_i32_1 = arith.constant 0 : i32
    return %c0_i32, %c0_i32_0 : i32, i32
  }
  func.func @transform_8(%arg0: i32) -> (i32, i32) {
    %c0_i32 = arith.constant 0 : i32
    %c0_i32_0 = arith.constant 0 : i32
    %c0_i32_1 = arith.constant 0 : i32
    return %c0_i32, %c0_i32_0 : i32, i32
  }
  func.func @transform_9(%arg0: i32) -> (i32, i32) {
    %c0_i32 = arith.constant 0 : i32
    %c0_i32_0 = arith.constant 0 : i32
    %c0_i32_1 = arith.constant 0 : i32
    return %c0_i32, %c0_i32_0 : i32, i32
  }
  func.func @transform_10(%arg0: i32) -> (i32, i32) {
    %c0_i32 = arith.constant 0 : i32
    %c0_i32_0 = arith.constant 0 : i32
    %c0_i32_1 = arith.constant 0 : i32
    return %c0_i32, %c0_i32_0 : i32, i32
  }
  func.func @transform_11(%arg0: i32) -> (i32, i32) {
    %c0_i32 = arith.constant 0 : i32
    %c0_i32_0 = arith.constant 0 : i32
    %c0_i32_1 = arith.constant 0 : i32
    return %c0_i32, %c0_i32_0 : i32, i32
  }
  func.func @transform_12(%arg0: i32) -> (i32, i32) {
    %c0_i32 = arith.constant 0 : i32
    %c0_i32_0 = arith.constant 0 : i32
    %c0_i32_1 = arith.constant 0 : i32
    return %c0_i32, %c0_i32_0 : i32, i32
  }
  func.func @transform_13(%arg0: i32) -> (i32, i32) {
    %c0_i32 = arith.constant 0 : i32
    %c0_i32_0 = arith.constant 0 : i32
    return %arg0, %c0_i32 : i32, i32
  }
  func.func @transform_14(%arg0: i32) -> (i32, i32) {
    %c0_i32 = arith.constant 0 : i32
    %c0_i32_0 = arith.constant 0 : i32
    return %arg0, %c0_i32 : i32, i32
  }
}

</mosaic_0001>

<llo_original>
// kernel: ae_forward.1
$region0: #{ae_forward.1}
  #allocation0 [shape = 'u32[]', space=smem, size = 0x4, offset = 0x4, fixed_abs, tag = 'smem constant byte address 0x4 - core index']
  #allocation1 [shape = 'u32[144,128]{1,0:T(1,128)}', space=vmem, size = 0x12000, scoped, tag = 'internal scratch']
  %s0 = inlined_call_operand.hbm [shape: f32[200,784], index: 0, kind: input, shape index: {}]
  %s1 = inlined_call_operand.hbm [shape: bf16[784,512], index: 1, kind: input, shape index: {}]
  %s2 = inlined_call_operand.vmem [shape: f32[1,512], index: 2, kind: input, shape index: {}]
  %s3 = inlined_call_operand.hbm [shape: bf16[512,256], index: 3, kind: input, shape index: {}]
  %s4 = inlined_call_operand.hbm [shape: f32[1,256], index: 4, kind: input, shape index: {}]
  %s5 = inlined_call_operand.hbm [shape: bf16[256,128], index: 5, kind: input, shape index: {}]
  %s6 = inlined_call_operand.vmem [shape: f32[1,128], index: 6, kind: input, shape index: {}]
  %s7 = inlined_call_operand.hbm [shape: bf16[128,256], index: 7, kind: input, shape index: {}]
  %s8 = inlined_call_operand.vmem [shape: f32[1,256], index: 8, kind: input, shape index: {}]
  %s9 = inlined_call_operand.hbm [shape: bf16[256,512], index: 9, kind: input, shape index: {}]
  %s10 = inlined_call_operand.vmem [shape: f32[1,512], index: 10, kind: input, shape index: {}]
  %s11 = inlined_call_operand.hbm [shape: bf16[512,896], index: 11, kind: input, shape index: {}]
  %s12 = inlined_call_operand.vmem [shape: f32[1,896], index: 12, kind: input, shape index: {}]
  %s13 = inlined_call_operand.vmem [shape: bf16[200,128], index: 13, kind: output, shape index: {0}]
  %s14 = inlined_call_operand.hbm [shape: bf16[200,896], index: 14, kind: output, shape index: {1}]
  %15 = xla_tuple %s13, %s14
  %s16 = sld [smem:[#allocation0]]
  $region169: #{ae_forward.1} parent=0
    _
  %s18 = ssub.s32 1, %s16
  %s19 = scalar_select 0, %s18, %s16
  $region1: #{ae_forward.1} parent=0
    #allocation2 [shape = 'u8[917504]{0}', space=vmem, size = 0xe0000, scoped, tag = 'input window, operand 0']
    #allocation3 [shape = 's32[2]{0}', space=sflag, size = 0x8, scoped, tag = 'scoped memory for ae_forward.1']
    #allocation4 [shape = 's32[2]{0}', space=sflag, size = 0x8, scoped, tag = 'scoped memory for ae_forward.1']
    #allocation5 [shape = 'u8[802816]{0}', space=vmem, size = 0xc4000, scoped, tag = 'input window, operand 1, single buffered']
    #allocation6 [shape = 's32[1]{0}', space=sflag, size = 0x4, scoped, tag = 'scoped memory for ae_forward.1']
    #allocation7 [shape = 'u8[262144]{0}', space=vmem, size = 0x40000, scoped, tag = 'input window, operand 3, single buffered']
    #allocation8 [shape = 'u8[1024]{0}', space=vmem, size = 0x400, scoped, tag = 'input window, operand 4, single buffered']
    #allocation9 [shape = 's32[1]{0}', space=sflag, size = 0x4, scoped, tag = 'scoped memory for ae_forward.1']
    #allocation10 [shape = 'u8[65536]{0}', space=vmem, size = 0x10000, scoped, tag = 'input window, operand 5, single buffered']
    #allocation11 [shape = 'u8[65536]{0}', space=vmem, size = 0x10000, scoped, tag = 'input window, operand 7, single buffered']
    #allocation12 [shape = 's32[1]{0}', space=sflag, size = 0x4, scoped, tag = 'scoped memory for ae_forward.1']
    #allocation13 [shape = 'u8[262144]{0}', space=vmem, size = 0x40000, scoped, tag = 'input window, operand 9, single buffered']
    #allocation14 [shape = 'u8[917504]{0}', space=vmem, size = 0xe0000, scoped, tag = 'input window, operand 11, single buffered']
    #allocation15 [shape = 's32[1]{0}', space=sflag, size = 0x4, scoped, tag = 'scoped memory for ae_forward.1']
    #allocation16 [shape = 'u8[65536]{0}', space=vmem, size = 0x10000, scoped, tag = 'output window, operand 0']
    #allocation17 [shape = 'u8[458752]{0}', space=vmem, size = 0x70000, scoped, tag = 'output window, operand 1']
    %20 = vsyncpa [#allocation3], 0
    %s21 = scalar_lea.sflag [#allocation3], 1
    %22 = vsyncpa %s21, 0
    %23 = vsyncpa [#allocation6], 0
    %24 = vsyncpa [#allocation9], 0
    %25 = vsyncpa [#allocation12], 0
    %26 = vsyncpa [#allocation15], 0
    %27 = vsyncpa [#allocation4], 0
    %s28 = scalar_lea.sflag [#allocation4], 1
    %29 = vsyncpa %s28, 0
    loop: start=0, step=1, limit=4
    $region2: #{ae_forward.1} parent=1 // loop_pre_header
      _
    $region3: #{ae_forward.1} parent=1 // loop_header
      %s31 = sphi 0, %s35
      %p32 = scmp.ge.s32.totalorder %s31, 4
      %s41 = sphi 0, %s43
      %s44 = sphi 0, %s41
      %s45 = sphi 0, %s44
      %s61 = sphi 0, %s45
      %s65 = sphi 0, %s65
      %s67 = sphi 0, %s65
      %s68 = sphi 0, %s67
      %s82 = sphi 0, %s68
      %s86 = sphi 0, %s86
      %s88 = sphi 0, %s86
      %s89 = sphi 0, %s88
      %s103 = sphi 0, %s89
      %s107 = sphi 0, %s107
      %s109 = sphi 0, %s107
      %s110 = sphi 0, %s109
      %s124 = sphi 0, %s110
      %s128 = sphi 0, %s128
      %s130 = sphi 0, %s128
      %s131 = sphi 0, %s130
      %s145 = sphi 0, %s131
      %s149 = sphi 0, %s149
      %s151 = sphi 0, %s149
      %s152 = sphi 0, %s151
      %s166 = sphi 0, %s152
      %s170 = sphi 0, %s170
      %s172 = sphi 0, %s170
      %s173 = sphi 0, %s172
      %s187 = sphi 0, %s173
      %s191 = sphi 0, %s191
      %s193 = sphi 0, %s191
      %s194 = sphi 0, %s193
      %s208 = sphi 0, %s194
      %s212 = sphi 0, %s212
      %s214 = sphi 0, %s212
      %s215 = sphi 0, %s214
      %s229 = sphi 0, %s215
      %s233 = sphi 0, %s233
      %s235 = sphi 0, %s233
      %s236 = sphi 0, %s235
      %s250 = sphi 0, %s236
      %s254 = sphi 0, %s254
      %s256 = sphi 0, %s254
      %s257 = sphi 0, %s256
      %s271 = sphi 0, %s257
      %s275 = sphi 0, %s275
      %s277 = sphi 0, %s275
      %s278 = sphi 0, %s277
      %s292 = sphi 0, %s278
      %s296 = sphi 0, %s296
      %s298 = sphi 0, %s296
      %s299 = sphi 0, %s298
      %s313 = sphi 0, %s299
      %s319 = sphi 0, %s321
      %s322 = sphi 0, %s319
      %s323 = sphi 0, %s322
      %s339 = sphi 0, %s323
      %s345 = sphi 0, %s347
      %s348 = sphi 0, %s345
      %s349 = sphi 0, %s348
      %s365 = sphi 0, %s349
    $region4: #{ae_forward.1} parent=1 // loop_header_branch
      %34 = sbr.rel (%p32) target = $region8
    $region5: #{ae_forward.1} parent=1 // loop_body
      %s36 = ssub.s32 %s31, 1
      %s37 = ssub.s32 %s31, 2
      %s38 = sadd.s32 %s31, 1
      %s39 = ssub.s32 %s31, %s38
      %p40 = scmp.eq.s32.totalorder %s39, 0
      %s42 = sadd.s32 %s41, 1
      %s43 = scalar_select %p40, %s41, %s42
      %p46 = pneg %p40
      %p47 = scmp.eq.s32.totalorder %s31, 1
      %p48 = por %p46, %p47
      %p49 = scmp.ne.s32.totalorder %s41, %s44
      %p50 = scmp.eq.s32.totalorder %s31, 0
      %p51 = por %p49, %p50
      %p52 = scmp.ne.s32.totalorder %s41, %s44
      %p53 = scmp.eq.s32.totalorder %s36, 1
      %p54 = por %p52, %p53
      %p55 = scmp.ne.s32.totalorder %s44, %s45
      %p56 = scmp.eq.s32.totalorder %s36, 0
      %p57 = por %p55, %p56
      %p58 = scmp.ne.s32.totalorder %s44, %s45
      %p59 = scmp.eq.s32.totalorder %s37, 1
      %p60 = por %p58, %p59
      %p62 = scmp.ne.s32.totalorder %s45, %s61
      %p63 = scmp.eq.s32.totalorder %s37, 0
      %p64 = por %p62, %p63
      %s66 = sadd.s32 %s65, 1
      %p69 = scmp.eq.s32.totalorder %s31, 1
      %p70 = scmp.ne.s32.totalorder %s65, %s67
      %p71 = scmp.eq.s32.totalorder %s31, 0
      %p72 = por %p70, %p71
      %p73 = scmp.ne.s32.totalorder %s65, %s67
      %p74 = scmp.eq.s32.totalorder %s36, 1
      %p75 = por %p73, %p74
      %p76 = scmp.ne.s32.totalorder %s67, %s68
      %p77 = scmp.eq.s32.totalorder %s36, 0
      %p78 = por %p76, %p77
      %p79 = scmp.ne.s32.totalorder %s67, %s68
      %p80 = scmp.eq.s32.totalorder %s37, 1
      %p81 = por %p79, %p80
      %p83 = scmp.ne.s32.totalorder %s68, %s82
      %p84 = scmp.eq.s32.totalorder %s37, 0
      %p85 = por %p83, %p84
      %s87 = sadd.s32 %s86, 1
      %p90 = scmp.eq.s32.totalorder %s31, 1
      %p91 = scmp.ne.s32.totalorder %s86, %s88
      %p92 = scmp.eq.s32.totalorder %s31, 0
      %p93 = por %p91, %p92
      %p94 = scmp.ne.s32.totalorder %s86, %s88
      %p95 = scmp.eq.s32.totalorder %s36, 1
      %p96 = por %p94, %p95
      %p97 = scmp.ne.s32.totalorder %s88, %s89
      %p98 = scmp.eq.s32.totalorder %s36, 0
      %p99 = por %p97, %p98
      %p100 = scmp.ne.s32.totalorder %s88, %s89
      %p101 = scmp.eq.s32.totalorder %s37, 1
      %p102 = por %p100, %p101
      %p104 = scmp.ne.s32.totalorder %s89, %s103
      %p105 = scmp.eq.s32.totalorder %s37, 0
      %p106 = por %p104, %p105
      %s108 = sadd.s32 %s107, 1
      %p111 = scmp.eq.s32.totalorder %s31, 1
      %p112 = scmp.ne.s32.totalorder %s107, %s109
      %p113 = scmp.eq.s32.totalorder %s31, 0
      %p114 = por %p112, %p113
      %p115 = scmp.ne.s32.totalorder %s107, %s109
      %p116 = scmp.eq.s32.totalorder %s36, 1
      %p117 = por %p115, %p116
      %p118 = scmp.ne.s32.totalorder %s109, %s110
      %p119 = scmp.eq.s32.totalorder %s36, 0
      %p120 = por %p118, %p119
      %p121 = scmp.ne.s32.totalorder %s109, %s110
      %p122 = scmp.eq.s32.totalorder %s37, 1
      %p123 = por %p121, %p122
      %p125 = scmp.ne.s32.totalorder %s110, %s124
      %p126 = scmp.eq.s32.totalorder %s37, 0
      %p127 = por %p125, %p126
      %s129 = sadd.s32 %s128, 1
      %p132 = scmp.eq.s32.totalorder %s31, 1
      %p133 = scmp.ne.s32.totalorder %s128, %s130
      %p134 = scmp.eq.s32.totalorder %s31, 0
      %p135 = por %p133, %p134
      %p136 = scmp.ne.s32.totalorder %s128, %s130
      %p137 = scmp.eq.s32.totalorder %s36, 1
      %p138 = por %p136, %p137
      %p139 = scmp.ne.s32.totalorder %s130, %s131
      %p140 = scmp.eq.s32.totalorder %s36, 0
      %p141 = por %p139, %p140
      %p142 = scmp.ne.s32.totalorder %s130, %s131
      %p143 = scmp.eq.s32.totalorder %s37, 1
      %p144 = por %p142, %p143
      %p146 = scmp.ne.s32.totalorder %s131, %s145
      %p147 = scmp.eq.s32.totalorder %s37, 0
      %p148 = por %p146, %p147
      %s150 = sadd.s32 %s149, 1
      %p153 = scmp.eq.s32.totalorder %s31, 1
      %p154 = scmp.ne.s32.totalorder %s149, %s151
      %p155 = scmp.eq.s32.totalorder %s31, 0
      %p156 = por %p154, %p155
      %p157 = scmp.ne.s32.totalorder %s149, %s151
      %p158 = scmp.eq.s32.totalorder %s36, 1
      %p159 = por %p157, %p158
      %p160 = scmp.ne.s32.totalorder %s151, %s152
      %p161 = scmp.eq.s32.totalorder %s36, 0
      %p162 = por %p160, %p161
      %p163 = scmp.ne.s32.totalorder %s151, %s152
      %p164 = scmp.eq.s32.totalorder %s37, 1
      %p165 = por %p163, %p164
      %p167 = scmp.ne.s32.totalorder %s152, %s166
      %p168 = scmp.eq.s32.totalorder %s37, 0
      %p169 = por %p167, %p168
      %s171 = sadd.s32 %s170, 1
      %p174 = scmp.eq.s32.totalorder %s31, 1
      %p175 = scmp.ne.s32.totalorder %s170, %s172
      %p176 = scmp.eq.s32.totalorder %s31, 0
      %p177 = por %p175, %p176
      %p178 = scmp.ne.s32.totalorder %s170, %s172
      %p179 = scmp.eq.s32.totalorder %s36, 1
      %p180 = por %p178, %p179
      %p181 = scmp.ne.s32.totalorder %s172, %s173
      %p182 = scmp.eq.s32.totalorder %s36, 0
      %p183 = por %p181, %p182
      %p184 = scmp.ne.s32.totalorder %s172, %s173
      %p185 = scmp.eq.s32.totalorder %s37, 1
      %p186 = por %p184, %p185
      %p188 = scmp.ne.s32.totalorder %s173, %s187
      %p189 = scmp.eq.s32.totalorder %s37, 0
      %p190 = por %p188, %p189
      %s192 = sadd.s32 %s191, 1
      %p195 = scmp.eq.s32.totalorder %s31, 1
      %p196 = scmp.ne.s32.totalorder %s191, %s193
      %p197 = scmp.eq.s32.totalorder %s31, 0
      %p198 = por %p196, %p197
      %p199 = scmp.ne.s32.totalorder %s191, %s193
      %p200 = scmp.eq.s32.totalorder %s36, 1
      %p201 = por %p199, %p200
      %p202 = scmp.ne.s32.totalorder %s193, %s194
      %p203 = scmp.eq.s32.totalorder %s36, 0
      %p204 = por %p202, %p203
      %p205 = scmp.ne.s32.totalorder %s193, %s194
      %p206 = scmp.eq.s32.totalorder %s37, 1
      %p207 = por %p205, %p206
      %p209 = scmp.ne.s32.totalorder %s194, %s208
      %p210 = scmp.eq.s32.totalorder %s37, 0
      %p211 = por %p209, %p210
      %s213 = sadd.s32 %s212, 1
      %p216 = scmp.eq.s32.totalorder %s31, 1
      %p217 = scmp.ne.s32.totalorder %s212, %s214
      %p218 = scmp.eq.s32.totalorder %s31, 0
      %p219 = por %p217, %p218
      %p220 = scmp.ne.s32.totalorder %s212, %s214
      %p221 = scmp.eq.s32.totalorder %s36, 1
      %p222 = por %p220, %p221
      %p223 = scmp.ne.s32.totalorder %s214, %s215
      %p224 = scmp.eq.s32.totalorder %s36, 0
      %p225 = por %p223, %p224
      %p226 = scmp.ne.s32.totalorder %s214, %s215
      %p227 = scmp.eq.s32.totalorder %s37, 1
      %p228 = por %p226, %p227
      %p230 = scmp.ne.s32.totalorder %s215, %s229
      %p231 = scmp.eq.s32.totalorder %s37, 0
      %p232 = por %p230, %p231
      %s234 = sadd.s32 %s233, 1
      %p237 = scmp.eq.s32.totalorder %s31, 1
      %p238 = scmp.ne.s32.totalorder %s233, %s235
      %p239 = scmp.eq.s32.totalorder %s31, 0
      %p240 = por %p238, %p239
      %p241 = scmp.ne.s32.totalorder %s233, %s235
      %p242 = scmp.eq.s32.totalorder %s36, 1
      %p243 = por %p241, %p242
      %p244 = scmp.ne.s32.totalorder %s235, %s236
      %p245 = scmp.eq.s32.totalorder %s36, 0
      %p246 = por %p244, %p245
      %p247 = scmp.ne.s32.totalorder %s235, %s236
      %p248 = scmp.eq.s32.totalorder %s37, 1
      %p249 = por %p247, %p248
      %p251 = scmp.ne.s32.totalorder %s236, %s250
      %p252 = scmp.eq.s32.totalorder %s37, 0
      %p253 = por %p251, %p252
      %s255 = sadd.s32 %s254, 1
      %p258 = scmp.eq.s32.totalorder %s31, 1
      %p259 = scmp.ne.s32.totalorder %s254, %s256
      %p260 = scmp.eq.s32.totalorder %s31, 0
      %p261 = por %p259, %p260
      %p262 = scmp.ne.s32.totalorder %s254, %s256
      %p263 = scmp.eq.s32.totalorder %s36, 1
      %p264 = por %p262, %p263
      %p265 = scmp.ne.s32.totalorder %s256, %s257
      %p266 = scmp.eq.s32.totalorder %s36, 0
      %p267 = por %p265, %p266
      %p268 = scmp.ne.s32.totalorder %s256, %s257
      %p269 = scmp.eq.s32.totalorder %s37, 1
      %p270 = por %p268, %p269
      %p272 = scmp.ne.s32.totalorder %s257, %s271
      %p273 = scmp.eq.s32.totalorder %s37, 0
      %p274 = por %p272, %p273
      %s276 = sadd.s32 %s275, 1
      %p279 = scmp.eq.s32.totalorder %s31, 1
      %p280 = scmp.ne.s32.totalorder %s275, %s277
      %p281 = scmp.eq.s32.totalorder %s31, 0
      %p282 = por %p280, %p281
      %p283 = scmp.ne.s32.totalorder %s275, %s277
      %p284 = scmp.eq.s32.totalorder %s36, 1
      %p285 = por %p283, %p284
      %p286 = scmp.ne.s32.totalorder %s277, %s278
      %p287 = scmp.eq.s32.totalorder %s36, 0
      %p288 = por %p286, %p287
      %p289 = scmp.ne.s32.totalorder %s277, %s278
      %p290 = scmp.eq.s32.totalorder %s37, 1
      %p291 = por %p289, %p290
      %p293 = scmp.ne.s32.totalorder %s278, %s292
      %p294 = scmp.eq.s32.totalorder %s37, 0
      %p295 = por %p293, %p294
      %s297 = sadd.s32 %s296, 1
      %p300 = scmp.eq.s32.totalorder %s31, 1
      %p301 = scmp.ne.s32.totalorder %s296, %s298
      %p302 = scmp.eq.s32.totalorder %s31, 0
      %p303 = por %p301, %p302
      %p304 = scmp.ne.s32.totalorder %s296, %s298
      %p305 = scmp.eq.s32.totalorder %s36, 1
      %p306 = por %p304, %p305
      %p307 = scmp.ne.s32.totalorder %s298, %s299
      %p308 = scmp.eq.s32.totalorder %s36, 0
      %p309 = por %p307, %p308
      %p310 = scmp.ne.s32.totalorder %s298, %s299
      %p311 = scmp.eq.s32.totalorder %s37, 1
      %p312 = por %p310, %p311
      %p314 = scmp.ne.s32.totalorder %s299, %s313
      %p315 = scmp.eq.s32.totalorder %s37, 0
      %p316 = por %p314, %p315
      %s317 = ssub.s32 %s31, %s38
      %p318 = scmp.eq.s32.totalorder %s317, 0
      %s320 = sadd.s32 %s319, 1
      %s321 = scalar_select %p318, %s319, %s320
      %p324 = pneg %p318
      %p325 = scmp.eq.s32.totalorder %s31, 1
      %p326 = por %p324, %p325
      %p327 = scmp.ne.s32.totalorder %s319, %s322
      %p328 = scmp.eq.s32.totalorder %s31, 0
      %p329 = por %p327, %p328
      %p330 = scmp.ne.s32.totalorder %s319, %s322
      %p331 = scmp.eq.s32.totalorder %s36, 1
      %p332 = por %p330, %p331
      %p333 = scmp.ne.s32.totalorder %s322, %s323
      %p334 = scmp.eq.s32.totalorder %s36, 0
      %p335 = por %p333, %p334
      %p336 = scmp.ne.s32.totalorder %s322, %s323
      %p337 = scmp.eq.s32.totalorder %s37, 1
      %p338 = por %p336, %p337
      %p340 = scmp.ne.s32.totalorder %s323, %s339
      %p341 = scmp.eq.s32.totalorder %s37, 0
      %p342 = por %p340, %p341
      %s343 = ssub.s32 %s31, %s38
      %p344 = scmp.eq.s32.totalorder %s343, 0
      %s346 = sadd.s32 %s345, 1
      %s347 = scalar_select %p344, %s345, %s346
      %p350 = pneg %p344
      %p351 = scmp.eq.s32.totalorder %s31, 1
      %p352 = por %p350, %p351
      %p353 = scmp.ne.s32.totalorder %s345, %s348
      %p354 = scmp.eq.s32.totalorder %s31, 0
      %p355 = por %p353, %p354
      %p356 = scmp.ne.s32.totalorder %s345, %s348
      %p357 = scmp.eq.s32.totalorder %s36, 1
      %p358 = por %p356, %p357
      %p359 = scmp.ne.s32.totalorder %s348, %s349
      %p360 = scmp.eq.s32.totalorder %s36, 0
      %p361 = por %p359, %p360
      %p362 = scmp.ne.s32.totalorder %s348, %s349
      %p363 = scmp.eq.s32.totalorder %s37, 1
      %p364 = por %p362, %p363
      %p366 = scmp.ne.s32.totalorder %s349, %s365
      %p367 = scmp.eq.s32.totalorder %s37, 0
      %p368 = por %p366, %p367
      %p369 = scmp.le.s32.totalorder 1, %s31
      %p370 = scmp.lt.s32.totalorder %s31, 3
      %p371 = pnand %p369, %p370
      %p372 = pneg %p371
      // Predicated region
      $region9: #{ae_forward.1} parent=5 // pred_check
        _
      $region10: #{ae_forward.1} parent=5 // pred_check_branch
        %374 = sbr.rel (%p371) target = $region12
      $region11: #{ae_forward.1} parent=5 // pred_region
        %s375 = ssub.s32 %s31, 1
        // Predicated region
        $region13: #{ae_forward.1} parent=11 // pred_check
          %p376 = pneg %p78
        $region14: #{ae_forward.1} parent=11 // pred_check_branch
          %378 = sbr.rel (%p376) target = $region16
        $region15: #{ae_forward.1} parent=11 // pred_region
          %s380 = ssub.s32 25088, 25088
          %381 = vsyncadd [#allocation6], %s380
          %s382 = sshll.u32 [#allocation5], 4
          %s383 = int_to_ptr.vmem [resolvable:$true] %s382
          %388 = dma.hbm_to_vmem [thread:$0]  %s1, 25088, %s383, [#allocation6], 256, 256, 16
        $region16: #{ae_forward.1} parent=11 // pred_fallthru
          _
        // Predicated region
        $region17: #{ae_forward.1} parent=11 // pred_check
          %p389 = pneg %p99
        $region18: #{ae_forward.1} parent=11 // pred_check_branch
          %391 = sbr.rel (%p389) target = $region20
        $region19: #{ae_forward.1} parent=11 // pred_region
          _
        $region20: #{ae_forward.1} parent=11 // pred_fallthru
          _
        // Predicated region
        $region21: #{ae_forward.1} parent=11 // pred_check
          %p392 = pneg %p120
        $region22: #{ae_forward.1} parent=11 // pred_check_branch
          %394 = sbr.rel (%p392) target = $region24
        $region23: #{ae_forward.1} parent=11 // pred_region
          %s396 = ssub.s32 8192, 8192
          %397 = vsyncadd [#allocation6], %s396
          %s398 = sshll.u32 [#allocation7], 4
          %s399 = int_to_ptr.vmem [resolvable:$true] %s398
          %404 = dma.hbm_to_vmem [thread:$0]  %s3, 8192, %s399, [#allocation6], 128, 128, 8
        $region24: #{ae_forward.1} parent=11 // pred_fallthru
          _
        // Predicated region
        $region25: #{ae_forward.1} parent=11 // pred_check
          %p405 = pneg %p141
        $region26: #{ae_forward.1} parent=11 // pred_check_branch
          %407 = sbr.rel (%p405) target = $region28
        $region27: #{ae_forward.1} parent=11 // pred_region
          %s409 = ssub.s32 32, 32
          %410 = vsyncadd [#allocation9], %s409
          %s412 = sshll.u32 [#allocation8], 4
          %s413 = int_to_ptr.vmem [resolvable:$true] %s412
          %415 = dma.hbm_to_vmem [thread:$0]  %s4, 32, %s413, [#allocation9]
        $region28: #{ae_forward.1} parent=11 // pred_fallthru
          _
        // Predicated region
        $region29: #{ae_forward.1} parent=11 // pred_check
          %p416 = pneg %p162
        $region30: #{ae_forward.1} parent=11 // pred_check_branch
          %418 = sbr.rel (%p416) target = $region32
        $region31: #{ae_forward.1} parent=11 // pred_region
          %s420 = ssub.s32 2048, 2048
          %421 = vsyncadd [#allocation9], %s420
          %s422 = sshll.u32 [#allocation10], 4
          %s423 = int_to_ptr.vmem [resolvable:$true] %s422
          %428 = dma.hbm_to_vmem [thread:$0]  %s5, 2048, %s423, [#allocation9], 64, 64, 4
        $region32: #{ae_forward.1} parent=11 // pred_fallthru
          _
        // Predicated region
        $region33: #{ae_forward.1} parent=11 // pred_check
          %p429 = pneg %p183
        $region34: #{ae_forward.1} parent=11 // pred_check_branch
          %431 = sbr.rel (%p429) target = $region36
        $region35: #{ae_forward.1} parent=11 // pred_region
          _
        $region36: #{ae_forward.1} parent=11 // pred_fallthru
          _
        // Predicated region
        $region37: #{ae_forward.1} parent=11 // pred_check
          %p432 = pneg %p204
        $region38: #{ae_forward.1} parent=11 // pred_check_branch
          %434 = sbr.rel (%p432) target = $region40
        $region39: #{ae_forward.1} parent=11 // pred_region
          %s436 = ssub.s32 2048, 2048
          %437 = vsyncadd [#allocation12], %s436
          %s438 = sshll.u32 [#allocation11], 4
          %s439 = int_to_ptr.vmem [resolvable:$true] %s438
          %444 = dma.hbm_to_vmem [thread:$0]  %s7, 2048, %s439, [#allocation12], 128, 128, 8
        $region40: #{ae_forward.1} parent=11 // pred_fallthru
          _
        // Predicated region
        $region41: #{ae_forward.1} parent=11 // pred_check
          %p445 = pneg %p225
        $region42: #{ae_forward.1} parent=11 // pred_check_branch
          %447 = sbr.rel (%p445) target = $region44
        $region43: #{ae_forward.1} parent=11 // pred_region
          _
        $region44: #{ae_forward.1} parent=11 // pred_fallthru
          _
        // Predicated region
        $region45: #{ae_forward.1} parent=11 // pred_check
          %p448 = pneg %p246
        $region46: #{ae_forward.1} parent=11 // pred_check_branch
          %450 = sbr.rel (%p448) target = $region48
        $region47: #{ae_forward.1} parent=11 // pred_region
          %s452 = ssub.s32 8192, 8192
          %453 = vsyncadd [#allocation12], %s452
          %s454 = sshll.u32 [#allocation13], 4
          %s455 = int_to_ptr.vmem [resolvable:$true] %s454
          %460 = dma.hbm_to_vmem [thread:$0]  %s9, 8192, %s455, [#allocation12], 256, 256, 16
        $region48: #{ae_forward.1} parent=11 // pred_fallthru
          _
        // Predicated region
        $region49: #{ae_forward.1} parent=11 // pred_check
          %p461 = pneg %p267
        $region50: #{ae_forward.1} parent=11 // pred_check_branch
          %463 = sbr.rel (%p461) target = $region52
        $region51: #{ae_forward.1} parent=11 // pred_region
          _
        $region52: #{ae_forward.1} parent=11 // pred_fallthru
          _
        // Predicated region
        $region53: #{ae_forward.1} parent=11 // pred_check
          %p464 = pneg %p288
        $region54: #{ae_forward.1} parent=11 // pred_check_branch
          %466 = sbr.rel (%p464) target = $region56
        $region55: #{ae_forward.1} parent=11 // pred_region
          %s468 = ssub.s32 28672, 28672
          %469 = vsyncadd [#allocation15], %s468
          %s470 = sshll.u32 [#allocation14], 4
          %s471 = int_to_ptr.vmem [resolvable:$true] %s470
          %476 = dma.hbm_to_vmem [thread:$0]  %s11, 28672, %s471, [#allocation15], 448, 448, 28
        $region56: #{ae_forward.1} parent=11 // pred_fallthru
          _
        // Predicated region
        $region57: #{ae_forward.1} parent=11 // pred_check
          %p477 = pneg %p309
        $region58: #{ae_forward.1} parent=11 // pred_check_branch
          %479 = sbr.rel (%p477) target = $region60
        $region59: #{ae_forward.1} parent=11 // pred_region
          _
        $region60: #{ae_forward.1} parent=11 // pred_fallthru
          _
      $region12: #{ae_forward.1} parent=5 // pred_fallthru
        _
      %p480 = scmp.lt.s32.totalorder %s31, 2
      // Predicated region
      $region61: #{ae_forward.1} parent=5 // pred_check
        %p481 = pneg %p480
      $region62: #{ae_forward.1} parent=5 // pred_check_branch
        %483 = sbr.rel (%p481) target = $region64
      $region63: #{ae_forward.1} parent=5 // pred_region
        // Predicated region
        $region65: #{ae_forward.1} parent=63 // pred_check
          %p484 = pneg %p51
        $region66: #{ae_forward.1} parent=63 // pred_check_branch
          %486 = sbr.rel (%p484) target = $region68
        $region67: #{ae_forward.1} parent=63 // pred_region
          %s487 = sand.u32 %s41, 1
          %s488 = scalar_lea.sflag [#allocation3], %s487
          %s489 = sand.u32 %s41, 1
          %s490 = smul.addr %s489, 896
          %s491 = scalar_lea.vmem [#allocation2], %s490
          %s492 = smul.u32 16, %s31
          %s493 = ssub.s32 25, %s492
          %p494 = scmp.lt.s32.totalorder %s493, 16
          %s495 = scalar_select %p494, %s493, 16
          %s496 = smul.u32 128, %s495
          %s497 = smul.u32 %s496, 7
          %s499 = ssub.s32 14336, %s497
          %500 = vsyncadd %s488, %s499
          %p501 = scmp.ne.s32.totalorder 0, %s497
          %s502 = smul.addr %s492, 7
          %s503 = smul.addr %s502, 128
          %s504 = scalar_lea.hbm %s0, %s503
          %s505 = smul.u32 56, %s495
          %s506 = sshll.u32 %s491, 4
          %s507 = int_to_ptr.vmem [resolvable:$true] %s506
          %s508 = sshll.u32 %s505, 4
          %512 = dma.hbm_to_vmem [thread:$0]  (%p501), %s504, %s508, %s507, %s488, 896, 896, 56
        $region68: #{ae_forward.1} parent=63 // pred_fallthru
          _
      $region64: #{ae_forward.1} parent=5 // pred_fallthru
        _
      %p513 = scmp.le.s32.totalorder 1, %s31
      %p514 = scmp.lt.s32.totalorder %s31, 3
      %p515 = pnand %p513, %p514
      %p516 = pneg %p515
      // Predicated region
      $region69: #{ae_forward.1} parent=5 // pred_check
        _
      $region70: #{ae_forward.1} parent=5 // pred_check_branch
        %518 = sbr.rel (%p515) target = $region72
      $region71: #{ae_forward.1} parent=5 // pred_region
        %s519 = ssub.s32 %s31, 1
        %s520 = sand.u32 %s44, 1
        %s521 = scalar_lea.sflag [#allocation3], %s520
        %s522 = sand.u32 %s44, 1
        %s523 = smul.addr %s522, 896
        %s524 = scalar_lea.vmem [#allocation2], %s523
        // Predicated region
        $region73: #{ae_forward.1} parent=71 // pred_check
          %p525 = pneg %p57
        $region74: #{ae_forward.1} parent=71 // pred_check_branch
          %527 = sbr.rel (%p525) target = $region76
        $region75: #{ae_forward.1} parent=71 // pred_region
          %528 = dma.done %s521, 14336
        $region76: #{ae_forward.1} parent=71 // pred_fallthru
          _
        // Predicated region
        $region77: #{ae_forward.1} parent=71 // pred_check
          %p529 = pneg %p78
        $region78: #{ae_forward.1} parent=71 // pred_check_branch
          %531 = sbr.rel (%p529) target = $region80
        $region79: #{ae_forward.1} parent=71 // pred_region
          %532 = dma.done [#allocation6], 25088
        $region80: #{ae_forward.1} parent=71 // pred_fallthru
          _
        // Predicated region
        $region81: #{ae_forward.1} parent=71 // pred_check
          %p533 = pneg %p120
        $region82: #{ae_forward.1} parent=71 // pred_check_branch
          %535 = sbr.rel (%p533) target = $region84
        $region83: #{ae_forward.1} parent=71 // pred_region
          %536 = dma.done [#allocation6], 8192
        $region84: #{ae_forward.1} parent=71 // pred_fallthru
          _
        // Predicated region
        $region85: #{ae_forward.1} parent=71 // pred_check
          %p537 = pneg %p141
        $region86: #{ae_forward.1} parent=71 // pred_check_branch
          %539 = sbr.rel (%p537) target = $region88
        $region87: #{ae_forward.1} parent=71 // pred_region
          %540 = dma.done [#allocation9], 32
        $region88: #{ae_forward.1} parent=71 // pred_fallthru
          _
        // Predicated region
        $region89: #{ae_forward.1} parent=71 // pred_check
          %p541 = pneg %p162
        $region90: #{ae_forward.1} parent=71 // pred_check_branch
          %543 = sbr.rel (%p541) target = $region92
        $region91: #{ae_forward.1} parent=71 // pred_region
          %544 = dma.done [#allocation9], 2048
        $region92: #{ae_forward.1} parent=71 // pred_fallthru
          _
        // Predicated region
        $region93: #{ae_forward.1} parent=71 // pred_check
          %p545 = pneg %p204
        $region94: #{ae_forward.1} parent=71 // pred_check_branch
          %547 = sbr.rel (%p545) target = $region96
        $region95: #{ae_forward.1} parent=71 // pred_region
          %548 = dma.done [#allocation12], 2048
        $region96: #{ae_forward.1} parent=71 // pred_fallthru
          _
        // Predicated region
        $region97: #{ae_forward.1} parent=71 // pred_check
          %p549 = pneg %p246
        $region98: #{ae_forward.1} parent=71 // pred_check_branch
          %551 = sbr.rel (%p549) target = $region100
        $region99: #{ae_forward.1} parent=71 // pred_region
          %552 = dma.done [#allocation12], 8192
        $region100: #{ae_forward.1} parent=71 // pred_fallthru
          _
        // Predicated region
        $region101: #{ae_forward.1} parent=71 // pred_check
          %p553 = pneg %p288
        $region102: #{ae_forward.1} parent=71 // pred_check_branch
          %555 = sbr.rel (%p553) target = $region104
        $region103: #{ae_forward.1} parent=71 // pred_region
          %556 = dma.done [#allocation15], 28672
        $region104: #{ae_forward.1} parent=71 // pred_fallthru
          _
        %s557 = sand.u32 %s44, 1
        %s558 = scalar_lea.sflag [#allocation3], %s557
        %s559 = sand.u32 %s44, 1
        %s560 = smul.addr %s559, 896
        %s561 = scalar_lea.vmem [#allocation2], %s560
        %p562 = pneg %p57
        %p563 = pneg %p54
        %p564 = pneg %p78
        %p565 = pneg %p75
        %p566 = pneg %p99
        %p567 = pneg %p96
        %p568 = pneg %p120
        %p569 = pneg %p117
        %p570 = pneg %p141
        %p571 = pneg %p138
        %p572 = pneg %p162
        %p573 = pneg %p159
        %p574 = pneg %p183
        %p575 = pneg %p180
        %p576 = pneg %p204
        %p577 = pneg %p201
        %p578 = pneg %p225
        %p579 = pneg %p222
        %p580 = pneg %p246
        %p581 = pneg %p243
        %p582 = pneg %p267
        %p583 = pneg %p264
        %p584 = pneg %p288
        %p585 = pneg %p285
        %p586 = pneg %p309
        %p587 = pneg %p306
        %p588 = pneg %p335
        %p589 = pneg %p332
        %s590 = sand.u32 %s322, 1
        %s591 = sand.u32 %s322, 1
        %s592 = smul.addr %s591, 64
        %s593 = scalar_lea.vmem [#allocation16], %s592
        %p594 = pneg %p361
        %p595 = pneg %p358
        %s596 = sand.u32 %s348, 1
        %s597 = scalar_lea.sflag [#allocation4], %s596
        %s598 = sand.u32 %s348, 1
        %s599 = smul.addr %s598, 448
        %s600 = scalar_lea.vmem [#allocation17], %s599
        %s601 = smul.u32 16, %s36
        %s602 = ssub.s32 25, %s601
        %p603 = scmp.lt.s32.totalorder %s602, 16
        %s604 = scalar_select %p603, %s602, 16
        %s605 = smul.u32 128, %s604
        %s606 = smul.u32 %s605, 7
        %s607 = smul.u32 16, %s36
        %s608 = ssub.s32 25, %s607
        %p609 = scmp.lt.s32.totalorder %s608, 16
        %s610 = scalar_select %p609, %s608, 16
        %s611 = smul.u32 64, %s610
        %s612 = smul.u32 16, %s36
        %s613 = ssub.s32 25, %s612
        %p614 = scmp.lt.s32.totalorder %s613, 16
        %s615 = scalar_select %p614, %s613, 16
        %s616 = smul.u32 64, %s615
        %s617 = smul.u32 %s616, 7
        %v619 = vld [vmem:[%s524] sm:$0xff]
        %v620 = vld [vmem:[%s524 + $0x8] sm:$0xff]
        %v621 = vld [vmem:[%s524 + $0x10] sm:$0xff]
        %v622 = vld [vmem:[%s524 + $0x18] sm:$0xff]
        %v623 = vld [vmem:[%s524 + $0x20] sm:$0xff]
        %v624 = vld [vmem:[%s524 + $0x28] sm:$0xff]
        %v625 = vld [vmem:[%s524 + $0x30] sm:$0xff]
        %v626 = vld [vmem:[%s524 + $0x38] sm:$0xff]
        %v627 = vld [vmem:[%s524 + $0x40] sm:$0xff]
        %v628 = vld [vmem:[%s524 + $0x48] sm:$0xff]
        %v629 = vld [vmem:[%s524 + $0x50] sm:$0xff]
        %v630 = vld [vmem:[%s524 + $0x58] sm:$0xff]
        %v631 = vld [vmem:[%s524 + $0x60] sm:$0xff]
        %v632 = vld [vmem:[%s524 + $0x68] sm:$0xff]
        %v633 = vld [vmem:[%s524 + $0x70] sm:$0xff]
        %v634 = vld [vmem:[%s524 + $0x78] sm:$0xff]
        %v635 = vld [vmem:[%s524 + $0x80] sm:$0xff]
        %v636 = vld [vmem:[%s524 + $0x88] sm:$0xff]
        %v637 = vld [vmem:[%s524 + $0x90] sm:$0xff]
        %v638 = vld [vmem:[%s524 + $0x98] sm:$0xff]
        %v639 = vld [vmem:[%s524 + $0xa0] sm:$0xff]
        %v640 = vld [vmem:[%s524 + $0xa8] sm:$0xff]
        %v641 = vld [vmem:[%s524 + $0xb0] sm:$0xff]
        %v642 = vld [vmem:[%s524 + $0xb8] sm:$0xff]
        %v643 = vld [vmem:[%s524 + $0xc0] sm:$0xff]
        %v644 = vld [vmem:[%s524 + $0xc8] sm:$0xff]
        %v645 = vld [vmem:[%s524 + $0xd0] sm:$0xff]
        %v646 = vld [vmem:[%s524 + $0xd8] sm:$0xff]
        %v647 = vld [vmem:[%s524 + $0xe0] sm:$0xff]
        %v648 = vld [vmem:[%s524 + $0xe8] sm:$0xff]
        %v649 = vld [vmem:[%s524 + $0xf0] sm:$0xff]
        %v650 = vld [vmem:[%s524 + $0xf8] sm:$0xff]
        %v651 = vld [vmem:[%s524 + $0x100] sm:$0xff]
        %v652 = vld [vmem:[%s524 + $0x108] sm:$0xff]
        %v653 = vld [vmem:[%s524 + $0x110] sm:$0xff]
        %v654 = vld [vmem:[%s524 + $0x118] sm:$0xff]
        %v655 = vld [vmem:[%s524 + $0x120] sm:$0xff]
        %v656 = vld [vmem:[%s524 + $0x128] sm:$0xff]
        %v657 = vld [vmem:[%s524 + $0x130] sm:$0xff]
        %v658 = vld [vmem:[%s524 + $0x138] sm:$0xff]
        %v659 = vld [vmem:[%s524 + $0x140] sm:$0xff]
        %v660 = vld [vmem:[%s524 + $0x148] sm:$0xff]
        %v661 = vld [vmem:[%s524 + $0x150] sm:$0xff]
        %v662 = vld [vmem:[%s524 + $0x158] sm:$0xff]
        %v663 = vld [vmem:[%s524 + $0x160] sm:$0xff]
        %v664 = vld [vmem:[%s524 + $0x168] sm:$0xff]
        %v665 = vld [vmem:[%s524 + $0x170] sm:$0xff]
        %v666 = vld [vmem:[%s524 + $0x178] sm:$0xff]
        %v667 = vld [vmem:[%s524 + $0x180] sm:$0xff]
        %v668 = vld [vmem:[%s524 + $0x188] sm:$0xff]
        %v669 = vld [vmem:[%s524 + $0x190] sm:$0xff]
        %v670 = vld [vmem:[%s524 + $0x198] sm:$0xff]
        %v671 = vld [vmem:[%s524 + $0x1a0] sm:$0xff]
        %v672 = vld [vmem:[%s524 + $0x1a8] sm:$0xff]
        %v673 = vld [vmem:[%s524 + $0x1b0] sm:$0xff]
        %v674 = vld [vmem:[%s524 + $0x1b8] sm:$0xff]
        %v675 = vld [vmem:[%s524 + $0x1c0] sm:$0xff]
        %v676 = vld [vmem:[%s524 + $0x1c8] sm:$0xff]
        %v677 = vld [vmem:[%s524 + $0x1d0] sm:$0xff]
        %v678 = vld [vmem:[%s524 + $0x1d8] sm:$0xff]
        %v679 = vld [vmem:[%s524 + $0x1e0] sm:$0xff]
        %v680 = vld [vmem:[%s524 + $0x1e8] sm:$0xff]
        %v681 = vld [vmem:[%s524 + $0x1f0] sm:$0xff]
        %v682 = vld [vmem:[%s524 + $0x1f8] sm:$0xff]
        %v683 = vld [vmem:[%s524 + $0x200] sm:$0xff]
        %v684 = vld [vmem:[%s524 + $0x208] sm:$0xff]
        %v685 = vld [vmem:[%s524 + $0x210] sm:$0xff]
        %v686 = vld [vmem:[%s524 + $0x218] sm:$0xff]
        %v687 = vld [vmem:[%s524 + $0x220] sm:$0xff]
        %v688 = vld [vmem:[%s524 + $0x228] sm:$0xff]
        %v689 = vld [vmem:[%s524 + $0x230] sm:$0xff]
        %v690 = vld [vmem:[%s524 + $0x238] sm:$0xff]
        %v691 = vld [vmem:[%s524 + $0x240] sm:$0xff]
        %v692 = vld [vmem:[%s524 + $0x248] sm:$0xff]
        %v693 = vld [vmem:[%s524 + $0x250] sm:$0xff]
        %v694 = vld [vmem:[%s524 + $0x258] sm:$0xff]
        %v695 = vld [vmem:[%s524 + $0x260] sm:$0xff]
        %v696 = vld [vmem:[%s524 + $0x268] sm:$0xff]
        %v697 = vld [vmem:[%s524 + $0x270] sm:$0xff]
        %v698 = vld [vmem:[%s524 + $0x278] sm:$0xff]
        %v699 = vld [vmem:[%s524 + $0x280] sm:$0xff]
        %v700 = vld [vmem:[%s524 + $0x288] sm:$0xff]
        %v701 = vld [vmem:[%s524 + $0x290] sm:$0xff]
        %v702 = vld [vmem:[%s524 + $0x298] sm:$0xff]
        %v703 = vld [vmem:[%s524 + $0x2a0] sm:$0xff]
        %v704 = vld [vmem:[%s524 + $0x2a8] sm:$0xff]
        %v705 = vld [vmem:[%s524 + $0x2b0] sm:$0xff]
        %v706 = vld [vmem:[%s524 + $0x2b8] sm:$0xff]
        %v707 = vld [vmem:[%s524 + $0x2c0] sm:$0xff]
        %v708 = vld [vmem:[%s524 + $0x2c8] sm:$0xff]
        %v709 = vld [vmem:[%s524 + $0x2d0] sm:$0xff]
        %v710 = vld [vmem:[%s524 + $0x2d8] sm:$0xff]
        %v711 = vld [vmem:[%s524 + $0x2e0] sm:$0xff]
        %v712 = vld [vmem:[%s524 + $0x2e8] sm:$0xff]
        %v713 = vld [vmem:[%s524 + $0x2f0] sm:$0xff]
        %v714 = vld [vmem:[%s524 + $0x2f8] sm:$0xff]
        %v715 = vld [vmem:[%s524 + $0x300] sm:$0xff]
        %v716 = vld [vmem:[%s524 + $0x308] sm:$0xff]
        %v717 = vld [vmem:[%s524 + $0x310] sm:$0xff]
        %v718 = vld [vmem:[%s524 + $0x318] sm:$0xff]
        %v719 = vld [vmem:[%s524 + $0x320] sm:$0xff]
        %v720 = vld [vmem:[%s524 + $0x328] sm:$0xff]
        %v721 = vld [vmem:[%s524 + $0x330] sm:$0xff]
        %v722 = vld [vmem:[%s524 + $0x338] sm:$0xff]
        %v723 = vld [vmem:[%s524 + $0x340] sm:$0xff]
        %v724 = vld [vmem:[%s524 + $0x348] sm:$0xff]
        %v725 = vld [vmem:[%s524 + $0x350] sm:$0xff]
        %v726 = vld [vmem:[%s524 + $0x358] sm:$0xff]
        %v727 = vld [vmem:[%s524 + $0x360] sm:$0xff]
        %v728 = vld [vmem:[%s524 + $0x368] sm:$0xff]
        %v729 = vld [vmem:[%s524 + $0x370] sm:$0xff]
        %v730 = vld [vmem:[%s524 + $0x378] sm:$0xff]
        %v731 = vpack.c.bf16 %v626, %v619
        %v732 = vpack.c.bf16 %v627, %v620
        %v733 = vpack.c.bf16 %v628, %v621
        %v734 = vpack.c.bf16 %v629, %v622
        %v735 = vpack.c.bf16 %v630, %v623
        %v736 = vpack.c.bf16 %v631, %v624
        %v737 = vpack.c.bf16 %v632, %v625
        %v738 = vpack.c.bf16 %v640, %v633
        %v739 = vpack.c.bf16 %v641, %v634
        %v740 = vpack.c.bf16 %v642, %v635
        %v741 = vpack.c.bf16 %v643, %v636
        %v742 = vpack.c.bf16 %v644, %v637
        %v743 = vpack.c.bf16 %v645, %v638
        %v744 = vpack.c.bf16 %v646, %v639
        %v745 = vpack.c.bf16 %v654, %v647
        %v746 = vpack.c.bf16 %v655, %v648
        %v747 = vpack.c.bf16 %v656, %v649
        %v748 = vpack.c.bf16 %v657, %v650
        %v749 = vpack.c.bf16 %v658, %v651
        %v750 = vpack.c.bf16 %v659, %v652
        %v751 = vpack.c.bf16 %v660, %v653
        %v752 = vpack.c.bf16 %v668, %v661
        %v753 = vpack.c.bf16 %v669, %v662
        %v754 = vpack.c.bf16 %v670, %v663
        %v755 = vpack.c.bf16 %v671, %v664
        %v756 = vpack.c.bf16 %v672, %v665
        %v757 = vpack.c.bf16 %v673, %v666
        %v758 = vpack.c.bf16 %v674, %v667
        %v759 = vpack.c.bf16 %v682, %v675
        %v760 = vpack.c.bf16 %v683, %v676
        %v761 = vpack.c.bf16 %v684, %v677
        %v762 = vpack.c.bf16 %v685, %v678
        %v763 = vpack.c.bf16 %v686, %v679
        %v764 = vpack.c.bf16 %v687, %v680
        %v765 = vpack.c.bf16 %v688, %v681
        %v766 = vpack.c.bf16 %v696, %v689
        %v767 = vpack.c.bf16 %v697, %v690
        %v768 = vpack.c.bf16 %v698, %v691
        %v769 = vpack.c.bf16 %v699, %v692
        %v770 = vpack.c.bf16 %v700, %v693
        %v771 = vpack.c.bf16 %v701, %v694
        %v772 = vpack.c.bf16 %v702, %v695
        %v773 = vpack.c.bf16 %v710, %v703
        %v774 = vpack.c.bf16 %v711, %v704
        %v775 = vpack.c.bf16 %v712, %v705
        %v776 = vpack.c.bf16 %v713, %v706
        %v777 = vpack.c.bf16 %v714, %v707
        %v778 = vpack.c.bf16 %v715, %v708
        %v779 = vpack.c.bf16 %v716, %v709
        %v780 = vpack.c.bf16 %v724, %v717
        %v781 = vpack.c.bf16 %v725, %v718
        %v782 = vpack.c.bf16 %v726, %v719
        %v783 = vpack.c.bf16 %v727, %v720
        %v784 = vpack.c.bf16 %v728, %v721
        %v785 = vpack.c.bf16 %v729, %v722
        %v786 = vpack.c.bf16 %v730, %v723
        %v787 = vld [vmem:[#allocation5] sm:$0xff]
        %v788 = vld [vmem:[#allocation5 + $0x8] sm:$0xff]
        %v789 = vld [vmem:[#allocation5 + $0x10] sm:$0xff]
        %v790 = vld [vmem:[#allocation5 + $0x18] sm:$0xff]
        %v791 = vld [vmem:[#allocation5 + $0x20] sm:$0xff]
        %v792 = vld [vmem:[#allocation5 + $0x28] sm:$0xff]
        %v793 = vld [vmem:[#allocation5 + $0x30] sm:$0xff]
        %v794 = vld [vmem:[#allocation5 + $0x38] sm:$0xff]
        %v795 = vld [vmem:[#allocation5 + $0x40] sm:$0xff]
        %v796 = vld [vmem:[#allocation5 + $0x48] sm:$0xff]
        %v797 = vld [vmem:[#allocation5 + $0x50] sm:$0xff]
        %v798 = vld [vmem:[#allocation5 + $0x58] sm:$0xff]
        %v799 = vld [vmem:[#allocation5 + $0x60] sm:$0xff]
        %v800 = vld [vmem:[#allocation5 + $0x68] sm:$0xff]
        %v801 = vld [vmem:[#allocation5 + $0x70] sm:$0xff]
        %v802 = vld [vmem:[#allocation5 + $0x78] sm:$0xff]
        %v803 = vld [vmem:[#allocation5 + $0x80] sm:$0xff]
        %v804 = vld [vmem:[#allocation5 + $0x88] sm:$0xff]
        %v805 = vld [vmem:[#allocation5 + $0x90] sm:$0xff]
        %v806 = vld [vmem:[#allocation5 + $0x98] sm:$0xff]
        %v807 = vld [vmem:[#allocation5 + $0xa0] sm:$0xff]
        %v808 = vld [vmem:[#allocation5 + $0xa8] sm:$0xff]
        %v809 = vld [vmem:[#allocation5 + $0xb0] sm:$0xff]
        %v810 = vld [vmem:[#allocation5 + $0xb8] sm:$0xff]
        %v811 = vld [vmem:[#allocation5 + $0xc0] sm:$0xff]
        %v812 = vld [vmem:[#allocation5 + $0xc8] sm:$0xff]
        %v813 = vld [vmem:[#allocation5 + $0xd0] sm:$0xff]
        %v814 = vld [vmem:[#allocation5 + $0xd8] sm:$0xff]
        %v815 = vld [vmem:[#allocation5 + $0xe0] sm:$0xff]
        %v816 = vld [vmem:[#allocation5 + $0xe8] sm:$0xff]
        %v817 = vld [vmem:[#allocation5 + $0xf0] sm:$0xff]
        %v818 = vld [vmem:[#allocation5 + $0xf8] sm:$0xff]
        %v819 = vld [vmem:[#allocation5 + $0x100] sm:$0xff]
        %v820 = vld [vmem:[#allocation5 + $0x108] sm:$0xff]
        %v821 = vld [vmem:[#allocation5 + $0x110] sm:$0xff]
        %v822 = vld [vmem:[#allocation5 + $0x118] sm:$0xff]
        %v823 = vld [vmem:[#allocation5 + $0x120] sm:$0xff]
        %v824 = vld [vmem:[#allocation5 + $0x128] sm:$0xff]
        %v825 = vld [vmem:[#allocation5 + $0x130] sm:$0xff]
        %v826 = vld [vmem:[#allocation5 + $0x138] sm:$0xff]
        %v827 = vld [vmem:[#allocation5 + $0x140] sm:$0xff]
        %v828 = vld [vmem:[#allocation5 + $0x148] sm:$0xff]
        %v829 = vld [vmem:[#allocation5 + $0x150] sm:$0xff]
        %v830 = vld [vmem:[#allocation5 + $0x158] sm:$0xff]
        %v831 = vld [vmem:[#allocation5 + $0x160] sm:$0xff]
        %v832 = vld [vmem:[#allocation5 + $0x168] sm:$0xff]
        %v833 = vld [vmem:[#allocation5 + $0x170] sm:$0xff]
        %v834 = vld [vmem:[#allocation5 + $0x178] sm:$0xff]
        %v835 = vld [vmem:[#allocation5 + $0x180] sm:$0xff]
        %v836 = vld [vmem:[#allocation5 + $0x188] sm:$0xff]
        %v837 = vld [vmem:[#allocation5 + $0x190] sm:$0xff]
        %v838 = vld [vmem:[#allocation5 + $0x198] sm:$0xff]
        %v839 = vld [vmem:[#allocation5 + $0x1a0] sm:$0xff]
        %v840 = vld [vmem:[#allocation5 + $0x1a8] sm:$0xff]
        %v841 = vld [vmem:[#allocation5 + $0x1b0] sm:$0xff]
        %v842 = vld [vmem:[#allocation5 + $0x1b8] sm:$0xff]
        %v843 = vld [vmem:[#allocation5 + $0x1c0] sm:$0xff]
        %v844 = vld [vmem:[#allocation5 + $0x1c8] sm:$0xff]
        %v845 = vld [vmem:[#allocation5 + $0x1d0] sm:$0xff]
        %v846 = vld [vmem:[#allocation5 + $0x1d8] sm:$0xff]
        %v847 = vld [vmem:[#allocation5 + $0x1e0] sm:$0xff]
        %v848 = vld [vmem:[#allocation5 + $0x1e8] sm:$0xff]
        %v849 = vld [vmem:[#allocation5 + $0x1f0] sm:$0xff]
        %v850 = vld [vmem:[#allocation5 + $0x1f8] sm:$0xff]
        %v851 = vld [vmem:[#allocation5 + $0x200] sm:$0xff]
        %v852 = vld [vmem:[#allocation5 + $0x208] sm:$0xff]
        %v853 = vld [vmem:[#allocation5 + $0x210] sm:$0xff]
        %v854 = vld [vmem:[#allocation5 + $0x218] sm:$0xff]
        %v855 = vld [vmem:[#allocation5 + $0x220] sm:$0xff]
        %v856 = vld [vmem:[#allocation5 + $0x228] sm:$0xff]
        %v857 = vld [vmem:[#allocation5 + $0x230] sm:$0xff]
        %v858 = vld [vmem:[#allocation5 + $0x238] sm:$0xff]
        %v859 = vld [vmem:[#allocation5 + $0x240] sm:$0xff]
        %v860 = vld [vmem:[#allocation5 + $0x248] sm:$0xff]
        %v861 = vld [vmem:[#allocation5 + $0x250] sm:$0xff]
        %v862 = vld [vmem:[#allocation5 + $0x258] sm:$0xff]
        %v863 = vld [vmem:[#allocation5 + $0x260] sm:$0xff]
        %v864 = vld [vmem:[#allocation5 + $0x268] sm:$0xff]
        %v865 = vld [vmem:[#allocation5 + $0x270] sm:$0xff]
        %v866 = vld [vmem:[#allocation5 + $0x278] sm:$0xff]
        %v867 = vld [vmem:[#allocation5 + $0x280] sm:$0xff]
        %v868 = vld [vmem:[#allocation5 + $0x288] sm:$0xff]
        %v869 = vld [vmem:[#allocation5 + $0x290] sm:$0xff]
        %v870 = vld [vmem:[#allocation5 + $0x298] sm:$0xff]
        %v871 = vld [vmem:[#allocation5 + $0x2a0] sm:$0xff]
        %v872 = vld [vmem:[#allocation5 + $0x2a8] sm:$0xff]
        %v873 = vld [vmem:[#allocation5 + $0x2b0] sm:$0xff]
        %v874 = vld [vmem:[#allocation5 + $0x2b8] sm:$0xff]
        %v875 = vld [vmem:[#allocation5 + $0x2c0] sm:$0xff]
        %v876 = vld [vmem:[#allocation5 + $0x2c8] sm:$0xff]
        %v877 = vld [vmem:[#allocation5 + $0x2d0] sm:$0xff]
        %v878 = vld [vmem:[#allocation5 + $0x2d8] sm:$0xff]
        %v879 = vld [vmem:[#allocation5 + $0x2e0] sm:$0xff]
        %v880 = vld [vmem:[#allocation5 + $0x2e8] sm:$0xff]
        %v881 = vld [vmem:[#allocation5 + $0x2f0] sm:$0xff]
        %v882 = vld [vmem:[#allocation5 + $0x2f8] sm:$0xff]
        %v883 = vld [vmem:[#allocation5 + $0x300] sm:$0xff]
        %v884 = vld [vmem:[#allocation5 + $0x308] sm:$0xff]
        %v885 = vld [vmem:[#allocation5 + $0x310] sm:$0xff]
        %v886 = vld [vmem:[#allocation5 + $0x318] sm:$0xff]
        %v887 = vld [vmem:[#allocation5 + $0x320] sm:$0xff]
        %v888 = vld [vmem:[#allocation5 + $0x328] sm:$0xff]
        %v889 = vld [vmem:[#allocation5 + $0x330] sm:$0xff]
        %v890 = vld [vmem:[#allocation5 + $0x338] sm:$0xff]
        %v891 = vld [vmem:[#allocation5 + $0x340] sm:$0xff]
        %v892 = vld [vmem:[#allocation5 + $0x348] sm:$0xff]
        %v893 = vld [vmem:[#allocation5 + $0x350] sm:$0xff]
        %v894 = vld [vmem:[#allocation5 + $0x358] sm:$0xff]
        %v895 = vld [vmem:[#allocation5 + $0x360] sm:$0xff]
        %v896 = vld [vmem:[#allocation5 + $0x368] sm:$0xff]
        %v897 = vld [vmem:[#allocation5 + $0x370] sm:$0xff]
        %v898 = vld [vmem:[#allocation5 + $0x378] sm:$0xff]
        %v899 = vld [vmem:[#allocation5 + $0x380] sm:$0xff]
        %v900 = vld [vmem:[#allocation5 + $0x388] sm:$0xff]
        %v901 = vld [vmem:[#allocation5 + $0x390] sm:$0xff]
        %v902 = vld [vmem:[#allocation5 + $0x398] sm:$0xff]
        %v903 = vld [vmem:[#allocation5 + $0x3a0] sm:$0xff]
        %v904 = vld [vmem:[#allocation5 + $0x3a8] sm:$0xff]
        %v905 = vld [vmem:[#allocation5 + $0x3b0] sm:$0xff]
        %v906 = vld [vmem:[#allocation5 + $0x3b8] sm:$0xff]
        %v907 = vld [vmem:[#allocation5 + $0x3c0] sm:$0xff]
        %v908 = vld [vmem:[#allocation5 + $0x3c8] sm:$0xff]
        %v909 = vld [vmem:[#allocation5 + $0x3d0] sm:$0xff]
        %v910 = vld [vmem:[#allocation5 + $0x3d8] sm:$0xff]
        %v911 = vld [vmem:[#allocation5 + $0x3e0] sm:$0xff]
        %v912 = vld [vmem:[#allocation5 + $0x3e8] sm:$0xff]
        %v913 = vld [vmem:[#allocation5 + $0x3f0] sm:$0xff]
        %v914 = vld [vmem:[#allocation5 + $0x3f8] sm:$0xff]
        %v915 = vld [vmem:[#allocation5 + $0x400] sm:$0xff]
        %v916 = vld [vmem:[#allocation5 + $0x408] sm:$0xff]
        %v917 = vld [vmem:[#allocation5 + $0x410] sm:$0xff]
        %v918 = vld [vmem:[#allocation5 + $0x418] sm:$0xff]
        %v919 = vld [vmem:[#allocation5 + $0x420] sm:$0xff]
        %v920 = vld [vmem:[#allocation5 + $0x428] sm:$0xff]
        %v921 = vld [vmem:[#allocation5 + $0x430] sm:$0xff]
        %v922 = vld [vmem:[#allocation5 + $0x438] sm:$0xff]
        %v923 = vld [vmem:[#allocation5 + $0x440] sm:$0xff]
        %v924 = vld [vmem:[#allocation5 + $0x448] sm:$0xff]
        %v925 = vld [vmem:[#allocation5 + $0x450] sm:$0xff]
        %v926 = vld [vmem:[#allocation5 + $0x458] sm:$0xff]
        %v927 = vld [vmem:[#allocation5 + $0x460] sm:$0xff]
        %v928 = vld [vmem:[#allocation5 + $0x468] sm:$0xff]
        %v929 = vld [vmem:[#allocation5 + $0x470] sm:$0xff]
        %v930 = vld [vmem:[#allocation5 + $0x478] sm:$0xff]
        %v931 = vld [vmem:[#allocation5 + $0x480] sm:$0xff]
        %v932 = vld [vmem:[#allocation5 + $0x488] sm:$0xff]
        %v933 = vld [vmem:[#allocation5 + $0x490] sm:$0xff]
        %v934 = vld [vmem:[#allocation5 + $0x498] sm:$0xff]
        %v935 = vld [vmem:[#allocation5 + $0x4a0] sm:$0xff]
        %v936 = vld [vmem:[#allocation5 + $0x4a8] sm:$0xff]
        %v937 = vld [vmem:[#allocation5 + $0x4b0] sm:$0xff]
        %v938 = vld [vmem:[#allocation5 + $0x4b8] sm:$0xff]
        %v939 = vld [vmem:[#allocation5 + $0x4c0] sm:$0xff]
        %v940 = vld [vmem:[#allocation5 + $0x4c8] sm:$0xff]
        %v941 = vld [vmem:[#allocation5 + $0x4d0] sm:$0xff]
        %v942 = vld [vmem:[#allocation5 + $0x4d8] sm:$0xff]
        %v943 = vld [vmem:[#allocation5 + $0x4e0] sm:$0xff]
        %v944 = vld [vmem:[#allocation5 + $0x4e8] sm:$0xff]
        %v945 = vld [vmem:[#allocation5 + $0x4f0] sm:$0xff]
        %v946 = vld [vmem:[#allocation5 + $0x4f8] sm:$0xff]
        %v947 = vld [vmem:[#allocation5 + $0x500] sm:$0xff]
        %v948 = vld [vmem:[#allocation5 + $0x508] sm:$0xff]
        %v949 = vld [vmem:[#allocation5 + $0x510] sm:$0xff]
        %v950 = vld [vmem:[#allocation5 + $0x518] sm:$0xff]
        %v951 = vld [vmem:[#allocation5 + $0x520] sm:$0xff]
        %v952 = vld [vmem:[#allocation5 + $0x528] sm:$0xff]
        %v953 = vld [vmem:[#allocation5 + $0x530] sm:$0xff]
        %v954 = vld [vmem:[#allocation5 + $0x538] sm:$0xff]
        %v955 = vld [vmem:[#allocation5 + $0x540] sm:$0xff]
        %v956 = vld [vmem:[#allocation5 + $0x548] sm:$0xff]
        %v957 = vld [vmem:[#allocation5 + $0x550] sm:$0xff]
        %v958 = vld [vmem:[#allocation5 + $0x558] sm:$0xff]
        %v959 = vld [vmem:[#allocation5 + $0x560] sm:$0xff]
        %v960 = vld [vmem:[#allocation5 + $0x568] sm:$0xff]
        %v961 = vld [vmem:[#allocation5 + $0x570] sm:$0xff]
        %v962 = vld [vmem:[#allocation5 + $0x578] sm:$0xff]
        %v963 = vld [vmem:[#allocation5 + $0x580] sm:$0xff]
        %v964 = vld [vmem:[#allocation5 + $0x588] sm:$0xff]
        %v965 = vld [vmem:[#allocation5 + $0x590] sm:$0xff]
        %v966 = vld [vmem:[#allocation5 + $0x598] sm:$0xff]
        %v967 = vld [vmem:[#allocation5 + $0x5a0] sm:$0xff]
        %v968 = vld [vmem:[#allocation5 + $0x5a8] sm:$0xff]
        %v969 = vld [vmem:[#allocation5 + $0x5b0] sm:$0xff]
        %v970 = vld [vmem:[#allocation5 + $0x5b8] sm:$0xff]
        %v971 = vld [vmem:[#allocation5 + $0x5c0] sm:$0xff]
        %v972 = vld [vmem:[#allocation5 + $0x5c8] sm:$0xff]
        %v973 = vld [vmem:[#allocation5 + $0x5d0] sm:$0xff]
        %v974 = vld [vmem:[#allocation5 + $0x5d8] sm:$0xff]
        %v975 = vld [vmem:[#allocation5 + $0x5e0] sm:$0xff]
        %v976 = vld [vmem:[#allocation5 + $0x5e8] sm:$0xff]
        %v977 = vld [vmem:[#allocation5 + $0x5f0] sm:$0xff]
        %v978 = vld [vmem:[#allocation5 + $0x5f8] sm:$0xff]
        %v979 = vld [vmem:[#allocation5 + $0x600] sm:$0xff]
        %v980 = vld [vmem:[#allocation5 + $0x608] sm:$0xff]
        %v981 = vld [vmem:[#allocation5 + $0x610] sm:$0xff]
        %v982 = vld [vmem:[#allocation5 + $0x618] sm:$0xff]
        %v983 = vld [vmem:[%s2] sm:$0xf]
        %v985 = vlaneseq
        %v986 = vshrl.u32 %v985, 7
        %v987 = vsub.s32 0, %v986
        %v988 = vrot.slane %v983, %v987
        %v989 = vlaneseq
        %v990 = vshrl.u32 %v989, 7
        %v991 = vsub.s32 1, %v990
        %v992 = vrot.slane %v983, %v991
        %v993 = vlaneseq
        %v994 = vshrl.u32 %v993, 7
        %v995 = vsub.s32 2, %v994
        %v996 = vrot.slane %v983, %v995
        %v997 = vlaneseq
        %v998 = vshrl.u32 %v997, 7
        %v999 = vsub.s32 3, %v998
        %v1000 = vrot.slane %v983, %v999
        %v1201 = vunpack.c.l.b16 %v787
        %v1202 = vunpack.c.h.b16 %v787
        %v1203 = vunpack.c.l.b16 %v788
        %v1204 = vunpack.c.h.b16 %v788
        %v1205 = vunpack.c.l.b16 %v789
        %v1206 = vunpack.c.h.b16 %v789
        %v1207 = vunpack.c.l.b16 %v790
        %v1208 = vunpack.c.h.b16 %v790
        %v1209 = vunpack.c.l.b16 %v791
        %v1210 = vunpack.c.h.b16 %v791
        %v1211 = vunpack.c.l.b16 %v792
        %v1212 = vunpack.c.h.b16 %v792
        %v1213 = vunpack.c.l.b16 %v793
        %v1214 = vunpack.c.h.b16 %v793
        %v1215 = vunpack.c.l.b16 %v794
        %v1216 = vunpack.c.h.b16 %v794
        %v1217 = vunpack.c.l.b16 %v795
        %v1218 = vunpack.c.h.b16 %v795
        %v1219 = vunpack.c.l.b16 %v796
        %v1220 = vunpack.c.h.b16 %v796
        %v1221 = vunpack.c.l.b16 %v797
        %v1222 = vunpack.c.h.b16 %v797
        %v1223 = vunpack.c.l.b16 %v798
        %v1224 = vunpack.c.h.b16 %v798
        %v1225 = vunpack.c.l.b16 %v799
        %v1226 = vunpack.c.h.b16 %v799
        %v1227 = vunpack.c.l.b16 %v800
        %v1228 = vunpack.c.h.b16 %v800
        %v1229 = vunpack.c.l.b16 %v801
        %v1230 = vunpack.c.h.b16 %v801
        %v1231 = vunpack.c.l.b16 %v802
        %v1232 = vunpack.c.h.b16 %v802
        %v1233 = vunpack.c.l.b16 %v803
        %v1234 = vunpack.c.h.b16 %v803
        %v1235 = vunpack.c.l.b16 %v804
        %v1236 = vunpack.c.h.b16 %v804
        %v1237 = vunpack.c.l.b16 %v805
        %v1238 = vunpack.c.h.b16 %v805
        %v1239 = vunpack.c.l.b16 %v806
        %v1240 = vunpack.c.h.b16 %v806
        %v1241 = vunpack.c.l.b16 %v807
        %v1242 = vunpack.c.h.b16 %v807
        %v1243 = vunpack.c.l.b16 %v808
        %v1244 = vunpack.c.h.b16 %v808
        %v1245 = vunpack.c.l.b16 %v809
        %v1246 = vunpack.c.h.b16 %v809
        %v1247 = vunpack.c.l.b16 %v810
        %v1248 = vunpack.c.h.b16 %v810
        %v1249 = vunpack.c.l.b16 %v811
        %v1250 = vunpack.c.h.b16 %v811
        %v1251 = vunpack.c.l.b16 %v812
        %v1252 = vunpack.c.h.b16 %v812
        %v1253 = vunpack.c.l.b16 %v813
        %v1254 = vunpack.c.h.b16 %v813
        %v1255 = vunpack.c.l.b16 %v814
        %v1256 = vunpack.c.h.b16 %v814
        %v1257 = vunpack.c.l.b16 %v815
        %v1258 = vunpack.c.h.b16 %v815
        %v1259 = vunpack.c.l.b16 %v816
        %v1260 = vunpack.c.h.b16 %v816
        %v1261 = vunpack.c.l.b16 %v817
        %v1262 = vunpack.c.h.b16 %v817
        %v1263 = vunpack.c.l.b16 %v818
        %v1264 = vunpack.c.h.b16 %v818
        %v1265 = vunpack.c.l.b16 %v819
        %v1266 = vunpack.c.h.b16 %v819
        %v1267 = vunpack.c.l.b16 %v820
        %v1268 = vunpack.c.h.b16 %v820
        %v1269 = vunpack.c.l.b16 %v821
        %v1270 = vunpack.c.h.b16 %v821
        %v1271 = vunpack.c.l.b16 %v822
        %v1272 = vunpack.c.h.b16 %v822
        %v1273 = vunpack.c.l.b16 %v823
        %v1274 = vunpack.c.h.b16 %v823
        %v1275 = vunpack.c.l.b16 %v824
        %v1276 = vunpack.c.h.b16 %v824
        %v1277 = vunpack.c.l.b16 %v825
        %v1278 = vunpack.c.h.b16 %v825
        %v1279 = vunpack.c.l.b16 %v826
        %v1280 = vunpack.c.h.b16 %v826
        %v1281 = vunpack.c.l.b16 %v827
        %v1282 = vunpack.c.h.b16 %v827
        %v1283 = vunpack.c.l.b16 %v828
        %v1284 = vunpack.c.h.b16 %v828
        %v1285 = vunpack.c.l.b16 %v829
        %v1286 = vunpack.c.h.b16 %v829
        %v1287 = vunpack.c.l.b16 %v830
        %v1288 = vunpack.c.h.b16 %v830
        %v1289 = vunpack.c.l.b16 %v831
        %v1290 = vunpack.c.h.b16 %v831
        %v1291 = vunpack.c.l.b16 %v832
        %v1292 = vunpack.c.h.b16 %v832
        %v1293 = vunpack.c.l.b16 %v833
        %v1294 = vunpack.c.h.b16 %v833
        %v1295 = vunpack.c.l.b16 %v834
        %v1296 = vunpack.c.h.b16 %v834
        %v1297 = vunpack.c.l.b16 %v835
        %v1298 = vunpack.c.h.b16 %v835
        %v1299 = vunpack.c.l.b16 %v836
        %v1300 = vunpack.c.h.b16 %v836
        %v1301 = vunpack.c.l.b16 %v837
        %v1302 = vunpack.c.h.b16 %v837
        %v1303 = vunpack.c.l.b16 %v838
        %v1304 = vunpack.c.h.b16 %v838
        %v1305 = vunpack.c.l.b16 %v839
        %v1306 = vunpack.c.h.b16 %v839
        %v1307 = vunpack.c.l.b16 %v840
        %v1308 = vunpack.c.h.b16 %v840
        %v1309 = vunpack.c.l.b16 %v841
        %v1310 = vunpack.c.h.b16 %v841
        %v1311 = vunpack.c.l.b16 %v842
        %v1312 = vunpack.c.h.b16 %v842
        %v1313 = vunpack.c.l.b16 %v843
        %v1314 = vunpack.c.h.b16 %v843
        %v1315 = vunpack.c.l.b16 %v844
        %v1316 = vunpack.c.h.b16 %v844
        %v1317 = vunpack.c.l.b16 %v845
        %v1318 = vunpack.c.h.b16 %v845
        %v1319 = vunpack.c.l.b16 %v846
        %v1320 = vunpack.c.h.b16 %v846
        %v1321 = vunpack.c.l.b16 %v847
        %v1322 = vunpack.c.h.b16 %v847
        %v1323 = vunpack.c.l.b16 %v848
        %v1324 = vunpack.c.h.b16 %v848
        %v1325 = vunpack.c.l.b16 %v849
        %v1326 = vunpack.c.h.b16 %v849
        %v1327 = vunpack.c.l.b16 %v850
        %v1328 = vunpack.c.h.b16 %v850
        %v1329 = vunpack.c.l.b16 %v851
        %v1330 = vunpack.c.h.b16 %v851
        %v1331 = vunpack.c.l.b16 %v852
        %v1332 = vunpack.c.h.b16 %v852
        %v1333 = vunpack.c.l.b16 %v853
        %v1334 = vunpack.c.h.b16 %v853
        %v1335 = vunpack.c.l.b16 %v854
        %v1336 = vunpack.c.h.b16 %v854
        %v1337 = vunpack.c.l.b16 %v855
        %v1338 = vunpack.c.h.b16 %v855
        %v1339 = vunpack.c.l.b16 %v856
        %v1340 = vunpack.c.h.b16 %v856
        %v1341 = vunpack.c.l.b16 %v857
        %v1342 = vunpack.c.h.b16 %v857
        %v1343 = vunpack.c.l.b16 %v858
        %v1344 = vunpack.c.h.b16 %v858
        %v1345 = vunpack.c.l.b16 %v859
        %v1346 = vunpack.c.h.b16 %v859
        %v1347 = vunpack.c.l.b16 %v860
        %v1348 = vunpack.c.h.b16 %v860
        %v1349 = vunpack.c.l.b16 %v861
        %v1350 = vunpack.c.h.b16 %v861
        %v1351 = vunpack.c.l.b16 %v862
        %v1352 = vunpack.c.h.b16 %v862
        %v1353 = vunpack.c.l.b16 %v863
        %v1354 = vunpack.c.h.b16 %v863
        %v1355 = vunpack.c.l.b16 %v864
        %v1356 = vunpack.c.h.b16 %v864
        %v1357 = vunpack.c.l.b16 %v865
        %v1358 = vunpack.c.h.b16 %v865
        %v1359 = vunpack.c.l.b16 %v866
        %v1360 = vunpack.c.h.b16 %v866
        %v1361 = vunpack.c.l.b16 %v867
        %v1362 = vunpack.c.h.b16 %v867
        %v1363 = vunpack.c.l.b16 %v868
        %v1364 = vunpack.c.h.b16 %v868
        %v1365 = vunpack.c.l.b16 %v869
        %v1366 = vunpack.c.h.b16 %v869
        %v1367 = vunpack.c.l.b16 %v870
        %v1368 = vunpack.c.h.b16 %v870
        %v1369 = vunpack.c.l.b16 %v871
        %v1370 = vunpack.c.h.b16 %v871
        %v1371 = vunpack.c.l.b16 %v872
        %v1372 = vunpack.c.h.b16 %v872
        %v1373 = vunpack.c.l.b16 %v873
        %v1374 = vunpack.c.h.b16 %v873
        %v1375 = vunpack.c.l.b16 %v874
        %v1376 = vunpack.c.h.b16 %v874
        %v1377 = vunpack.c.l.b16 %v875
        %v1378 = vunpack.c.h.b16 %v875
        %v1379 = vunpack.c.l.b16 %v876
        %v1380 = vunpack.c.h.b16 %v876
        %v1381 = vunpack.c.l.b16 %v877
        %v1382 = vunpack.c.h.b16 %v877
        %v1383 = vunpack.c.l.b16 %v878
        %v1384 = vunpack.c.h.b16 %v878
        %v1385 = vunpack.c.l.b16 %v879
        %v1386 = vunpack.c.h.b16 %v879
        %v1387 = vunpack.c.l.b16 %v880
        %v1388 = vunpack.c.h.b16 %v880
        %v1389 = vunpack.c.l.b16 %v881
        %v1390 = vunpack.c.h.b16 %v881
        %v1391 = vunpack.c.l.b16 %v882
        %v1392 = vunpack.c.h.b16 %v882
        %v1393 = vunpack.c.l.b16 %v883
        %v1394 = vunpack.c.h.b16 %v883
        %v1395 = vunpack.c.l.b16 %v884
        %v1396 = vunpack.c.h.b16 %v884
        %v1397 = vunpack.c.l.b16 %v885
        %v1398 = vunpack.c.h.b16 %v885
        %v1399 = vunpack.c.l.b16 %v886
        %v1400 = vunpack.c.h.b16 %v886
        %v1401 = vunpack.c.l.b16 %v887
        %v1402 = vunpack.c.h.b16 %v887
        %v1403 = vunpack.c.l.b16 %v888
        %v1404 = vunpack.c.h.b16 %v888
        %v1405 = vunpack.c.l.b16 %v889
        %v1406 = vunpack.c.h.b16 %v889
        %v1407 = vunpack.c.l.b16 %v890
        %v1408 = vunpack.c.h.b16 %v890
        %v1409 = vunpack.c.l.b16 %v891
        %v1410 = vunpack.c.h.b16 %v891
        %v1411 = vunpack.c.l.b16 %v892
        %v1412 = vunpack.c.h.b16 %v892
        %v1413 = vunpack.c.l.b16 %v893
        %v1414 = vunpack.c.h.b16 %v893
        %v1415 = vunpack.c.l.b16 %v894
        %v1416 = vunpack.c.h.b16 %v894
        %v1417 = vunpack.c.l.b16 %v895
        %v1418 = vunpack.c.h.b16 %v895
        %v1419 = vunpack.c.l.b16 %v896
        %v1420 = vunpack.c.h.b16 %v896
        %v1421 = vunpack.c.l.b16 %v897
        %v1422 = vunpack.c.h.b16 %v897
        %v1423 = vunpack.c.l.b16 %v898
        %v1424 = vunpack.c.h.b16 %v898
        %v1425 = vunpack.c.l.b16 %v899
        %v1426 = vunpack.c.h.b16 %v899
        %v1427 = vunpack.c.l.b16 %v900
        %v1428 = vunpack.c.h.b16 %v900
        %v1429 = vunpack.c.l.b16 %v901
        %v1430 = vunpack.c.h.b16 %v901
        %v1431 = vunpack.c.l.b16 %v902
        %v1432 = vunpack.c.h.b16 %v902
        %v1433 = vunpack.c.l.b16 %v903
        %v1434 = vunpack.c.h.b16 %v903
        %v1435 = vunpack.c.l.b16 %v904
        %v1436 = vunpack.c.h.b16 %v904
        %v1437 = vunpack.c.l.b16 %v905
        %v1438 = vunpack.c.h.b16 %v905
        %v1439 = vunpack.c.l.b16 %v906
        %v1440 = vunpack.c.h.b16 %v906
        %v1441 = vunpack.c.l.b16 %v907
        %v1442 = vunpack.c.h.b16 %v907
        %v1443 = vunpack.c.l.b16 %v908
        %v1444 = vunpack.c.h.b16 %v908
        %v1445 = vunpack.c.l.b16 %v909
        %v1446 = vunpack.c.h.b16 %v909
        %v1447 = vunpack.c.l.b16 %v910
        %v1448 = vunpack.c.h.b16 %v910
        %v1449 = vunpack.c.l.b16 %v911
        %v1450 = vunpack.c.h.b16 %v911
        %v1451 = vunpack.c.l.b16 %v912
        %v1452 = vunpack.c.h.b16 %v912
        %v1453 = vunpack.c.l.b16 %v913
        %v1454 = vunpack.c.h.b16 %v913
        %v1455 = vunpack.c.l.b16 %v914
        %v1456 = vunpack.c.h.b16 %v914
        %v1457 = vunpack.c.l.b16 %v915
        %v1458 = vunpack.c.h.b16 %v915
        %v1459 = vunpack.c.l.b16 %v916
        %v1460 = vunpack.c.h.b16 %v916
        %v1461 = vunpack.c.l.b16 %v917
        %v1462 = vunpack.c.h.b16 %v917
        %v1463 = vunpack.c.l.b16 %v918
        %v1464 = vunpack.c.h.b16 %v918
        %v1465 = vunpack.c.l.b16 %v919
        %v1466 = vunpack.c.h.b16 %v919
        %v1467 = vunpack.c.l.b16 %v920
        %v1468 = vunpack.c.h.b16 %v920
        %v1469 = vunpack.c.l.b16 %v921
        %v1470 = vunpack.c.h.b16 %v921
        %v1471 = vunpack.c.l.b16 %v922
        %v1472 = vunpack.c.h.b16 %v922
        %v1473 = vunpack.c.l.b16 %v923
        %v1474 = vunpack.c.h.b16 %v923
        %v1475 = vunpack.c.l.b16 %v924
        %v1476 = vunpack.c.h.b16 %v924
        %v1477 = vunpack.c.l.b16 %v925
        %v1478 = vunpack.c.h.b16 %v925
        %v1479 = vunpack.c.l.b16 %v926
        %v1480 = vunpack.c.h.b16 %v926
        %v1481 = vunpack.c.l.b16 %v927
        %v1482 = vunpack.c.h.b16 %v927
        %v1483 = vunpack.c.l.b16 %v928
        %v1484 = vunpack.c.h.b16 %v928
        %v1485 = vunpack.c.l.b16 %v929
        %v1486 = vunpack.c.h.b16 %v929
        %v1487 = vunpack.c.l.b16 %v930
        %v1488 = vunpack.c.h.b16 %v930
        %v1489 = vunpack.c.l.b16 %v931
        %v1490 = vunpack.c.h.b16 %v931
        %v1491 = vunpack.c.l.b16 %v932
        %v1492 = vunpack.c.h.b16 %v932
        %v1493 = vunpack.c.l.b16 %v933
        %v1494 = vunpack.c.h.b16 %v933
        %v1495 = vunpack.c.l.b16 %v934
        %v1496 = vunpack.c.h.b16 %v934
        %v1497 = vunpack.c.l.b16 %v935
        %v1498 = vunpack.c.h.b16 %v935
        %v1499 = vunpack.c.l.b16 %v936
        %v1500 = vunpack.c.h.b16 %v936
        %v1501 = vunpack.c.l.b16 %v937
        %v1502 = vunpack.c.h.b16 %v937
        %v1503 = vunpack.c.l.b16 %v938
        %v1504 = vunpack.c.h.b16 %v938
        %v1505 = vunpack.c.l.b16 %v939
        %v1506 = vunpack.c.h.b16 %v939
        %v1507 = vunpack.c.l.b16 %v940
        %v1508 = vunpack.c.h.b16 %v940
        %v1509 = vunpack.c.l.b16 %v941
        %v1510 = vunpack.c.h.b16 %v941
        %v1511 = vunpack.c.l.b16 %v942
        %v1512 = vunpack.c.h.b16 %v942
        %v1513 = vunpack.c.l.b16 %v943
        %v1514 = vunpack.c.h.b16 %v943
        %v1515 = vunpack.c.l.b16 %v944
        %v1516 = vunpack.c.h.b16 %v944
        %v1517 = vunpack.c.l.b16 %v945
        %v1518 = vunpack.c.h.b16 %v945
        %v1519 = vunpack.c.l.b16 %v946
        %v1520 = vunpack.c.h.b16 %v946
        %v1521 = vunpack.c.l.b16 %v947
        %v1522 = vunpack.c.h.b16 %v947
        %v1523 = vunpack.c.l.b16 %v948
        %v1524 = vunpack.c.h.b16 %v948
        %v1525 = vunpack.c.l.b16 %v949
        %v1526 = vunpack.c.h.b16 %v949
        %v1527 = vunpack.c.l.b16 %v950
        %v1528 = vunpack.c.h.b16 %v950
        %v1529 = vunpack.c.l.b16 %v951
        %v1530 = vunpack.c.h.b16 %v951
        %v1531 = vunpack.c.l.b16 %v952
        %v1532 = vunpack.c.h.b16 %v952
        %v1533 = vunpack.c.l.b16 %v953
        %v1534 = vunpack.c.h.b16 %v953
        %v1535 = vunpack.c.l.b16 %v954
        %v1536 = vunpack.c.h.b16 %v954
        %v1537 = vunpack.c.l.b16 %v955
        %v1538 = vunpack.c.h.b16 %v955
        %v1539 = vunpack.c.l.b16 %v956
        %v1540 = vunpack.c.h.b16 %v956
        %v1541 = vunpack.c.l.b16 %v957
        %v1542 = vunpack.c.h.b16 %v957
        %v1543 = vunpack.c.l.b16 %v958
        %v1544 = vunpack.c.h.b16 %v958
        %v1545 = vunpack.c.l.b16 %v959
        %v1546 = vunpack.c.h.b16 %v959
        %v1547 = vunpack.c.l.b16 %v960
        %v1548 = vunpack.c.h.b16 %v960
        %v1549 = vunpack.c.l.b16 %v961
        %v1550 = vunpack.c.h.b16 %v961
        %v1551 = vunpack.c.l.b16 %v962
        %v1552 = vunpack.c.h.b16 %v962
        %v1553 = vunpack.c.l.b16 %v963
        %v1554 = vunpack.c.h.b16 %v963
        %v1555 = vunpack.c.l.b16 %v964
        %v1556 = vunpack.c.h.b16 %v964
        %v1557 = vunpack.c.l.b16 %v965
        %v1558 = vunpack.c.h.b16 %v965
        %v1559 = vunpack.c.l.b16 %v966
        %v1560 = vunpack.c.h.b16 %v966
        %v1561 = vunpack.c.l.b16 %v967
        %v1562 = vunpack.c.h.b16 %v967
        %v1563 = vunpack.c.l.b16 %v968
        %v1564 = vunpack.c.h.b16 %v968
        %v1565 = vunpack.c.l.b16 %v969
        %v1566 = vunpack.c.h.b16 %v969
        %v1567 = vunpack.c.l.b16 %v970
        %v1568 = vunpack.c.h.b16 %v970
        %v1569 = vunpack.c.l.b16 %v971
        %v1570 = vunpack.c.h.b16 %v971
        %v1571 = vunpack.c.l.b16 %v972
        %v1572 = vunpack.c.h.b16 %v972
        %v1573 = vunpack.c.l.b16 %v973
        %v1574 = vunpack.c.h.b16 %v973
        %v1575 = vunpack.c.l.b16 %v974
        %v1576 = vunpack.c.h.b16 %v974
        %v1577 = vunpack.c.l.b16 %v975
        %v1578 = vunpack.c.h.b16 %v975
        %v1579 = vunpack.c.l.b16 %v976
        %v1580 = vunpack.c.h.b16 %v976
        %v1581 = vunpack.c.l.b16 %v977
        %v1582 = vunpack.c.h.b16 %v977
        %v1583 = vunpack.c.l.b16 %v978
        %v1584 = vunpack.c.h.b16 %v978
        %v1585 = vunpack.c.l.b16 %v979
        %v1586 = vunpack.c.h.b16 %v979
        %v1587 = vunpack.c.l.b16 %v980
        %v1588 = vunpack.c.h.b16 %v980
        %v1589 = vunpack.c.l.b16 %v981
        %v1590 = vunpack.c.h.b16 %v981
        %v1591 = vunpack.c.l.b16 %v982
        %v1592 = vunpack.c.h.b16 %v982
        %v1593 = vpack.c.b16 %v1205, %v1201
        %v1594 = vpack.c.b16 %v1206, %v1202
        %v1595 = vpack.c.b16 %v1207, %v1203
        %v1596 = vpack.c.b16 %v1208, %v1204
        %v1597 = vpack.c.b16 %v1213, %v1209
        %v1598 = vpack.c.b16 %v1214, %v1210
        %v1599 = vpack.c.b16 %v1215, %v1211
        %v1600 = vpack.c.b16 %v1216, %v1212
        %v1601 = vpack.c.b16 %v1221, %v1217
        %v1602 = vpack.c.b16 %v1222, %v1218
        %v1603 = vpack.c.b16 %v1223, %v1219
        %v1604 = vpack.c.b16 %v1224, %v1220
        %v1605 = vpack.c.b16 %v1229, %v1225
        %v1606 = vpack.c.b16 %v1230, %v1226
        %v1607 = vpack.c.b16 %v1231, %v1227
        %v1608 = vpack.c.b16 %v1232, %v1228
        %v1609 = vpack.c.b16 %v1237, %v1233
        %v1610 = vpack.c.b16 %v1238, %v1234
        %v1611 = vpack.c.b16 %v1239, %v1235
        %v1612 = vpack.c.b16 %v1240, %v1236
        %v1613 = vpack.c.b16 %v1245, %v1241
        %v1614 = vpack.c.b16 %v1246, %v1242
        %v1615 = vpack.c.b16 %v1247, %v1243
        %v1616 = vpack.c.b16 %v1248, %v1244
        %v1617 = vpack.c.b16 %v1253, %v1249
        %v1618 = vpack.c.b16 %v1254, %v1250
        %v1619 = vpack.c.b16 %v1255, %v1251
        %v1620 = vpack.c.b16 %v1256, %v1252
        %v1621 = vpack.c.b16 %v1261, %v1257
        %v1622 = vpack.c.b16 %v1262, %v1258
        %v1623 = vpack.c.b16 %v1263, %v1259
        %v1624 = vpack.c.b16 %v1264, %v1260
        %v1625 = vpack.c.b16 %v1269, %v1265
        %v1626 = vpack.c.b16 %v1270, %v1266
        %v1627 = vpack.c.b16 %v1271, %v1267
        %v1628 = vpack.c.b16 %v1272, %v1268
        %v1629 = vpack.c.b16 %v1277, %v1273
        %v1630 = vpack.c.b16 %v1278, %v1274
        %v1631 = vpack.c.b16 %v1279, %v1275
        %v1632 = vpack.c.b16 %v1280, %v1276
        %v1633 = vpack.c.b16 %v1285, %v1281
        %v1634 = vpack.c.b16 %v1286, %v1282
        %v1635 = vpack.c.b16 %v1287, %v1283
        %v1636 = vpack.c.b16 %v1288, %v1284
        %v1637 = vpack.c.b16 %v1293, %v1289
        %v1638 = vpack.c.b16 %v1294, %v1290
        %v1639 = vpack.c.b16 %v1295, %v1291
        %v1640 = vpack.c.b16 %v1296, %v1292
        %v1641 = vpack.c.b16 %v1301, %v1297
        %v1642 = vpack.c.b16 %v1302, %v1298
        %v1643 = vpack.c.b16 %v1303, %v1299
        %v1644 = vpack.c.b16 %v1304, %v1300
        %v1645 = vpack.c.b16 %v1309, %v1305
        %v1646 = vpack.c.b16 %v1310, %v1306
        %v1647 = vpack.c.b16 %v1311, %v1307
        %v1648 = vpack.c.b16 %v1312, %v1308
        %v1649 = vpack.c.b16 %v1317, %v1313
        %v1650 = vpack.c.b16 %v1318, %v1314
        %v1651 = vpack.c.b16 %v1319, %v1315
        %v1652 = vpack.c.b16 %v1320, %v1316
        %v1653 = vpack.c.b16 %v1325, %v1321
        %v1654 = vpack.c.b16 %v1326, %v1322
        %v1655 = vpack.c.b16 %v1327, %v1323
        %v1656 = vpack.c.b16 %v1328, %v1324
        %v1657 = vpack.c.b16 %v1333, %v1329
        %v1658 = vpack.c.b16 %v1334, %v1330
        %v1659 = vpack.c.b16 %v1335, %v1331
        %v1660 = vpack.c.b16 %v1336, %v1332
        %v1661 = vpack.c.b16 %v1341, %v1337
        %v1662 = vpack.c.b16 %v1342, %v1338
        %v1663 = vpack.c.b16 %v1343, %v1339
        %v1664 = vpack.c.b16 %v1344, %v1340
        %v1665 = vpack.c.b16 %v1349, %v1345
        %v1666 = vpack.c.b16 %v1350, %v1346
        %v1667 = vpack.c.b16 %v1351, %v1347
        %v1668 = vpack.c.b16 %v1352, %v1348
        %v1669 = vpack.c.b16 %v1357, %v1353
        %v1670 = vpack.c.b16 %v1358, %v1354
        %v1671 = vpack.c.b16 %v1359, %v1355
        %v1672 = vpack.c.b16 %v1360, %v1356
        %v1673 = vpack.c.b16 %v1365, %v1361
        %v1674 = vpack.c.b16 %v1366, %v1362
        %v1675 = vpack.c.b16 %v1367, %v1363
        %v1676 = vpack.c.b16 %v1368, %v1364
        %v1677 = vpack.c.b16 %v1373, %v1369
        %v1678 = vpack.c.b16 %v1374, %v1370
        %v1679 = vpack.c.b16 %v1375, %v1371
        %v1680 = vpack.c.b16 %v1376, %v1372
        %v1681 = vpack.c.b16 %v1381, %v1377
        %v1682 = vpack.c.b16 %v1382, %v1378
        %v1683 = vpack.c.b16 %v1383, %v1379
        %v1684 = vpack.c.b16 %v1384, %v1380
        %v1685 = vpack.c.b16 %v1389, %v1385
        %v1686 = vpack.c.b16 %v1390, %v1386
        %v1687 = vpack.c.b16 %v1391, %v1387
        %v1688 = vpack.c.b16 %v1392, %v1388
        %v1689 = vpack.c.b16 %v1397, %v1393
        %v1690 = vpack.c.b16 %v1398, %v1394
        %v1691 = vpack.c.b16 %v1399, %v1395
        %v1692 = vpack.c.b16 %v1400, %v1396
        %v1693 = vpack.c.b16 %v1405, %v1401
        %v1694 = vpack.c.b16 %v1406, %v1402
        %v1695 = vpack.c.b16 %v1407, %v1403
        %v1696 = vpack.c.b16 %v1408, %v1404
        %v1697 = vpack.c.b16 %v1413, %v1409
        %v1698 = vpack.c.b16 %v1414, %v1410
        %v1699 = vpack.c.b16 %v1415, %v1411
        %v1700 = vpack.c.b16 %v1416, %v1412
        %v1701 = vpack.c.b16 %v1421, %v1417
        %v1702 = vpack.c.b16 %v1422, %v1418
        %v1703 = vpack.c.b16 %v1423, %v1419
        %v1704 = vpack.c.b16 %v1424, %v1420
        %v1705 = vpack.c.b16 %v1429, %v1425
        %v1706 = vpack.c.b16 %v1430, %v1426
        %v1707 = vpack.c.b16 %v1431, %v1427
        %v1708 = vpack.c.b16 %v1432, %v1428
        %v1709 = vpack.c.b16 %v1437, %v1433
        %v1710 = vpack.c.b16 %v1438, %v1434
        %v1711 = vpack.c.b16 %v1439, %v1435
        %v1712 = vpack.c.b16 %v1440, %v1436
        %v1713 = vpack.c.b16 %v1445, %v1441
        %v1714 = vpack.c.b16 %v1446, %v1442
        %v1715 = vpack.c.b16 %v1447, %v1443
        %v1716 = vpack.c.b16 %v1448, %v1444
        %v1717 = vpack.c.b16 %v1453, %v1449
        %v1718 = vpack.c.b16 %v1454, %v1450
        %v1719 = vpack.c.b16 %v1455, %v1451
        %v1720 = vpack.c.b16 %v1456, %v1452
        %v1721 = vpack.c.b16 %v1461, %v1457
        %v1722 = vpack.c.b16 %v1462, %v1458
        %v1723 = vpack.c.b16 %v1463, %v1459
        %v1724 = vpack.c.b16 %v1464, %v1460
        %v1725 = vpack.c.b16 %v1469, %v1465
        %v1726 = vpack.c.b16 %v1470, %v1466
        %v1727 = vpack.c.b16 %v1471, %v1467
        %v1728 = vpack.c.b16 %v1472, %v1468
        %v1729 = vpack.c.b16 %v1477, %v1473
        %v1730 = vpack.c.b16 %v1478, %v1474
        %v1731 = vpack.c.b16 %v1479, %v1475
        %v1732 = vpack.c.b16 %v1480, %v1476
        %v1733 = vpack.c.b16 %v1485, %v1481
        %v1734 = vpack.c.b16 %v1486, %v1482
        %v1735 = vpack.c.b16 %v1487, %v1483
        %v1736 = vpack.c.b16 %v1488, %v1484
        %v1737 = vpack.c.b16 %v1493, %v1489
        %v1738 = vpack.c.b16 %v1494, %v1490
        %v1739 = vpack.c.b16 %v1495, %v1491
        %v1740 = vpack.c.b16 %v1496, %v1492
        %v1741 = vpack.c.b16 %v1501, %v1497
        %v1742 = vpack.c.b16 %v1502, %v1498
        %v1743 = vpack.c.b16 %v1503, %v1499
        %v1744 = vpack.c.b16 %v1504, %v1500
        %v1745 = vpack.c.b16 %v1509, %v1505
        %v1746 = vpack.c.b16 %v1510, %v1506
        %v1747 = vpack.c.b16 %v1511, %v1507
        %v1748 = vpack.c.b16 %v1512, %v1508
        %v1749 = vpack.c.b16 %v1517, %v1513
        %v1750 = vpack.c.b16 %v1518, %v1514
        %v1751 = vpack.c.b16 %v1519, %v1515
        %v1752 = vpack.c.b16 %v1520, %v1516
        %v1753 = vpack.c.b16 %v1525, %v1521
        %v1754 = vpack.c.b16 %v1526, %v1522
        %v1755 = vpack.c.b16 %v1527, %v1523
        %v1756 = vpack.c.b16 %v1528, %v1524
        %v1757 = vpack.c.b16 %v1533, %v1529
        %v1758 = vpack.c.b16 %v1534, %v1530
        %v1759 = vpack.c.b16 %v1535, %v1531
        %v1760 = vpack.c.b16 %v1536, %v1532
        %v1761 = vpack.c.b16 %v1541, %v1537
        %v1762 = vpack.c.b16 %v1542, %v1538
        %v1763 = vpack.c.b16 %v1543, %v1539
        %v1764 = vpack.c.b16 %v1544, %v1540
        %v1765 = vpack.c.b16 %v1549, %v1545
        %v1766 = vpack.c.b16 %v1550, %v1546
        %v1767 = vpack.c.b16 %v1551, %v1547
        %v1768 = vpack.c.b16 %v1552, %v1548
        %v1769 = vpack.c.b16 %v1557, %v1553
        %v1770 = vpack.c.b16 %v1558, %v1554
        %v1771 = vpack.c.b16 %v1559, %v1555
        %v1772 = vpack.c.b16 %v1560, %v1556
        %v1773 = vpack.c.b16 %v1565, %v1561
        %v1774 = vpack.c.b16 %v1566, %v1562
        %v1775 = vpack.c.b16 %v1567, %v1563
        %v1776 = vpack.c.b16 %v1568, %v1564
        %v1777 = vpack.c.b16 %v1573, %v1569
        %v1778 = vpack.c.b16 %v1574, %v1570
        %v1779 = vpack.c.b16 %v1575, %v1571
        %v1780 = vpack.c.b16 %v1576, %v1572
        %v1781 = vpack.c.b16 %v1581, %v1577
        %v1782 = vpack.c.b16 %v1582, %v1578
        %v1783 = vpack.c.b16 %v1583, %v1579
        %v1784 = vpack.c.b16 %v1584, %v1580
        %v1785 = vpack.c.b16 %v1589, %v1585
        %v1786 = vpack.c.b16 %v1590, %v1586
        %v1787 = vpack.c.b16 %v1591, %v1587
        %v1788 = vpack.c.b16 %v1592, %v1588
        %vm1985 = vcmask 130048
        %v1987 = vsel %vm1985, %v737, 0
        %v1990 = vsel %vm1985, %v744, 0
        %v1993 = vsel %vm1985, %v751, 0
        %v1996 = vsel %vm1985, %v758, 0
        %v1999 = vsel %vm1985, %v765, 0
        %v2002 = vsel %vm1985, %v772, 0
        %v2005 = vsel %vm1985, %v779, 0
        %v2008 = vsel %vm1985, %v786, 0
        %2010 = vmatprep.subr.bf16.mxu0 %v1594
        %2011 = vmatpush1.bf16.msra.mxu0 %v1593
        %2012 = vmatprep.subr.bf16.mxu0 %v1598
        %2013 = vmatpush1.bf16.msra.mxu0 %v1597
        %2014 = vmatprep.subr.bf16.mxu0 %v1602
        %2015 = vmatpush1.bf16.msra.mxu0 %v1601
        %2016 = vmatprep.subr.bf16.mxu0 %v1606
        %2017 = vmatpush1.bf16.msra.mxu0 %v1605
        %2018 = vmatprep.subr.bf16.mxu0 %v1610
        %2019 = vmatpush1.bf16.msra.mxu0 %v1609
        %2020 = vmatprep.subr.bf16.mxu0 %v1614
        %2021 = vmatpush1.bf16.msra.mxu0 %v1613
        %2022 = vmatprep.subr.bf16.mxu0 %v1618
        %2023 = vmatpush1.bf16.msra.mxu0 %v1617
        %2024 = vmatprep.subr.bf16.mxu0 %v1622
        %2025 = vmatpush1.bf16.msra.mxu0 %v1621
        %2026 = vmatprep.subr.bf16.mxu0 %v1626
        %2027 = vmatpush1.bf16.msra.mxu0 %v1625
        %2028 = vmatprep.subr.bf16.mxu0 %v1630
        %2029 = vmatpush1.bf16.msra.mxu0 %v1629
        %2030 = vmatprep.subr.bf16.mxu0 %v1634
        %2031 = vmatpush1.bf16.msra.mxu0 %v1633
        %2032 = vmatprep.subr.bf16.mxu0 %v1638
        %2033 = vmatpush1.bf16.msra.mxu0 %v1637
        %2034 = vmatprep.subr.bf16.mxu0 %v1642
        %2035 = vmatpush1.bf16.msra.mxu0 %v1641
        %2036 = vmatprep.subr.bf16.mxu0 %v1646
        %2037 = vmatpush1.bf16.msra.mxu0 %v1645
        %2038 = vmatprep.subr.bf16.mxu0 %v1650
        %2039 = vmatpush1.bf16.msra.mxu0 %v1649
        %2040 = vmatprep.subr.bf16.mxu0 %v1654
        %2041 = vmatpush1.bf16.msra.mxu0 %v1653
        %2042 = vmatprep.mubr.bf16.mxu0 %v732
        %2043 = vmatmul.mubr.bf16.gmra.mrb[0].mxu0 %v731
        %v2044 = vpop.f32.mrb[0].mxu0
        %v2045 = vadd.f32 %v988, %v2044
        %v2046 = vpop.f32.mrb[0].mxu0
        %v2047 = vadd.f32 %v992, %v2046
        %v2048 = vpop.f32.mrb[0].mxu0
        %v2049 = vadd.f32 %v988, %v2048
        %v2050 = vpop.f32.mrb[0].mxu0
        %v2051 = vadd.f32 %v992, %v2050
        %2052 = vmatprep.mubr.bf16.mxu0 %v739
        %2053 = vmatmul.mubr.bf16.gmra.mrb[0].mxu0 %v738
        %v2054 = vpop.f32.mrb[0].mxu0
        %v2055 = vadd.f32 %v988, %v2054
        %v2056 = vpop.f32.mrb[0].mxu0
        %v2057 = vadd.f32 %v992, %v2056
        %v2058 = vpop.f32.mrb[0].mxu0
        %v2059 = vadd.f32 %v988, %v2058
        %v2060 = vpop.f32.mrb[0].mxu0
        %v2061 = vadd.f32 %v992, %v2060
        %2062 = vmatprep.mubr.bf16.mxu0 %v746
        %2063 = vmatmul.mubr.bf16.gmra.mrb[0].mxu0 %v745
        %v2064 = vpop.f32.mrb[0].mxu0
        %v2065 = vadd.f32 %v988, %v2064
        %v2066 = vpop.f32.mrb[0].mxu0
        %v2067 = vadd.f32 %v992, %v2066
        %v2068 = vpop.f32.mrb[0].mxu0
        %v2069 = vadd.f32 %v988, %v2068
        %v2070 = vpop.f32.mrb[0].mxu0
        %v2071 = vadd.f32 %v992, %v2070
        %2072 = vmatprep.mubr.bf16.mxu0 %v753
        %2073 = vmatmul.mubr.bf16.gmra.mrb[0].mxu0 %v752
        %v2074 = vpop.f32.mrb[0].mxu0
        %v2075 = vadd.f32 %v988, %v2074
        %v2076 = vpop.f32.mrb[0].mxu0
        %v2077 = vadd.f32 %v992, %v2076
        %v2078 = vpop.f32.mrb[0].mxu0
        %v2079 = vadd.f32 %v988, %v2078
        %v2080 = vpop.f32.mrb[0].mxu0
        %v2081 = vadd.f32 %v992, %v2080
        %2082 = vmatprep.mubr.bf16.mxu0 %v760
        %2083 = vmatmul.mubr.bf16.gmra.mrb[0].mxu0 %v759
        %v2084 = vpop.f32.mrb[0].mxu0
        %v2085 = vadd.f32 %v988, %v2084
        %v2086 = vpop.f32.mrb[0].mxu0
        %v2087 = vadd.f32 %v992, %v2086
        %v2088 = vpop.f32.mrb[0].mxu0
        %v2089 = vadd.f32 %v988, %v2088
        %v2090 = vpop.f32.mrb[0].mxu0
        %v2091 = vadd.f32 %v992, %v2090
        %2092 = vmatprep.mubr.bf16.mxu0 %v767
        %2093 = vmatmul.mubr.bf16.gmra.mrb[0].mxu0 %v766
        %v2094 = vpop.f32.mrb[0].mxu0
        %v2095 = vadd.f32 %v988, %v2094
        %v2096 = vpop.f32.mrb[0].mxu0
        %v2097 = vadd.f32 %v992, %v2096
        %v2098 = vpop.f32.mrb[0].mxu0
        %v2099 = vadd.f32 %v988, %v2098
        %v2100 = vpop.f32.mrb[0].mxu0
        %v2101 = vadd.f32 %v992, %v2100
        %2102 = vmatprep.mubr.bf16.mxu0 %v774
        %2103 = vmatmul.mubr.bf16.gmra.mrb[0].mxu0 %v773
        %v2104 = vpop.f32.mrb[0].mxu0
        %v2105 = vadd.f32 %v988, %v2104
        %v2106 = vpop.f32.mrb[0].mxu0
        %v2107 = vadd.f32 %v992, %v2106
        %v2108 = vpop.f32.mrb[0].mxu0
        %v2109 = vadd.f32 %v988, %v2108
        %v2110 = vpop.f32.mrb[0].mxu0
        %v2111 = vadd.f32 %v992, %v2110
        %2112 = vmatprep.mubr.bf16.mxu0 %v781
        %2113 = vmatmul.mubr.bf16.gmra.mrb[0].mxu0 %v780
        %v2114 = vpop.f32.mrb[0].mxu0
        %v2115 = vadd.f32 %v988, %v2114
        %v2116 = vpop.f32.mrb[0].mxu0
        %v2117 = vadd.f32 %v992, %v2116
        %v2118 = vpop.f32.mrb[0].mxu0
        %v2119 = vadd.f32 %v988, %v2118
        %v2120 = vpop.f32.mrb[0].mxu0
        %v2121 = vadd.f32 %v992, %v2120
        %2122 = vdwg.mxu0
        %2123 = vmatprep.subr.bf16.mxu0 %v1658
        %2124 = vmatpush1.bf16.msra.mxu0 %v1657
        %2125 = vmatprep.subr.bf16.mxu0 %v1662
        %2126 = vmatpush1.bf16.msra.mxu0 %v1661
        %2127 = vmatprep.subr.bf16.mxu0 %v1666
        %2128 = vmatpush1.bf16.msra.mxu0 %v1665
        %2129 = vmatprep.subr.bf16.mxu0 %v1670
        %2130 = vmatpush1.bf16.msra.mxu0 %v1669
        %2131 = vmatprep.subr.bf16.mxu0 %v1674
        %2132 = vmatpush1.bf16.msra.mxu0 %v1673
        %2133 = vmatprep.subr.bf16.mxu0 %v1678
        %2134 = vmatpush1.bf16.msra.mxu0 %v1677
        %2135 = vmatprep.subr.bf16.mxu0 %v1682
        %2136 = vmatpush1.bf16.msra.mxu0 %v1681
        %2137 = vmatprep.subr.bf16.mxu0 %v1686
        %2138 = vmatpush1.bf16.msra.mxu0 %v1685
        %2139 = vmatprep.subr.bf16.mxu0 %v1690
        %2140 = vmatpush1.bf16.msra.mxu0 %v1689
        %2141 = vmatprep.subr.bf16.mxu0 %v1694
        %2142 = vmatpush1.bf16.msra.mxu0 %v1693
        %2143 = vmatprep.subr.bf16.mxu0 %v1698
        %2144 = vmatpush1.bf16.msra.mxu0 %v1697
        %2145 = vmatprep.subr.bf16.mxu0 %v1702
        %2146 = vmatpush1.bf16.msra.mxu0 %v1701
        %2147 = vmatprep.subr.bf16.mxu0 %v1706
        %2148 = vmatpush1.bf16.msra.mxu0 %v1705
        %2149 = vmatprep.subr.bf16.mxu0 %v1710
        %2150 = vmatpush1.bf16.msra.mxu0 %v1709
        %2151 = vmatprep.subr.bf16.mxu0 %v1714
        %2152 = vmatpush1.bf16.msra.mxu0 %v1713
        %2153 = vmatprep.subr.bf16.mxu0 %v1718
        %2154 = vmatpush1.bf16.msra.mxu0 %v1717
        %2155 = vmatprep.mubr.bf16.mxu0 %v734
        %2156 = vmatmul.mubr.bf16.gmra.mrb[0].mxu0 %v733
        %v2157 = vpop.f32.mrb[0].mxu0
        %v2158 = vadd.f32 %v2045, %v2157
        %v2159 = vpop.f32.mrb[0].mxu0
        %v2160 = vadd.f32 %v2047, %v2159
        %v2161 = vpop.f32.mrb[0].mxu0
        %v2162 = vadd.f32 %v2049, %v2161
        %v2163 = vpop.f32.mrb[0].mxu0
        %v2164 = vadd.f32 %v2051, %v2163
        %2165 = vmatprep.mubr.bf16.mxu0 %v741
        %2166 = vmatmul.mubr.bf16.gmra.mrb[0].mxu0 %v740
        %v2167 = vpop.f32.mrb[0].mxu0
        %v2168 = vadd.f32 %v2055, %v2167
        %v2169 = vpop.f32.mrb[0].mxu0
        %v2170 = vadd.f32 %v2057, %v2169
        %v2171 = vpop.f32.mrb[0].mxu0
        %v2172 = vadd.f32 %v2059, %v2171
        %v2173 = vpop.f32.mrb[0].mxu0
        %v2174 = vadd.f32 %v2061, %v2173
        %2175 = vmatprep.mubr.bf16.mxu0 %v748
        %2176 = vmatmul.mubr.bf16.gmra.mrb[0].mxu0 %v747
        %v2177 = vpop.f32.mrb[0].mxu0
        %v2178 = vadd.f32 %v2065, %v2177
        %v2179 = vpop.f32.mrb[0].mxu0
        %v2180 = vadd.f32 %v2067, %v2179
        %v2181 = vpop.f32.mrb[0].mxu0
        %v2182 = vadd.f32 %v2069, %v2181
        %v2183 = vpop.f32.mrb[0].mxu0
        %v2184 = vadd.f32 %v2071, %v2183
        %2185 = vmatprep.mubr.bf16.mxu0 %v755
        %2186 = vmatmul.mubr.bf16.gmra.mrb[0].mxu0 %v754
        %v2187 = vpop.f32.mrb[0].mxu0
        %v2188 = vadd.f32 %v2075, %v2187
        %v2189 = vpop.f32.mrb[0].mxu0
        %v2190 = vadd.f32 %v2077, %v2189
        %v2191 = vpop.f32.mrb[0].mxu0
        %v2192 = vadd.f32 %v2079, %v2191
        %v2193 = vpop.f32.mrb[0].mxu0
        %v2194 = vadd.f32 %v2081, %v2193
        %2195 = vmatprep.mubr.bf16.mxu0 %v762
        %2196 = vmatmul.mubr.bf16.gmra.mrb[0].mxu0 %v761
        %v2197 = vpop.f32.mrb[0].mxu0
        %v2198 = vadd.f32 %v2085, %v2197
        %v2199 = vpop.f32.mrb[0].mxu0
        %v2200 = vadd.f32 %v2087, %v2199
        %v2201 = vpop.f32.mrb[0].mxu0
        %v2202 = vadd.f32 %v2089, %v2201
        %v2203 = vpop.f32.mrb[0].mxu0
        %v2204 = vadd.f32 %v2091, %v2203
        %2205 = vmatprep.mubr.bf16.mxu0 %v769
        %2206 = vmatmul.mubr.bf16.gmra.mrb[0].mxu0 %v768
        %v2207 = vpop.f32.mrb[0].mxu0
        %v2208 = vadd.f32 %v2095, %v2207
        %v2209 = vpop.f32.mrb[0].mxu0
        %v2210 = vadd.f32 %v2097, %v2209
        %v2211 = vpop.f32.mrb[0].mxu0
        %v2212 = vadd.f32 %v2099, %v2211
        %v2213 = vpop.f32.mrb[0].mxu0
        %v2214 = vadd.f32 %v2101, %v2213
        %2215 = vmatprep.mubr.bf16.mxu0 %v776
        %2216 = vmatmul.mubr.bf16.gmra.mrb[0].mxu0 %v775
        %v2217 = vpop.f32.mrb[0].mxu0
        %v2218 = vadd.f32 %v2105, %v2217
        %v2219 = vpop.f32.mrb[0].mxu0
        %v2220 = vadd.f32 %v2107, %v2219
        %v2221 = vpop.f32.mrb[0].mxu0
        %v2222 = vadd.f32 %v2109, %v2221
        %v2223 = vpop.f32.mrb[0].mxu0
        %v2224 = vadd.f32 %v2111, %v2223
        %2225 = vmatprep.mubr.bf16.mxu0 %v783
        %2226 = vmatmul.mubr.bf16.gmra.mrb[0].mxu0 %v782
        %v2227 = vpop.f32.mrb[0].mxu0
        %v2228 = vadd.f32 %v2115, %v2227
        %v2229 = vpop.f32.mrb[0].mxu0
        %v2230 = vadd.f32 %v2117, %v2229
        %v2231 = vpop.f32.mrb[0].mxu0
        %v2232 = vadd.f32 %v2119, %v2231
        %v2233 = vpop.f32.mrb[0].mxu0
        %v2234 = vadd.f32 %v2121, %v2233
        %2235 = vdwg.mxu0
        %2236 = vmatprep.subr.bf16.mxu0 %v1722
        %2237 = vmatpush1.bf16.msra.mxu0 %v1721
        %2238 = vmatprep.subr.bf16.mxu0 %v1726
        %2239 = vmatpush1.bf16.msra.mxu0 %v1725
        %2240 = vmatprep.subr.bf16.mxu0 %v1730
        %2241 = vmatpush1.bf16.msra.mxu0 %v1729
        %2242 = vmatprep.subr.bf16.mxu0 %v1734
        %2243 = vmatpush1.bf16.msra.mxu0 %v1733
        %2244 = vmatprep.subr.bf16.mxu0 %v1738
        %2245 = vmatpush1.bf16.msra.mxu0 %v1737
        %2246 = vmatprep.subr.bf16.mxu0 %v1742
        %2247 = vmatpush1.bf16.msra.mxu0 %v1741
        %2248 = vmatprep.subr.bf16.mxu0 %v1746
        %2249 = vmatpush1.bf16.msra.mxu0 %v1745
        %2250 = vmatprep.subr.bf16.mxu0 %v1750
        %2251 = vmatpush1.bf16.msra.mxu0 %v1749
        %2252 = vmatprep.subr.bf16.mxu0 %v1754
        %2253 = vmatpush1.bf16.msra.mxu0 %v1753
        %2254 = vmatprep.subr.bf16.mxu0 %v1758
        %2255 = vmatpush1.bf16.msra.mxu0 %v1757
        %2256 = vmatprep.subr.bf16.mxu0 %v1762
        %2257 = vmatpush1.bf16.msra.mxu0 %v1761
        %2258 = vmatprep.subr.bf16.mxu0 %v1766
        %2259 = vmatpush1.bf16.msra.mxu0 %v1765
        %2260 = vmatprep.subr.bf16.mxu0 %v1770
        %2261 = vmatpush1.bf16.msra.mxu0 %v1769
        %2262 = vmatprep.subr.bf16.mxu0 %v1774
        %2263 = vmatpush1.bf16.msra.mxu0 %v1773
        %2264 = vmatprep.subr.bf16.mxu0 %v1778
        %2265 = vmatpush1.bf16.msra.mxu0 %v1777
        %2266 = vmatprep.subr.bf16.mxu0 %v1782
        %2267 = vmatpush1.bf16.msra.mxu0 %v1781
        %2268 = vmatprep.mubr.bf16.mxu0 %v736
        %2269 = vmatmul.mubr.bf16.gmra.mrb[0].mxu0 %v735
        %v2270 = vpop.f32.mrb[0].mxu0
        %v2271 = vadd.f32 %v2158, %v2270
        %v2272 = vpop.f32.mrb[0].mxu0
        %v2273 = vadd.f32 %v2160, %v2272
        %v2274 = vpop.f32.mrb[0].mxu0
        %v2275 = vadd.f32 %v2162, %v2274
        %v2276 = vpop.f32.mrb[0].mxu0
        %v2277 = vadd.f32 %v2164, %v2276
        %2278 = vmatprep.mubr.bf16.mxu0 %v743
        %2279 = vmatmul.mubr.bf16.gmra.mrb[0].mxu0 %v742
        %v2280 = vpop.f32.mrb[0].mxu0
        %v2281 = vadd.f32 %v2168, %v2280
        %v2282 = vpop.f32.mrb[0].mxu0
        %v2283 = vadd.f32 %v2170, %v2282
        %v2284 = vpop.f32.mrb[0].mxu0
        %v2285 = vadd.f32 %v2172, %v2284
        %v2286 = vpop.f32.mrb[0].mxu0
        %v2287 = vadd.f32 %v2174, %v2286
        %2288 = vmatprep.mubr.bf16.mxu0 %v750
        %2289 = vmatmul.mubr.bf16.gmra.mrb[0].mxu0 %v749
        %v2290 = vpop.f32.mrb[0].mxu0
        %v2291 = vadd.f32 %v2178, %v2290
        %v2292 = vpop.f32.mrb[0].mxu0
        %v2293 = vadd.f32 %v2180, %v2292
        %v2294 = vpop.f32.mrb[0].mxu0
        %v2295 = vadd.f32 %v2182, %v2294
        %v2296 = vpop.f32.mrb[0].mxu0
        %v2297 = vadd.f32 %v2184, %v2296
        %2298 = vmatprep.mubr.bf16.mxu0 %v757
        %2299 = vmatmul.mubr.bf16.gmra.mrb[0].mxu0 %v756
        %v2300 = vpop.f32.mrb[0].mxu0
        %v2301 = vadd.f32 %v2188, %v2300
        %v2302 = vpop.f32.mrb[0].mxu0
        %v2303 = vadd.f32 %v2190, %v2302
        %v2304 = vpop.f32.mrb[0].mxu0
        %v2305 = vadd.f32 %v2192, %v2304
        %v2306 = vpop.f32.mrb[0].mxu0
        %v2307 = vadd.f32 %v2194, %v2306
        %2308 = vmatprep.mubr.bf16.mxu0 %v764
        %2309 = vmatmul.mubr.bf16.gmra.mrb[0].mxu0 %v763
        %v2310 = vpop.f32.mrb[0].mxu0
        %v2311 = vadd.f32 %v2198, %v2310
        %v2312 = vpop.f32.mrb[0].mxu0
        %v2313 = vadd.f32 %v2200, %v2312
        %v2314 = vpop.f32.mrb[0].mxu0
        %v2315 = vadd.f32 %v2202, %v2314
        %v2316 = vpop.f32.mrb[0].mxu0
        %v2317 = vadd.f32 %v2204, %v2316
        %2318 = vmatprep.mubr.bf16.mxu0 %v771
        %2319 = vmatmul.mubr.bf16.gmra.mrb[0].mxu0 %v770
        %v2320 = vpop.f32.mrb[0].mxu0
        %v2321 = vadd.f32 %v2208, %v2320
        %v2322 = vpop.f32.mrb[0].mxu0
        %v2323 = vadd.f32 %v2210, %v2322
        %v2324 = vpop.f32.mrb[0].mxu0
        %v2325 = vadd.f32 %v2212, %v2324
        %v2326 = vpop.f32.mrb[0].mxu0
        %v2327 = vadd.f32 %v2214, %v2326
        %2328 = vmatprep.mubr.bf16.mxu0 %v778
        %2329 = vmatmul.mubr.bf16.gmra.mrb[0].mxu0 %v777
        %v2330 = vpop.f32.mrb[0].mxu0
        %v2331 = vadd.f32 %v2218, %v2330
        %v2332 = vpop.f32.mrb[0].mxu0
        %v2333 = vadd.f32 %v2220, %v2332
        %v2334 = vpop.f32.mrb[0].mxu0
        %v2335 = vadd.f32 %v2222, %v2334
        %v2336 = vpop.f32.mrb[0].mxu0
        %v2337 = vadd.f32 %v2224, %v2336
        %2338 = vmatprep.mubr.bf16.mxu0 %v785
        %2339 = vmatmul.mubr.bf16.gmra.mrb[0].mxu0 %v784
        %v2340 = vpop.f32.mrb[0].mxu0
        %v2341 = vadd.f32 %v2228, %v2340
        %v2342 = vpop.f32.mrb[0].mxu0
        %v2343 = vadd.f32 %v2230, %v2342
        %v2344 = vpop.f32.mrb[0].mxu0
        %v2345 = vadd.f32 %v2232, %v2344
        %v2346 = vpop.f32.mrb[0].mxu0
        %v2347 = vadd.f32 %v2234, %v2346
        %2348 = vdwg.mxu0
        %2349 = vmatprep.subr.bf16.mxu0 %v1786
        %2350 = vmatpush1.bf16.msra.mxu0 %v1785
        %2351 = vmatprep.subr.bf16.mxu0 0
        %2352 = vmatpush1.bf16.msra.mxu0 0
        %2353 = vmatprep.subr.bf16.mxu0 0
        %2354 = vmatpush1.bf16.msra.mxu0 0
        %2355 = vmatprep.subr.bf16.mxu0 0
        %2356 = vmatpush1.bf16.msra.mxu0 0
        %2357 = vmatprep.subr.bf16.mxu0 0
        %2358 = vmatpush1.bf16.msra.mxu0 0
        %2359 = vmatprep.subr.bf16.mxu0 0
        %2360 = vmatpush1.bf16.msra.mxu0 0
        %2361 = vmatprep.subr.bf16.mxu0 0
        %2362 = vmatpush1.bf16.msra.mxu0 0
        %2363 = vmatprep.subr.bf16.mxu0 0
        %2364 = vmatpush1.bf16.msra.mxu0 0
        %2365 = vmatprep.subr.bf16.mxu0 0
        %2366 = vmatpush1.bf16.msra.mxu0 0
        %2367 = vmatprep.subr.bf16.mxu0 0
        %2368 = vmatpush1.bf16.msra.mxu0 0
        %2369 = vmatprep.subr.bf16.mxu0 0
        %2370 = vmatpush1.bf16.msra.mxu0 0
        %2371 = vmatprep.subr.bf16.mxu0 0
        %2372 = vmatpush1.bf16.msra.mxu0 0
        %2373 = vmatprep.subr.bf16.mxu0 0
        %2374 = vmatpush1.bf16.msra.mxu0 0
        %2375 = vmatprep.subr.bf16.mxu0 0
        %2376 = vmatpush1.bf16.msra.mxu0 0
        %2377 = vmatprep.subr.bf16.mxu0 0
        %2378 = vmatpush1.bf16.msra.mxu0 0
        %2379 = vmatprep.subr.bf16.mxu0 0
        %2380 = vmatpush1.bf16.msra.mxu0 0
        %2381 = vmatprep.mubr.bf16.mxu0 0
        %2382 = vmatmul.mubr.bf16.gmra.mrb[0].mxu0 %v1987
        %v2383 = vpop.f32.mrb[0].mxu0
        %v2384 = vadd.f32 %v2271, %v2383
        %v2385 = vpop.f32.mrb[0].mxu0
        %v2386 = vadd.f32 %v2273, %v2385
        %v2387 = vpop.f32.mrb[0].mxu0
        %v2388 = vadd.f32 %v2275, %v2387
        %v2389 = vpop.f32.mrb[0].mxu0
        %v2390 = vadd.f32 %v2277, %v2389
        %2391 = vmatprep.mubr.bf16.mxu0 0
        %2392 = vmatmul.mubr.bf16.gmra.mrb[0].mxu0 %v1990
        %v2393 = vpop.f32.mrb[0].mxu0
        %v2394 = vadd.f32 %v2281, %v2393
        %v2395 = vpop.f32.mrb[0].mxu0
        %v2396 = vadd.f32 %v2283, %v2395
        %v2397 = vpop.f32.mrb[0].mxu0
        %v2398 = vadd.f32 %v2285, %v2397
        %v2399 = vpop.f32.mrb[0].mxu0
        %v2400 = vadd.f32 %v2287, %v2399
        %2401 = vmatprep.mubr.bf16.mxu0 0
        %2402 = vmatmul.mubr.bf16.gmra.mrb[0].mxu0 %v1993
        %v2403 = vpop.f32.mrb[0].mxu0
        %v2404 = vadd.f32 %v2291, %v2403
        %v2405 = vpop.f32.mrb[0].mxu0
        %v2406 = vadd.f32 %v2293, %v2405
        %v2407 = vpop.f32.mrb[0].mxu0
        %v2408 = vadd.f32 %v2295, %v2407
        %v2409 = vpop.f32.mrb[0].mxu0
        %v2410 = vadd.f32 %v2297, %v2409
        %2411 = vmatprep.mubr.bf16.mxu0 0
        %2412 = vmatmul.mubr.bf16.gmra.mrb[0].mxu0 %v1996
        %v2413 = vpop.f32.mrb[0].mxu0
        %v2414 = vadd.f32 %v2301, %v2413
        %v2415 = vpop.f32.mrb[0].mxu0
        %v2416 = vadd.f32 %v2303, %v2415
        %v2417 = vpop.f32.mrb[0].mxu0
        %v2418 = vadd.f32 %v2305, %v2417
        %v2419 = vpop.f32.mrb[0].mxu0
        %v2420 = vadd.f32 %v2307, %v2419
        %2421 = vmatprep.mubr.bf16.mxu0 0
        %2422 = vmatmul.mubr.bf16.gmra.mrb[0].mxu0 %v1999
        %v2423 = vpop.f32.mrb[0].mxu0
        %v2424 = vadd.f32 %v2311, %v2423
        %v2425 = vpop.f32.mrb[0].mxu0
        %v2426 = vadd.f32 %v2313, %v2425
        %v2427 = vpop.f32.mrb[0].mxu0
        %v2428 = vadd.f32 %v2315, %v2427
        %v2429 = vpop.f32.mrb[0].mxu0
        %v2430 = vadd.f32 %v2317, %v2429
        %2431 = vmatprep.mubr.bf16.mxu0 0
        %2432 = vmatmul.mubr.bf16.gmra.mrb[0].mxu0 %v2002
        %v2433 = vpop.f32.mrb[0].mxu0
        %v2434 = vadd.f32 %v2321, %v2433
        %v2435 = vpop.f32.mrb[0].mxu0
        %v2436 = vadd.f32 %v2323, %v2435
        %v2437 = vpop.f32.mrb[0].mxu0
        %v2438 = vadd.f32 %v2325, %v2437
        %v2439 = vpop.f32.mrb[0].mxu0
        %v2440 = vadd.f32 %v2327, %v2439
        %2441 = vmatprep.mubr.bf16.mxu0 0
        %2442 = vmatmul.mubr.bf16.gmra.mrb[0].mxu0 %v2005
        %v2443 = vpop.f32.mrb[0].mxu0
        %v2444 = vadd.f32 %v2331, %v2443
        %v2445 = vpop.f32.mrb[0].mxu0
        %v2446 = vadd.f32 %v2333, %v2445
        %v2447 = vpop.f32.mrb[0].mxu0
        %v2448 = vadd.f32 %v2335, %v2447
        %v2449 = vpop.f32.mrb[0].mxu0
        %v2450 = vadd.f32 %v2337, %v2449
        %2451 = vmatprep.mubr.bf16.mxu0 0
        %2452 = vmatmul.mubr.bf16.gmra.mrb[0].mxu0 %v2008
        %v2453 = vpop.f32.mrb[0].mxu0
        %v2454 = vadd.f32 %v2341, %v2453
        %v2455 = vpop.f32.mrb[0].mxu0
        %v2456 = vadd.f32 %v2343, %v2455
        %v2457 = vpop.f32.mrb[0].mxu0
        %v2458 = vadd.f32 %v2345, %v2457
        %v2459 = vpop.f32.mrb[0].mxu0
        %v2460 = vadd.f32 %v2347, %v2459
        %2461 = vdwg.mxu0
        %2462 = vmatprep.subr.bf16.mxu0 %v1596
        %2463 = vmatpush1.bf16.msra.mxu0 %v1595
        %2464 = vmatprep.subr.bf16.mxu0 %v1600
        %2465 = vmatpush1.bf16.msra.mxu0 %v1599
        %2466 = vmatprep.subr.bf16.mxu0 %v1604
        %2467 = vmatpush1.bf16.msra.mxu0 %v1603
        %2468 = vmatprep.subr.bf16.mxu0 %v1608
        %2469 = vmatpush1.bf16.msra.mxu0 %v1607
        %2470 = vmatprep.subr.bf16.mxu0 %v1612
        %2471 = vmatpush1.bf16.msra.mxu0 %v1611
        %2472 = vmatprep.subr.bf16.mxu0 %v1616
        %2473 = vmatpush1.bf16.msra.mxu0 %v1615
        %2474 = vmatprep.subr.bf16.mxu0 %v1620
        %2475 = vmatpush1.bf16.msra.mxu0 %v1619
        %2476 = vmatprep.subr.bf16.mxu0 %v1624
        %2477 = vmatpush1.bf16.msra.mxu0 %v1623
        %2478 = vmatprep.subr.bf16.mxu0 %v1628
        %2479 = vmatpush1.bf16.msra.mxu0 %v1627
        %2480 = vmatprep.subr.bf16.mxu0 %v1632
        %2481 = vmatpush1.bf16.msra.mxu0 %v1631
        %2482 = vmatprep.subr.bf16.mxu0 %v1636
        %2483 = vmatpush1.bf16.msra.mxu0 %v1635
        %2484 = vmatprep.subr.bf16.mxu0 %v1640
        %2485 = vmatpush1.bf16.msra.mxu0 %v1639
        %2486 = vmatprep.subr.bf16.mxu0 %v1644
        %2487 = vmatpush1.bf16.msra.mxu0 %v1643
        %2488 = vmatprep.subr.bf16.mxu0 %v1648
        %2489 = vmatpush1.bf16.msra.mxu0 %v1647
        %2490 = vmatprep.subr.bf16.mxu0 %v1652
        %2491 = vmatpush1.bf16.msra.mxu0 %v1651
        %2492 = vmatprep.subr.bf16.mxu0 %v1656
        %2493 = vmatpush1.bf16.msra.mxu0 %v1655
        %2494 = vmatprep.mubr.bf16.mxu0 %v732
        %2495 = vmatmul.mubr.bf16.gmra.mrb[0].mxu0 %v731
        %v2496 = vpop.f32.mrb[0].mxu0
        %v2497 = vadd.f32 %v996, %v2496
        %v2498 = vpop.f32.mrb[0].mxu0
        %v2499 = vadd.f32 %v1000, %v2498
        %v2500 = vpop.f32.mrb[0].mxu0
        %v2501 = vadd.f32 %v996, %v2500
        %v2502 = vpop.f32.mrb[0].mxu0
        %v2503 = vadd.f32 %v1000, %v2502
        %2504 = vmatprep.mubr.bf16.mxu0 %v739
        %2505 = vmatmul.mubr.bf16.gmra.mrb[0].mxu0 %v738
        %v2506 = vpop.f32.mrb[0].mxu0
        %v2507 = vadd.f32 %v996, %v2506
        %v2508 = vpop.f32.mrb[0].mxu0
        %v2509 = vadd.f32 %v1000, %v2508
        %v2510 = vpop.f32.mrb[0].mxu0
        %v2511 = vadd.f32 %v996, %v2510
        %v2512 = vpop.f32.mrb[0].mxu0
        %v2513 = vadd.f32 %v1000, %v2512
        %2514 = vmatprep.mubr.bf16.mxu0 %v746
        %2515 = vmatmul.mubr.bf16.gmra.mrb[0].mxu0 %v745
        %v2516 = vpop.f32.mrb[0].mxu0
        %v2517 = vadd.f32 %v996, %v2516
        %v2518 = vpop.f32.mrb[0].mxu0
        %v2519 = vadd.f32 %v1000, %v2518
        %v2520 = vpop.f32.mrb[0].mxu0
        %v2521 = vadd.f32 %v996, %v2520
        %v2522 = vpop.f32.mrb[0].mxu0
        %v2523 = vadd.f32 %v1000, %v2522
        %2524 = vmatprep.mubr.bf16.mxu0 %v753
        %2525 = vmatmul.mubr.bf16.gmra.mrb[0].mxu0 %v752
        %v2526 = vpop.f32.mrb[0].mxu0
        %v2527 = vadd.f32 %v996, %v2526
        %v2528 = vpop.f32.mrb[0].mxu0
        %v2529 = vadd.f32 %v1000, %v2528
        %v2530 = vpop.f32.mrb[0].mxu0
        %v2531 = vadd.f32 %v996, %v2530
        %v2532 = vpop.f32.mrb[0].mxu0
        %v2533 = vadd.f32 %v1000, %v2532
        %2534 = vmatprep.mubr.bf16.mxu0 %v760
        %2535 = vmatmul.mubr.bf16.gmra.mrb[0].mxu0 %v759
        %v2536 = vpop.f32.mrb[0].mxu0
        %v2537 = vadd.f32 %v996, %v2536
        %v2538 = vpop.f32.mrb[0].mxu0
        %v2539 = vadd.f32 %v1000, %v2538
        %v2540 = vpop.f32.mrb[0].mxu0
        %v2541 = vadd.f32 %v996, %v2540
        %v2542 = vpop.f32.mrb[0].mxu0
        %v2543 = vadd.f32 %v1000, %v2542
        %2544 = vmatprep.mubr.bf16.mxu0 %v767
        %2545 = vmatmul.mubr.bf16.gmra.mrb[0].mxu0 %v766
        %v2546 = vpop.f32.mrb[0].mxu0
        %v2547 = vadd.f32 %v996, %v2546
        %v2548 = vpop.f32.mrb[0].mxu0
        %v2549 = vadd.f32 %v1000, %v2548
        %v2550 = vpop.f32.mrb[0].mxu0
        %v2551 = vadd.f32 %v996, %v2550
        %v2552 = vpop.f32.mrb[0].mxu0
        %v2553 = vadd.f32 %v1000, %v2552
        %2554 = vmatprep.mubr.bf16.mxu0 %v774
        %2555 = vmatmul.mubr.bf16.gmra.mrb[0].mxu0 %v773
        %v2556 = vpop.f32.mrb[0].mxu0
        %v2557 = vadd.f32 %v996, %v2556
        %v2558 = vpop.f32.mrb[0].mxu0
        %v2559 = vadd.f32 %v1000, %v2558
        %v2560 = vpop.f32.mrb[0].mxu0
        %v2561 = vadd.f32 %v996, %v2560
        %v2562 = vpop.f32.mrb[0].mxu0
        %v2563 = vadd.f32 %v1000, %v2562
        %2564 = vmatprep.mubr.bf16.mxu0 %v781
        %2565 = vmatmul.mubr.bf16.gmra.mrb[0].mxu0 %v780
        %v2566 = vpop.f32.mrb[0].mxu0
        %v2567 = vadd.f32 %v996, %v2566
        %v2568 = vpop.f32.mrb[0].mxu0
        %v2569 = vadd.f32 %v1000, %v2568
        %v2570 = vpop.f32.mrb[0].mxu0
        %v2571 = vadd.f32 %v996, %v2570
        %v2572 = vpop.f32.mrb[0].mxu0
        %v2573 = vadd.f32 %v1000, %v2572
        %2574 = vdwg.mxu0
        %2575 = vmatprep.subr.bf16.mxu0 %v1660
        %2576 = vmatpush1.bf16.msra.mxu0 %v1659
        %2577 = vmatprep.subr.bf16.mxu0 %v1664
        %2578 = vmatpush1.bf16.msra.mxu0 %v1663
        %2579 = vmatprep.subr.bf16.mxu0 %v1668
        %2580 = vmatpush1.bf16.msra.mxu0 %v1667
        %2581 = vmatprep.subr.bf16.mxu0 %v1672
        %2582 = vmatpush1.bf16.msra.mxu0 %v1671
        %2583 = vmatprep.subr.bf16.mxu0 %v1676
        %2584 = vmatpush1.bf16.msra.mxu0 %v1675
        %2585 = vmatprep.subr.bf16.mxu0 %v1680
        %2586 = vmatpush1.bf16.msra.mxu0 %v1679
        %2587 = vmatprep.subr.bf16.mxu0 %v1684
        %2588 = vmatpush1.bf16.msra.mxu0 %v1683
        %2589 = vmatprep.subr.bf16.mxu0 %v1688
        %2590 = vmatpush1.bf16.msra.mxu0 %v1687
        %2591 = vmatprep.subr.bf16.mxu0 %v1692
        %2592 = vmatpush1.bf16.msra.mxu0 %v1691
        %2593 = vmatprep.subr.bf16.mxu0 %v1696
        %2594 = vmatpush1.bf16.msra.mxu0 %v1695
        %2595 = vmatprep.subr.bf16.mxu0 %v1700
        %2596 = vmatpush1.bf16.msra.mxu0 %v1699
        %2597 = vmatprep.subr.bf16.mxu0 %v1704
        %2598 = vmatpush1.bf16.msra.mxu0 %v1703
        %2599 = vmatprep.subr.bf16.mxu0 %v1708
        %2600 = vmatpush1.bf16.msra.mxu0 %v1707
        %2601 = vmatprep.subr.bf16.mxu0 %v1712
        %2602 = vmatpush1.bf16.msra.mxu0 %v1711
        %2603 = vmatprep.subr.bf16.mxu0 %v1716
        %2604 = vmatpush1.bf16.msra.mxu0 %v1715
        %2605 = vmatprep.subr.bf16.mxu0 %v1720
        %2606 = vmatpush1.bf16.msra.mxu0 %v1719
        %2607 = vmatprep.mubr.bf16.mxu0 %v734
        %2608 = vmatmul.mubr.bf16.gmra.mrb[0].mxu0 %v733
        %v2609 = vpop.f32.mrb[0].mxu0
        %v2610 = vadd.f32 %v2497, %v2609
        %v2611 = vpop.f32.mrb[0].mxu0
        %v2612 = vadd.f32 %v2499, %v2611
        %v2613 = vpop.f32.mrb[0].mxu0
        %v2614 = vadd.f32 %v2501, %v2613
        %v2615 = vpop.f32.mrb[0].mxu0
        %v2616 = vadd.f32 %v2503, %v2615
        %2617 = vmatprep.mubr.bf16.mxu0 %v741
        %2618 = vmatmul.mubr.bf16.gmra.mrb[0].mxu0 %v740
        %v2619 = vpop.f32.mrb[0].mxu0
        %v2620 = vadd.f32 %v2507, %v2619
        %v2621 = vpop.f32.mrb[0].mxu0
        %v2622 = vadd.f32 %v2509, %v2621
        %v2623 = vpop.f32.mrb[0].mxu0
        %v2624 = vadd.f32 %v2511, %v2623
        %v2625 = vpop.f32.mrb[0].mxu0
        %v2626 = vadd.f32 %v2513, %v2625
        %2627 = vmatprep.mubr.bf16.mxu0 %v748
        %2628 = vmatmul.mubr.bf16.gmra.mrb[0].mxu0 %v747
        %v2629 = vpop.f32.mrb[0].mxu0
        %v2630 = vadd.f32 %v2517, %v2629
        %v2631 = vpop.f32.mrb[0].mxu0
        %v2632 = vadd.f32 %v2519, %v2631
        %v2633 = vpop.f32.mrb[0].mxu0
        %v2634 = vadd.f32 %v2521, %v2633
        %v2635 = vpop.f32.mrb[0].mxu0
        %v2636 = vadd.f32 %v2523, %v2635
        %2637 = vmatprep.mubr.bf16.mxu0 %v755
        %2638 = vmatmul.mubr.bf16.gmra.mrb[0].mxu0 %v754
        %v2639 = vpop.f32.mrb[0].mxu0
        %v2640 = vadd.f32 %v2527, %v2639
        %v2641 = vpop.f32.mrb[0].mxu0
        %v2642 = vadd.f32 %v2529, %v2641
        %v2643 = vpop.f32.mrb[0].mxu0
        %v2644 = vadd.f32 %v2531, %v2643
        %v2645 = vpop.f32.mrb[0].mxu0
        %v2646 = vadd.f32 %v2533, %v2645
        %2647 = vmatprep.mubr.bf16.mxu0 %v762
        %2648 = vmatmul.mubr.bf16.gmra.mrb[0].mxu0 %v761
        %v2649 = vpop.f32.mrb[0].mxu0
        %v2650 = vadd.f32 %v2537, %v2649
        %v2651 = vpop.f32.mrb[0].mxu0
        %v2652 = vadd.f32 %v2539, %v2651
        %v2653 = vpop.f32.mrb[0].mxu0
        %v2654 = vadd.f32 %v2541, %v2653
        %v2655 = vpop.f32.mrb[0].mxu0
        %v2656 = vadd.f32 %v2543, %v2655
        %2657 = vmatprep.mubr.bf16.mxu0 %v769
        %2658 = vmatmul.mubr.bf16.gmra.mrb[0].mxu0 %v768
        %v2659 = vpop.f32.mrb[0].mxu0
        %v2660 = vadd.f32 %v2547, %v2659
        %v2661 = vpop.f32.mrb[0].mxu0
        %v2662 = vadd.f32 %v2549, %v2661
        %v2663 = vpop.f32.mrb[0].mxu0
        %v2664 = vadd.f32 %v2551, %v2663
        %v2665 = vpop.f32.mrb[0].mxu0
        %v2666 = vadd.f32 %v2553, %v2665
        %2667 = vmatprep.mubr.bf16.mxu0 %v776
        %2668 = vmatmul.mubr.bf16.gmra.mrb[0].mxu0 %v775
        %v2669 = vpop.f32.mrb[0].mxu0
        %v2670 = vadd.f32 %v2557, %v2669
        %v2671 = vpop.f32.mrb[0].mxu0
        %v2672 = vadd.f32 %v2559, %v2671
        %v2673 = vpop.f32.mrb[0].mxu0
        %v2674 = vadd.f32 %v2561, %v2673
        %v2675 = vpop.f32.mrb[0].mxu0
        %v2676 = vadd.f32 %v2563, %v2675
        %2677 = vmatprep.mubr.bf16.mxu0 %v783
        %2678 = vmatmul.mubr.bf16.gmra.mrb[0].mxu0 %v782
        %v2679 = vpop.f32.mrb[0].mxu0
        %v2680 = vadd.f32 %v2567, %v2679
        %v2681 = vpop.f32.mrb[0].mxu0
        %v2682 = vadd.f32 %v2569, %v2681
        %v2683 = vpop.f32.mrb[0].mxu0
        %v2684 = vadd.f32 %v2571, %v2683
        %v2685 = vpop.f32.mrb[0].mxu0
        %v2686 = vadd.f32 %v2573, %v2685
        %2687 = vdwg.mxu0
        %2688 = vmatprep.subr.bf16.mxu0 %v1724
        %2689 = vmatpush1.bf16.msra.mxu0 %v1723
        %2690 = vmatprep.subr.bf16.mxu0 %v1728
        %2691 = vmatpush1.bf16.msra.mxu0 %v1727
        %2692 = vmatprep.subr.bf16.mxu0 %v1732
        %2693 = vmatpush1.bf16.msra.mxu0 %v1731
        %2694 = vmatprep.subr.bf16.mxu0 %v1736
        %2695 = vmatpush1.bf16.msra.mxu0 %v1735
        %2696 = vmatprep.subr.bf16.mxu0 %v1740
        %2697 = vmatpush1.bf16.msra.mxu0 %v1739
        %2698 = vmatprep.subr.bf16.mxu0 %v1744
        %2699 = vmatpush1.bf16.msra.mxu0 %v1743
        %2700 = vmatprep.subr.bf16.mxu0 %v1748
        %2701 = vmatpush1.bf16.msra.mxu0 %v1747
        %2702 = vmatprep.subr.bf16.mxu0 %v1752
        %2703 = vmatpush1.bf16.msra.mxu0 %v1751
        %2704 = vmatprep.subr.bf16.mxu0 %v1756
        %2705 = vmatpush1.bf16.msra.mxu0 %v1755
        %2706 = vmatprep.subr.bf16.mxu0 %v1760
        %2707 = vmatpush1.bf16.msra.mxu0 %v1759
        %2708 = vmatprep.subr.bf16.mxu0 %v1764
        %2709 = vmatpush1.bf16.msra.mxu0 %v1763
        %2710 = vmatprep.subr.bf16.mxu0 %v1768
        %2711 = vmatpush1.bf16.msra.mxu0 %v1767
        %2712 = vmatprep.subr.bf16.mxu0 %v1772
        %2713 = vmatpush1.bf16.msra.mxu0 %v1771
        %2714 = vmatprep.subr.bf16.mxu0 %v1776
        %2715 = vmatpush1.bf16.msra.mxu0 %v1775
        %2716 = vmatprep.subr.bf16.mxu0 %v1780
        %2717 = vmatpush1.bf16.msra.mxu0 %v1779
        %2718 = vmatprep.subr.bf16.mxu0 %v1784
        %2719 = vmatpush1.bf16.msra.mxu0 %v1783
        %2720 = vmatprep.mubr.bf16.mxu0 %v736
        %2721 = vmatmul.mubr.bf16.gmra.mrb[0].mxu0 %v735
        %v2722 = vpop.f32.mrb[0].mxu0
        %v2723 = vadd.f32 %v2610, %v2722
        %v2724 = vpop.f32.mrb[0].mxu0
        %v2725 = vadd.f32 %v2612, %v2724
        %v2726 = vpop.f32.mrb[0].mxu0
        %v2727 = vadd.f32 %v2614, %v2726
        %v2728 = vpop.f32.mrb[0].mxu0
        %v2729 = vadd.f32 %v2616, %v2728
        %2730 = vmatprep.mubr.bf16.mxu0 %v743
        %2731 = vmatmul.mubr.bf16.gmra.mrb[0].mxu0 %v742
        %v2732 = vpop.f32.mrb[0].mxu0
        %v2733 = vadd.f32 %v2620, %v2732
        %v2734 = vpop.f32.mrb[0].mxu0
        %v2735 = vadd.f32 %v2622, %v2734
        %v2736 = vpop.f32.mrb[0].mxu0
        %v2737 = vadd.f32 %v2624, %v2736
        %v2738 = vpop.f32.mrb[0].mxu0
        %v2739 = vadd.f32 %v2626, %v2738
        %2740 = vmatprep.mubr.bf16.mxu0 %v750
        %2741 = vmatmul.mubr.bf16.gmra.mrb[0].mxu0 %v749
        %v2742 = vpop.f32.mrb[0].mxu0
        %v2743 = vadd.f32 %v2630, %v2742
        %v2744 = vpop.f32.mrb[0].mxu0
        %v2745 = vadd.f32 %v2632, %v2744
        %v2746 = vpop.f32.mrb[0].mxu0
        %v2747 = vadd.f32 %v2634, %v2746
        %v2748 = vpop.f32.mrb[0].mxu0
        %v2749 = vadd.f32 %v2636, %v2748
        %2750 = vmatprep.mubr.bf16.mxu0 %v757
        %2751 = vmatmul.mubr.bf16.gmra.mrb[0].mxu0 %v756
        %v2752 = vpop.f32.mrb[0].mxu0
        %v2753 = vadd.f32 %v2640, %v2752
        %v2754 = vpop.f32.mrb[0].mxu0
        %v2755 = vadd.f32 %v2642, %v2754
        %v2756 = vpop.f32.mrb[0].mxu0
        %v2757 = vadd.f32 %v2644, %v2756
        %v2758 = vpop.f32.mrb[0].mxu0
        %v2759 = vadd.f32 %v2646, %v2758
        %2760 = vmatprep.mubr.bf16.mxu0 %v764
        %2761 = vmatmul.mubr.bf16.gmra.mrb[0].mxu0 %v763
        %v2762 = vpop.f32.mrb[0].mxu0
        %v2763 = vadd.f32 %v2650, %v2762
        %v2764 = vpop.f32.mrb[0].mxu0
        %v2765 = vadd.f32 %v2652, %v2764
        %v2766 = vpop.f32.mrb[0].mxu0
        %v2767 = vadd.f32 %v2654, %v2766
        %v2768 = vpop.f32.mrb[0].mxu0
        %v2769 = vadd.f32 %v2656, %v2768
        %2770 = vmatprep.mubr.bf16.mxu0 %v771
        %2771 = vmatmul.mubr.bf16.gmra.mrb[0].mxu0 %v770
        %v2772 = vpop.f32.mrb[0].mxu0
        %v2773 = vadd.f32 %v2660, %v2772
        %v2774 = vpop.f32.mrb[0].mxu0
        %v2775 = vadd.f32 %v2662, %v2774
        %v2776 = vpop.f32.mrb[0].mxu0
        %v2777 = vadd.f32 %v2664, %v2776
        %v2778 = vpop.f32.mrb[0].mxu0
        %v2779 = vadd.f32 %v2666, %v2778
        %2780 = vmatprep.mubr.bf16.mxu0 %v778
        %2781 = vmatmul.mubr.bf16.gmra.mrb[0].mxu0 %v777
        %v2782 = vpop.f32.mrb[0].mxu0
        %v2783 = vadd.f32 %v2670, %v2782
        %v2784 = vpop.f32.mrb[0].mxu0
        %v2785 = vadd.f32 %v2672, %v2784
        %v2786 = vpop.f32.mrb[0].mxu0
        %v2787 = vadd.f32 %v2674, %v2786
        %v2788 = vpop.f32.mrb[0].mxu0
        %v2789 = vadd.f32 %v2676, %v2788
        %2790 = vmatprep.mubr.bf16.mxu0 %v785
        %2791 = vmatmul.mubr.bf16.gmra.mrb[0].mxu0 %v784
        %v2792 = vpop.f32.mrb[0].mxu0
        %v2793 = vadd.f32 %v2680, %v2792
        %v2794 = vpop.f32.mrb[0].mxu0
        %v2795 = vadd.f32 %v2682, %v2794
        %v2796 = vpop.f32.mrb[0].mxu0
        %v2797 = vadd.f32 %v2684, %v2796
        %v2798 = vpop.f32.mrb[0].mxu0
        %v2799 = vadd.f32 %v2686, %v2798
        %2800 = vdwg.mxu0
        %2801 = vmatprep.subr.bf16.mxu0 %v1788
        %2802 = vmatpush1.bf16.msra.mxu0 %v1787
        %2803 = vmatprep.subr.bf16.mxu0 0
        %2804 = vmatpush1.bf16.msra.mxu0 0
        %2805 = vmatprep.subr.bf16.mxu0 0
        %2806 = vmatpush1.bf16.msra.mxu0 0
        %2807 = vmatprep.subr.bf16.mxu0 0
        %2808 = vmatpush1.bf16.msra.mxu0 0
        %2809 = vmatprep.subr.bf16.mxu0 0
        %2810 = vmatpush1.bf16.msra.mxu0 0
        %2811 = vmatprep.subr.bf16.mxu0 0
        %2812 = vmatpush1.bf16.msra.mxu0 0
        %2813 = vmatprep.subr.bf16.mxu0 0
        %2814 = vmatpush1.bf16.msra.mxu0 0
        %2815 = vmatprep.subr.bf16.mxu0 0
        %2816 = vmatpush1.bf16.msra.mxu0 0
        %2817 = vmatprep.subr.bf16.mxu0 0
        %2818 = vmatpush1.bf16.msra.mxu0 0
        %2819 = vmatprep.subr.bf16.mxu0 0
        %2820 = vmatpush1.bf16.msra.mxu0 0
        %2821 = vmatprep.subr.bf16.mxu0 0
        %2822 = vmatpush1.bf16.msra.mxu0 0
        %2823 = vmatprep.subr.bf16.mxu0 0
        %2824 = vmatpush1.bf16.msra.mxu0 0
        %2825 = vmatprep.subr.bf16.mxu0 0
        %2826 = vmatpush1.bf16.msra.mxu0 0
        %2827 = vmatprep.subr.bf16.mxu0 0
        %2828 = vmatpush1.bf16.msra.mxu0 0
        %2829 = vmatprep.subr.bf16.mxu0 0
        %2830 = vmatpush1.bf16.msra.mxu0 0
        %2831 = vmatprep.subr.bf16.mxu0 0
        %2832 = vmatpush1.bf16.msra.mxu0 0
        %2833 = vmatprep.mubr.bf16.mxu0 0
        %2834 = vmatmul.mubr.bf16.gmra.mrb[0].mxu0 %v1987
        %v2835 = vpop.f32.mrb[0].mxu0
        %v2836 = vadd.f32 %v2723, %v2835
        %v2837 = vpop.f32.mrb[0].mxu0
        %v2838 = vadd.f32 %v2725, %v2837
        %v2839 = vpop.f32.mrb[0].mxu0
        %v2840 = vadd.f32 %v2727, %v2839
        %v2841 = vpop.f32.mrb[0].mxu0
        %v2842 = vadd.f32 %v2729, %v2841
        %2843 = vmatprep.mubr.bf16.mxu0 0
        %2844 = vmatmul.mubr.bf16.gmra.mrb[0].mxu0 %v1990
        %v2845 = vpop.f32.mrb[0].mxu0
        %v2846 = vadd.f32 %v2733, %v2845
        %v2847 = vpop.f32.mrb[0].mxu0
        %v2848 = vadd.f32 %v2735, %v2847
        %v2849 = vpop.f32.mrb[0].mxu0
        %v2850 = vadd.f32 %v2737, %v2849
        %v2851 = vpop.f32.mrb[0].mxu0
        %v2852 = vadd.f32 %v2739, %v2851
        %2853 = vmatprep.mubr.bf16.mxu0 0
        %2854 = vmatmul.mubr.bf16.gmra.mrb[0].mxu0 %v1993
        %v2855 = vpop.f32.mrb[0].mxu0
        %v2856 = vadd.f32 %v2743, %v2855
        %v2857 = vpop.f32.mrb[0].mxu0
        %v2858 = vadd.f32 %v2745, %v2857
        %v2859 = vpop.f32.mrb[0].mxu0
        %v2860 = vadd.f32 %v2747, %v2859
        %v2861 = vpop.f32.mrb[0].mxu0
        %v2862 = vadd.f32 %v2749, %v2861
        %2863 = vmatprep.mubr.bf16.mxu0 0
        %2864 = vmatmul.mubr.bf16.gmra.mrb[0].mxu0 %v1996
        %v2865 = vpop.f32.mrb[0].mxu0
        %v2866 = vadd.f32 %v2753, %v2865
        %v2867 = vpop.f32.mrb[0].mxu0
        %v2868 = vadd.f32 %v2755, %v2867
        %v2869 = vpop.f32.mrb[0].mxu0
        %v2870 = vadd.f32 %v2757, %v2869
        %v2871 = vpop.f32.mrb[0].mxu0
        %v2872 = vadd.f32 %v2759, %v2871
        %2873 = vmatprep.mubr.bf16.mxu0 0
        %2874 = vmatmul.mubr.bf16.gmra.mrb[0].mxu0 %v1999
        %v2875 = vpop.f32.mrb[0].mxu0
        %v2876 = vadd.f32 %v2763, %v2875
        %v2877 = vpop.f32.mrb[0].mxu0
        %v2878 = vadd.f32 %v2765, %v2877
        %v2879 = vpop.f32.mrb[0].mxu0
        %v2880 = vadd.f32 %v2767, %v2879
        %v2881 = vpop.f32.mrb[0].mxu0
        %v2882 = vadd.f32 %v2769, %v2881
        %2883 = vmatprep.mubr.bf16.mxu0 0
        %2884 = vmatmul.mubr.bf16.gmra.mrb[0].mxu0 %v2002
        %v2885 = vpop.f32.mrb[0].mxu0
        %v2886 = vadd.f32 %v2773, %v2885
        %v2887 = vpop.f32.mrb[0].mxu0
        %v2888 = vadd.f32 %v2775, %v2887
        %v2889 = vpop.f32.mrb[0].mxu0
        %v2890 = vadd.f32 %v2777, %v2889
        %v2891 = vpop.f32.mrb[0].mxu0
        %v2892 = vadd.f32 %v2779, %v2891
        %2893 = vmatprep.mubr.bf16.mxu0 0
        %2894 = vmatmul.mubr.bf16.gmra.mrb[0].mxu0 %v2005
        %v2895 = vpop.f32.mrb[0].mxu0
        %v2896 = vadd.f32 %v2783, %v2895
        %v2897 = vpop.f32.mrb[0].mxu0
        %v2898 = vadd.f32 %v2785, %v2897
        %v2899 = vpop.f32.mrb[0].mxu0
        %v2900 = vadd.f32 %v2787, %v2899
        %v2901 = vpop.f32.mrb[0].mxu0
        %v2902 = vadd.f32 %v2789, %v2901
        %2903 = vmatprep.mubr.bf16.mxu0 0
        %2904 = vmatmul.mubr.bf16.gmra.mrb[0].mxu0 %v2008
        %v2905 = vpop.f32.mrb[0].mxu0
        %v2906 = vadd.f32 %v2793, %v2905
        %v2907 = vpop.f32.mrb[0].mxu0
        %v2908 = vadd.f32 %v2795, %v2907
        %v2909 = vpop.f32.mrb[0].mxu0
        %v2910 = vadd.f32 %v2797, %v2909
        %v2911 = vpop.f32.mrb[0].mxu0
        %v2912 = vadd.f32 %v2799, %v2911
        %2913 = vdwg.mxu0
        %v2914 = vmax.f32 %v2384, 0.0
        %v2915 = vmax.f32 %v2386, 0.0
        %v2916 = vmax.f32 %v2836, 0.0
        %v2917 = vmax.f32 %v2838, 0.0
        %v2918 = vmax.f32 %v2388, 0.0
        %v2919 = vmax.f32 %v2390, 0.0
        %v2920 = vmax.f32 %v2840, 0.0
        %v2921 = vmax.f32 %v2842, 0.0
        %v2922 = vmax.f32 %v2394, 0.0
        %v2923 = vmax.f32 %v2396, 0.0
        %v2924 = vmax.f32 %v2846, 0.0
        %v2925 = vmax.f32 %v2848, 0.0
        %v2926 = vmax.f32 %v2398, 0.0
        %v2927 = vmax.f32 %v2400, 0.0
        %v2928 = vmax.f32 %v2850, 0.0
        %v2929 = vmax.f32 %v2852, 0.0
        %v2930 = vmax.f32 %v2404, 0.0
        %v2931 = vmax.f32 %v2406, 0.0
        %v2932 = vmax.f32 %v2856, 0.0
        %v2933 = vmax.f32 %v2858, 0.0
        %v2934 = vmax.f32 %v2408, 0.0
        %v2935 = vmax.f32 %v2410, 0.0
        %v2936 = vmax.f32 %v2860, 0.0
        %v2937 = vmax.f32 %v2862, 0.0
        %v2938 = vmax.f32 %v2414, 0.0
        %v2939 = vmax.f32 %v2416, 0.0
        %v2940 = vmax.f32 %v2866, 0.0
        %v2941 = vmax.f32 %v2868, 0.0
        %v2942 = vmax.f32 %v2418, 0.0
        %v2943 = vmax.f32 %v2420, 0.0
        %v2944 = vmax.f32 %v2870, 0.0
        %v2945 = vmax.f32 %v2872, 0.0
        %v2946 = vmax.f32 %v2424, 0.0
        %v2947 = vmax.f32 %v2426, 0.0
        %v2948 = vmax.f32 %v2876, 0.0
        %v2949 = vmax.f32 %v2878, 0.0
        %v2950 = vmax.f32 %v2428, 0.0
        %v2951 = vmax.f32 %v2430, 0.0
        %v2952 = vmax.f32 %v2880, 0.0
        %v2953 = vmax.f32 %v2882, 0.0
        %v2954 = vmax.f32 %v2434, 0.0
        %v2955 = vmax.f32 %v2436, 0.0
        %v2956 = vmax.f32 %v2886, 0.0
        %v2957 = vmax.f32 %v2888, 0.0
        %v2958 = vmax.f32 %v2438, 0.0
        %v2959 = vmax.f32 %v2440, 0.0
        %v2960 = vmax.f32 %v2890, 0.0
        %v2961 = vmax.f32 %v2892, 0.0
        %v2962 = vmax.f32 %v2444, 0.0
        %v2963 = vmax.f32 %v2446, 0.0
        %v2964 = vmax.f32 %v2896, 0.0
        %v2965 = vmax.f32 %v2898, 0.0
        %v2966 = vmax.f32 %v2448, 0.0
        %v2967 = vmax.f32 %v2450, 0.0
        %v2968 = vmax.f32 %v2900, 0.0
        %v2969 = vmax.f32 %v2902, 0.0
        %v2970 = vmax.f32 %v2454, 0.0
        %v2971 = vmax.f32 %v2456, 0.0
        %v2972 = vmax.f32 %v2906, 0.0
        %v2973 = vmax.f32 %v2908, 0.0
        %v2974 = vmax.f32 %v2458, 0.0
        %v2975 = vmax.f32 %v2460, 0.0
        %v2976 = vmax.f32 %v2910, 0.0
        %v2977 = vmax.f32 %v2912, 0.0
        %v2978 = vpack.c.bf16 %v2918, %v2914
        %v2979 = vpack.c.bf16 %v2919, %v2915
        %v2980 = vpack.c.bf16 %v2920, %v2916
        %v2981 = vpack.c.bf16 %v2921, %v2917
        %v2982 = vpack.c.bf16 %v2926, %v2922
        %v2983 = vpack.c.bf16 %v2927, %v2923
        %v2984 = vpack.c.bf16 %v2928, %v2924
        %v2985 = vpack.c.bf16 %v2929, %v2925
        %v2986 = vpack.c.bf16 %v2934, %v2930
        %v2987 = vpack.c.bf16 %v2935, %v2931
        %v2988 = vpack.c.bf16 %v2936, %v2932
        %v2989 = vpack.c.bf16 %v2937, %v2933
        %v2990 = vpack.c.bf16 %v2942, %v2938
        %v2991 = vpack.c.bf16 %v2943, %v2939
        %v2992 = vpack.c.bf16 %v2944, %v2940
        %v2993 = vpack.c.bf16 %v2945, %v2941
        %v2994 = vpack.c.bf16 %v2950, %v2946
        %v2995 = vpack.c.bf16 %v2951, %v2947
        %v2996 = vpack.c.bf16 %v2952, %v2948
        %v2997 = vpack.c.bf16 %v2953, %v2949
        %v2998 = vpack.c.bf16 %v2958, %v2954
        %v2999 = vpack.c.bf16 %v2959, %v2955
        %v3000 = vpack.c.bf16 %v2960, %v2956
        %v3001 = vpack.c.bf16 %v2961, %v2957
        %v3002 = vpack.c.bf16 %v2966, %v2962
        %v3003 = vpack.c.bf16 %v2967, %v2963
        %v3004 = vpack.c.bf16 %v2968, %v2964
        %v3005 = vpack.c.bf16 %v2969, %v2965
        %v3006 = vpack.c.bf16 %v2974, %v2970
        %v3007 = vpack.c.bf16 %v2975, %v2971
        %v3008 = vpack.c.bf16 %v2976, %v2972
        %v3009 = vpack.c.bf16 %v2977, %v2973
        %v3010 = vld [vmem:[#allocation7] sm:$0xff]
        %v3011 = vld [vmem:[#allocation7 + $0x8] sm:$0xff]
        %v3012 = vld [vmem:[#allocation7 + $0x10] sm:$0xff]
        %v3013 = vld [vmem:[#allocation7 + $0x18] sm:$0xff]
        %v3014 = vld [vmem:[#allocation7 + $0x20] sm:$0xff]
        %v3015 = vld [vmem:[#allocation7 + $0x28] sm:$0xff]
        %v3016 = vld [vmem:[#allocation7 + $0x30] sm:$0xff]
        %v3017 = vld [vmem:[#allocation7 + $0x38] sm:$0xff]
        %v3018 = vld [vmem:[#allocation7 + $0x40] sm:$0xff]
        %v3019 = vld [vmem:[#allocation7 + $0x48] sm:$0xff]
        %v3020 = vld [vmem:[#allocation7 + $0x50] sm:$0xff]
        %v3021 = vld [vmem:[#allocation7 + $0x58] sm:$0xff]
        %v3022 = vld [vmem:[#allocation7 + $0x60] sm:$0xff]
        %v3023 = vld [vmem:[#allocation7 + $0x68] sm:$0xff]
        %v3024 = vld [vmem:[#allocation7 + $0x70] sm:$0xff]
        %v3025 = vld [vmem:[#allocation7 + $0x78] sm:$0xff]
        %v3026 = vld [vmem:[#allocation7 + $0x80] sm:$0xff]
        %v3027 = vld [vmem:[#allocation7 + $0x88] sm:$0xff]
        %v3028 = vld [vmem:[#allocation7 + $0x90] sm:$0xff]
        %v3029 = vld [vmem:[#allocation7 + $0x98] sm:$0xff]
        %v3030 = vld [vmem:[#allocation7 + $0xa0] sm:$0xff]
        %v3031 = vld [vmem:[#allocation7 + $0xa8] sm:$0xff]
        %v3032 = vld [vmem:[#allocation7 + $0xb0] sm:$0xff]
        %v3033 = vld [vmem:[#allocation7 + $0xb8] sm:$0xff]
        %v3034 = vld [vmem:[#allocation7 + $0xc0] sm:$0xff]
        %v3035 = vld [vmem:[#allocation7 + $0xc8] sm:$0xff]
        %v3036 = vld [vmem:[#allocation7 + $0xd0] sm:$0xff]
        %v3037 = vld [vmem:[#allocation7 + $0xd8] sm:$0xff]
        %v3038 = vld [vmem:[#allocation7 + $0xe0] sm:$0xff]
        %v3039 = vld [vmem:[#allocation7 + $0xe8] sm:$0xff]
        %v3040 = vld [vmem:[#allocation7 + $0xf0] sm:$0xff]
        %v3041 = vld [vmem:[#allocation7 + $0xf8] sm:$0xff]
        %v3042 = vld [vmem:[#allocation7 + $0x100] sm:$0xff]
        %v3043 = vld [vmem:[#allocation7 + $0x108] sm:$0xff]
        %v3044 = vld [vmem:[#allocation7 + $0x110] sm:$0xff]
        %v3045 = vld [vmem:[#allocation7 + $0x118] sm:$0xff]
        %v3046 = vld [vmem:[#allocation7 + $0x120] sm:$0xff]
        %v3047 = vld [vmem:[#allocation7 + $0x128] sm:$0xff]
        %v3048 = vld [vmem:[#allocation7 + $0x130] sm:$0xff]
        %v3049 = vld [vmem:[#allocation7 + $0x138] sm:$0xff]
        %v3050 = vld [vmem:[#allocation7 + $0x140] sm:$0xff]
        %v3051 = vld [vmem:[#allocation7 + $0x148] sm:$0xff]
        %v3052 = vld [vmem:[#allocation7 + $0x150] sm:$0xff]
        %v3053 = vld [vmem:[#allocation7 + $0x158] sm:$0xff]
        %v3054 = vld [vmem:[#allocation7 + $0x160] sm:$0xff]
        %v3055 = vld [vmem:[#allocation7 + $0x168] sm:$0xff]
        %v3056 = vld [vmem:[#allocation7 + $0x170] sm:$0xff]
        %v3057 = vld [vmem:[#allocation7 + $0x178] sm:$0xff]
        %v3058 = vld [vmem:[#allocation7 + $0x180] sm:$0xff]
        %v3059 = vld [vmem:[#allocation7 + $0x188] sm:$0xff]
        %v3060 = vld [vmem:[#allocation7 + $0x190] sm:$0xff]
        %v3061 = vld [vmem:[#allocation7 + $0x198] sm:$0xff]
        %v3062 = vld [vmem:[#allocation7 + $0x1a0] sm:$0xff]
        %v3063 = vld [vmem:[#allocation7 + $0x1a8] sm:$0xff]
        %v3064 = vld [vmem:[#allocation7 + $0x1b0] sm:$0xff]
        %v3065 = vld [vmem:[#allocation7 + $0x1b8] sm:$0xff]
        %v3066 = vld [vmem:[#allocation7 + $0x1c0] sm:$0xff]
        %v3067 = vld [vmem:[#allocation7 + $0x1c8] sm:$0xff]
        %v3068 = vld [vmem:[#allocation7 + $0x1d0] sm:$0xff]
        %v3069 = vld [vmem:[#allocation7 + $0x1d8] sm:$0xff]
        %v3070 = vld [vmem:[#allocation7 + $0x1e0] sm:$0xff]
        %v3071 = vld [vmem:[#allocation7 + $0x1e8] sm:$0xff]
        %v3072 = vld [vmem:[#allocation7 + $0x1f0] sm:$0xff]
        %v3073 = vld [vmem:[#allocation7 + $0x1f8] sm:$0xff]
        %v3074 = vld [vmem:[#allocation8] sm:$0x3]
        %v3076 = vlaneseq
        %v3077 = vshrl.u32 %v3076, 7
        %v3078 = vsub.s32 0, %v3077
        %v3079 = vrot.slane %v3074, %v3078
        %v3080 = vlaneseq
        %v3081 = vshrl.u32 %v3080, 7
        %v3082 = vsub.s32 1, %v3081
        %v3083 = vrot.slane %v3074, %v3082
        %v3150 = vunpack.c.l.b16 %v3010
        %v3151 = vunpack.c.h.b16 %v3010
        %v3152 = vunpack.c.l.b16 %v3011
        %v3153 = vunpack.c.h.b16 %v3011
        %v3154 = vunpack.c.l.b16 %v3012
        %v3155 = vunpack.c.h.b16 %v3012
        %v3156 = vunpack.c.l.b16 %v3013
        %v3157 = vunpack.c.h.b16 %v3013
        %v3158 = vunpack.c.l.b16 %v3014
        %v3159 = vunpack.c.h.b16 %v3014
        %v3160 = vunpack.c.l.b16 %v3015
        %v3161 = vunpack.c.h.b16 %v3015
        %v3162 = vunpack.c.l.b16 %v3016
        %v3163 = vunpack.c.h.b16 %v3016
        %v3164 = vunpack.c.l.b16 %v3017
        %v3165 = vunpack.c.h.b16 %v3017
        %v3166 = vunpack.c.l.b16 %v3018
        %v3167 = vunpack.c.h.b16 %v3018
        %v3168 = vunpack.c.l.b16 %v3019
        %v3169 = vunpack.c.h.b16 %v3019
        %v3170 = vunpack.c.l.b16 %v3020
        %v3171 = vunpack.c.h.b16 %v3020
        %v3172 = vunpack.c.l.b16 %v3021
        %v3173 = vunpack.c.h.b16 %v3021
        %v3174 = vunpack.c.l.b16 %v3022
        %v3175 = vunpack.c.h.b16 %v3022
        %v3176 = vunpack.c.l.b16 %v3023
        %v3177 = vunpack.c.h.b16 %v3023
        %v3178 = vunpack.c.l.b16 %v3024
        %v3179 = vunpack.c.h.b16 %v3024
        %v3180 = vunpack.c.l.b16 %v3025
        %v3181 = vunpack.c.h.b16 %v3025
        %v3182 = vunpack.c.l.b16 %v3026
        %v3183 = vunpack.c.h.b16 %v3026
        %v3184 = vunpack.c.l.b16 %v3027
        %v3185 = vunpack.c.h.b16 %v3027
        %v3186 = vunpack.c.l.b16 %v3028
        %v3187 = vunpack.c.h.b16 %v3028
        %v3188 = vunpack.c.l.b16 %v3029
        %v3189 = vunpack.c.h.b16 %v3029
        %v3190 = vunpack.c.l.b16 %v3030
        %v3191 = vunpack.c.h.b16 %v3030
        %v3192 = vunpack.c.l.b16 %v3031
        %v3193 = vunpack.c.h.b16 %v3031
        %v3194 = vunpack.c.l.b16 %v3032
        %v3195 = vunpack.c.h.b16 %v3032
        %v3196 = vunpack.c.l.b16 %v3033
        %v3197 = vunpack.c.h.b16 %v3033
        %v3198 = vunpack.c.l.b16 %v3034
        %v3199 = vunpack.c.h.b16 %v3034
        %v3200 = vunpack.c.l.b16 %v3035
        %v3201 = vunpack.c.h.b16 %v3035
        %v3202 = vunpack.c.l.b16 %v3036
        %v3203 = vunpack.c.h.b16 %v3036
        %v3204 = vunpack.c.l.b16 %v3037
        %v3205 = vunpack.c.h.b16 %v3037
        %v3206 = vunpack.c.l.b16 %v3038
        %v3207 = vunpack.c.h.b16 %v3038
        %v3208 = vunpack.c.l.b16 %v3039
        %v3209 = vunpack.c.h.b16 %v3039
        %v3210 = vunpack.c.l.b16 %v3040
        %v3211 = vunpack.c.h.b16 %v3040
        %v3212 = vunpack.c.l.b16 %v3041
        %v3213 = vunpack.c.h.b16 %v3041
        %v3214 = vunpack.c.l.b16 %v3042
        %v3215 = vunpack.c.h.b16 %v3042
        %v3216 = vunpack.c.l.b16 %v3043
        %v3217 = vunpack.c.h.b16 %v3043
        %v3218 = vunpack.c.l.b16 %v3044
        %v3219 = vunpack.c.h.b16 %v3044
        %v3220 = vunpack.c.l.b16 %v3045
        %v3221 = vunpack.c.h.b16 %v3045
        %v3222 = vunpack.c.l.b16 %v3046
        %v3223 = vunpack.c.h.b16 %v3046
        %v3224 = vunpack.c.l.b16 %v3047
        %v3225 = vunpack.c.h.b16 %v3047
        %v3226 = vunpack.c.l.b16 %v3048
        %v3227 = vunpack.c.h.b16 %v3048
        %v3228 = vunpack.c.l.b16 %v3049
        %v3229 = vunpack.c.h.b16 %v3049
        %v3230 = vunpack.c.l.b16 %v3050
        %v3231 = vunpack.c.h.b16 %v3050
        %v3232 = vunpack.c.l.b16 %v3051
        %v3233 = vunpack.c.h.b16 %v3051
        %v3234 = vunpack.c.l.b16 %v3052
        %v3235 = vunpack.c.h.b16 %v3052
        %v3236 = vunpack.c.l.b16 %v3053
        %v3237 = vunpack.c.h.b16 %v3053
        %v3238 = vunpack.c.l.b16 %v3054
        %v3239 = vunpack.c.h.b16 %v3054
        %v3240 = vunpack.c.l.b16 %v3055
        %v3241 = vunpack.c.h.b16 %v3055
        %v3242 = vunpack.c.l.b16 %v3056
        %v3243 = vunpack.c.h.b16 %v3056
        %v3244 = vunpack.c.l.b16 %v3057
        %v3245 = vunpack.c.h.b16 %v3057
        %v3246 = vunpack.c.l.b16 %v3058
        %v3247 = vunpack.c.h.b16 %v3058
        %v3248 = vunpack.c.l.b16 %v3059
        %v3249 = vunpack.c.h.b16 %v3059
        %v3250 = vunpack.c.l.b16 %v3060
        %v3251 = vunpack.c.h.b16 %v3060
        %v3252 = vunpack.c.l.b16 %v3061
        %v3253 = vunpack.c.h.b16 %v3061
        %v3254 = vunpack.c.l.b16 %v3062
        %v3255 = vunpack.c.h.b16 %v3062
        %v3256 = vunpack.c.l.b16 %v3063
        %v3257 = vunpack.c.h.b16 %v3063
        %v3258 = vunpack.c.l.b16 %v3064
        %v3259 = vunpack.c.h.b16 %v3064
        %v3260 = vunpack.c.l.b16 %v3065
        %v3261 = vunpack.c.h.b16 %v3065
        %v3262 = vunpack.c.l.b16 %v3066
        %v3263 = vunpack.c.h.b16 %v3066
        %v3264 = vunpack.c.l.b16 %v3067
        %v3265 = vunpack.c.h.b16 %v3067
        %v3266 = vunpack.c.l.b16 %v3068
        %v3267 = vunpack.c.h.b16 %v3068
        %v3268 = vunpack.c.l.b16 %v3069
        %v3269 = vunpack.c.h.b16 %v3069
        %v3270 = vunpack.c.l.b16 %v3070
        %v3271 = vunpack.c.h.b16 %v3070
        %v3272 = vunpack.c.l.b16 %v3071
        %v3273 = vunpack.c.h.b16 %v3071
        %v3274 = vunpack.c.l.b16 %v3072
        %v3275 = vunpack.c.h.b16 %v3072
        %v3276 = vunpack.c.l.b16 %v3073
        %v3277 = vunpack.c.h.b16 %v3073
        %v3278 = vpack.c.b16 %v3152, %v3150
        %v3279 = vpack.c.b16 %v3153, %v3151
        %v3280 = vpack.c.b16 %v3156, %v3154
        %v3281 = vpack.c.b16 %v3157, %v3155
        %v3282 = vpack.c.b16 %v3160, %v3158
        %v3283 = vpack.c.b16 %v3161, %v3159
        %v3284 = vpack.c.b16 %v3164, %v3162
        %v3285 = vpack.c.b16 %v3165, %v3163
        %v3286 = vpack.c.b16 %v3168, %v3166
        %v3287 = vpack.c.b16 %v3169, %v3167
        %v3288 = vpack.c.b16 %v3172, %v3170
        %v3289 = vpack.c.b16 %v3173, %v3171
        %v3290 = vpack.c.b16 %v3176, %v3174
        %v3291 = vpack.c.b16 %v3177, %v3175
        %v3292 = vpack.c.b16 %v3180, %v3178
        %v3293 = vpack.c.b16 %v3181, %v3179
        %v3294 = vpack.c.b16 %v3184, %v3182
        %v3295 = vpack.c.b16 %v3185, %v3183
        %v3296 = vpack.c.b16 %v3188, %v3186
        %v3297 = vpack.c.b16 %v3189, %v3187
        %v3298 = vpack.c.b16 %v3192, %v3190
        %v3299 = vpack.c.b16 %v3193, %v3191
        %v3300 = vpack.c.b16 %v3196, %v3194
        %v3301 = vpack.c.b16 %v3197, %v3195
        %v3302 = vpack.c.b16 %v3200, %v3198
        %v3303 = vpack.c.b16 %v3201, %v3199
        %v3304 = vpack.c.b16 %v3204, %v3202
        %v3305 = vpack.c.b16 %v3205, %v3203
        %v3306 = vpack.c.b16 %v3208, %v3206
        %v3307 = vpack.c.b16 %v3209, %v3207
        %v3308 = vpack.c.b16 %v3212, %v3210
        %v3309 = vpack.c.b16 %v3213, %v3211
        %v3310 = vpack.c.b16 %v3216, %v3214
        %v3311 = vpack.c.b16 %v3217, %v3215
        %v3312 = vpack.c.b16 %v3220, %v3218
        %v3313 = vpack.c.b16 %v3221, %v3219
        %v3314 = vpack.c.b16 %v3224, %v3222
        %v3315 = vpack.c.b16 %v3225, %v3223
        %v3316 = vpack.c.b16 %v3228, %v3226
        %v3317 = vpack.c.b16 %v3229, %v3227
        %v3318 = vpack.c.b16 %v3232, %v3230
        %v3319 = vpack.c.b16 %v3233, %v3231
        %v3320 = vpack.c.b16 %v3236, %v3234
        %v3321 = vpack.c.b16 %v3237, %v3235
        %v3322 = vpack.c.b16 %v3240, %v3238
        %v3323 = vpack.c.b16 %v3241, %v3239
        %v3324 = vpack.c.b16 %v3244, %v3242
        %v3325 = vpack.c.b16 %v3245, %v3243
        %v3326 = vpack.c.b16 %v3248, %v3246
        %v3327 = vpack.c.b16 %v3249, %v3247
        %v3328 = vpack.c.b16 %v3252, %v3250
        %v3329 = vpack.c.b16 %v3253, %v3251
        %v3330 = vpack.c.b16 %v3256, %v3254
        %v3331 = vpack.c.b16 %v3257, %v3255
        %v3332 = vpack.c.b16 %v3260, %v3258
        %v3333 = vpack.c.b16 %v3261, %v3259
        %v3334 = vpack.c.b16 %v3264, %v3262
        %v3335 = vpack.c.b16 %v3265, %v3263
        %v3336 = vpack.c.b16 %v3268, %v3266
        %v3337 = vpack.c.b16 %v3269, %v3267
        %v3338 = vpack.c.b16 %v3272, %v3270
        %v3339 = vpack.c.b16 %v3273, %v3271
        %v3340 = vpack.c.b16 %v3276, %v3274
        %v3341 = vpack.c.b16 %v3277, %v3275
        %3406 = vmatprep.subr.bf16.mxu0 %v3279
        %3407 = vmatpush1.bf16.msra.mxu0 %v3278
        %3408 = vmatprep.subr.bf16.mxu0 %v3281
        %3409 = vmatpush1.bf16.msra.mxu0 %v3280
        %3410 = vmatprep.subr.bf16.mxu0 %v3283
        %3411 = vmatpush1.bf16.msra.mxu0 %v3282
        %3412 = vmatprep.subr.bf16.mxu0 %v3285
        %3413 = vmatpush1.bf16.msra.mxu0 %v3284
        %3414 = vmatprep.subr.bf16.mxu0 %v3287
        %3415 = vmatpush1.bf16.msra.mxu0 %v3286
        %3416 = vmatprep.subr.bf16.mxu0 %v3289
        %3417 = vmatpush1.bf16.msra.mxu0 %v3288
        %3418 = vmatprep.subr.bf16.mxu0 %v3291
        %3419 = vmatpush1.bf16.msra.mxu0 %v3290
        %3420 = vmatprep.subr.bf16.mxu0 %v3293
        %3421 = vmatpush1.bf16.msra.mxu0 %v3292
        %3422 = vmatprep.subr.bf16.mxu0 %v3295
        %3423 = vmatpush1.bf16.msra.mxu0 %v3294
        %3424 = vmatprep.subr.bf16.mxu0 %v3297
        %3425 = vmatpush1.bf16.msra.mxu0 %v3296
        %3426 = vmatprep.subr.bf16.mxu0 %v3299
        %3427 = vmatpush1.bf16.msra.mxu0 %v3298
        %3428 = vmatprep.subr.bf16.mxu0 %v3301
        %3429 = vmatpush1.bf16.msra.mxu0 %v3300
        %3430 = vmatprep.subr.bf16.mxu0 %v3303
        %3431 = vmatpush1.bf16.msra.mxu0 %v3302
        %3432 = vmatprep.subr.bf16.mxu0 %v3305
        %3433 = vmatpush1.bf16.msra.mxu0 %v3304
        %3434 = vmatprep.subr.bf16.mxu0 %v3307
        %3435 = vmatpush1.bf16.msra.mxu0 %v3306
        %3436 = vmatprep.subr.bf16.mxu0 %v3309
        %3437 = vmatpush1.bf16.msra.mxu0 %v3308
        %3438 = vmatprep.mubr.bf16.mxu0 %v2979
        %3439 = vmatmul.mubr.bf16.gmra.mrb[0].mxu0 %v2978
        %v3440 = vpop.f32.mrb[0].mxu0
        %v3441 = vadd.f32 %v3079, %v3440
        %v3442 = vpop.f32.mrb[0].mxu0
        %v3443 = vadd.f32 %v3083, %v3442
        %v3444 = vpop.f32.mrb[0].mxu0
        %v3445 = vadd.f32 %v3079, %v3444
        %v3446 = vpop.f32.mrb[0].mxu0
        %v3447 = vadd.f32 %v3083, %v3446
        %3448 = vmatprep.mubr.bf16.mxu0 %v2983
        %3449 = vmatmul.mubr.bf16.gmra.mrb[0].mxu0 %v2982
        %v3450 = vpop.f32.mrb[0].mxu0
        %v3451 = vadd.f32 %v3079, %v3450
        %v3452 = vpop.f32.mrb[0].mxu0
        %v3453 = vadd.f32 %v3083, %v3452
        %v3454 = vpop.f32.mrb[0].mxu0
        %v3455 = vadd.f32 %v3079, %v3454
        %v3456 = vpop.f32.mrb[0].mxu0
        %v3457 = vadd.f32 %v3083, %v3456
        %3458 = vmatprep.mubr.bf16.mxu0 %v2987
        %3459 = vmatmul.mubr.bf16.gmra.mrb[0].mxu0 %v2986
        %v3460 = vpop.f32.mrb[0].mxu0
        %v3461 = vadd.f32 %v3079, %v3460
        %v3462 = vpop.f32.mrb[0].mxu0
        %v3463 = vadd.f32 %v3083, %v3462
        %v3464 = vpop.f32.mrb[0].mxu0
        %v3465 = vadd.f32 %v3079, %v3464
        %v3466 = vpop.f32.mrb[0].mxu0
        %v3467 = vadd.f32 %v3083, %v3466
        %3468 = vmatprep.mubr.bf16.mxu0 %v2991
        %3469 = vmatmul.mubr.bf16.gmra.mrb[0].mxu0 %v2990
        %v3470 = vpop.f32.mrb[0].mxu0
        %v3471 = vadd.f32 %v3079, %v3470
        %v3472 = vpop.f32.mrb[0].mxu0
        %v3473 = vadd.f32 %v3083, %v3472
        %v3474 = vpop.f32.mrb[0].mxu0
        %v3475 = vadd.f32 %v3079, %v3474
        %v3476 = vpop.f32.mrb[0].mxu0
        %v3477 = vadd.f32 %v3083, %v3476
        %3478 = vmatprep.mubr.bf16.mxu0 %v2995
        %3479 = vmatmul.mubr.bf16.gmra.mrb[0].mxu0 %v2994
        %v3480 = vpop.f32.mrb[0].mxu0
        %v3481 = vadd.f32 %v3079, %v3480
        %v3482 = vpop.f32.mrb[0].mxu0
        %v3483 = vadd.f32 %v3083, %v3482
        %v3484 = vpop.f32.mrb[0].mxu0
        %v3485 = vadd.f32 %v3079, %v3484
        %v3486 = vpop.f32.mrb[0].mxu0
        %v3487 = vadd.f32 %v3083, %v3486
        %3488 = vmatprep.mubr.bf16.mxu0 %v2999
        %3489 = vmatmul.mubr.bf16.gmra.mrb[0].mxu0 %v2998
        %v3490 = vpop.f32.mrb[0].mxu0
        %v3491 = vadd.f32 %v3079, %v3490
        %v3492 = vpop.f32.mrb[0].mxu0
        %v3493 = vadd.f32 %v3083, %v3492
        %v3494 = vpop.f32.mrb[0].mxu0
        %v3495 = vadd.f32 %v3079, %v3494
        %v3496 = vpop.f32.mrb[0].mxu0
        %v3497 = vadd.f32 %v3083, %v3496
        %3498 = vmatprep.mubr.bf16.mxu0 %v3003
        %3499 = vmatmul.mubr.bf16.gmra.mrb[0].mxu0 %v3002
        %v3500 = vpop.f32.mrb[0].mxu0
        %v3501 = vadd.f32 %v3079, %v3500
        %v3502 = vpop.f32.mrb[0].mxu0
        %v3503 = vadd.f32 %v3083, %v3502
        %v3504 = vpop.f32.mrb[0].mxu0
        %v3505 = vadd.f32 %v3079, %v3504
        %v3506 = vpop.f32.mrb[0].mxu0
        %v3507 = vadd.f32 %v3083, %v3506
        %3508 = vmatprep.mubr.bf16.mxu0 %v3007
        %3509 = vmatmul.mubr.bf16.gmra.mrb[0].mxu0 %v3006
        %v3510 = vpop.f32.mrb[0].mxu0
        %v3511 = vadd.f32 %v3079, %v3510
        %v3512 = vpop.f32.mrb[0].mxu0
        %v3513 = vadd.f32 %v3083, %v3512
        %v3514 = vpop.f32.mrb[0].mxu0
        %v3515 = vadd.f32 %v3079, %v3514
        %v3516 = vpop.f32.mrb[0].mxu0
        %v3517 = vadd.f32 %v3083, %v3516
        %3518 = vdwg.mxu0
        %3519 = vmatprep.subr.bf16.mxu0 %v3311
        %3520 = vmatpush1.bf16.msra.mxu0 %v3310
        %3521 = vmatprep.subr.bf16.mxu0 %v3313
        %3522 = vmatpush1.bf16.msra.mxu0 %v3312
        %3523 = vmatprep.subr.bf16.mxu0 %v3315
        %3524 = vmatpush1.bf16.msra.mxu0 %v3314
        %3525 = vmatprep.subr.bf16.mxu0 %v3317
        %3526 = vmatpush1.bf16.msra.mxu0 %v3316
        %3527 = vmatprep.subr.bf16.mxu0 %v3319
        %3528 = vmatpush1.bf16.msra.mxu0 %v3318
        %3529 = vmatprep.subr.bf16.mxu0 %v3321
        %3530 = vmatpush1.bf16.msra.mxu0 %v3320
        %3531 = vmatprep.subr.bf16.mxu0 %v3323
        %3532 = vmatpush1.bf16.msra.mxu0 %v3322
        %3533 = vmatprep.subr.bf16.mxu0 %v3325
        %3534 = vmatpush1.bf16.msra.mxu0 %v3324
        %3535 = vmatprep.subr.bf16.mxu0 %v3327
        %3536 = vmatpush1.bf16.msra.mxu0 %v3326
        %3537 = vmatprep.subr.bf16.mxu0 %v3329
        %3538 = vmatpush1.bf16.msra.mxu0 %v3328
        %3539 = vmatprep.subr.bf16.mxu0 %v3331
        %3540 = vmatpush1.bf16.msra.mxu0 %v3330
        %3541 = vmatprep.subr.bf16.mxu0 %v3333
        %3542 = vmatpush1.bf16.msra.mxu0 %v3332
        %3543 = vmatprep.subr.bf16.mxu0 %v3335
        %3544 = vmatpush1.bf16.msra.mxu0 %v3334
        %3545 = vmatprep.subr.bf16.mxu0 %v3337
        %3546 = vmatpush1.bf16.msra.mxu0 %v3336
        %3547 = vmatprep.subr.bf16.mxu0 %v3339
        %3548 = vmatpush1.bf16.msra.mxu0 %v3338
        %3549 = vmatprep.subr.bf16.mxu0 %v3341
        %3550 = vmatpush1.bf16.msra.mxu0 %v3340
        %3551 = vmatprep.mubr.bf16.mxu0 %v2981
        %3552 = vmatmul.mubr.bf16.gmra.mrb[0].mxu0 %v2980
        %v3553 = vpop.f32.mrb[0].mxu0
        %v3554 = vadd.f32 %v3441, %v3553
        %v3555 = vpop.f32.mrb[0].mxu0
        %v3556 = vadd.f32 %v3443, %v3555
        %v3557 = vpop.f32.mrb[0].mxu0
        %v3558 = vadd.f32 %v3445, %v3557
        %v3559 = vpop.f32.mrb[0].mxu0
        %v3560 = vadd.f32 %v3447, %v3559
        %3561 = vmatprep.mubr.bf16.mxu0 %v2985
        %3562 = vmatmul.mubr.bf16.gmra.mrb[0].mxu0 %v2984
        %v3563 = vpop.f32.mrb[0].mxu0
        %v3564 = vadd.f32 %v3451, %v3563
        %v3565 = vpop.f32.mrb[0].mxu0
        %v3566 = vadd.f32 %v3453, %v3565
        %v3567 = vpop.f32.mrb[0].mxu0
        %v3568 = vadd.f32 %v3455, %v3567
        %v3569 = vpop.f32.mrb[0].mxu0
        %v3570 = vadd.f32 %v3457, %v3569
        %3571 = vmatprep.mubr.bf16.mxu0 %v2989
        %3572 = vmatmul.mubr.bf16.gmra.mrb[0].mxu0 %v2988
        %v3573 = vpop.f32.mrb[0].mxu0
        %v3574 = vadd.f32 %v3461, %v3573
        %v3575 = vpop.f32.mrb[0].mxu0
        %v3576 = vadd.f32 %v3463, %v3575
        %v3577 = vpop.f32.mrb[0].mxu0
        %v3578 = vadd.f32 %v3465, %v3577
        %v3579 = vpop.f32.mrb[0].mxu0
        %v3580 = vadd.f32 %v3467, %v3579
        %3581 = vmatprep.mubr.bf16.mxu0 %v2993
        %3582 = vmatmul.mubr.bf16.gmra.mrb[0].mxu0 %v2992
        %v3583 = vpop.f32.mrb[0].mxu0
        %v3584 = vadd.f32 %v3471, %v3583
        %v3585 = vpop.f32.mrb[0].mxu0
        %v3586 = vadd.f32 %v3473, %v3585
        %v3587 = vpop.f32.mrb[0].mxu0
        %v3588 = vadd.f32 %v3475, %v3587
        %v3589 = vpop.f32.mrb[0].mxu0
        %v3590 = vadd.f32 %v3477, %v3589
        %3591 = vmatprep.mubr.bf16.mxu0 %v2997
        %3592 = vmatmul.mubr.bf16.gmra.mrb[0].mxu0 %v2996
        %v3593 = vpop.f32.mrb[0].mxu0
        %v3594 = vadd.f32 %v3481, %v3593
        %v3595 = vpop.f32.mrb[0].mxu0
        %v3596 = vadd.f32 %v3483, %v3595
        %v3597 = vpop.f32.mrb[0].mxu0
        %v3598 = vadd.f32 %v3485, %v3597
        %v3599 = vpop.f32.mrb[0].mxu0
        %v3600 = vadd.f32 %v3487, %v3599
        %3601 = vmatprep.mubr.bf16.mxu0 %v3001
        %3602 = vmatmul.mubr.bf16.gmra.mrb[0].mxu0 %v3000
        %v3603 = vpop.f32.mrb[0].mxu0
        %v3604 = vadd.f32 %v3491, %v3603
        %v3605 = vpop.f32.mrb[0].mxu0
        %v3606 = vadd.f32 %v3493, %v3605
        %v3607 = vpop.f32.mrb[0].mxu0
        %v3608 = vadd.f32 %v3495, %v3607
        %v3609 = vpop.f32.mrb[0].mxu0
        %v3610 = vadd.f32 %v3497, %v3609
        %3611 = vmatprep.mubr.bf16.mxu0 %v3005
        %3612 = vmatmul.mubr.bf16.gmra.mrb[0].mxu0 %v3004
        %v3613 = vpop.f32.mrb[0].mxu0
        %v3614 = vadd.f32 %v3501, %v3613
        %v3615 = vpop.f32.mrb[0].mxu0
        %v3616 = vadd.f32 %v3503, %v3615
        %v3617 = vpop.f32.mrb[0].mxu0
        %v3618 = vadd.f32 %v3505, %v3617
        %v3619 = vpop.f32.mrb[0].mxu0
        %v3620 = vadd.f32 %v3507, %v3619
        %3621 = vmatprep.mubr.bf16.mxu0 %v3009
        %3622 = vmatmul.mubr.bf16.gmra.mrb[0].mxu0 %v3008
        %v3623 = vpop.f32.mrb[0].mxu0
        %v3624 = vadd.f32 %v3511, %v3623
        %v3625 = vpop.f32.mrb[0].mxu0
        %v3626 = vadd.f32 %v3513, %v3625
        %v3627 = vpop.f32.mrb[0].mxu0
        %v3628 = vadd.f32 %v3515, %v3627
        %v3629 = vpop.f32.mrb[0].mxu0
        %v3630 = vadd.f32 %v3517, %v3629
        %3631 = vdwg.mxu0
        %v3632 = vmax.f32 %v3554, 0.0
        %v3633 = vmax.f32 %v3556, 0.0
        %v3634 = vmax.f32 %v3558, 0.0
        %v3635 = vmax.f32 %v3560, 0.0
        %v3636 = vmax.f32 %v3564, 0.0
        %v3637 = vmax.f32 %v3566, 0.0
        %v3638 = vmax.f32 %v3568, 0.0
        %v3639 = vmax.f32 %v3570, 0.0
        %v3640 = vmax.f32 %v3574, 0.0
        %v3641 = vmax.f32 %v3576, 0.0
        %v3642 = vmax.f32 %v3578, 0.0
        %v3643 = vmax.f32 %v3580, 0.0
        %v3644 = vmax.f32 %v3584, 0.0
        %v3645 = vmax.f32 %v3586, 0.0
        %v3646 = vmax.f32 %v3588, 0.0
        %v3647 = vmax.f32 %v3590, 0.0
        %v3648 = vmax.f32 %v3594, 0.0
        %v3649 = vmax.f32 %v3596, 0.0
        %v3650 = vmax.f32 %v3598, 0.0
        %v3651 = vmax.f32 %v3600, 0.0
        %v3652 = vmax.f32 %v3604, 0.0
        %v3653 = vmax.f32 %v3606, 0.0
        %v3654 = vmax.f32 %v3608, 0.0
        %v3655 = vmax.f32 %v3610, 0.0
        %v3656 = vmax.f32 %v3614, 0.0
        %v3657 = vmax.f32 %v3616, 0.0
        %v3658 = vmax.f32 %v3618, 0.0
        %v3659 = vmax.f32 %v3620, 0.0
        %v3660 = vmax.f32 %v3624, 0.0
        %v3661 = vmax.f32 %v3626, 0.0
        %v3662 = vmax.f32 %v3628, 0.0
        %v3663 = vmax.f32 %v3630, 0.0
        %v3664 = vpack.c.bf16 %v3634, %v3632
        %v3665 = vpack.c.bf16 %v3635, %v3633
        %v3666 = vpack.c.bf16 %v3638, %v3636
        %v3667 = vpack.c.bf16 %v3639, %v3637
        %v3668 = vpack.c.bf16 %v3642, %v3640
        %v3669 = vpack.c.bf16 %v3643, %v3641
        %v3670 = vpack.c.bf16 %v3646, %v3644
        %v3671 = vpack.c.bf16 %v3647, %v3645
        %v3672 = vpack.c.bf16 %v3650, %v3648
        %v3673 = vpack.c.bf16 %v3651, %v3649
        %v3674 = vpack.c.bf16 %v3654, %v3652
        %v3675 = vpack.c.bf16 %v3655, %v3653
        %v3676 = vpack.c.bf16 %v3658, %v3656
        %v3677 = vpack.c.bf16 %v3659, %v3657
        %v3678 = vpack.c.bf16 %v3662, %v3660
        %v3679 = vpack.c.bf16 %v3663, %v3661
        %v3680 = vld [vmem:[#allocation10] sm:$0xf]
        %v3681 = vld [vmem:[#allocation10 + $0x4] sm:$0xf]
        %v3682 = vld [vmem:[#allocation10 + $0x8] sm:$0xf]
        %v3683 = vld [vmem:[#allocation10 + $0xc] sm:$0xf]
        %v3684 = vld [vmem:[#allocation10 + $0x10] sm:$0xf]
        %v3685 = vld [vmem:[#allocation10 + $0x14] sm:$0xf]
        %v3686 = vld [vmem:[#allocation10 + $0x18] sm:$0xf]
        %v3687 = vld [vmem:[#allocation10 + $0x1c] sm:$0xf]
        %v3688 = vld [vmem:[#allocation10 + $0x20] sm:$0xf]
        %v3689 = vld [vmem:[#allocation10 + $0x24] sm:$0xf]
        %v3690 = vld [vmem:[#allocation10 + $0x28] sm:$0xf]
        %v3691 = vld [vmem:[#allocation10 + $0x2c] sm:$0xf]
        %v3692 = vld [vmem:[#allocation10 + $0x30] sm:$0xf]
        %v3693 = vld [vmem:[#allocation10 + $0x34] sm:$0xf]
        %v3694 = vld [vmem:[#allocation10 + $0x38] sm:$0xf]
        %v3695 = vld [vmem:[#allocation10 + $0x3c] sm:$0xf]
        %v3696 = vld [vmem:[#allocation10 + $0x40] sm:$0xf]
        %v3697 = vld [vmem:[#allocation10 + $0x44] sm:$0xf]
        %v3698 = vld [vmem:[#allocation10 + $0x48] sm:$0xf]
        %v3699 = vld [vmem:[#allocation10 + $0x4c] sm:$0xf]
        %v3700 = vld [vmem:[#allocation10 + $0x50] sm:$0xf]
        %v3701 = vld [vmem:[#allocation10 + $0x54] sm:$0xf]
        %v3702 = vld [vmem:[#allocation10 + $0x58] sm:$0xf]
        %v3703 = vld [vmem:[#allocation10 + $0x5c] sm:$0xf]
        %v3704 = vld [vmem:[#allocation10 + $0x60] sm:$0xf]
        %v3705 = vld [vmem:[#allocation10 + $0x64] sm:$0xf]
        %v3706 = vld [vmem:[#allocation10 + $0x68] sm:$0xf]
        %v3707 = vld [vmem:[#allocation10 + $0x6c] sm:$0xf]
        %v3708 = vld [vmem:[#allocation10 + $0x70] sm:$0xf]
        %v3709 = vld [vmem:[#allocation10 + $0x74] sm:$0xf]
        %v3710 = vld [vmem:[#allocation10 + $0x78] sm:$0xf]
        %v3711 = vld [vmem:[#allocation10 + $0x7c] sm:$0xf]
        %v3712 = vld [vmem:[%s6] sm:$0x1]
        %v3714 = vlaneseq
        %v3715 = vshrl.u32 %v3714, 7
        %v3716 = vsub.s32 0, %v3715
        %v3717 = vrot.slane %v3712, %v3716
        %v3751 = vunpack.c.l.b16 %v3680
        %v3752 = vunpack.c.l.b16 %v3681
        %v3753 = vunpack.c.l.b16 %v3682
        %v3754 = vunpack.c.l.b16 %v3683
        %v3755 = vunpack.c.l.b16 %v3684
        %v3756 = vunpack.c.l.b16 %v3685
        %v3757 = vunpack.c.l.b16 %v3686
        %v3758 = vunpack.c.l.b16 %v3687
        %v3759 = vunpack.c.l.b16 %v3688
        %v3760 = vunpack.c.l.b16 %v3689
        %v3761 = vunpack.c.l.b16 %v3690
        %v3762 = vunpack.c.l.b16 %v3691
        %v3763 = vunpack.c.l.b16 %v3692
        %v3764 = vunpack.c.l.b16 %v3693
        %v3765 = vunpack.c.l.b16 %v3694
        %v3766 = vunpack.c.l.b16 %v3695
        %v3767 = vunpack.c.l.b16 %v3696
        %v3768 = vunpack.c.l.b16 %v3697
        %v3769 = vunpack.c.l.b16 %v3698
        %v3770 = vunpack.c.l.b16 %v3699
        %v3771 = vunpack.c.l.b16 %v3700
        %v3772 = vunpack.c.l.b16 %v3701
        %v3773 = vunpack.c.l.b16 %v3702
        %v3774 = vunpack.c.l.b16 %v3703
        %v3775 = vunpack.c.l.b16 %v3704
        %v3776 = vunpack.c.l.b16 %v3705
        %v3777 = vunpack.c.l.b16 %v3706
        %v3778 = vunpack.c.l.b16 %v3707
        %v3779 = vunpack.c.l.b16 %v3708
        %v3780 = vunpack.c.l.b16 %v3709
        %v3781 = vunpack.c.l.b16 %v3710
        %v3782 = vunpack.c.l.b16 %v3711
        %v3783 = vpack.c.b16 %v3752, %v3751
        %v3784 = vpack.c.b16 %v3754, %v3753
        %v3785 = vpack.c.b16 %v3756, %v3755
        %v3786 = vpack.c.b16 %v3758, %v3757
        %v3787 = vpack.c.b16 %v3760, %v3759
        %v3788 = vpack.c.b16 %v3762, %v3761
        %v3789 = vpack.c.b16 %v3764, %v3763
        %v3790 = vpack.c.b16 %v3766, %v3765
        %v3791 = vpack.c.b16 %v3768, %v3767
        %v3792 = vpack.c.b16 %v3770, %v3769
        %v3793 = vpack.c.b16 %v3772, %v3771
        %v3794 = vpack.c.b16 %v3774, %v3773
        %v3795 = vpack.c.b16 %v3776, %v3775
        %v3796 = vpack.c.b16 %v3778, %v3777
        %v3797 = vpack.c.b16 %v3780, %v3779
        %v3798 = vpack.c.b16 %v3782, %v3781
        %3815 = vmatprep.subr.bf16.mxu0 0
        %3816 = vmatpush1.bf16.msra.mxu0 %v3783
        %3817 = vmatprep.subr.bf16.mxu0 0
        %3818 = vmatpush1.bf16.msra.mxu0 %v3784
        %3819 = vmatprep.subr.bf16.mxu0 0
        %3820 = vmatpush1.bf16.msra.mxu0 %v3785
        %3821 = vmatprep.subr.bf16.mxu0 0
        %3822 = vmatpush1.bf16.msra.mxu0 %v3786
        %3823 = vmatprep.subr.bf16.mxu0 0
        %3824 = vmatpush1.bf16.msra.mxu0 %v3787
        %3825 = vmatprep.subr.bf16.mxu0 0
        %3826 = vmatpush1.bf16.msra.mxu0 %v3788
        %3827 = vmatprep.subr.bf16.mxu0 0
        %3828 = vmatpush1.bf16.msra.mxu0 %v3789
        %3829 = vmatprep.subr.bf16.mxu0 0
        %3830 = vmatpush1.bf16.msra.mxu0 %v3790
        %3831 = vmatprep.subr.bf16.mxu0 0
        %3832 = vmatpush1.bf16.msra.mxu0 %v3791
        %3833 = vmatprep.subr.bf16.mxu0 0
        %3834 = vmatpush1.bf16.msra.mxu0 %v3792
        %3835 = vmatprep.subr.bf16.mxu0 0
        %3836 = vmatpush1.bf16.msra.mxu0 %v3793
        %3837 = vmatprep.subr.bf16.mxu0 0
        %3838 = vmatpush1.bf16.msra.mxu0 %v3794
        %3839 = vmatprep.subr.bf16.mxu0 0
        %3840 = vmatpush1.bf16.msra.mxu0 %v3795
        %3841 = vmatprep.subr.bf16.mxu0 0
        %3842 = vmatpush1.bf16.msra.mxu0 %v3796
        %3843 = vmatprep.subr.bf16.mxu0 0
        %3844 = vmatpush1.bf16.msra.mxu0 %v3797
        %3845 = vmatprep.subr.bf16.mxu0 0
        %3846 = vmatpush1.bf16.msra.mxu0 %v3798
        %3847 = vmatprep.mubr.bf16.mxu0 %v3665
        %3848 = vmatmul.mubr.bf16.gmra.mrb[0].mxu0 %v3664
        %v3849 = vpop.f32.mrb[0].mxu0
        %v3850 = vadd.f32 %v3717, %v3849
        %v3851 = vpop.f32.mrb[0].mxu0
        %v3852 = vpop.f32.mrb[0].mxu0
        %v3853 = vadd.f32 %v3717, %v3852
        %v3854 = vpop.f32.mrb[0].mxu0
        %3855 = vmatprep.mubr.bf16.mxu0 %v3667
        %3856 = vmatmul.mubr.bf16.gmra.mrb[0].mxu0 %v3666
        %v3857 = vpop.f32.mrb[0].mxu0
        %v3858 = vadd.f32 %v3717, %v3857
        %v3859 = vpop.f32.mrb[0].mxu0
        %v3860 = vpop.f32.mrb[0].mxu0
        %v3861 = vadd.f32 %v3717, %v3860
        %v3862 = vpop.f32.mrb[0].mxu0
        %3863 = vmatprep.mubr.bf16.mxu0 %v3669
        %3864 = vmatmul.mubr.bf16.gmra.mrb[0].mxu0 %v3668
        %v3865 = vpop.f32.mrb[0].mxu0
        %v3866 = vadd.f32 %v3717, %v3865
        %v3867 = vpop.f32.mrb[0].mxu0
        %v3868 = vpop.f32.mrb[0].mxu0
        %v3869 = vadd.f32 %v3717, %v3868
        %v3870 = vpop.f32.mrb[0].mxu0
        %3871 = vmatprep.mubr.bf16.mxu0 %v3671
        %3872 = vmatmul.mubr.bf16.gmra.mrb[0].mxu0 %v3670
        %v3873 = vpop.f32.mrb[0].mxu0
        %v3874 = vadd.f32 %v3717, %v3873
        %v3875 = vpop.f32.mrb[0].mxu0
        %v3876 = vpop.f32.mrb[0].mxu0
        %v3877 = vadd.f32 %v3717, %v3876
        %v3878 = vpop.f32.mrb[0].mxu0
        %3879 = vmatprep.mubr.bf16.mxu0 %v3673
        %3880 = vmatmul.mubr.bf16.gmra.mrb[0].mxu0 %v3672
        %v3881 = vpop.f32.mrb[0].mxu0
        %v3882 = vadd.f32 %v3717, %v3881
        %v3883 = vpop.f32.mrb[0].mxu0
        %v3884 = vpop.f32.mrb[0].mxu0
        %v3885 = vadd.f32 %v3717, %v3884
        %v3886 = vpop.f32.mrb[0].mxu0
        %3887 = vmatprep.mubr.bf16.mxu0 %v3675
        %3888 = vmatmul.mubr.bf16.gmra.mrb[0].mxu0 %v3674
        %v3889 = vpop.f32.mrb[0].mxu0
        %v3890 = vadd.f32 %v3717, %v3889
        %v3891 = vpop.f32.mrb[0].mxu0
        %v3892 = vpop.f32.mrb[0].mxu0
        %v3893 = vadd.f32 %v3717, %v3892
        %v3894 = vpop.f32.mrb[0].mxu0
        %3895 = vmatprep.mubr.bf16.mxu0 %v3677
        %3896 = vmatmul.mubr.bf16.gmra.mrb[0].mxu0 %v3676
        %v3897 = vpop.f32.mrb[0].mxu0
        %v3898 = vadd.f32 %v3717, %v3897
        %v3899 = vpop.f32.mrb[0].mxu0
        %v3900 = vpop.f32.mrb[0].mxu0
        %v3901 = vadd.f32 %v3717, %v3900
        %v3902 = vpop.f32.mrb[0].mxu0
        %3903 = vmatprep.mubr.bf16.mxu0 %v3679
        %3904 = vmatmul.mubr.bf16.gmra.mrb[0].mxu0 %v3678
        %v3905 = vpop.f32.mrb[0].mxu0
        %v3906 = vadd.f32 %v3717, %v3905
        %v3907 = vpop.f32.mrb[0].mxu0
        %v3908 = vpop.f32.mrb[0].mxu0
        %v3909 = vadd.f32 %v3717, %v3908
        %v3910 = vpop.f32.mrb[0].mxu0
        %3911 = vdwg.mxu0
        %v3912 = vpack.c.bf16 %v3853, %v3850
        %v3913 = vpack.c.bf16 %v3861, %v3858
        %v3914 = vpack.c.bf16 %v3869, %v3866
        %v3915 = vpack.c.bf16 %v3877, %v3874
        %v3916 = vpack.c.bf16 %v3885, %v3882
        %v3917 = vpack.c.bf16 %v3893, %v3890
        %v3918 = vpack.c.bf16 %v3901, %v3898
        %v3919 = vpack.c.bf16 %v3909, %v3906
        %v3928 = vunpack.c.l.b16 %v3912
        %v3929 = vunpack.c.h.b16 %v3912
        %v3930 = vunpack.c.l.b16 %v3913
        %v3931 = vunpack.c.h.b16 %v3913
        %v3932 = vunpack.c.l.b16 %v3914
        %v3933 = vunpack.c.h.b16 %v3914
        %v3934 = vunpack.c.l.b16 %v3915
        %v3935 = vunpack.c.h.b16 %v3915
        %v3936 = vunpack.c.l.b16 %v3916
        %v3937 = vunpack.c.h.b16 %v3916
        %v3938 = vunpack.c.l.b16 %v3917
        %v3939 = vunpack.c.h.b16 %v3917
        %v3940 = vunpack.c.l.b16 %v3918
        %v3941 = vunpack.c.h.b16 %v3918
        %v3942 = vunpack.c.l.b16 %v3919
        %v3943 = vunpack.c.h.b16 %v3919
        %v3944 = vpack.c.b16 %v3928, %v3928
        %v3945 = vpack.c.b16 %v3929, %v3929
        %v3946 = vpack.c.b16 %v3930, %v3930
        %v3947 = vpack.c.b16 %v3931, %v3931
        %v3948 = vpack.c.b16 %v3932, %v3932
        %v3949 = vpack.c.b16 %v3933, %v3933
        %v3950 = vpack.c.b16 %v3934, %v3934
        %v3951 = vpack.c.b16 %v3935, %v3935
        %v3952 = vpack.c.b16 %v3936, %v3936
        %v3953 = vpack.c.b16 %v3937, %v3937
        %v3954 = vpack.c.b16 %v3938, %v3938
        %v3955 = vpack.c.b16 %v3939, %v3939
        %v3956 = vpack.c.b16 %v3940, %v3940
        %v3957 = vpack.c.b16 %v3941, %v3941
        %v3958 = vpack.c.b16 %v3942, %v3942
        %v3959 = vpack.c.b16 %v3943, %v3943
        %3976 = vst [vmem:[%s593] sm:$0xf] %v3944
        %3977 = vst [vmem:[%s593 + $0x4] sm:$0xf] %v3945
        %3978 = vst [vmem:[%s593 + $0x8] sm:$0xf] %v3946
        %3979 = vst [vmem:[%s593 + $0xc] sm:$0xf] %v3947
        %3980 = vst [vmem:[%s593 + $0x10] sm:$0xf] %v3948
        %3981 = vst [vmem:[%s593 + $0x14] sm:$0xf] %v3949
        %3982 = vst [vmem:[%s593 + $0x18] sm:$0xf] %v3950
        %3983 = vst [vmem:[%s593 + $0x1c] sm:$0xf] %v3951
        %3984 = vst [vmem:[%s593 + $0x20] sm:$0xf] %v3952
        %3985 = vst [vmem:[%s593 + $0x24] sm:$0xf] %v3953
        %3986 = vst [vmem:[%s593 + $0x28] sm:$0xf] %v3954
        %3987 = vst [vmem:[%s593 + $0x2c] sm:$0xf] %v3955
        %3988 = vst [vmem:[%s593 + $0x30] sm:$0xf] %v3956
        %3989 = vst [vmem:[%s593 + $0x34] sm:$0xf] %v3957
        %3990 = vst [vmem:[%s593 + $0x38] sm:$0xf] %v3958
        %3991 = vst [vmem:[%s593 + $0x3c] sm:$0xf] %v3959
        %v3992 = vld [vmem:[#allocation11] sm:$0xff]
        %v3993 = vld [vmem:[#allocation11 + $0x8] sm:$0xff]
        %v3994 = vld [vmem:[#allocation11 + $0x10] sm:$0xff]
        %v3995 = vld [vmem:[#allocation11 + $0x18] sm:$0xff]
        %v3996 = vld [vmem:[#allocation11 + $0x20] sm:$0xff]
        %v3997 = vld [vmem:[#allocation11 + $0x28] sm:$0xff]
        %v3998 = vld [vmem:[#allocation11 + $0x30] sm:$0xff]
        %v3999 = vld [vmem:[#allocation11 + $0x38] sm:$0xff]
        %v4000 = vld [vmem:[#allocation11 + $0x40] sm:$0xff]
        %v4001 = vld [vmem:[#allocation11 + $0x48] sm:$0xff]
        %v4002 = vld [vmem:[#allocation11 + $0x50] sm:$0xff]
        %v4003 = vld [vmem:[#allocation11 + $0x58] sm:$0xff]
        %v4004 = vld [vmem:[#allocation11 + $0x60] sm:$0xff]
        %v4005 = vld [vmem:[#allocation11 + $0x68] sm:$0xff]
        %v4006 = vld [vmem:[#allocation11 + $0x70] sm:$0xff]
        %v4007 = vld [vmem:[#allocation11 + $0x78] sm:$0xff]
        %v4008 = vld [vmem:[%s8] sm:$0x3]
        %v4010 = vlaneseq
        %v4011 = vshrl.u32 %v4010, 7
        %v4012 = vsub.s32 0, %v4011
        %v4013 = vrot.slane %v4008, %v4012
        %v4014 = vlaneseq
        %v4015 = vshrl.u32 %v4014, 7
        %v4016 = vsub.s32 1, %v4015
        %v4017 = vrot.slane %v4008, %v4016
        %v4036 = vunpack.c.l.b16 %v3992
        %v4037 = vunpack.c.h.b16 %v3992
        %v4038 = vunpack.c.l.b16 %v3993
        %v4039 = vunpack.c.h.b16 %v3993
        %v4040 = vunpack.c.l.b16 %v3994
        %v4041 = vunpack.c.h.b16 %v3994
        %v4042 = vunpack.c.l.b16 %v3995
        %v4043 = vunpack.c.h.b16 %v3995
        %v4044 = vunpack.c.l.b16 %v3996
        %v4045 = vunpack.c.h.b16 %v3996
        %v4046 = vunpack.c.l.b16 %v3997
        %v4047 = vunpack.c.h.b16 %v3997
        %v4048 = vunpack.c.l.b16 %v3998
        %v4049 = vunpack.c.h.b16 %v3998
        %v4050 = vunpack.c.l.b16 %v3999
        %v4051 = vunpack.c.h.b16 %v3999
        %v4052 = vunpack.c.l.b16 %v4000
        %v4053 = vunpack.c.h.b16 %v4000
        %v4054 = vunpack.c.l.b16 %v4001
        %v4055 = vunpack.c.h.b16 %v4001
        %v4056 = vunpack.c.l.b16 %v4002
        %v4057 = vunpack.c.h.b16 %v4002
        %v4058 = vunpack.c.l.b16 %v4003
        %v4059 = vunpack.c.h.b16 %v4003
        %v4060 = vunpack.c.l.b16 %v4004
        %v4061 = vunpack.c.h.b16 %v4004
        %v4062 = vunpack.c.l.b16 %v4005
        %v4063 = vunpack.c.h.b16 %v4005
        %v4064 = vunpack.c.l.b16 %v4006
        %v4065 = vunpack.c.h.b16 %v4006
        %v4066 = vunpack.c.l.b16 %v4007
        %v4067 = vunpack.c.h.b16 %v4007
        %v4068 = vpack.c.b16 %v4038, %v4036
        %v4069 = vpack.c.b16 %v4039, %v4037
        %v4070 = vpack.c.b16 %v4042, %v4040
        %v4071 = vpack.c.b16 %v4043, %v4041
        %v4072 = vpack.c.b16 %v4046, %v4044
        %v4073 = vpack.c.b16 %v4047, %v4045
        %v4074 = vpack.c.b16 %v4050, %v4048
        %v4075 = vpack.c.b16 %v4051, %v4049
        %v4076 = vpack.c.b16 %v4054, %v4052
        %v4077 = vpack.c.b16 %v4055, %v4053
        %v4078 = vpack.c.b16 %v4058, %v4056
        %v4079 = vpack.c.b16 %v4059, %v4057
        %v4080 = vpack.c.b16 %v4062, %v4060
        %v4081 = vpack.c.b16 %v4063, %v4061
        %v4082 = vpack.c.b16 %v4066, %v4064
        %v4083 = vpack.c.b16 %v4067, %v4065
        %4100 = vmatprep.subr.bf16.mxu0 %v4069
        %4101 = vmatpush1.bf16.msra.mxu0 %v4068
        %4102 = vmatprep.subr.bf16.mxu0 %v4071
        %4103 = vmatpush1.bf16.msra.mxu0 %v4070
        %4104 = vmatprep.subr.bf16.mxu0 %v4073
        %4105 = vmatpush1.bf16.msra.mxu0 %v4072
        %4106 = vmatprep.subr.bf16.mxu0 %v4075
        %4107 = vmatpush1.bf16.msra.mxu0 %v4074
        %4108 = vmatprep.subr.bf16.mxu0 %v4077
        %4109 = vmatpush1.bf16.msra.mxu0 %v4076
        %4110 = vmatprep.subr.bf16.mxu0 %v4079
        %4111 = vmatpush1.bf16.msra.mxu0 %v4078
        %4112 = vmatprep.subr.bf16.mxu0 %v4081
        %4113 = vmatpush1.bf16.msra.mxu0 %v4080
        %4114 = vmatprep.subr.bf16.mxu0 %v4083
        %4115 = vmatpush1.bf16.msra.mxu0 %v4082
        %4116 = vmatprep.subr.bf16.mxu0 0
        %4117 = vmatpush1.bf16.msra.mxu0 0
        %4118 = vmatprep.subr.bf16.mxu0 0
        %4119 = vmatpush1.bf16.msra.mxu0 0
        %4120 = vmatprep.subr.bf16.mxu0 0
        %4121 = vmatpush1.bf16.msra.mxu0 0
        %4122 = vmatprep.subr.bf16.mxu0 0
        %4123 = vmatpush1.bf16.msra.mxu0 0
        %4124 = vmatprep.subr.bf16.mxu0 0
        %4125 = vmatpush1.bf16.msra.mxu0 0
        %4126 = vmatprep.subr.bf16.mxu0 0
        %4127 = vmatpush1.bf16.msra.mxu0 0
        %4128 = vmatprep.subr.bf16.mxu0 0
        %4129 = vmatpush1.bf16.msra.mxu0 0
        %4130 = vmatprep.subr.bf16.mxu0 0
        %4131 = vmatpush1.bf16.msra.mxu0 0
        %4132 = vmatprep.mubr.bf16.mxu0 0
        %4133 = vmatmul.mubr.bf16.gmra.mrb[0].mxu0 %v3912
        %v4134 = vpop.f32.mrb[0].mxu0
        %v4135 = vadd.f32 %v4013, %v4134
        %v4136 = vpop.f32.mrb[0].mxu0
        %v4137 = vadd.f32 %v4017, %v4136
        %v4138 = vpop.f32.mrb[0].mxu0
        %v4139 = vadd.f32 %v4013, %v4138
        %v4140 = vpop.f32.mrb[0].mxu0
        %v4141 = vadd.f32 %v4017, %v4140
        %4142 = vmatprep.mubr.bf16.mxu0 0
        %4143 = vmatmul.mubr.bf16.gmra.mrb[0].mxu0 %v3913
        %v4144 = vpop.f32.mrb[0].mxu0
        %v4145 = vadd.f32 %v4013, %v4144
        %v4146 = vpop.f32.mrb[0].mxu0
        %v4147 = vadd.f32 %v4017, %v4146
        %v4148 = vpop.f32.mrb[0].mxu0
        %v4149 = vadd.f32 %v4013, %v4148
        %v4150 = vpop.f32.mrb[0].mxu0
        %v4151 = vadd.f32 %v4017, %v4150
        %4152 = vmatprep.mubr.bf16.mxu0 0
        %4153 = vmatmul.mubr.bf16.gmra.mrb[0].mxu0 %v3914
        %v4154 = vpop.f32.mrb[0].mxu0
        %v4155 = vadd.f32 %v4013, %v4154
        %v4156 = vpop.f32.mrb[0].mxu0
        %v4157 = vadd.f32 %v4017, %v4156
        %v4158 = vpop.f32.mrb[0].mxu0
        %v4159 = vadd.f32 %v4013, %v4158
        %v4160 = vpop.f32.mrb[0].mxu0
        %v4161 = vadd.f32 %v4017, %v4160
        %4162 = vmatprep.mubr.bf16.mxu0 0
        %4163 = vmatmul.mubr.bf16.gmra.mrb[0].mxu0 %v3915
        %v4164 = vpop.f32.mrb[0].mxu0
        %v4165 = vadd.f32 %v4013, %v4164
        %v4166 = vpop.f32.mrb[0].mxu0
        %v4167 = vadd.f32 %v4017, %v4166
        %v4168 = vpop.f32.mrb[0].mxu0
        %v4169 = vadd.f32 %v4013, %v4168
        %v4170 = vpop.f32.mrb[0].mxu0
        %v4171 = vadd.f32 %v4017, %v4170
        %4172 = vmatprep.mubr.bf16.mxu0 0
        %4173 = vmatmul.mubr.bf16.gmra.mrb[0].mxu0 %v3916
        %v4174 = vpop.f32.mrb[0].mxu0
        %v4175 = vadd.f32 %v4013, %v4174
        %v4176 = vpop.f32.mrb[0].mxu0
        %v4177 = vadd.f32 %v4017, %v4176
        %v4178 = vpop.f32.mrb[0].mxu0
        %v4179 = vadd.f32 %v4013, %v4178
        %v4180 = vpop.f32.mrb[0].mxu0
        %v4181 = vadd.f32 %v4017, %v4180
        %4182 = vmatprep.mubr.bf16.mxu0 0
        %4183 = vmatmul.mubr.bf16.gmra.mrb[0].mxu0 %v3917
        %v4184 = vpop.f32.mrb[0].mxu0
        %v4185 = vadd.f32 %v4013, %v4184
        %v4186 = vpop.f32.mrb[0].mxu0
        %v4187 = vadd.f32 %v4017, %v4186
        %v4188 = vpop.f32.mrb[0].mxu0
        %v4189 = vadd.f32 %v4013, %v4188
        %v4190 = vpop.f32.mrb[0].mxu0
        %v4191 = vadd.f32 %v4017, %v4190
        %4192 = vmatprep.mubr.bf16.mxu0 0
        %4193 = vmatmul.mubr.bf16.gmra.mrb[0].mxu0 %v3918
        %v4194 = vpop.f32.mrb[0].mxu0
        %v4195 = vadd.f32 %v4013, %v4194
        %v4196 = vpop.f32.mrb[0].mxu0
        %v4197 = vadd.f32 %v4017, %v4196
        %v4198 = vpop.f32.mrb[0].mxu0
        %v4199 = vadd.f32 %v4013, %v4198
        %v4200 = vpop.f32.mrb[0].mxu0
        %v4201 = vadd.f32 %v4017, %v4200
        %4202 = vmatprep.mubr.bf16.mxu0 0
        %4203 = vmatmul.mubr.bf16.gmra.mrb[0].mxu0 %v3919
        %v4204 = vpop.f32.mrb[0].mxu0
        %v4205 = vadd.f32 %v4013, %v4204
        %v4206 = vpop.f32.mrb[0].mxu0
        %v4207 = vadd.f32 %v4017, %v4206
        %v4208 = vpop.f32.mrb[0].mxu0
        %v4209 = vadd.f32 %v4013, %v4208
        %v4210 = vpop.f32.mrb[0].mxu0
        %v4211 = vadd.f32 %v4017, %v4210
        %4212 = vdwg.mxu0
        %v4213 = vmax.f32 %v4135, 0.0
        %v4214 = vmax.f32 %v4137, 0.0
        %v4215 = vmax.f32 %v4139, 0.0
        %v4216 = vmax.f32 %v4141, 0.0
        %v4217 = vmax.f32 %v4145, 0.0
        %v4218 = vmax.f32 %v4147, 0.0
        %v4219 = vmax.f32 %v4149, 0.0
        %v4220 = vmax.f32 %v4151, 0.0
        %v4221 = vmax.f32 %v4155, 0.0
        %v4222 = vmax.f32 %v4157, 0.0
        %v4223 = vmax.f32 %v4159, 0.0
        %v4224 = vmax.f32 %v4161, 0.0
        %v4225 = vmax.f32 %v4165, 0.0
        %v4226 = vmax.f32 %v4167, 0.0
        %v4227 = vmax.f32 %v4169, 0.0
        %v4228 = vmax.f32 %v4171, 0.0
        %v4229 = vmax.f32 %v4175, 0.0
        %v4230 = vmax.f32 %v4177, 0.0
        %v4231 = vmax.f32 %v4179, 0.0
        %v4232 = vmax.f32 %v4181, 0.0
        %v4233 = vmax.f32 %v4185, 0.0
        %v4234 = vmax.f32 %v4187, 0.0
        %v4235 = vmax.f32 %v4189, 0.0
        %v4236 = vmax.f32 %v4191, 0.0
        %v4237 = vmax.f32 %v4195, 0.0
        %v4238 = vmax.f32 %v4197, 0.0
        %v4239 = vmax.f32 %v4199, 0.0
        %v4240 = vmax.f32 %v4201, 0.0
        %v4241 = vmax.f32 %v4205, 0.0
        %v4242 = vmax.f32 %v4207, 0.0
        %v4243 = vmax.f32 %v4209, 0.0
        %v4244 = vmax.f32 %v4211, 0.0
        %v4245 = vpack.c.bf16 %v4215, %v4213
        %v4246 = vpack.c.bf16 %v4216, %v4214
        %v4247 = vpack.c.bf16 %v4219, %v4217
        %v4248 = vpack.c.bf16 %v4220, %v4218
        %v4249 = vpack.c.bf16 %v4223, %v4221
        %v4250 = vpack.c.bf16 %v4224, %v4222
        %v4251 = vpack.c.bf16 %v4227, %v4225
        %v4252 = vpack.c.bf16 %v4228, %v4226
        %v4253 = vpack.c.bf16 %v4231, %v4229
        %v4254 = vpack.c.bf16 %v4232, %v4230
        %v4255 = vpack.c.bf16 %v4235, %v4233
        %v4256 = vpack.c.bf16 %v4236, %v4234
        %v4257 = vpack.c.bf16 %v4239, %v4237
        %v4258 = vpack.c.bf16 %v4240, %v4238
        %v4259 = vpack.c.bf16 %v4243, %v4241
        %v4260 = vpack.c.bf16 %v4244, %v4242
        %v4261 = vld [vmem:[#allocation13] sm:$0xff]
        %v4262 = vld [vmem:[#allocation13 + $0x8] sm:$0xff]
        %v4263 = vld [vmem:[#allocation13 + $0x10] sm:$0xff]
        %v4264 = vld [vmem:[#allocation13 + $0x18] sm:$0xff]
        %v4265 = vld [vmem:[#allocation13 + $0x20] sm:$0xff]
        %v4266 = vld [vmem:[#allocation13 + $0x28] sm:$0xff]
        %v4267 = vld [vmem:[#allocation13 + $0x30] sm:$0xff]
        %v4268 = vld [vmem:[#allocation13 + $0x38] sm:$0xff]
        %v4269 = vld [vmem:[#allocation13 + $0x40] sm:$0xff]
        %v4270 = vld [vmem:[#allocation13 + $0x48] sm:$0xff]
        %v4271 = vld [vmem:[#allocation13 + $0x50] sm:$0xff]
        %v4272 = vld [vmem:[#allocation13 + $0x58] sm:$0xff]
        %v4273 = vld [vmem:[#allocation13 + $0x60] sm:$0xff]
        %v4274 = vld [vmem:[#allocation13 + $0x68] sm:$0xff]
        %v4275 = vld [vmem:[#allocation13 + $0x70] sm:$0xff]
        %v4276 = vld [vmem:[#allocation13 + $0x78] sm:$0xff]
        %v4277 = vld [vmem:[#allocation13 + $0x80] sm:$0xff]
        %v4278 = vld [vmem:[#allocation13 + $0x88] sm:$0xff]
        %v4279 = vld [vmem:[#allocation13 + $0x90] sm:$0xff]
        %v4280 = vld [vmem:[#allocation13 + $0x98] sm:$0xff]
        %v4281 = vld [vmem:[#allocation13 + $0xa0] sm:$0xff]
        %v4282 = vld [vmem:[#allocation13 + $0xa8] sm:$0xff]
        %v4283 = vld [vmem:[#allocation13 + $0xb0] sm:$0xff]
        %v4284 = vld [vmem:[#allocation13 + $0xb8] sm:$0xff]
        %v4285 = vld [vmem:[#allocation13 + $0xc0] sm:$0xff]
        %v4286 = vld [vmem:[#allocation13 + $0xc8] sm:$0xff]
        %v4287 = vld [vmem:[#allocation13 + $0xd0] sm:$0xff]
        %v4288 = vld [vmem:[#allocation13 + $0xd8] sm:$0xff]
        %v4289 = vld [vmem:[#allocation13 + $0xe0] sm:$0xff]
        %v4290 = vld [vmem:[#allocation13 + $0xe8] sm:$0xff]
        %v4291 = vld [vmem:[#allocation13 + $0xf0] sm:$0xff]
        %v4292 = vld [vmem:[#allocation13 + $0xf8] sm:$0xff]
        %v4293 = vld [vmem:[#allocation13 + $0x100] sm:$0xff]
        %v4294 = vld [vmem:[#allocation13 + $0x108] sm:$0xff]
        %v4295 = vld [vmem:[#allocation13 + $0x110] sm:$0xff]
        %v4296 = vld [vmem:[#allocation13 + $0x118] sm:$0xff]
        %v4297 = vld [vmem:[#allocation13 + $0x120] sm:$0xff]
        %v4298 = vld [vmem:[#allocation13 + $0x128] sm:$0xff]
        %v4299 = vld [vmem:[#allocation13 + $0x130] sm:$0xff]
        %v4300 = vld [vmem:[#allocation13 + $0x138] sm:$0xff]
        %v4301 = vld [vmem:[#allocation13 + $0x140] sm:$0xff]
        %v4302 = vld [vmem:[#allocation13 + $0x148] sm:$0xff]
        %v4303 = vld [vmem:[#allocation13 + $0x150] sm:$0xff]
        %v4304 = vld [vmem:[#allocation13 + $0x158] sm:$0xff]
        %v4305 = vld [vmem:[#allocation13 + $0x160] sm:$0xff]
        %v4306 = vld [vmem:[#allocation13 + $0x168] sm:$0xff]
        %v4307 = vld [vmem:[#allocation13 + $0x170] sm:$0xff]
        %v4308 = vld [vmem:[#allocation13 + $0x178] sm:$0xff]
        %v4309 = vld [vmem:[#allocation13 + $0x180] sm:$0xff]
        %v4310 = vld [vmem:[#allocation13 + $0x188] sm:$0xff]
        %v4311 = vld [vmem:[#allocation13 + $0x190] sm:$0xff]
        %v4312 = vld [vmem:[#allocation13 + $0x198] sm:$0xff]
        %v4313 = vld [vmem:[#allocation13 + $0x1a0] sm:$0xff]
        %v4314 = vld [vmem:[#allocation13 + $0x1a8] sm:$0xff]
        %v4315 = vld [vmem:[#allocation13 + $0x1b0] sm:$0xff]
        %v4316 = vld [vmem:[#allocation13 + $0x1b8] sm:$0xff]
        %v4317 = vld [vmem:[#allocation13 + $0x1c0] sm:$0xff]
        %v4318 = vld [vmem:[#allocation13 + $0x1c8] sm:$0xff]
        %v4319 = vld [vmem:[#allocation13 + $0x1d0] sm:$0xff]
        %v4320 = vld [vmem:[#allocation13 + $0x1d8] sm:$0xff]
        %v4321 = vld [vmem:[#allocation13 + $0x1e0] sm:$0xff]
        %v4322 = vld [vmem:[#allocation13 + $0x1e8] sm:$0xff]
        %v4323 = vld [vmem:[#allocation13 + $0x1f0] sm:$0xff]
        %v4324 = vld [vmem:[#allocation13 + $0x1f8] sm:$0xff]
        %v4325 = vld [vmem:[%s10] sm:$0xf]
        %v4327 = vlaneseq
        %v4328 = vshrl.u32 %v4327, 7
        %v4329 = vsub.s32 0, %v4328
        %v4330 = vrot.slane %v4325, %v4329
        %v4331 = vlaneseq
        %v4332 = vshrl.u32 %v4331, 7
        %v4333 = vsub.s32 1, %v4332
        %v4334 = vrot.slane %v4325, %v4333
        %v4335 = vlaneseq
        %v4336 = vshrl.u32 %v4335, 7
        %v4337 = vsub.s32 2, %v4336
        %v4338 = vrot.slane %v4325, %v4337
        %v4339 = vlaneseq
        %v4340 = vshrl.u32 %v4339, 7
        %v4341 = vsub.s32 3, %v4340
        %v4342 = vrot.slane %v4325, %v4341
        %v4411 = vunpack.c.l.b16 %v4261
        %v4412 = vunpack.c.h.b16 %v4261
        %v4413 = vunpack.c.l.b16 %v4262
        %v4414 = vunpack.c.h.b16 %v4262
        %v4415 = vunpack.c.l.b16 %v4263
        %v4416 = vunpack.c.h.b16 %v4263
        %v4417 = vunpack.c.l.b16 %v4264
        %v4418 = vunpack.c.h.b16 %v4264
        %v4419 = vunpack.c.l.b16 %v4265
        %v4420 = vunpack.c.h.b16 %v4265
        %v4421 = vunpack.c.l.b16 %v4266
        %v4422 = vunpack.c.h.b16 %v4266
        %v4423 = vunpack.c.l.b16 %v4267
        %v4424 = vunpack.c.h.b16 %v4267
        %v4425 = vunpack.c.l.b16 %v4268
        %v4426 = vunpack.c.h.b16 %v4268
        %v4427 = vunpack.c.l.b16 %v4269
        %v4428 = vunpack.c.h.b16 %v4269
        %v4429 = vunpack.c.l.b16 %v4270
        %v4430 = vunpack.c.h.b16 %v4270
        %v4431 = vunpack.c.l.b16 %v4271
        %v4432 = vunpack.c.h.b16 %v4271
        %v4433 = vunpack.c.l.b16 %v4272
        %v4434 = vunpack.c.h.b16 %v4272
        %v4435 = vunpack.c.l.b16 %v4273
        %v4436 = vunpack.c.h.b16 %v4273
        %v4437 = vunpack.c.l.b16 %v4274
        %v4438 = vunpack.c.h.b16 %v4274
        %v4439 = vunpack.c.l.b16 %v4275
        %v4440 = vunpack.c.h.b16 %v4275
        %v4441 = vunpack.c.l.b16 %v4276
        %v4442 = vunpack.c.h.b16 %v4276
        %v4443 = vunpack.c.l.b16 %v4277
        %v4444 = vunpack.c.h.b16 %v4277
        %v4445 = vunpack.c.l.b16 %v4278
        %v4446 = vunpack.c.h.b16 %v4278
        %v4447 = vunpack.c.l.b16 %v4279
        %v4448 = vunpack.c.h.b16 %v4279
        %v4449 = vunpack.c.l.b16 %v4280
        %v4450 = vunpack.c.h.b16 %v4280
        %v4451 = vunpack.c.l.b16 %v4281
        %v4452 = vunpack.c.h.b16 %v4281
        %v4453 = vunpack.c.l.b16 %v4282
        %v4454 = vunpack.c.h.b16 %v4282
        %v4455 = vunpack.c.l.b16 %v4283
        %v4456 = vunpack.c.h.b16 %v4283
        %v4457 = vunpack.c.l.b16 %v4284
        %v4458 = vunpack.c.h.b16 %v4284
        %v4459 = vunpack.c.l.b16 %v4285
        %v4460 = vunpack.c.h.b16 %v4285
        %v4461 = vunpack.c.l.b16 %v4286
        %v4462 = vunpack.c.h.b16 %v4286
        %v4463 = vunpack.c.l.b16 %v4287
        %v4464 = vunpack.c.h.b16 %v4287
        %v4465 = vunpack.c.l.b16 %v4288
        %v4466 = vunpack.c.h.b16 %v4288
        %v4467 = vunpack.c.l.b16 %v4289
        %v4468 = vunpack.c.h.b16 %v4289
        %v4469 = vunpack.c.l.b16 %v4290
        %v4470 = vunpack.c.h.b16 %v4290
        %v4471 = vunpack.c.l.b16 %v4291
        %v4472 = vunpack.c.h.b16 %v4291
        %v4473 = vunpack.c.l.b16 %v4292
        %v4474 = vunpack.c.h.b16 %v4292
        %v4475 = vunpack.c.l.b16 %v4293
        %v4476 = vunpack.c.h.b16 %v4293
        %v4477 = vunpack.c.l.b16 %v4294
        %v4478 = vunpack.c.h.b16 %v4294
        %v4479 = vunpack.c.l.b16 %v4295
        %v4480 = vunpack.c.h.b16 %v4295
        %v4481 = vunpack.c.l.b16 %v4296
        %v4482 = vunpack.c.h.b16 %v4296
        %v4483 = vunpack.c.l.b16 %v4297
        %v4484 = vunpack.c.h.b16 %v4297
        %v4485 = vunpack.c.l.b16 %v4298
        %v4486 = vunpack.c.h.b16 %v4298
        %v4487 = vunpack.c.l.b16 %v4299
        %v4488 = vunpack.c.h.b16 %v4299
        %v4489 = vunpack.c.l.b16 %v4300
        %v4490 = vunpack.c.h.b16 %v4300
        %v4491 = vunpack.c.l.b16 %v4301
        %v4492 = vunpack.c.h.b16 %v4301
        %v4493 = vunpack.c.l.b16 %v4302
        %v4494 = vunpack.c.h.b16 %v4302
        %v4495 = vunpack.c.l.b16 %v4303
        %v4496 = vunpack.c.h.b16 %v4303
        %v4497 = vunpack.c.l.b16 %v4304
        %v4498 = vunpack.c.h.b16 %v4304
        %v4499 = vunpack.c.l.b16 %v4305
        %v4500 = vunpack.c.h.b16 %v4305
        %v4501 = vunpack.c.l.b16 %v4306
        %v4502 = vunpack.c.h.b16 %v4306
        %v4503 = vunpack.c.l.b16 %v4307
        %v4504 = vunpack.c.h.b16 %v4307
        %v4505 = vunpack.c.l.b16 %v4308
        %v4506 = vunpack.c.h.b16 %v4308
        %v4507 = vunpack.c.l.b16 %v4309
        %v4508 = vunpack.c.h.b16 %v4309
        %v4509 = vunpack.c.l.b16 %v4310
        %v4510 = vunpack.c.h.b16 %v4310
        %v4511 = vunpack.c.l.b16 %v4311
        %v4512 = vunpack.c.h.b16 %v4311
        %v4513 = vunpack.c.l.b16 %v4312
        %v4514 = vunpack.c.h.b16 %v4312
        %v4515 = vunpack.c.l.b16 %v4313
        %v4516 = vunpack.c.h.b16 %v4313
        %v4517 = vunpack.c.l.b16 %v4314
        %v4518 = vunpack.c.h.b16 %v4314
        %v4519 = vunpack.c.l.b16 %v4315
        %v4520 = vunpack.c.h.b16 %v4315
        %v4521 = vunpack.c.l.b16 %v4316
        %v4522 = vunpack.c.h.b16 %v4316
        %v4523 = vunpack.c.l.b16 %v4317
        %v4524 = vunpack.c.h.b16 %v4317
        %v4525 = vunpack.c.l.b16 %v4318
        %v4526 = vunpack.c.h.b16 %v4318
        %v4527 = vunpack.c.l.b16 %v4319
        %v4528 = vunpack.c.h.b16 %v4319
        %v4529 = vunpack.c.l.b16 %v4320
        %v4530 = vunpack.c.h.b16 %v4320
        %v4531 = vunpack.c.l.b16 %v4321
        %v4532 = vunpack.c.h.b16 %v4321
        %v4533 = vunpack.c.l.b16 %v4322
        %v4534 = vunpack.c.h.b16 %v4322
        %v4535 = vunpack.c.l.b16 %v4323
        %v4536 = vunpack.c.h.b16 %v4323
        %v4537 = vunpack.c.l.b16 %v4324
        %v4538 = vunpack.c.h.b16 %v4324
        %v4539 = vpack.c.b16 %v4415, %v4411
        %v4540 = vpack.c.b16 %v4416, %v4412
        %v4541 = vpack.c.b16 %v4417, %v4413
        %v4542 = vpack.c.b16 %v4418, %v4414
        %v4543 = vpack.c.b16 %v4423, %v4419
        %v4544 = vpack.c.b16 %v4424, %v4420
        %v4545 = vpack.c.b16 %v4425, %v4421
        %v4546 = vpack.c.b16 %v4426, %v4422
        %v4547 = vpack.c.b16 %v4431, %v4427
        %v4548 = vpack.c.b16 %v4432, %v4428
        %v4549 = vpack.c.b16 %v4433, %v4429
        %v4550 = vpack.c.b16 %v4434, %v4430
        %v4551 = vpack.c.b16 %v4439, %v4435
        %v4552 = vpack.c.b16 %v4440, %v4436
        %v4553 = vpack.c.b16 %v4441, %v4437
        %v4554 = vpack.c.b16 %v4442, %v4438
        %v4555 = vpack.c.b16 %v4447, %v4443
        %v4556 = vpack.c.b16 %v4448, %v4444
        %v4557 = vpack.c.b16 %v4449, %v4445
        %v4558 = vpack.c.b16 %v4450, %v4446
        %v4559 = vpack.c.b16 %v4455, %v4451
        %v4560 = vpack.c.b16 %v4456, %v4452
        %v4561 = vpack.c.b16 %v4457, %v4453
        %v4562 = vpack.c.b16 %v4458, %v4454
        %v4563 = vpack.c.b16 %v4463, %v4459
        %v4564 = vpack.c.b16 %v4464, %v4460
        %v4565 = vpack.c.b16 %v4465, %v4461
        %v4566 = vpack.c.b16 %v4466, %v4462
        %v4567 = vpack.c.b16 %v4471, %v4467
        %v4568 = vpack.c.b16 %v4472, %v4468
        %v4569 = vpack.c.b16 %v4473, %v4469
        %v4570 = vpack.c.b16 %v4474, %v4470
        %v4571 = vpack.c.b16 %v4479, %v4475
        %v4572 = vpack.c.b16 %v4480, %v4476
        %v4573 = vpack.c.b16 %v4481, %v4477
        %v4574 = vpack.c.b16 %v4482, %v4478
        %v4575 = vpack.c.b16 %v4487, %v4483
        %v4576 = vpack.c.b16 %v4488, %v4484
        %v4577 = vpack.c.b16 %v4489, %v4485
        %v4578 = vpack.c.b16 %v4490, %v4486
        %v4579 = vpack.c.b16 %v4495, %v4491
        %v4580 = vpack.c.b16 %v4496, %v4492
        %v4581 = vpack.c.b16 %v4497, %v4493
        %v4582 = vpack.c.b16 %v4498, %v4494
        %v4583 = vpack.c.b16 %v4503, %v4499
        %v4584 = vpack.c.b16 %v4504, %v4500
        %v4585 = vpack.c.b16 %v4505, %v4501
        %v4586 = vpack.c.b16 %v4506, %v4502
        %v4587 = vpack.c.b16 %v4511, %v4507
        %v4588 = vpack.c.b16 %v4512, %v4508
        %v4589 = vpack.c.b16 %v4513, %v4509
        %v4590 = vpack.c.b16 %v4514, %v4510
        %v4591 = vpack.c.b16 %v4519, %v4515
        %v4592 = vpack.c.b16 %v4520, %v4516
        %v4593 = vpack.c.b16 %v4521, %v4517
        %v4594 = vpack.c.b16 %v4522, %v4518
        %v4595 = vpack.c.b16 %v4527, %v4523
        %v4596 = vpack.c.b16 %v4528, %v4524
        %v4597 = vpack.c.b16 %v4529, %v4525
        %v4598 = vpack.c.b16 %v4530, %v4526
        %v4599 = vpack.c.b16 %v4535, %v4531
        %v4600 = vpack.c.b16 %v4536, %v4532
        %v4601 = vpack.c.b16 %v4537, %v4533
        %v4602 = vpack.c.b16 %v4538, %v4534
        %4667 = vmatprep.subr.bf16.mxu0 %v4540
        %4668 = vmatpush1.bf16.msra.mxu0 %v4539
        %4669 = vmatprep.subr.bf16.mxu0 %v4544
        %4670 = vmatpush1.bf16.msra.mxu0 %v4543
        %4671 = vmatprep.subr.bf16.mxu0 %v4548
        %4672 = vmatpush1.bf16.msra.mxu0 %v4547
        %4673 = vmatprep.subr.bf16.mxu0 %v4552
        %4674 = vmatpush1.bf16.msra.mxu0 %v4551
        %4675 = vmatprep.subr.bf16.mxu0 %v4556
        %4676 = vmatpush1.bf16.msra.mxu0 %v4555
        %4677 = vmatprep.subr.bf16.mxu0 %v4560
        %4678 = vmatpush1.bf16.msra.mxu0 %v4559
        %4679 = vmatprep.subr.bf16.mxu0 %v4564
        %4680 = vmatpush1.bf16.msra.mxu0 %v4563
        %4681 = vmatprep.subr.bf16.mxu0 %v4568
        %4682 = vmatpush1.bf16.msra.mxu0 %v4567
        %4683 = vmatprep.subr.bf16.mxu0 %v4572
        %4684 = vmatpush1.bf16.msra.mxu0 %v4571
        %4685 = vmatprep.subr.bf16.mxu0 %v4576
        %4686 = vmatpush1.bf16.msra.mxu0 %v4575
        %4687 = vmatprep.subr.bf16.mxu0 %v4580
        %4688 = vmatpush1.bf16.msra.mxu0 %v4579
        %4689 = vmatprep.subr.bf16.mxu0 %v4584
        %4690 = vmatpush1.bf16.msra.mxu0 %v4583
        %4691 = vmatprep.subr.bf16.mxu0 %v4588
        %4692 = vmatpush1.bf16.msra.mxu0 %v4587
        %4693 = vmatprep.subr.bf16.mxu0 %v4592
        %4694 = vmatpush1.bf16.msra.mxu0 %v4591
        %4695 = vmatprep.subr.bf16.mxu0 %v4596
        %4696 = vmatpush1.bf16.msra.mxu0 %v4595
        %4697 = vmatprep.subr.bf16.mxu0 %v4600
        %4698 = vmatpush1.bf16.msra.mxu0 %v4599
        %4699 = vmatprep.mubr.bf16.mxu0 %v4246
        %4700 = vmatmul.mubr.bf16.gmra.mrb[0].mxu0 %v4245
        %v4701 = vpop.f32.mrb[0].mxu0
        %v4702 = vadd.f32 %v4330, %v4701
        %v4703 = vpop.f32.mrb[0].mxu0
        %v4704 = vadd.f32 %v4334, %v4703
        %v4705 = vpop.f32.mrb[0].mxu0
        %v4706 = vadd.f32 %v4330, %v4705
        %v4707 = vpop.f32.mrb[0].mxu0
        %v4708 = vadd.f32 %v4334, %v4707
        %4709 = vmatprep.mubr.bf16.mxu0 %v4248
        %4710 = vmatmul.mubr.bf16.gmra.mrb[0].mxu0 %v4247
        %v4711 = vpop.f32.mrb[0].mxu0
        %v4712 = vadd.f32 %v4330, %v4711
        %v4713 = vpop.f32.mrb[0].mxu0
        %v4714 = vadd.f32 %v4334, %v4713
        %v4715 = vpop.f32.mrb[0].mxu0
        %v4716 = vadd.f32 %v4330, %v4715
        %v4717 = vpop.f32.mrb[0].mxu0
        %v4718 = vadd.f32 %v4334, %v4717
        %4719 = vmatprep.mubr.bf16.mxu0 %v4250
        %4720 = vmatmul.mubr.bf16.gmra.mrb[0].mxu0 %v4249
        %v4721 = vpop.f32.mrb[0].mxu0
        %v4722 = vadd.f32 %v4330, %v4721
        %v4723 = vpop.f32.mrb[0].mxu0
        %v4724 = vadd.f32 %v4334, %v4723
        %v4725 = vpop.f32.mrb[0].mxu0
        %v4726 = vadd.f32 %v4330, %v4725
        %v4727 = vpop.f32.mrb[0].mxu0
        %v4728 = vadd.f32 %v4334, %v4727
        %4729 = vmatprep.mubr.bf16.mxu0 %v4252
        %4730 = vmatmul.mubr.bf16.gmra.mrb[0].mxu0 %v4251
        %v4731 = vpop.f32.mrb[0].mxu0
        %v4732 = vadd.f32 %v4330, %v4731
        %v4733 = vpop.f32.mrb[0].mxu0
        %v4734 = vadd.f32 %v4334, %v4733
        %v4735 = vpop.f32.mrb[0].mxu0
        %v4736 = vadd.f32 %v4330, %v4735
        %v4737 = vpop.f32.mrb[0].mxu0
        %v4738 = vadd.f32 %v4334, %v4737
        %4739 = vmatprep.mubr.bf16.mxu0 %v4254
        %4740 = vmatmul.mubr.bf16.gmra.mrb[0].mxu0 %v4253
        %v4741 = vpop.f32.mrb[0].mxu0
        %v4742 = vadd.f32 %v4330, %v4741
        %v4743 = vpop.f32.mrb[0].mxu0
        %v4744 = vadd.f32 %v4334, %v4743
        %v4745 = vpop.f32.mrb[0].mxu0
        %v4746 = vadd.f32 %v4330, %v4745
        %v4747 = vpop.f32.mrb[0].mxu0
        %v4748 = vadd.f32 %v4334, %v4747
        %4749 = vmatprep.mubr.bf16.mxu0 %v4256
        %4750 = vmatmul.mubr.bf16.gmra.mrb[0].mxu0 %v4255
        %v4751 = vpop.f32.mrb[0].mxu0
        %v4752 = vadd.f32 %v4330, %v4751
        %v4753 = vpop.f32.mrb[0].mxu0
        %v4754 = vadd.f32 %v4334, %v4753
        %v4755 = vpop.f32.mrb[0].mxu0
        %v4756 = vadd.f32 %v4330, %v4755
        %v4757 = vpop.f32.mrb[0].mxu0
        %v4758 = vadd.f32 %v4334, %v4757
        %4759 = vmatprep.mubr.bf16.mxu0 %v4258
        %4760 = vmatmul.mubr.bf16.gmra.mrb[0].mxu0 %v4257
        %v4761 = vpop.f32.mrb[0].mxu0
        %v4762 = vadd.f32 %v4330, %v4761
        %v4763 = vpop.f32.mrb[0].mxu0
        %v4764 = vadd.f32 %v4334, %v4763
        %v4765 = vpop.f32.mrb[0].mxu0
        %v4766 = vadd.f32 %v4330, %v4765
        %v4767 = vpop.f32.mrb[0].mxu0
        %v4768 = vadd.f32 %v4334, %v4767
        %4769 = vmatprep.mubr.bf16.mxu0 %v4260
        %4770 = vmatmul.mubr.bf16.gmra.mrb[0].mxu0 %v4259
        %v4771 = vpop.f32.mrb[0].mxu0
        %v4772 = vadd.f32 %v4330, %v4771
        %v4773 = vpop.f32.mrb[0].mxu0
        %v4774 = vadd.f32 %v4334, %v4773
        %v4775 = vpop.f32.mrb[0].mxu0
        %v4776 = vadd.f32 %v4330, %v4775
        %v4777 = vpop.f32.mrb[0].mxu0
        %v4778 = vadd.f32 %v4334, %v4777
        %4779 = vdwg.mxu0
        %4780 = vmatprep.subr.bf16.mxu0 %v4542
        %4781 = vmatpush1.bf16.msra.mxu0 %v4541
        %4782 = vmatprep.subr.bf16.mxu0 %v4546
        %4783 = vmatpush1.bf16.msra.mxu0 %v4545
        %4784 = vmatprep.subr.bf16.mxu0 %v4550
        %4785 = vmatpush1.bf16.msra.mxu0 %v4549
        %4786 = vmatprep.subr.bf16.mxu0 %v4554
        %4787 = vmatpush1.bf16.msra.mxu0 %v4553
        %4788 = vmatprep.subr.bf16.mxu0 %v4558
        %4789 = vmatpush1.bf16.msra.mxu0 %v4557
        %4790 = vmatprep.subr.bf16.mxu0 %v4562
        %4791 = vmatpush1.bf16.msra.mxu0 %v4561
        %4792 = vmatprep.subr.bf16.mxu0 %v4566
        %4793 = vmatpush1.bf16.msra.mxu0 %v4565
        %4794 = vmatprep.subr.bf16.mxu0 %v4570
        %4795 = vmatpush1.bf16.msra.mxu0 %v4569
        %4796 = vmatprep.subr.bf16.mxu0 %v4574
        %4797 = vmatpush1.bf16.msra.mxu0 %v4573
        %4798 = vmatprep.subr.bf16.mxu0 %v4578
        %4799 = vmatpush1.bf16.msra.mxu0 %v4577
        %4800 = vmatprep.subr.bf16.mxu0 %v4582
        %4801 = vmatpush1.bf16.msra.mxu0 %v4581
        %4802 = vmatprep.subr.bf16.mxu0 %v4586
        %4803 = vmatpush1.bf16.msra.mxu0 %v4585
        %4804 = vmatprep.subr.bf16.mxu0 %v4590
        %4805 = vmatpush1.bf16.msra.mxu0 %v4589
        %4806 = vmatprep.subr.bf16.mxu0 %v4594
        %4807 = vmatpush1.bf16.msra.mxu0 %v4593
        %4808 = vmatprep.subr.bf16.mxu0 %v4598
        %4809 = vmatpush1.bf16.msra.mxu0 %v4597
        %4810 = vmatprep.subr.bf16.mxu0 %v4602
        %4811 = vmatpush1.bf16.msra.mxu0 %v4601
        %4812 = vmatprep.mubr.bf16.mxu0 %v4246
        %4813 = vmatmul.mubr.bf16.gmra.mrb[0].mxu0 %v4245
        %v4814 = vpop.f32.mrb[0].mxu0
        %v4815 = vadd.f32 %v4338, %v4814
        %v4816 = vpop.f32.mrb[0].mxu0
        %v4817 = vadd.f32 %v4342, %v4816
        %v4818 = vpop.f32.mrb[0].mxu0
        %v4819 = vadd.f32 %v4338, %v4818
        %v4820 = vpop.f32.mrb[0].mxu0
        %v4821 = vadd.f32 %v4342, %v4820
        %4822 = vmatprep.mubr.bf16.mxu0 %v4248
        %4823 = vmatmul.mubr.bf16.gmra.mrb[0].mxu0 %v4247
        %v4824 = vpop.f32.mrb[0].mxu0
        %v4825 = vadd.f32 %v4338, %v4824
        %v4826 = vpop.f32.mrb[0].mxu0
        %v4827 = vadd.f32 %v4342, %v4826
        %v4828 = vpop.f32.mrb[0].mxu0
        %v4829 = vadd.f32 %v4338, %v4828
        %v4830 = vpop.f32.mrb[0].mxu0
        %v4831 = vadd.f32 %v4342, %v4830
        %4832 = vmatprep.mubr.bf16.mxu0 %v4250
        %4833 = vmatmul.mubr.bf16.gmra.mrb[0].mxu0 %v4249
        %v4834 = vpop.f32.mrb[0].mxu0
        %v4835 = vadd.f32 %v4338, %v4834
        %v4836 = vpop.f32.mrb[0].mxu0
        %v4837 = vadd.f32 %v4342, %v4836
        %v4838 = vpop.f32.mrb[0].mxu0
        %v4839 = vadd.f32 %v4338, %v4838
        %v4840 = vpop.f32.mrb[0].mxu0
        %v4841 = vadd.f32 %v4342, %v4840
        %4842 = vmatprep.mubr.bf16.mxu0 %v4252
        %4843 = vmatmul.mubr.bf16.gmra.mrb[0].mxu0 %v4251
        %v4844 = vpop.f32.mrb[0].mxu0
        %v4845 = vadd.f32 %v4338, %v4844
        %v4846 = vpop.f32.mrb[0].mxu0
        %v4847 = vadd.f32 %v4342, %v4846
        %v4848 = vpop.f32.mrb[0].mxu0
        %v4849 = vadd.f32 %v4338, %v4848
        %v4850 = vpop.f32.mrb[0].mxu0
        %v4851 = vadd.f32 %v4342, %v4850
        %4852 = vmatprep.mubr.bf16.mxu0 %v4254
        %4853 = vmatmul.mubr.bf16.gmra.mrb[0].mxu0 %v4253
        %v4854 = vpop.f32.mrb[0].mxu0
        %v4855 = vadd.f32 %v4338, %v4854
        %v4856 = vpop.f32.mrb[0].mxu0
        %v4857 = vadd.f32 %v4342, %v4856
        %v4858 = vpop.f32.mrb[0].mxu0
        %v4859 = vadd.f32 %v4338, %v4858
        %v4860 = vpop.f32.mrb[0].mxu0
        %v4861 = vadd.f32 %v4342, %v4860
        %4862 = vmatprep.mubr.bf16.mxu0 %v4256
        %4863 = vmatmul.mubr.bf16.gmra.mrb[0].mxu0 %v4255
        %v4864 = vpop.f32.mrb[0].mxu0
        %v4865 = vadd.f32 %v4338, %v4864
        %v4866 = vpop.f32.mrb[0].mxu0
        %v4867 = vadd.f32 %v4342, %v4866
        %v4868 = vpop.f32.mrb[0].mxu0
        %v4869 = vadd.f32 %v4338, %v4868
        %v4870 = vpop.f32.mrb[0].mxu0
        %v4871 = vadd.f32 %v4342, %v4870
        %4872 = vmatprep.mubr.bf16.mxu0 %v4258
        %4873 = vmatmul.mubr.bf16.gmra.mrb[0].mxu0 %v4257
        %v4874 = vpop.f32.mrb[0].mxu0
        %v4875 = vadd.f32 %v4338, %v4874
        %v4876 = vpop.f32.mrb[0].mxu0
        %v4877 = vadd.f32 %v4342, %v4876
        %v4878 = vpop.f32.mrb[0].mxu0
        %v4879 = vadd.f32 %v4338, %v4878
        %v4880 = vpop.f32.mrb[0].mxu0
        %v4881 = vadd.f32 %v4342, %v4880
        %4882 = vmatprep.mubr.bf16.mxu0 %v4260
        %4883 = vmatmul.mubr.bf16.gmra.mrb[0].mxu0 %v4259
        %v4884 = vpop.f32.mrb[0].mxu0
        %v4885 = vadd.f32 %v4338, %v4884
        %v4886 = vpop.f32.mrb[0].mxu0
        %v4887 = vadd.f32 %v4342, %v4886
        %v4888 = vpop.f32.mrb[0].mxu0
        %v4889 = vadd.f32 %v4338, %v4888
        %v4890 = vpop.f32.mrb[0].mxu0
        %v4891 = vadd.f32 %v4342, %v4890
        %4892 = vdwg.mxu0
        %v4893 = vmax.f32 %v4702, 0.0
        %v4894 = vmax.f32 %v4704, 0.0
        %v4895 = vmax.f32 %v4815, 0.0
        %v4896 = vmax.f32 %v4817, 0.0
        %v4897 = vmax.f32 %v4706, 0.0
        %v4898 = vmax.f32 %v4708, 0.0
        %v4899 = vmax.f32 %v4819, 0.0
        %v4900 = vmax.f32 %v4821, 0.0
        %v4901 = vmax.f32 %v4712, 0.0
        %v4902 = vmax.f32 %v4714, 0.0
        %v4903 = vmax.f32 %v4825, 0.0
        %v4904 = vmax.f32 %v4827, 0.0
        %v4905 = vmax.f32 %v4716, 0.0
        %v4906 = vmax.f32 %v4718, 0.0
        %v4907 = vmax.f32 %v4829, 0.0
        %v4908 = vmax.f32 %v4831, 0.0
        %v4909 = vmax.f32 %v4722, 0.0
        %v4910 = vmax.f32 %v4724, 0.0
        %v4911 = vmax.f32 %v4835, 0.0
        %v4912 = vmax.f32 %v4837, 0.0
        %v4913 = vmax.f32 %v4726, 0.0
        %v4914 = vmax.f32 %v4728, 0.0
        %v4915 = vmax.f32 %v4839, 0.0
        %v4916 = vmax.f32 %v4841, 0.0
        %v4917 = vmax.f32 %v4732, 0.0
        %v4918 = vmax.f32 %v4734, 0.0
        %v4919 = vmax.f32 %v4845, 0.0
        %v4920 = vmax.f32 %v4847, 0.0
        %v4921 = vmax.f32 %v4736, 0.0
        %v4922 = vmax.f32 %v4738, 0.0
        %v4923 = vmax.f32 %v4849, 0.0
        %v4924 = vmax.f32 %v4851, 0.0
        %v4925 = vmax.f32 %v4742, 0.0
        %v4926 = vmax.f32 %v4744, 0.0
        %v4927 = vmax.f32 %v4855, 0.0
        %v4928 = vmax.f32 %v4857, 0.0
        %v4929 = vmax.f32 %v4746, 0.0
        %v4930 = vmax.f32 %v4748, 0.0
        %v4931 = vmax.f32 %v4859, 0.0
        %v4932 = vmax.f32 %v4861, 0.0
        %v4933 = vmax.f32 %v4752, 0.0
        %v4934 = vmax.f32 %v4754, 0.0
        %v4935 = vmax.f32 %v4865, 0.0
        %v4936 = vmax.f32 %v4867, 0.0
        %v4937 = vmax.f32 %v4756, 0.0
        %v4938 = vmax.f32 %v4758, 0.0
        %v4939 = vmax.f32 %v4869, 0.0
        %v4940 = vmax.f32 %v4871, 0.0
        %v4941 = vmax.f32 %v4762, 0.0
        %v4942 = vmax.f32 %v4764, 0.0
        %v4943 = vmax.f32 %v4875, 0.0
        %v4944 = vmax.f32 %v4877, 0.0
        %v4945 = vmax.f32 %v4766, 0.0
        %v4946 = vmax.f32 %v4768, 0.0
        %v4947 = vmax.f32 %v4879, 0.0
        %v4948 = vmax.f32 %v4881, 0.0
        %v4949 = vmax.f32 %v4772, 0.0
        %v4950 = vmax.f32 %v4774, 0.0
        %v4951 = vmax.f32 %v4885, 0.0
        %v4952 = vmax.f32 %v4887, 0.0
        %v4953 = vmax.f32 %v4776, 0.0
        %v4954 = vmax.f32 %v4778, 0.0
        %v4955 = vmax.f32 %v4889, 0.0
        %v4956 = vmax.f32 %v4891, 0.0
        %v4957 = vpack.c.bf16 %v4897, %v4893
        %v4958 = vpack.c.bf16 %v4898, %v4894
        %v4959 = vpack.c.bf16 %v4899, %v4895
        %v4960 = vpack.c.bf16 %v4900, %v4896
        %v4961 = vpack.c.bf16 %v4905, %v4901
        %v4962 = vpack.c.bf16 %v4906, %v4902
        %v4963 = vpack.c.bf16 %v4907, %v4903
        %v4964 = vpack.c.bf16 %v4908, %v4904
        %v4965 = vpack.c.bf16 %v4913, %v4909
        %v4966 = vpack.c.bf16 %v4914, %v4910
        %v4967 = vpack.c.bf16 %v4915, %v4911
        %v4968 = vpack.c.bf16 %v4916, %v4912
        %v4969 = vpack.c.bf16 %v4921, %v4917
        %v4970 = vpack.c.bf16 %v4922, %v4918
        %v4971 = vpack.c.bf16 %v4923, %v4919
        %v4972 = vpack.c.bf16 %v4924, %v4920
        %v4973 = vpack.c.bf16 %v4929, %v4925
        %v4974 = vpack.c.bf16 %v4930, %v4926
        %v4975 = vpack.c.bf16 %v4931, %v4927
        %v4976 = vpack.c.bf16 %v4932, %v4928
        %v4977 = vpack.c.bf16 %v4937, %v4933
        %v4978 = vpack.c.bf16 %v4938, %v4934
        %v4979 = vpack.c.bf16 %v4939, %v4935
        %v4980 = vpack.c.bf16 %v4940, %v4936
        %v4981 = vpack.c.bf16 %v4945, %v4941
        %v4982 = vpack.c.bf16 %v4946, %v4942
        %v4983 = vpack.c.bf16 %v4947, %v4943
        %v4984 = vpack.c.bf16 %v4948, %v4944
        %v4985 = vpack.c.bf16 %v4953, %v4949
        %v4986 = vpack.c.bf16 %v4954, %v4950
        %v4987 = vpack.c.bf16 %v4955, %v4951
        %v4988 = vpack.c.bf16 %v4956, %v4952
        %v4989 = vld [vmem:[#allocation14] sm:$0xff]
        %v4990 = vld [vmem:[#allocation14 + $0x8] sm:$0xff]
        %v4991 = vld [vmem:[#allocation14 + $0x10] sm:$0xff]
        %v4992 = vld [vmem:[#allocation14 + $0x18] sm:$0xf]
        %v4993 = vld [vmem:[#allocation14 + $0x1c] sm:$0xff]
        %v4994 = vld [vmem:[#allocation14 + $0x24] sm:$0xff]
        %v4995 = vld [vmem:[#allocation14 + $0x2c] sm:$0xff]
        %v4996 = vld [vmem:[#allocation14 + $0x34] sm:$0xf]
        %v4997 = vld [vmem:[#allocation14 + $0x38] sm:$0xff]
        %v4998 = vld [vmem:[#allocation14 + $0x40] sm:$0xff]
        %v4999 = vld [vmem:[#allocation14 + $0x48] sm:$0xff]
        %v5000 = vld [vmem:[#allocation14 + $0x50] sm:$0xf]
        %v5001 = vld [vmem:[#allocation14 + $0x54] sm:$0xff]
        %v5002 = vld [vmem:[#allocation14 + $0x5c] sm:$0xff]
        %v5003 = vld [vmem:[#allocation14 + $0x64] sm:$0xff]
        %v5004 = vld [vmem:[#allocation14 + $0x6c] sm:$0xf]
        %v5005 = vld [vmem:[#allocation14 + $0x70] sm:$0xff]
        %v5006 = vld [vmem:[#allocation14 + $0x78] sm:$0xff]
        %v5007 = vld [vmem:[#allocation14 + $0x80] sm:$0xff]
        %v5008 = vld [vmem:[#allocation14 + $0x88] sm:$0xf]
        %v5009 = vld [vmem:[#allocation14 + $0x8c] sm:$0xff]
        %v5010 = vld [vmem:[#allocation14 + $0x94] sm:$0xff]
        %v5011 = vld [vmem:[#allocation14 + $0x9c] sm:$0xff]
        %v5012 = vld [vmem:[#allocation14 + $0xa4] sm:$0xf]
        %v5013 = vld [vmem:[#allocation14 + $0xa8] sm:$0xff]
        %v5014 = vld [vmem:[#allocation14 + $0xb0] sm:$0xff]
        %v5015 = vld [vmem:[#allocation14 + $0xb8] sm:$0xff]
        %v5016 = vld [vmem:[#allocation14 + $0xc0] sm:$0xf]
        %v5017 = vld [vmem:[#allocation14 + $0xc4] sm:$0xff]
        %v5018 = vld [vmem:[#allocation14 + $0xcc] sm:$0xff]
        %v5019 = vld [vmem:[#allocation14 + $0xd4] sm:$0xff]
        %v5020 = vld [vmem:[#allocation14 + $0xdc] sm:$0xf]
        %v5021 = vld [vmem:[#allocation14 + $0xe0] sm:$0xff]
        %v5022 = vld [vmem:[#allocation14 + $0xe8] sm:$0xff]
        %v5023 = vld [vmem:[#allocation14 + $0xf0] sm:$0xff]
        %v5024 = vld [vmem:[#allocation14 + $0xf8] sm:$0xf]
        %v5025 = vld [vmem:[#allocation14 + $0xfc] sm:$0xff]
        %v5026 = vld [vmem:[#allocation14 + $0x104] sm:$0xff]
        %v5027 = vld [vmem:[#allocation14 + $0x10c] sm:$0xff]
        %v5028 = vld [vmem:[#allocation14 + $0x114] sm:$0xf]
        %v5029 = vld [vmem:[#allocation14 + $0x118] sm:$0xff]
        %v5030 = vld [vmem:[#allocation14 + $0x120] sm:$0xff]
        %v5031 = vld [vmem:[#allocation14 + $0x128] sm:$0xff]
        %v5032 = vld [vmem:[#allocation14 + $0x130] sm:$0xf]
        %v5033 = vld [vmem:[#allocation14 + $0x134] sm:$0xff]
        %v5034 = vld [vmem:[#allocation14 + $0x13c] sm:$0xff]
        %v5035 = vld [vmem:[#allocation14 + $0x144] sm:$0xff]
        %v5036 = vld [vmem:[#allocation14 + $0x14c] sm:$0xf]
        %v5037 = vld [vmem:[#allocation14 + $0x150] sm:$0xff]
        %v5038 = vld [vmem:[#allocation14 + $0x158] sm:$0xff]
        %v5039 = vld [vmem:[#allocation14 + $0x160] sm:$0xff]
        %v5040 = vld [vmem:[#allocation14 + $0x168] sm:$0xf]
        %v5041 = vld [vmem:[#allocation14 + $0x16c] sm:$0xff]
        %v5042 = vld [vmem:[#allocation14 + $0x174] sm:$0xff]
        %v5043 = vld [vmem:[#allocation14 + $0x17c] sm:$0xff]
        %v5044 = vld [vmem:[#allocation14 + $0x184] sm:$0xf]
        %v5045 = vld [vmem:[#allocation14 + $0x188] sm:$0xff]
        %v5046 = vld [vmem:[#allocation14 + $0x190] sm:$0xff]
        %v5047 = vld [vmem:[#allocation14 + $0x198] sm:$0xff]
        %v5048 = vld [vmem:[#allocation14 + $0x1a0] sm:$0xf]
        %v5049 = vld [vmem:[#allocation14 + $0x1a4] sm:$0xff]
        %v5050 = vld [vmem:[#allocation14 + $0x1ac] sm:$0xff]
        %v5051 = vld [vmem:[#allocation14 + $0x1b4] sm:$0xff]
        %v5052 = vld [vmem:[#allocation14 + $0x1bc] sm:$0xf]
        %v5053 = vld [vmem:[#allocation14 + $0x1c0] sm:$0xff]
        %v5054 = vld [vmem:[#allocation14 + $0x1c8] sm:$0xff]
        %v5055 = vld [vmem:[#allocation14 + $0x1d0] sm:$0xff]
        %v5056 = vld [vmem:[#allocation14 + $0x1d8] sm:$0xf]
        %v5057 = vld [vmem:[#allocation14 + $0x1dc] sm:$0xff]
        %v5058 = vld [vmem:[#allocation14 + $0x1e4] sm:$0xff]
        %v5059 = vld [vmem:[#allocation14 + $0x1ec] sm:$0xff]
        %v5060 = vld [vmem:[#allocation14 + $0x1f4] sm:$0xf]
        %v5061 = vld [vmem:[#allocation14 + $0x1f8] sm:$0xff]
        %v5062 = vld [vmem:[#allocation14 + $0x200] sm:$0xff]
        %v5063 = vld [vmem:[#allocation14 + $0x208] sm:$0xff]
        %v5064 = vld [vmem:[#allocation14 + $0x210] sm:$0xf]
        %v5065 = vld [vmem:[#allocation14 + $0x214] sm:$0xff]
        %v5066 = vld [vmem:[#allocation14 + $0x21c] sm:$0xff]
        %v5067 = vld [vmem:[#allocation14 + $0x224] sm:$0xff]
        %v5068 = vld [vmem:[#allocation14 + $0x22c] sm:$0xf]
        %v5069 = vld [vmem:[#allocation14 + $0x230] sm:$0xff]
        %v5070 = vld [vmem:[#allocation14 + $0x238] sm:$0xff]
        %v5071 = vld [vmem:[#allocation14 + $0x240] sm:$0xff]
        %v5072 = vld [vmem:[#allocation14 + $0x248] sm:$0xf]
        %v5073 = vld [vmem:[#allocation14 + $0x24c] sm:$0xff]
        %v5074 = vld [vmem:[#allocation14 + $0x254] sm:$0xff]
        %v5075 = vld [vmem:[#allocation14 + $0x25c] sm:$0xff]
        %v5076 = vld [vmem:[#allocation14 + $0x264] sm:$0xf]
        %v5077 = vld [vmem:[#allocation14 + $0x268] sm:$0xff]
        %v5078 = vld [vmem:[#allocation14 + $0x270] sm:$0xff]
        %v5079 = vld [vmem:[#allocation14 + $0x278] sm:$0xff]
        %v5080 = vld [vmem:[#allocation14 + $0x280] sm:$0xf]
        %v5081 = vld [vmem:[#allocation14 + $0x284] sm:$0xff]
        %v5082 = vld [vmem:[#allocation14 + $0x28c] sm:$0xff]
        %v5083 = vld [vmem:[#allocation14 + $0x294] sm:$0xff]
        %v5084 = vld [vmem:[#allocation14 + $0x29c] sm:$0xf]
        %v5085 = vld [vmem:[#allocation14 + $0x2a0] sm:$0xff]
        %v5086 = vld [vmem:[#allocation14 + $0x2a8] sm:$0xff]
        %v5087 = vld [vmem:[#allocation14 + $0x2b0] sm:$0xff]
        %v5088 = vld [vmem:[#allocation14 + $0x2b8] sm:$0xf]
        %v5089 = vld [vmem:[#allocation14 + $0x2bc] sm:$0xff]
        %v5090 = vld [vmem:[#allocation14 + $0x2c4] sm:$0xff]
        %v5091 = vld [vmem:[#allocation14 + $0x2cc] sm:$0xff]
        %v5092 = vld [vmem:[#allocation14 + $0x2d4] sm:$0xf]
        %v5093 = vld [vmem:[#allocation14 + $0x2d8] sm:$0xff]
        %v5094 = vld [vmem:[#allocation14 + $0x2e0] sm:$0xff]
        %v5095 = vld [vmem:[#allocation14 + $0x2e8] sm:$0xff]
        %v5096 = vld [vmem:[#allocation14 + $0x2f0] sm:$0xf]
        %v5097 = vld [vmem:[#allocation14 + $0x2f4] sm:$0xff]
        %v5098 = vld [vmem:[#allocation14 + $0x2fc] sm:$0xff]
        %v5099 = vld [vmem:[#allocation14 + $0x304] sm:$0xff]
        %v5100 = vld [vmem:[#allocation14 + $0x30c] sm:$0xf]
        %v5101 = vld [vmem:[#allocation14 + $0x310] sm:$0xff]
        %v5102 = vld [vmem:[#allocation14 + $0x318] sm:$0xff]
        %v5103 = vld [vmem:[#allocation14 + $0x320] sm:$0xff]
        %v5104 = vld [vmem:[#allocation14 + $0x328] sm:$0xf]
        %v5105 = vld [vmem:[#allocation14 + $0x32c] sm:$0xff]
        %v5106 = vld [vmem:[#allocation14 + $0x334] sm:$0xff]
        %v5107 = vld [vmem:[#allocation14 + $0x33c] sm:$0xff]
        %v5108 = vld [vmem:[#allocation14 + $0x344] sm:$0xf]
        %v5109 = vld [vmem:[#allocation14 + $0x348] sm:$0xff]
        %v5110 = vld [vmem:[#allocation14 + $0x350] sm:$0xff]
        %v5111 = vld [vmem:[#allocation14 + $0x358] sm:$0xff]
        %v5112 = vld [vmem:[#allocation14 + $0x360] sm:$0xf]
        %v5113 = vld [vmem:[#allocation14 + $0x364] sm:$0xff]
        %v5114 = vld [vmem:[#allocation14 + $0x36c] sm:$0xff]
        %v5115 = vld [vmem:[#allocation14 + $0x374] sm:$0xff]
        %v5116 = vld [vmem:[#allocation14 + $0x37c] sm:$0xf]
        %v5117 = vld [vmem:[#allocation14 + $0x380] sm:$0xff]
        %v5118 = vld [vmem:[#allocation14 + $0x388] sm:$0xff]
        %v5119 = vld [vmem:[#allocation14 + $0x390] sm:$0xff]
        %v5120 = vld [vmem:[#allocation14 + $0x398] sm:$0xf]
        %v5121 = vld [vmem:[#allocation14 + $0x39c] sm:$0xff]
        %v5122 = vld [vmem:[#allocation14 + $0x3a4] sm:$0xff]
        %v5123 = vld [vmem:[#allocation14 + $0x3ac] sm:$0xff]
        %v5124 = vld [vmem:[#allocation14 + $0x3b4] sm:$0xf]
        %v5125 = vld [vmem:[#allocation14 + $0x3b8] sm:$0xff]
        %v5126 = vld [vmem:[#allocation14 + $0x3c0] sm:$0xff]
        %v5127 = vld [vmem:[#allocation14 + $0x3c8] sm:$0xff]
        %v5128 = vld [vmem:[#allocation14 + $0x3d0] sm:$0xf]
        %v5129 = vld [vmem:[#allocation14 + $0x3d4] sm:$0xff]
        %v5130 = vld [vmem:[#allocation14 + $0x3dc] sm:$0xff]
        %v5131 = vld [vmem:[#allocation14 + $0x3e4] sm:$0xff]
        %v5132 = vld [vmem:[#allocation14 + $0x3ec] sm:$0xf]
        %v5133 = vld [vmem:[#allocation14 + $0x3f0] sm:$0xff]
        %v5134 = vld [vmem:[#allocation14 + $0x3f8] sm:$0xff]
        %v5135 = vld [vmem:[#allocation14 + $0x400] sm:$0xff]
        %v5136 = vld [vmem:[#allocation14 + $0x408] sm:$0xf]
        %v5137 = vld [vmem:[#allocation14 + $0x40c] sm:$0xff]
        %v5138 = vld [vmem:[#allocation14 + $0x414] sm:$0xff]
        %v5139 = vld [vmem:[#allocation14 + $0x41c] sm:$0xff]
        %v5140 = vld [vmem:[#allocation14 + $0x424] sm:$0xf]
        %v5141 = vld [vmem:[#allocation14 + $0x428] sm:$0xff]
        %v5142 = vld [vmem:[#allocation14 + $0x430] sm:$0xff]
        %v5143 = vld [vmem:[#allocation14 + $0x438] sm:$0xff]
        %v5144 = vld [vmem:[#allocation14 + $0x440] sm:$0xf]
        %v5145 = vld [vmem:[#allocation14 + $0x444] sm:$0xff]
        %v5146 = vld [vmem:[#allocation14 + $0x44c] sm:$0xff]
        %v5147 = vld [vmem:[#allocation14 + $0x454] sm:$0xff]
        %v5148 = vld [vmem:[#allocation14 + $0x45c] sm:$0xf]
        %v5149 = vld [vmem:[#allocation14 + $0x460] sm:$0xff]
        %v5150 = vld [vmem:[#allocation14 + $0x468] sm:$0xff]
        %v5151 = vld [vmem:[#allocation14 + $0x470] sm:$0xff]
        %v5152 = vld [vmem:[#allocation14 + $0x478] sm:$0xf]
        %v5153 = vld [vmem:[#allocation14 + $0x47c] sm:$0xff]
        %v5154 = vld [vmem:[#allocation14 + $0x484] sm:$0xff]
        %v5155 = vld [vmem:[#allocation14 + $0x48c] sm:$0xff]
        %v5156 = vld [vmem:[#allocation14 + $0x494] sm:$0xf]
        %v5157 = vld [vmem:[#allocation14 + $0x498] sm:$0xff]
        %v5158 = vld [vmem:[#allocation14 + $0x4a0] sm:$0xff]
        %v5159 = vld [vmem:[#allocation14 + $0x4a8] sm:$0xff]
        %v5160 = vld [vmem:[#allocation14 + $0x4b0] sm:$0xf]
        %v5161 = vld [vmem:[#allocation14 + $0x4b4] sm:$0xff]
        %v5162 = vld [vmem:[#allocation14 + $0x4bc] sm:$0xff]
        %v5163 = vld [vmem:[#allocation14 + $0x4c4] sm:$0xff]
        %v5164 = vld [vmem:[#allocation14 + $0x4cc] sm:$0xf]
        %v5165 = vld [vmem:[#allocation14 + $0x4d0] sm:$0xff]
        %v5166 = vld [vmem:[#allocation14 + $0x4d8] sm:$0xff]
        %v5167 = vld [vmem:[#allocation14 + $0x4e0] sm:$0xff]
        %v5168 = vld [vmem:[#allocation14 + $0x4e8] sm:$0xf]
        %v5169 = vld [vmem:[#allocation14 + $0x4ec] sm:$0xff]
        %v5170 = vld [vmem:[#allocation14 + $0x4f4] sm:$0xff]
        %v5171 = vld [vmem:[#allocation14 + $0x4fc] sm:$0xff]
        %v5172 = vld [vmem:[#allocation14 + $0x504] sm:$0xf]
        %v5173 = vld [vmem:[#allocation14 + $0x508] sm:$0xff]
        %v5174 = vld [vmem:[#allocation14 + $0x510] sm:$0xff]
        %v5175 = vld [vmem:[#allocation14 + $0x518] sm:$0xff]
        %v5176 = vld [vmem:[#allocation14 + $0x520] sm:$0xf]
        %v5177 = vld [vmem:[#allocation14 + $0x524] sm:$0xff]
        %v5178 = vld [vmem:[#allocation14 + $0x52c] sm:$0xff]
        %v5179 = vld [vmem:[#allocation14 + $0x534] sm:$0xff]
        %v5180 = vld [vmem:[#allocation14 + $0x53c] sm:$0xf]
        %v5181 = vld [vmem:[#allocation14 + $0x540] sm:$0xff]
        %v5182 = vld [vmem:[#allocation14 + $0x548] sm:$0xff]
        %v5183 = vld [vmem:[#allocation14 + $0x550] sm:$0xff]
        %v5184 = vld [vmem:[#allocation14 + $0x558] sm:$0xf]
        %v5185 = vld [vmem:[#allocation14 + $0x55c] sm:$0xff]
        %v5186 = vld [vmem:[#allocation14 + $0x564] sm:$0xff]
        %v5187 = vld [vmem:[#allocation14 + $0x56c] sm:$0xff]
        %v5188 = vld [vmem:[#allocation14 + $0x574] sm:$0xf]
        %v5189 = vld [vmem:[#allocation14 + $0x578] sm:$0xff]
        %v5190 = vld [vmem:[#allocation14 + $0x580] sm:$0xff]
        %v5191 = vld [vmem:[#allocation14 + $0x588] sm:$0xff]
        %v5192 = vld [vmem:[#allocation14 + $0x590] sm:$0xf]
        %v5193 = vld [vmem:[#allocation14 + $0x594] sm:$0xff]
        %v5194 = vld [vmem:[#allocation14 + $0x59c] sm:$0xff]
        %v5195 = vld [vmem:[#allocation14 + $0x5a4] sm:$0xff]
        %v5196 = vld [vmem:[#allocation14 + $0x5ac] sm:$0xf]
        %v5197 = vld [vmem:[#allocation14 + $0x5b0] sm:$0xff]
        %v5198 = vld [vmem:[#allocation14 + $0x5b8] sm:$0xff]
        %v5199 = vld [vmem:[#allocation14 + $0x5c0] sm:$0xff]
        %v5200 = vld [vmem:[#allocation14 + $0x5c8] sm:$0xf]
        %v5201 = vld [vmem:[#allocation14 + $0x5cc] sm:$0xff]
        %v5202 = vld [vmem:[#allocation14 + $0x5d4] sm:$0xff]
        %v5203 = vld [vmem:[#allocation14 + $0x5dc] sm:$0xff]
        %v5204 = vld [vmem:[#allocation14 + $0x5e4] sm:$0xf]
        %v5205 = vld [vmem:[#allocation14 + $0x5e8] sm:$0xff]
        %v5206 = vld [vmem:[#allocation14 + $0x5f0] sm:$0xff]
        %v5207 = vld [vmem:[#allocation14 + $0x5f8] sm:$0xff]
        %v5208 = vld [vmem:[#allocation14 + $0x600] sm:$0xf]
        %v5209 = vld [vmem:[#allocation14 + $0x604] sm:$0xff]
        %v5210 = vld [vmem:[#allocation14 + $0x60c] sm:$0xff]
        %v5211 = vld [vmem:[#allocation14 + $0x614] sm:$0xff]
        %v5212 = vld [vmem:[#allocation14 + $0x61c] sm:$0xf]
        %v5213 = vld [vmem:[#allocation14 + $0x620] sm:$0xff]
        %v5214 = vld [vmem:[#allocation14 + $0x628] sm:$0xff]
        %v5215 = vld [vmem:[#allocation14 + $0x630] sm:$0xff]
        %v5216 = vld [vmem:[#allocation14 + $0x638] sm:$0xf]
        %v5217 = vld [vmem:[#allocation14 + $0x63c] sm:$0xff]
        %v5218 = vld [vmem:[#allocation14 + $0x644] sm:$0xff]
        %v5219 = vld [vmem:[#allocation14 + $0x64c] sm:$0xff]
        %v5220 = vld [vmem:[#allocation14 + $0x654] sm:$0xf]
        %v5221 = vld [vmem:[#allocation14 + $0x658] sm:$0xff]
        %v5222 = vld [vmem:[#allocation14 + $0x660] sm:$0xff]
        %v5223 = vld [vmem:[#allocation14 + $0x668] sm:$0xff]
        %v5224 = vld [vmem:[#allocation14 + $0x670] sm:$0xf]
        %v5225 = vld [vmem:[#allocation14 + $0x674] sm:$0xff]
        %v5226 = vld [vmem:[#allocation14 + $0x67c] sm:$0xff]
        %v5227 = vld [vmem:[#allocation14 + $0x684] sm:$0xff]
        %v5228 = vld [vmem:[#allocation14 + $0x68c] sm:$0xf]
        %v5229 = vld [vmem:[#allocation14 + $0x690] sm:$0xff]
        %v5230 = vld [vmem:[#allocation14 + $0x698] sm:$0xff]
        %v5231 = vld [vmem:[#allocation14 + $0x6a0] sm:$0xff]
        %v5232 = vld [vmem:[#allocation14 + $0x6a8] sm:$0xf]
        %v5233 = vld [vmem:[#allocation14 + $0x6ac] sm:$0xff]
        %v5234 = vld [vmem:[#allocation14 + $0x6b4] sm:$0xff]
        %v5235 = vld [vmem:[#allocation14 + $0x6bc] sm:$0xff]
        %v5236 = vld [vmem:[#allocation14 + $0x6c4] sm:$0xf]
        %v5237 = vld [vmem:[#allocation14 + $0x6c8] sm:$0xff]
        %v5238 = vld [vmem:[#allocation14 + $0x6d0] sm:$0xff]
        %v5239 = vld [vmem:[#allocation14 + $0x6d8] sm:$0xff]
        %v5240 = vld [vmem:[#allocation14 + $0x6e0] sm:$0xf]
        %v5241 = vld [vmem:[#allocation14 + $0x6e4] sm:$0xff]
        %v5242 = vld [vmem:[#allocation14 + $0x6ec] sm:$0xff]
        %v5243 = vld [vmem:[#allocation14 + $0x6f4] sm:$0xff]
        %v5244 = vld [vmem:[#allocation14 + $0x6fc] sm:$0xf]
        %v5245 = vld [vmem:[%s12] sm:$0xff]
        %v5247 = vlaneseq
        %v5248 = vshrl.u32 %v5247, 7
        %v5249 = vsub.s32 0, %v5248
        %v5250 = vrot.slane %v5245, %v5249
        %v5251 = vlaneseq
        %v5252 = vshrl.u32 %v5251, 7
        %v5253 = vsub.s32 1, %v5252
        %v5254 = vrot.slane %v5245, %v5253
        %v5255 = vlaneseq
        %v5256 = vshrl.u32 %v5255, 7
        %v5257 = vsub.s32 2, %v5256
        %v5258 = vrot.slane %v5245, %v5257
        %v5259 = vlaneseq
        %v5260 = vshrl.u32 %v5259, 7
        %v5261 = vsub.s32 3, %v5260
        %v5262 = vrot.slane %v5245, %v5261
        %v5263 = vlaneseq
        %v5264 = vshrl.u32 %v5263, 7
        %v5265 = vsub.s32 4, %v5264
        %v5266 = vrot.slane %v5245, %v5265
        %v5267 = vlaneseq
        %v5268 = vshrl.u32 %v5267, 7
        %v5269 = vsub.s32 5, %v5268
        %v5270 = vrot.slane %v5245, %v5269
        %v5271 = vlaneseq
        %v5272 = vshrl.u32 %v5271, 7
        %v5273 = vsub.s32 6, %v5272
        %v5274 = vrot.slane %v5245, %v5273
        %v5538 = vunpack.c.l.b16 %v4989
        %v5539 = vunpack.c.h.b16 %v4989
        %v5540 = vunpack.c.l.b16 %v4990
        %v5541 = vunpack.c.h.b16 %v4990
        %v5542 = vunpack.c.l.b16 %v4991
        %v5543 = vunpack.c.h.b16 %v4991
        %v5544 = vunpack.c.l.b16 %v4992
        %v5545 = vunpack.c.l.b16 %v4993
        %v5546 = vunpack.c.h.b16 %v4993
        %v5547 = vunpack.c.l.b16 %v4994
        %v5548 = vunpack.c.h.b16 %v4994
        %v5549 = vunpack.c.l.b16 %v4995
        %v5550 = vunpack.c.h.b16 %v4995
        %v5551 = vunpack.c.l.b16 %v4996
        %v5552 = vunpack.c.l.b16 %v4997
        %v5553 = vunpack.c.h.b16 %v4997
        %v5554 = vunpack.c.l.b16 %v4998
        %v5555 = vunpack.c.h.b16 %v4998
        %v5556 = vunpack.c.l.b16 %v4999
        %v5557 = vunpack.c.h.b16 %v4999
        %v5558 = vunpack.c.l.b16 %v5000
        %v5559 = vunpack.c.l.b16 %v5001
        %v5560 = vunpack.c.h.b16 %v5001
        %v5561 = vunpack.c.l.b16 %v5002
        %v5562 = vunpack.c.h.b16 %v5002
        %v5563 = vunpack.c.l.b16 %v5003
        %v5564 = vunpack.c.h.b16 %v5003
        %v5565 = vunpack.c.l.b16 %v5004
        %v5566 = vunpack.c.l.b16 %v5005
        %v5567 = vunpack.c.h.b16 %v5005
        %v5568 = vunpack.c.l.b16 %v5006
        %v5569 = vunpack.c.h.b16 %v5006
        %v5570 = vunpack.c.l.b16 %v5007
        %v5571 = vunpack.c.h.b16 %v5007
        %v5572 = vunpack.c.l.b16 %v5008
        %v5573 = vunpack.c.l.b16 %v5009
        %v5574 = vunpack.c.h.b16 %v5009
        %v5575 = vunpack.c.l.b16 %v5010
        %v5576 = vunpack.c.h.b16 %v5010
        %v5577 = vunpack.c.l.b16 %v5011
        %v5578 = vunpack.c.h.b16 %v5011
        %v5579 = vunpack.c.l.b16 %v5012
        %v5580 = vunpack.c.l.b16 %v5013
        %v5581 = vunpack.c.h.b16 %v5013
        %v5582 = vunpack.c.l.b16 %v5014
        %v5583 = vunpack.c.h.b16 %v5014
        %v5584 = vunpack.c.l.b16 %v5015
        %v5585 = vunpack.c.h.b16 %v5015
        %v5586 = vunpack.c.l.b16 %v5016
        %v5587 = vunpack.c.l.b16 %v5017
        %v5588 = vunpack.c.h.b16 %v5017
        %v5589 = vunpack.c.l.b16 %v5018
        %v5590 = vunpack.c.h.b16 %v5018
        %v5591 = vunpack.c.l.b16 %v5019
        %v5592 = vunpack.c.h.b16 %v5019
        %v5593 = vunpack.c.l.b16 %v5020
        %v5594 = vunpack.c.l.b16 %v5021
        %v5595 = vunpack.c.h.b16 %v5021
        %v5596 = vunpack.c.l.b16 %v5022
        %v5597 = vunpack.c.h.b16 %v5022
        %v5598 = vunpack.c.l.b16 %v5023
        %v5599 = vunpack.c.h.b16 %v5023
        %v5600 = vunpack.c.l.b16 %v5024
        %v5601 = vunpack.c.l.b16 %v5025
        %v5602 = vunpack.c.h.b16 %v5025
        %v5603 = vunpack.c.l.b16 %v5026
        %v5604 = vunpack.c.h.b16 %v5026
        %v5605 = vunpack.c.l.b16 %v5027
        %v5606 = vunpack.c.h.b16 %v5027
        %v5607 = vunpack.c.l.b16 %v5028
        %v5608 = vunpack.c.l.b16 %v5029
        %v5609 = vunpack.c.h.b16 %v5029
        %v5610 = vunpack.c.l.b16 %v5030
        %v5611 = vunpack.c.h.b16 %v5030
        %v5612 = vunpack.c.l.b16 %v5031
        %v5613 = vunpack.c.h.b16 %v5031
        %v5614 = vunpack.c.l.b16 %v5032
        %v5615 = vunpack.c.l.b16 %v5033
        %v5616 = vunpack.c.h.b16 %v5033
        %v5617 = vunpack.c.l.b16 %v5034
        %v5618 = vunpack.c.h.b16 %v5034
        %v5619 = vunpack.c.l.b16 %v5035
        %v5620 = vunpack.c.h.b16 %v5035
        %v5621 = vunpack.c.l.b16 %v5036
        %v5622 = vunpack.c.l.b16 %v5037
        %v5623 = vunpack.c.h.b16 %v5037
        %v5624 = vunpack.c.l.b16 %v5038
        %v5625 = vunpack.c.h.b16 %v5038
        %v5626 = vunpack.c.l.b16 %v5039
        %v5627 = vunpack.c.h.b16 %v5039
        %v5628 = vunpack.c.l.b16 %v5040
        %v5629 = vunpack.c.l.b16 %v5041
        %v5630 = vunpack.c.h.b16 %v5041
        %v5631 = vunpack.c.l.b16 %v5042
        %v5632 = vunpack.c.h.b16 %v5042
        %v5633 = vunpack.c.l.b16 %v5043
        %v5634 = vunpack.c.h.b16 %v5043
        %v5635 = vunpack.c.l.b16 %v5044
        %v5636 = vunpack.c.l.b16 %v5045
        %v5637 = vunpack.c.h.b16 %v5045
        %v5638 = vunpack.c.l.b16 %v5046
        %v5639 = vunpack.c.h.b16 %v5046
        %v5640 = vunpack.c.l.b16 %v5047
        %v5641 = vunpack.c.h.b16 %v5047
        %v5642 = vunpack.c.l.b16 %v5048
        %v5643 = vunpack.c.l.b16 %v5049
        %v5644 = vunpack.c.h.b16 %v5049
        %v5645 = vunpack.c.l.b16 %v5050
        %v5646 = vunpack.c.h.b16 %v5050
        %v5647 = vunpack.c.l.b16 %v5051
        %v5648 = vunpack.c.h.b16 %v5051
        %v5649 = vunpack.c.l.b16 %v5052
        %v5650 = vunpack.c.l.b16 %v5053
        %v5651 = vunpack.c.h.b16 %v5053
        %v5652 = vunpack.c.l.b16 %v5054
        %v5653 = vunpack.c.h.b16 %v5054
        %v5654 = vunpack.c.l.b16 %v5055
        %v5655 = vunpack.c.h.b16 %v5055
        %v5656 = vunpack.c.l.b16 %v5056
        %v5657 = vunpack.c.l.b16 %v5057
        %v5658 = vunpack.c.h.b16 %v5057
        %v5659 = vunpack.c.l.b16 %v5058
        %v5660 = vunpack.c.h.b16 %v5058
        %v5661 = vunpack.c.l.b16 %v5059
        %v5662 = vunpack.c.h.b16 %v5059
        %v5663 = vunpack.c.l.b16 %v5060
        %v5664 = vunpack.c.l.b16 %v5061
        %v5665 = vunpack.c.h.b16 %v5061
        %v5666 = vunpack.c.l.b16 %v5062
        %v5667 = vunpack.c.h.b16 %v5062
        %v5668 = vunpack.c.l.b16 %v5063
        %v5669 = vunpack.c.h.b16 %v5063
        %v5670 = vunpack.c.l.b16 %v5064
        %v5671 = vunpack.c.l.b16 %v5065
        %v5672 = vunpack.c.h.b16 %v5065
        %v5673 = vunpack.c.l.b16 %v5066
        %v5674 = vunpack.c.h.b16 %v5066
        %v5675 = vunpack.c.l.b16 %v5067
        %v5676 = vunpack.c.h.b16 %v5067
        %v5677 = vunpack.c.l.b16 %v5068
        %v5678 = vunpack.c.l.b16 %v5069
        %v5679 = vunpack.c.h.b16 %v5069
        %v5680 = vunpack.c.l.b16 %v5070
        %v5681 = vunpack.c.h.b16 %v5070
        %v5682 = vunpack.c.l.b16 %v5071
        %v5683 = vunpack.c.h.b16 %v5071
        %v5684 = vunpack.c.l.b16 %v5072
        %v5685 = vunpack.c.l.b16 %v5073
        %v5686 = vunpack.c.h.b16 %v5073
        %v5687 = vunpack.c.l.b16 %v5074
        %v5688 = vunpack.c.h.b16 %v5074
        %v5689 = vunpack.c.l.b16 %v5075
        %v5690 = vunpack.c.h.b16 %v5075
        %v5691 = vunpack.c.l.b16 %v5076
        %v5692 = vunpack.c.l.b16 %v5077
        %v5693 = vunpack.c.h.b16 %v5077
        %v5694 = vunpack.c.l.b16 %v5078
        %v5695 = vunpack.c.h.b16 %v5078
        %v5696 = vunpack.c.l.b16 %v5079
        %v5697 = vunpack.c.h.b16 %v5079
        %v5698 = vunpack.c.l.b16 %v5080
        %v5699 = vunpack.c.l.b16 %v5081
        %v5700 = vunpack.c.h.b16 %v5081
        %v5701 = vunpack.c.l.b16 %v5082
        %v5702 = vunpack.c.h.b16 %v5082
        %v5703 = vunpack.c.l.b16 %v5083
        %v5704 = vunpack.c.h.b16 %v5083
        %v5705 = vunpack.c.l.b16 %v5084
        %v5706 = vunpack.c.l.b16 %v5085
        %v5707 = vunpack.c.h.b16 %v5085
        %v5708 = vunpack.c.l.b16 %v5086
        %v5709 = vunpack.c.h.b16 %v5086
        %v5710 = vunpack.c.l.b16 %v5087
        %v5711 = vunpack.c.h.b16 %v5087
        %v5712 = vunpack.c.l.b16 %v5088
        %v5713 = vunpack.c.l.b16 %v5089
        %v5714 = vunpack.c.h.b16 %v5089
        %v5715 = vunpack.c.l.b16 %v5090
        %v5716 = vunpack.c.h.b16 %v5090
        %v5717 = vunpack.c.l.b16 %v5091
        %v5718 = vunpack.c.h.b16 %v5091
        %v5719 = vunpack.c.l.b16 %v5092
        %v5720 = vunpack.c.l.b16 %v5093
        %v5721 = vunpack.c.h.b16 %v5093
        %v5722 = vunpack.c.l.b16 %v5094
        %v5723 = vunpack.c.h.b16 %v5094
        %v5724 = vunpack.c.l.b16 %v5095
        %v5725 = vunpack.c.h.b16 %v5095
        %v5726 = vunpack.c.l.b16 %v5096
        %v5727 = vunpack.c.l.b16 %v5097
        %v5728 = vunpack.c.h.b16 %v5097
        %v5729 = vunpack.c.l.b16 %v5098
        %v5730 = vunpack.c.h.b16 %v5098
        %v5731 = vunpack.c.l.b16 %v5099
        %v5732 = vunpack.c.h.b16 %v5099
        %v5733 = vunpack.c.l.b16 %v5100
        %v5734 = vunpack.c.l.b16 %v5101
        %v5735 = vunpack.c.h.b16 %v5101
        %v5736 = vunpack.c.l.b16 %v5102
        %v5737 = vunpack.c.h.b16 %v5102
        %v5738 = vunpack.c.l.b16 %v5103
        %v5739 = vunpack.c.h.b16 %v5103
        %v5740 = vunpack.c.l.b16 %v5104
        %v5741 = vunpack.c.l.b16 %v5105
        %v5742 = vunpack.c.h.b16 %v5105
        %v5743 = vunpack.c.l.b16 %v5106
        %v5744 = vunpack.c.h.b16 %v5106
        %v5745 = vunpack.c.l.b16 %v5107
        %v5746 = vunpack.c.h.b16 %v5107
        %v5747 = vunpack.c.l.b16 %v5108
        %v5748 = vunpack.c.l.b16 %v5109
        %v5749 = vunpack.c.h.b16 %v5109
        %v5750 = vunpack.c.l.b16 %v5110
        %v5751 = vunpack.c.h.b16 %v5110
        %v5752 = vunpack.c.l.b16 %v5111
        %v5753 = vunpack.c.h.b16 %v5111
        %v5754 = vunpack.c.l.b16 %v5112
        %v5755 = vunpack.c.l.b16 %v5113
        %v5756 = vunpack.c.h.b16 %v5113
        %v5757 = vunpack.c.l.b16 %v5114
        %v5758 = vunpack.c.h.b16 %v5114
        %v5759 = vunpack.c.l.b16 %v5115
        %v5760 = vunpack.c.h.b16 %v5115
        %v5761 = vunpack.c.l.b16 %v5116
        %v5762 = vunpack.c.l.b16 %v5117
        %v5763 = vunpack.c.h.b16 %v5117
        %v5764 = vunpack.c.l.b16 %v5118
        %v5765 = vunpack.c.h.b16 %v5118
        %v5766 = vunpack.c.l.b16 %v5119
        %v5767 = vunpack.c.h.b16 %v5119
        %v5768 = vunpack.c.l.b16 %v5120
        %v5769 = vunpack.c.l.b16 %v5121
        %v5770 = vunpack.c.h.b16 %v5121
        %v5771 = vunpack.c.l.b16 %v5122
        %v5772 = vunpack.c.h.b16 %v5122
        %v5773 = vunpack.c.l.b16 %v5123
        %v5774 = vunpack.c.h.b16 %v5123
        %v5775 = vunpack.c.l.b16 %v5124
        %v5776 = vunpack.c.l.b16 %v5125
        %v5777 = vunpack.c.h.b16 %v5125
        %v5778 = vunpack.c.l.b16 %v5126
        %v5779 = vunpack.c.h.b16 %v5126
        %v5780 = vunpack.c.l.b16 %v5127
        %v5781 = vunpack.c.h.b16 %v5127
        %v5782 = vunpack.c.l.b16 %v5128
        %v5783 = vunpack.c.l.b16 %v5129
        %v5784 = vunpack.c.h.b16 %v5129
        %v5785 = vunpack.c.l.b16 %v5130
        %v5786 = vunpack.c.h.b16 %v5130
        %v5787 = vunpack.c.l.b16 %v5131
        %v5788 = vunpack.c.h.b16 %v5131
        %v5789 = vunpack.c.l.b16 %v5132
        %v5790 = vunpack.c.l.b16 %v5133
        %v5791 = vunpack.c.h.b16 %v5133
        %v5792 = vunpack.c.l.b16 %v5134
        %v5793 = vunpack.c.h.b16 %v5134
        %v5794 = vunpack.c.l.b16 %v5135
        %v5795 = vunpack.c.h.b16 %v5135
        %v5796 = vunpack.c.l.b16 %v5136
        %v5797 = vunpack.c.l.b16 %v5137
        %v5798 = vunpack.c.h.b16 %v5137
        %v5799 = vunpack.c.l.b16 %v5138
        %v5800 = vunpack.c.h.b16 %v5138
        %v5801 = vunpack.c.l.b16 %v5139
        %v5802 = vunpack.c.h.b16 %v5139
        %v5803 = vunpack.c.l.b16 %v5140
        %v5804 = vunpack.c.l.b16 %v5141
        %v5805 = vunpack.c.h.b16 %v5141
        %v5806 = vunpack.c.l.b16 %v5142
        %v5807 = vunpack.c.h.b16 %v5142
        %v5808 = vunpack.c.l.b16 %v5143
        %v5809 = vunpack.c.h.b16 %v5143
        %v5810 = vunpack.c.l.b16 %v5144
        %v5811 = vunpack.c.l.b16 %v5145
        %v5812 = vunpack.c.h.b16 %v5145
        %v5813 = vunpack.c.l.b16 %v5146
        %v5814 = vunpack.c.h.b16 %v5146
        %v5815 = vunpack.c.l.b16 %v5147
        %v5816 = vunpack.c.h.b16 %v5147
        %v5817 = vunpack.c.l.b16 %v5148
        %v5818 = vunpack.c.l.b16 %v5149
        %v5819 = vunpack.c.h.b16 %v5149
        %v5820 = vunpack.c.l.b16 %v5150
        %v5821 = vunpack.c.h.b16 %v5150
        %v5822 = vunpack.c.l.b16 %v5151
        %v5823 = vunpack.c.h.b16 %v5151
        %v5824 = vunpack.c.l.b16 %v5152
        %v5825 = vunpack.c.l.b16 %v5153
        %v5826 = vunpack.c.h.b16 %v5153
        %v5827 = vunpack.c.l.b16 %v5154
        %v5828 = vunpack.c.h.b16 %v5154
        %v5829 = vunpack.c.l.b16 %v5155
        %v5830 = vunpack.c.h.b16 %v5155
        %v5831 = vunpack.c.l.b16 %v5156
        %v5832 = vunpack.c.l.b16 %v5157
        %v5833 = vunpack.c.h.b16 %v5157
        %v5834 = vunpack.c.l.b16 %v5158
        %v5835 = vunpack.c.h.b16 %v5158
        %v5836 = vunpack.c.l.b16 %v5159
        %v5837 = vunpack.c.h.b16 %v5159
        %v5838 = vunpack.c.l.b16 %v5160
        %v5839 = vunpack.c.l.b16 %v5161
        %v5840 = vunpack.c.h.b16 %v5161
        %v5841 = vunpack.c.l.b16 %v5162
        %v5842 = vunpack.c.h.b16 %v5162
        %v5843 = vunpack.c.l.b16 %v5163
        %v5844 = vunpack.c.h.b16 %v5163
        %v5845 = vunpack.c.l.b16 %v5164
        %v5846 = vunpack.c.l.b16 %v5165
        %v5847 = vunpack.c.h.b16 %v5165
        %v5848 = vunpack.c.l.b16 %v5166
        %v5849 = vunpack.c.h.b16 %v5166
        %v5850 = vunpack.c.l.b16 %v5167
        %v5851 = vunpack.c.h.b16 %v5167
        %v5852 = vunpack.c.l.b16 %v5168
        %v5853 = vunpack.c.l.b16 %v5169
        %v5854 = vunpack.c.h.b16 %v5169
        %v5855 = vunpack.c.l.b16 %v5170
        %v5856 = vunpack.c.h.b16 %v5170
        %v5857 = vunpack.c.l.b16 %v5171
        %v5858 = vunpack.c.h.b16 %v5171
        %v5859 = vunpack.c.l.b16 %v5172
        %v5860 = vunpack.c.l.b16 %v5173
        %v5861 = vunpack.c.h.b16 %v5173
        %v5862 = vunpack.c.l.b16 %v5174
        %v5863 = vunpack.c.h.b16 %v5174
        %v5864 = vunpack.c.l.b16 %v5175
        %v5865 = vunpack.c.h.b16 %v5175
        %v5866 = vunpack.c.l.b16 %v5176
        %v5867 = vunpack.c.l.b16 %v5177
        %v5868 = vunpack.c.h.b16 %v5177
        %v5869 = vunpack.c.l.b16 %v5178
        %v5870 = vunpack.c.h.b16 %v5178
        %v5871 = vunpack.c.l.b16 %v5179
        %v5872 = vunpack.c.h.b16 %v5179
        %v5873 = vunpack.c.l.b16 %v5180
        %v5874 = vunpack.c.l.b16 %v5181
        %v5875 = vunpack.c.h.b16 %v5181
        %v5876 = vunpack.c.l.b16 %v5182
        %v5877 = vunpack.c.h.b16 %v5182
        %v5878 = vunpack.c.l.b16 %v5183
        %v5879 = vunpack.c.h.b16 %v5183
        %v5880 = vunpack.c.l.b16 %v5184
        %v5881 = vunpack.c.l.b16 %v5185
        %v5882 = vunpack.c.h.b16 %v5185
        %v5883 = vunpack.c.l.b16 %v5186
        %v5884 = vunpack.c.h.b16 %v5186
        %v5885 = vunpack.c.l.b16 %v5187
        %v5886 = vunpack.c.h.b16 %v5187
        %v5887 = vunpack.c.l.b16 %v5188
        %v5888 = vunpack.c.l.b16 %v5189
        %v5889 = vunpack.c.h.b16 %v5189
        %v5890 = vunpack.c.l.b16 %v5190
        %v5891 = vunpack.c.h.b16 %v5190
        %v5892 = vunpack.c.l.b16 %v5191
        %v5893 = vunpack.c.h.b16 %v5191
        %v5894 = vunpack.c.l.b16 %v5192
        %v5895 = vunpack.c.l.b16 %v5193
        %v5896 = vunpack.c.h.b16 %v5193
        %v5897 = vunpack.c.l.b16 %v5194
        %v5898 = vunpack.c.h.b16 %v5194
        %v5899 = vunpack.c.l.b16 %v5195
        %v5900 = vunpack.c.h.b16 %v5195
        %v5901 = vunpack.c.l.b16 %v5196
        %v5902 = vunpack.c.l.b16 %v5197
        %v5903 = vunpack.c.h.b16 %v5197
        %v5904 = vunpack.c.l.b16 %v5198
        %v5905 = vunpack.c.h.b16 %v5198
        %v5906 = vunpack.c.l.b16 %v5199
        %v5907 = vunpack.c.h.b16 %v5199
        %v5908 = vunpack.c.l.b16 %v5200
        %v5909 = vunpack.c.l.b16 %v5201
        %v5910 = vunpack.c.h.b16 %v5201
        %v5911 = vunpack.c.l.b16 %v5202
        %v5912 = vunpack.c.h.b16 %v5202
        %v5913 = vunpack.c.l.b16 %v5203
        %v5914 = vunpack.c.h.b16 %v5203
        %v5915 = vunpack.c.l.b16 %v5204
        %v5916 = vunpack.c.l.b16 %v5205
        %v5917 = vunpack.c.h.b16 %v5205
        %v5918 = vunpack.c.l.b16 %v5206
        %v5919 = vunpack.c.h.b16 %v5206
        %v5920 = vunpack.c.l.b16 %v5207
        %v5921 = vunpack.c.h.b16 %v5207
        %v5922 = vunpack.c.l.b16 %v5208
        %v5923 = vunpack.c.l.b16 %v5209
        %v5924 = vunpack.c.h.b16 %v5209
        %v5925 = vunpack.c.l.b16 %v5210
        %v5926 = vunpack.c.h.b16 %v5210
        %v5927 = vunpack.c.l.b16 %v5211
        %v5928 = vunpack.c.h.b16 %v5211
        %v5929 = vunpack.c.l.b16 %v5212
        %v5930 = vunpack.c.l.b16 %v5213
        %v5931 = vunpack.c.h.b16 %v5213
        %v5932 = vunpack.c.l.b16 %v5214
        %v5933 = vunpack.c.h.b16 %v5214
        %v5934 = vunpack.c.l.b16 %v5215
        %v5935 = vunpack.c.h.b16 %v5215
        %v5936 = vunpack.c.l.b16 %v5216
        %v5937 = vunpack.c.l.b16 %v5217
        %v5938 = vunpack.c.h.b16 %v5217
        %v5939 = vunpack.c.l.b16 %v5218
        %v5940 = vunpack.c.h.b16 %v5218
        %v5941 = vunpack.c.l.b16 %v5219
        %v5942 = vunpack.c.h.b16 %v5219
        %v5943 = vunpack.c.l.b16 %v5220
        %v5944 = vunpack.c.l.b16 %v5221
        %v5945 = vunpack.c.h.b16 %v5221
        %v5946 = vunpack.c.l.b16 %v5222
        %v5947 = vunpack.c.h.b16 %v5222
        %v5948 = vunpack.c.l.b16 %v5223
        %v5949 = vunpack.c.h.b16 %v5223
        %v5950 = vunpack.c.l.b16 %v5224
        %v5951 = vunpack.c.l.b16 %v5225
        %v5952 = vunpack.c.h.b16 %v5225
        %v5953 = vunpack.c.l.b16 %v5226
        %v5954 = vunpack.c.h.b16 %v5226
        %v5955 = vunpack.c.l.b16 %v5227
        %v5956 = vunpack.c.h.b16 %v5227
        %v5957 = vunpack.c.l.b16 %v5228
        %v5958 = vunpack.c.l.b16 %v5229
        %v5959 = vunpack.c.h.b16 %v5229
        %v5960 = vunpack.c.l.b16 %v5230
        %v5961 = vunpack.c.h.b16 %v5230
        %v5962 = vunpack.c.l.b16 %v5231
        %v5963 = vunpack.c.h.b16 %v5231
        %v5964 = vunpack.c.l.b16 %v5232
        %v5965 = vunpack.c.l.b16 %v5233
        %v5966 = vunpack.c.h.b16 %v5233
        %v5967 = vunpack.c.l.b16 %v5234
        %v5968 = vunpack.c.h.b16 %v5234
        %v5969 = vunpack.c.l.b16 %v5235
        %v5970 = vunpack.c.h.b16 %v5235
        %v5971 = vunpack.c.l.b16 %v5236
        %v5972 = vunpack.c.l.b16 %v5237
        %v5973 = vunpack.c.h.b16 %v5237
        %v5974 = vunpack.c.l.b16 %v5238
        %v5975 = vunpack.c.h.b16 %v5238
        %v5976 = vunpack.c.l.b16 %v5239
        %v5977 = vunpack.c.h.b16 %v5239
        %v5978 = vunpack.c.l.b16 %v5240
        %v5979 = vunpack.c.l.b16 %v5241
        %v5980 = vunpack.c.h.b16 %v5241
        %v5981 = vunpack.c.l.b16 %v5242
        %v5982 = vunpack.c.h.b16 %v5242
        %v5983 = vunpack.c.l.b16 %v5243
        %v5984 = vunpack.c.h.b16 %v5243
        %v5985 = vunpack.c.l.b16 %v5244
        %v5986 = vpack.c.b16 %v5545, %v5538
        %v5987 = vpack.c.b16 %v5546, %v5539
        %v5988 = vpack.c.b16 %v5547, %v5540
        %v5989 = vpack.c.b16 %v5548, %v5541
        %v5990 = vpack.c.b16 %v5549, %v5542
        %v5991 = vpack.c.b16 %v5550, %v5543
        %v5992 = vpack.c.b16 %v5551, %v5544
        %v5993 = vpack.c.b16 %v5559, %v5552
        %v5994 = vpack.c.b16 %v5560, %v5553
        %v5995 = vpack.c.b16 %v5561, %v5554
        %v5996 = vpack.c.b16 %v5562, %v5555
        %v5997 = vpack.c.b16 %v5563, %v5556
        %v5998 = vpack.c.b16 %v5564, %v5557
        %v5999 = vpack.c.b16 %v5565, %v5558
        %v6000 = vpack.c.b16 %v5573, %v5566
        %v6001 = vpack.c.b16 %v5574, %v5567
        %v6002 = vpack.c.b16 %v5575, %v5568
        %v6003 = vpack.c.b16 %v5576, %v5569
        %v6004 = vpack.c.b16 %v5577, %v5570
        %v6005 = vpack.c.b16 %v5578, %v5571
        %v6006 = vpack.c.b16 %v5579, %v5572
        %v6007 = vpack.c.b16 %v5587, %v5580
        %v6008 = vpack.c.b16 %v5588, %v5581
        %v6009 = vpack.c.b16 %v5589, %v5582
        %v6010 = vpack.c.b16 %v5590, %v5583
        %v6011 = vpack.c.b16 %v5591, %v5584
        %v6012 = vpack.c.b16 %v5592, %v5585
        %v6013 = vpack.c.b16 %v5593, %v5586
        %v6014 = vpack.c.b16 %v5601, %v5594
        %v6015 = vpack.c.b16 %v5602, %v5595
        %v6016 = vpack.c.b16 %v5603, %v5596
        %v6017 = vpack.c.b16 %v5604, %v5597
        %v6018 = vpack.c.b16 %v5605, %v5598
        %v6019 = vpack.c.b16 %v5606, %v5599
        %v6020 = vpack.c.b16 %v5607, %v5600
        %v6021 = vpack.c.b16 %v5615, %v5608
        %v6022 = vpack.c.b16 %v5616, %v5609
        %v6023 = vpack.c.b16 %v5617, %v5610
        %v6024 = vpack.c.b16 %v5618, %v5611
        %v6025 = vpack.c.b16 %v5619, %v5612
        %v6026 = vpack.c.b16 %v5620, %v5613
        %v6027 = vpack.c.b16 %v5621, %v5614
        %v6028 = vpack.c.b16 %v5629, %v5622
        %v6029 = vpack.c.b16 %v5630, %v5623
        %v6030 = vpack.c.b16 %v5631, %v5624
        %v6031 = vpack.c.b16 %v5632, %v5625
        %v6032 = vpack.c.b16 %v5633, %v5626
        %v6033 = vpack.c.b16 %v5634, %v5627
        %v6034 = vpack.c.b16 %v5635, %v5628
        %v6035 = vpack.c.b16 %v5643, %v5636
        %v6036 = vpack.c.b16 %v5644, %v5637
        %v6037 = vpack.c.b16 %v5645, %v5638
        %v6038 = vpack.c.b16 %v5646, %v5639
        %v6039 = vpack.c.b16 %v5647, %v5640
        %v6040 = vpack.c.b16 %v5648, %v5641
        %v6041 = vpack.c.b16 %v5649, %v5642
        %v6042 = vpack.c.b16 %v5657, %v5650
        %v6043 = vpack.c.b16 %v5658, %v5651
        %v6044 = vpack.c.b16 %v5659, %v5652
        %v6045 = vpack.c.b16 %v5660, %v5653
        %v6046 = vpack.c.b16 %v5661, %v5654
        %v6047 = vpack.c.b16 %v5662, %v5655
        %v6048 = vpack.c.b16 %v5663, %v5656
        %v6049 = vpack.c.b16 %v5671, %v5664
        %v6050 = vpack.c.b16 %v5672, %v5665
        %v6051 = vpack.c.b16 %v5673, %v5666
        %v6052 = vpack.c.b16 %v5674, %v5667
        %v6053 = vpack.c.b16 %v5675, %v5668
        %v6054 = vpack.c.b16 %v5676, %v5669
        %v6055 = vpack.c.b16 %v5677, %v5670
        %v6056 = vpack.c.b16 %v5685, %v5678
        %v6057 = vpack.c.b16 %v5686, %v5679
        %v6058 = vpack.c.b16 %v5687, %v5680
        %v6059 = vpack.c.b16 %v5688, %v5681
        %v6060 = vpack.c.b16 %v5689, %v5682
        %v6061 = vpack.c.b16 %v5690, %v5683
        %v6062 = vpack.c.b16 %v5691, %v5684
        %v6063 = vpack.c.b16 %v5699, %v5692
        %v6064 = vpack.c.b16 %v5700, %v5693
        %v6065 = vpack.c.b16 %v5701, %v5694
        %v6066 = vpack.c.b16 %v5702, %v5695
        %v6067 = vpack.c.b16 %v5703, %v5696
        %v6068 = vpack.c.b16 %v5704, %v5697
        %v6069 = vpack.c.b16 %v5705, %v5698
        %v6070 = vpack.c.b16 %v5713, %v5706
        %v6071 = vpack.c.b16 %v5714, %v5707
        %v6072 = vpack.c.b16 %v5715, %v5708
        %v6073 = vpack.c.b16 %v5716, %v5709
        %v6074 = vpack.c.b16 %v5717, %v5710
        %v6075 = vpack.c.b16 %v5718, %v5711
        %v6076 = vpack.c.b16 %v5719, %v5712
        %v6077 = vpack.c.b16 %v5727, %v5720
        %v6078 = vpack.c.b16 %v5728, %v5721
        %v6079 = vpack.c.b16 %v5729, %v5722
        %v6080 = vpack.c.b16 %v5730, %v5723
        %v6081 = vpack.c.b16 %v5731, %v5724
        %v6082 = vpack.c.b16 %v5732, %v5725
        %v6083 = vpack.c.b16 %v5733, %v5726
        %v6084 = vpack.c.b16 %v5741, %v5734
        %v6085 = vpack.c.b16 %v5742, %v5735
        %v6086 = vpack.c.b16 %v5743, %v5736
        %v6087 = vpack.c.b16 %v5744, %v5737
        %v6088 = vpack.c.b16 %v5745, %v5738
        %v6089 = vpack.c.b16 %v5746, %v5739
        %v6090 = vpack.c.b16 %v5747, %v5740
        %v6091 = vpack.c.b16 %v5755, %v5748
        %v6092 = vpack.c.b16 %v5756, %v5749
        %v6093 = vpack.c.b16 %v5757, %v5750
        %v6094 = vpack.c.b16 %v5758, %v5751
        %v6095 = vpack.c.b16 %v5759, %v5752
        %v6096 = vpack.c.b16 %v5760, %v5753
        %v6097 = vpack.c.b16 %v5761, %v5754
        %v6098 = vpack.c.b16 %v5769, %v5762
        %v6099 = vpack.c.b16 %v5770, %v5763
        %v6100 = vpack.c.b16 %v5771, %v5764
        %v6101 = vpack.c.b16 %v5772, %v5765
        %v6102 = vpack.c.b16 %v5773, %v5766
        %v6103 = vpack.c.b16 %v5774, %v5767
        %v6104 = vpack.c.b16 %v5775, %v5768
        %v6105 = vpack.c.b16 %v5783, %v5776
        %v6106 = vpack.c.b16 %v5784, %v5777
        %v6107 = vpack.c.b16 %v5785, %v5778
        %v6108 = vpack.c.b16 %v5786, %v5779
        %v6109 = vpack.c.b16 %v5787, %v5780
        %v6110 = vpack.c.b16 %v5788, %v5781
        %v6111 = vpack.c.b16 %v5789, %v5782
        %v6112 = vpack.c.b16 %v5797, %v5790
        %v6113 = vpack.c.b16 %v5798, %v5791
        %v6114 = vpack.c.b16 %v5799, %v5792
        %v6115 = vpack.c.b16 %v5800, %v5793
        %v6116 = vpack.c.b16 %v5801, %v5794
        %v6117 = vpack.c.b16 %v5802, %v5795
        %v6118 = vpack.c.b16 %v5803, %v5796
        %v6119 = vpack.c.b16 %v5811, %v5804
        %v6120 = vpack.c.b16 %v5812, %v5805
        %v6121 = vpack.c.b16 %v5813, %v5806
        %v6122 = vpack.c.b16 %v5814, %v5807
        %v6123 = vpack.c.b16 %v5815, %v5808
        %v6124 = vpack.c.b16 %v5816, %v5809
        %v6125 = vpack.c.b16 %v5817, %v5810
        %v6126 = vpack.c.b16 %v5825, %v5818
        %v6127 = vpack.c.b16 %v5826, %v5819
        %v6128 = vpack.c.b16 %v5827, %v5820
        %v6129 = vpack.c.b16 %v5828, %v5821
        %v6130 = vpack.c.b16 %v5829, %v5822
        %v6131 = vpack.c.b16 %v5830, %v5823
        %v6132 = vpack.c.b16 %v5831, %v5824
        %v6133 = vpack.c.b16 %v5839, %v5832
        %v6134 = vpack.c.b16 %v5840, %v5833
        %v6135 = vpack.c.b16 %v5841, %v5834
        %v6136 = vpack.c.b16 %v5842, %v5835
        %v6137 = vpack.c.b16 %v5843, %v5836
        %v6138 = vpack.c.b16 %v5844, %v5837
        %v6139 = vpack.c.b16 %v5845, %v5838
        %v6140 = vpack.c.b16 %v5853, %v5846
        %v6141 = vpack.c.b16 %v5854, %v5847
        %v6142 = vpack.c.b16 %v5855, %v5848
        %v6143 = vpack.c.b16 %v5856, %v5849
        %v6144 = vpack.c.b16 %v5857, %v5850
        %v6145 = vpack.c.b16 %v5858, %v5851
        %v6146 = vpack.c.b16 %v5859, %v5852
        %v6147 = vpack.c.b16 %v5867, %v5860
        %v6148 = vpack.c.b16 %v5868, %v5861
        %v6149 = vpack.c.b16 %v5869, %v5862
        %v6150 = vpack.c.b16 %v5870, %v5863
        %v6151 = vpack.c.b16 %v5871, %v5864
        %v6152 = vpack.c.b16 %v5872, %v5865
        %v6153 = vpack.c.b16 %v5873, %v5866
        %v6154 = vpack.c.b16 %v5881, %v5874
        %v6155 = vpack.c.b16 %v5882, %v5875
        %v6156 = vpack.c.b16 %v5883, %v5876
        %v6157 = vpack.c.b16 %v5884, %v5877
        %v6158 = vpack.c.b16 %v5885, %v5878
        %v6159 = vpack.c.b16 %v5886, %v5879
        %v6160 = vpack.c.b16 %v5887, %v5880
        %v6161 = vpack.c.b16 %v5895, %v5888
        %v6162 = vpack.c.b16 %v5896, %v5889
        %v6163 = vpack.c.b16 %v5897, %v5890
        %v6164 = vpack.c.b16 %v5898, %v5891
        %v6165 = vpack.c.b16 %v5899, %v5892
        %v6166 = vpack.c.b16 %v5900, %v5893
        %v6167 = vpack.c.b16 %v5901, %v5894
        %v6168 = vpack.c.b16 %v5909, %v5902
        %v6169 = vpack.c.b16 %v5910, %v5903
        %v6170 = vpack.c.b16 %v5911, %v5904
        %v6171 = vpack.c.b16 %v5912, %v5905
        %v6172 = vpack.c.b16 %v5913, %v5906
        %v6173 = vpack.c.b16 %v5914, %v5907
        %v6174 = vpack.c.b16 %v5915, %v5908
        %v6175 = vpack.c.b16 %v5923, %v5916
        %v6176 = vpack.c.b16 %v5924, %v5917
        %v6177 = vpack.c.b16 %v5925, %v5918
        %v6178 = vpack.c.b16 %v5926, %v5919
        %v6179 = vpack.c.b16 %v5927, %v5920
        %v6180 = vpack.c.b16 %v5928, %v5921
        %v6181 = vpack.c.b16 %v5929, %v5922
        %v6182 = vpack.c.b16 %v5937, %v5930
        %v6183 = vpack.c.b16 %v5938, %v5931
        %v6184 = vpack.c.b16 %v5939, %v5932
        %v6185 = vpack.c.b16 %v5940, %v5933
        %v6186 = vpack.c.b16 %v5941, %v5934
        %v6187 = vpack.c.b16 %v5942, %v5935
        %v6188 = vpack.c.b16 %v5943, %v5936
        %v6189 = vpack.c.b16 %v5951, %v5944
        %v6190 = vpack.c.b16 %v5952, %v5945
        %v6191 = vpack.c.b16 %v5953, %v5946
        %v6192 = vpack.c.b16 %v5954, %v5947
        %v6193 = vpack.c.b16 %v5955, %v5948
        %v6194 = vpack.c.b16 %v5956, %v5949
        %v6195 = vpack.c.b16 %v5957, %v5950
        %v6196 = vpack.c.b16 %v5965, %v5958
        %v6197 = vpack.c.b16 %v5966, %v5959
        %v6198 = vpack.c.b16 %v5967, %v5960
        %v6199 = vpack.c.b16 %v5968, %v5961
        %v6200 = vpack.c.b16 %v5969, %v5962
        %v6201 = vpack.c.b16 %v5970, %v5963
        %v6202 = vpack.c.b16 %v5971, %v5964
        %v6203 = vpack.c.b16 %v5979, %v5972
        %v6204 = vpack.c.b16 %v5980, %v5973
        %v6205 = vpack.c.b16 %v5981, %v5974
        %v6206 = vpack.c.b16 %v5982, %v5975
        %v6207 = vpack.c.b16 %v5983, %v5976
        %v6208 = vpack.c.b16 %v5984, %v5977
        %v6209 = vpack.c.b16 %v5985, %v5978
        %6434 = vmatprep.subr.bf16.mxu0 %v5987
        %6435 = vmatpush1.bf16.msra.mxu0 %v5986
        %6436 = vmatprep.subr.bf16.mxu0 %v5994
        %6437 = vmatpush1.bf16.msra.mxu0 %v5993
        %6438 = vmatprep.subr.bf16.mxu0 %v6001
        %6439 = vmatpush1.bf16.msra.mxu0 %v6000
        %6440 = vmatprep.subr.bf16.mxu0 %v6008
        %6441 = vmatpush1.bf16.msra.mxu0 %v6007
        %6442 = vmatprep.subr.bf16.mxu0 %v6015
        %6443 = vmatpush1.bf16.msra.mxu0 %v6014
        %6444 = vmatprep.subr.bf16.mxu0 %v6022
        %6445 = vmatpush1.bf16.msra.mxu0 %v6021
        %6446 = vmatprep.subr.bf16.mxu0 %v6029
        %6447 = vmatpush1.bf16.msra.mxu0 %v6028
        %6448 = vmatprep.subr.bf16.mxu0 %v6036
        %6449 = vmatpush1.bf16.msra.mxu0 %v6035
        %6450 = vmatprep.subr.bf16.mxu0 %v6043
        %6451 = vmatpush1.bf16.msra.mxu0 %v6042
        %6452 = vmatprep.subr.bf16.mxu0 %v6050
        %6453 = vmatpush1.bf16.msra.mxu0 %v6049
        %6454 = vmatprep.subr.bf16.mxu0 %v6057
        %6455 = vmatpush1.bf16.msra.mxu0 %v6056
        %6456 = vmatprep.subr.bf16.mxu0 %v6064
        %6457 = vmatpush1.bf16.msra.mxu0 %v6063
        %6458 = vmatprep.subr.bf16.mxu0 %v6071
        %6459 = vmatpush1.bf16.msra.mxu0 %v6070
        %6460 = vmatprep.subr.bf16.mxu0 %v6078
        %6461 = vmatpush1.bf16.msra.mxu0 %v6077
        %6462 = vmatprep.subr.bf16.mxu0 %v6085
        %6463 = vmatpush1.bf16.msra.mxu0 %v6084
        %6464 = vmatprep.subr.bf16.mxu0 %v6092
        %6465 = vmatpush1.bf16.msra.mxu0 %v6091
        %6466 = vmatprep.mubr.bf16.mxu0 %v4958
        %6467 = vmatmul.mubr.bf16.gmra.mrb[0].mxu0 %v4957
        %v6468 = vpop.f32.mrb[0].mxu0
        %v6469 = vadd.f32 %v5250, %v6468
        %v6470 = vpop.f32.mrb[0].mxu0
        %v6471 = vadd.f32 %v5254, %v6470
        %v6472 = vpop.f32.mrb[0].mxu0
        %v6473 = vadd.f32 %v5250, %v6472
        %v6474 = vpop.f32.mrb[0].mxu0
        %v6475 = vadd.f32 %v5254, %v6474
        %6476 = vmatprep.mubr.bf16.mxu0 %v4962
        %6477 = vmatmul.mubr.bf16.gmra.mrb[0].mxu0 %v4961
        %v6478 = vpop.f32.mrb[0].mxu0
        %v6479 = vadd.f32 %v5250, %v6478
        %v6480 = vpop.f32.mrb[0].mxu0
        %v6481 = vadd.f32 %v5254, %v6480
        %v6482 = vpop.f32.mrb[0].mxu0
        %v6483 = vadd.f32 %v5250, %v6482
        %v6484 = vpop.f32.mrb[0].mxu0
        %v6485 = vadd.f32 %v5254, %v6484
        %6486 = vmatprep.mubr.bf16.mxu0 %v4966
        %6487 = vmatmul.mubr.bf16.gmra.mrb[0].mxu0 %v4965
        %v6488 = vpop.f32.mrb[0].mxu0
        %v6489 = vadd.f32 %v5250, %v6488
        %v6490 = vpop.f32.mrb[0].mxu0
        %v6491 = vadd.f32 %v5254, %v6490
        %v6492 = vpop.f32.mrb[0].mxu0
        %v6493 = vadd.f32 %v5250, %v6492
        %v6494 = vpop.f32.mrb[0].mxu0
        %v6495 = vadd.f32 %v5254, %v6494
        %6496 = vmatprep.mubr.bf16.mxu0 %v4970
        %6497 = vmatmul.mubr.bf16.gmra.mrb[0].mxu0 %v4969
        %v6498 = vpop.f32.mrb[0].mxu0
        %v6499 = vadd.f32 %v5250, %v6498
        %v6500 = vpop.f32.mrb[0].mxu0
        %v6501 = vadd.f32 %v5254, %v6500
        %v6502 = vpop.f32.mrb[0].mxu0
        %v6503 = vadd.f32 %v5250, %v6502
        %v6504 = vpop.f32.mrb[0].mxu0
        %v6505 = vadd.f32 %v5254, %v6504
        %6506 = vmatprep.mubr.bf16.mxu0 %v4974
        %6507 = vmatmul.mubr.bf16.gmra.mrb[0].mxu0 %v4973
        %v6508 = vpop.f32.mrb[0].mxu0
        %v6509 = vadd.f32 %v5250, %v6508
        %v6510 = vpop.f32.mrb[0].mxu0
        %v6511 = vadd.f32 %v5254, %v6510
        %v6512 = vpop.f32.mrb[0].mxu0
        %v6513 = vadd.f32 %v5250, %v6512
        %v6514 = vpop.f32.mrb[0].mxu0
        %v6515 = vadd.f32 %v5254, %v6514
        %6516 = vmatprep.mubr.bf16.mxu0 %v4978
        %6517 = vmatmul.mubr.bf16.gmra.mrb[0].mxu0 %v4977
        %v6518 = vpop.f32.mrb[0].mxu0
        %v6519 = vadd.f32 %v5250, %v6518
        %v6520 = vpop.f32.mrb[0].mxu0
        %v6521 = vadd.f32 %v5254, %v6520
        %v6522 = vpop.f32.mrb[0].mxu0
        %v6523 = vadd.f32 %v5250, %v6522
        %v6524 = vpop.f32.mrb[0].mxu0
        %v6525 = vadd.f32 %v5254, %v6524
        %6526 = vmatprep.mubr.bf16.mxu0 %v4982
        %6527 = vmatmul.mubr.bf16.gmra.mrb[0].mxu0 %v4981
        %v6528 = vpop.f32.mrb[0].mxu0
        %v6529 = vadd.f32 %v5250, %v6528
        %v6530 = vpop.f32.mrb[0].mxu0
        %v6531 = vadd.f32 %v5254, %v6530
        %v6532 = vpop.f32.mrb[0].mxu0
        %v6533 = vadd.f32 %v5250, %v6532
        %v6534 = vpop.f32.mrb[0].mxu0
        %v6535 = vadd.f32 %v5254, %v6534
        %6536 = vmatprep.mubr.bf16.mxu0 %v4986
        %6537 = vmatmul.mubr.bf16.gmra.mrb[0].mxu0 %v4985
        %v6538 = vpop.f32.mrb[0].mxu0
        %v6539 = vadd.f32 %v5250, %v6538
        %v6540 = vpop.f32.mrb[0].mxu0
        %v6541 = vadd.f32 %v5254, %v6540
        %v6542 = vpop.f32.mrb[0].mxu0
        %v6543 = vadd.f32 %v5250, %v6542
        %v6544 = vpop.f32.mrb[0].mxu0
        %v6545 = vadd.f32 %v5254, %v6544
        %6546 = vdwg.mxu0
        %6547 = vmatprep.subr.bf16.mxu0 %v6099
        %6548 = vmatpush1.bf16.msra.mxu0 %v6098
        %6549 = vmatprep.subr.bf16.mxu0 %v6106
        %6550 = vmatpush1.bf16.msra.mxu0 %v6105
        %6551 = vmatprep.subr.bf16.mxu0 %v6113
        %6552 = vmatpush1.bf16.msra.mxu0 %v6112
        %6553 = vmatprep.subr.bf16.mxu0 %v6120
        %6554 = vmatpush1.bf16.msra.mxu0 %v6119
        %6555 = vmatprep.subr.bf16.mxu0 %v6127
        %6556 = vmatpush1.bf16.msra.mxu0 %v6126
        %6557 = vmatprep.subr.bf16.mxu0 %v6134
        %6558 = vmatpush1.bf16.msra.mxu0 %v6133
        %6559 = vmatprep.subr.bf16.mxu0 %v6141
        %6560 = vmatpush1.bf16.msra.mxu0 %v6140
        %6561 = vmatprep.subr.bf16.mxu0 %v6148
        %6562 = vmatpush1.bf16.msra.mxu0 %v6147
        %6563 = vmatprep.subr.bf16.mxu0 %v6155
        %6564 = vmatpush1.bf16.msra.mxu0 %v6154
        %6565 = vmatprep.subr.bf16.mxu0 %v6162
        %6566 = vmatpush1.bf16.msra.mxu0 %v6161
        %6567 = vmatprep.subr.bf16.mxu0 %v6169
        %6568 = vmatpush1.bf16.msra.mxu0 %v6168
        %6569 = vmatprep.subr.bf16.mxu0 %v6176
        %6570 = vmatpush1.bf16.msra.mxu0 %v6175
        %6571 = vmatprep.subr.bf16.mxu0 %v6183
        %6572 = vmatpush1.bf16.msra.mxu0 %v6182
        %6573 = vmatprep.subr.bf16.mxu0 %v6190
        %6574 = vmatpush1.bf16.msra.mxu0 %v6189
        %6575 = vmatprep.subr.bf16.mxu0 %v6197
        %6576 = vmatpush1.bf16.msra.mxu0 %v6196
        %6577 = vmatprep.subr.bf16.mxu0 %v6204
        %6578 = vmatpush1.bf16.msra.mxu0 %v6203
        %6579 = vmatprep.mubr.bf16.mxu0 %v4960
        %6580 = vmatmul.mubr.bf16.gmra.mrb[0].mxu0 %v4959
        %v6581 = vpop.f32.mrb[0].mxu0
        %v6582 = vadd.f32 %v6469, %v6581
        %v6583 = vpop.f32.mrb[0].mxu0
        %v6584 = vadd.f32 %v6471, %v6583
        %v6585 = vpop.f32.mrb[0].mxu0
        %v6586 = vadd.f32 %v6473, %v6585
        %v6587 = vpop.f32.mrb[0].mxu0
        %v6588 = vadd.f32 %v6475, %v6587
        %6589 = vmatprep.mubr.bf16.mxu0 %v4964
        %6590 = vmatmul.mubr.bf16.gmra.mrb[0].mxu0 %v4963
        %v6591 = vpop.f32.mrb[0].mxu0
        %v6592 = vadd.f32 %v6479, %v6591
        %v6593 = vpop.f32.mrb[0].mxu0
        %v6594 = vadd.f32 %v6481, %v6593
        %v6595 = vpop.f32.mrb[0].mxu0
        %v6596 = vadd.f32 %v6483, %v6595
        %v6597 = vpop.f32.mrb[0].mxu0
        %v6598 = vadd.f32 %v6485, %v6597
        %6599 = vmatprep.mubr.bf16.mxu0 %v4968
        %6600 = vmatmul.mubr.bf16.gmra.mrb[0].mxu0 %v4967
        %v6601 = vpop.f32.mrb[0].mxu0
        %v6602 = vadd.f32 %v6489, %v6601
        %v6603 = vpop.f32.mrb[0].mxu0
        %v6604 = vadd.f32 %v6491, %v6603
        %v6605 = vpop.f32.mrb[0].mxu0
        %v6606 = vadd.f32 %v6493, %v6605
        %v6607 = vpop.f32.mrb[0].mxu0
        %v6608 = vadd.f32 %v6495, %v6607
        %6609 = vmatprep.mubr.bf16.mxu0 %v4972
        %6610 = vmatmul.mubr.bf16.gmra.mrb[0].mxu0 %v4971
        %v6611 = vpop.f32.mrb[0].mxu0
        %v6612 = vadd.f32 %v6499, %v6611
        %v6613 = vpop.f32.mrb[0].mxu0
        %v6614 = vadd.f32 %v6501, %v6613
        %v6615 = vpop.f32.mrb[0].mxu0
        %v6616 = vadd.f32 %v6503, %v6615
        %v6617 = vpop.f32.mrb[0].mxu0
        %v6618 = vadd.f32 %v6505, %v6617
        %6619 = vmatprep.mubr.bf16.mxu0 %v4976
        %6620 = vmatmul.mubr.bf16.gmra.mrb[0].mxu0 %v4975
        %v6621 = vpop.f32.mrb[0].mxu0
        %v6622 = vadd.f32 %v6509, %v6621
        %v6623 = vpop.f32.mrb[0].mxu0
        %v6624 = vadd.f32 %v6511, %v6623
        %v6625 = vpop.f32.mrb[0].mxu0
        %v6626 = vadd.f32 %v6513, %v6625
        %v6627 = vpop.f32.mrb[0].mxu0
        %v6628 = vadd.f32 %v6515, %v6627
        %6629 = vmatprep.mubr.bf16.mxu0 %v4980
        %6630 = vmatmul.mubr.bf16.gmra.mrb[0].mxu0 %v4979
        %v6631 = vpop.f32.mrb[0].mxu0
        %v6632 = vadd.f32 %v6519, %v6631
        %v6633 = vpop.f32.mrb[0].mxu0
        %v6634 = vadd.f32 %v6521, %v6633
        %v6635 = vpop.f32.mrb[0].mxu0
        %v6636 = vadd.f32 %v6523, %v6635
        %v6637 = vpop.f32.mrb[0].mxu0
        %v6638 = vadd.f32 %v6525, %v6637
        %6639 = vmatprep.mubr.bf16.mxu0 %v4984
        %6640 = vmatmul.mubr.bf16.gmra.mrb[0].mxu0 %v4983
        %v6641 = vpop.f32.mrb[0].mxu0
        %v6642 = vadd.f32 %v6529, %v6641
        %v6643 = vpop.f32.mrb[0].mxu0
        %v6644 = vadd.f32 %v6531, %v6643
        %v6645 = vpop.f32.mrb[0].mxu0
        %v6646 = vadd.f32 %v6533, %v6645
        %v6647 = vpop.f32.mrb[0].mxu0
        %v6648 = vadd.f32 %v6535, %v6647
        %6649 = vmatprep.mubr.bf16.mxu0 %v4988
        %6650 = vmatmul.mubr.bf16.gmra.mrb[0].mxu0 %v4987
        %v6651 = vpop.f32.mrb[0].mxu0
        %v6652 = vadd.f32 %v6539, %v6651
        %v6653 = vpop.f32.mrb[0].mxu0
        %v6654 = vadd.f32 %v6541, %v6653
        %v6655 = vpop.f32.mrb[0].mxu0
        %v6656 = vadd.f32 %v6543, %v6655
        %v6657 = vpop.f32.mrb[0].mxu0
        %v6658 = vadd.f32 %v6545, %v6657
        %6659 = vdwg.mxu0
        %6660 = vmatprep.subr.bf16.mxu0 %v5989
        %6661 = vmatpush1.bf16.msra.mxu0 %v5988
        %6662 = vmatprep.subr.bf16.mxu0 %v5996
        %6663 = vmatpush1.bf16.msra.mxu0 %v5995
        %6664 = vmatprep.subr.bf16.mxu0 %v6003
        %6665 = vmatpush1.bf16.msra.mxu0 %v6002
        %6666 = vmatprep.subr.bf16.mxu0 %v6010
        %6667 = vmatpush1.bf16.msra.mxu0 %v6009
        %6668 = vmatprep.subr.bf16.mxu0 %v6017
        %6669 = vmatpush1.bf16.msra.mxu0 %v6016
        %6670 = vmatprep.subr.bf16.mxu0 %v6024
        %6671 = vmatpush1.bf16.msra.mxu0 %v6023
        %6672 = vmatprep.subr.bf16.mxu0 %v6031
        %6673 = vmatpush1.bf16.msra.mxu0 %v6030
        %6674 = vmatprep.subr.bf16.mxu0 %v6038
        %6675 = vmatpush1.bf16.msra.mxu0 %v6037
        %6676 = vmatprep.subr.bf16.mxu0 %v6045
        %6677 = vmatpush1.bf16.msra.mxu0 %v6044
        %6678 = vmatprep.subr.bf16.mxu0 %v6052
        %6679 = vmatpush1.bf16.msra.mxu0 %v6051
        %6680 = vmatprep.subr.bf16.mxu0 %v6059
        %6681 = vmatpush1.bf16.msra.mxu0 %v6058
        %6682 = vmatprep.subr.bf16.mxu0 %v6066
        %6683 = vmatpush1.bf16.msra.mxu0 %v6065
        %6684 = vmatprep.subr.bf16.mxu0 %v6073
        %6685 = vmatpush1.bf16.msra.mxu0 %v6072
        %6686 = vmatprep.subr.bf16.mxu0 %v6080
        %6687 = vmatpush1.bf16.msra.mxu0 %v6079
        %6688 = vmatprep.subr.bf16.mxu0 %v6087
        %6689 = vmatpush1.bf16.msra.mxu0 %v6086
        %6690 = vmatprep.subr.bf16.mxu0 %v6094
        %6691 = vmatpush1.bf16.msra.mxu0 %v6093
        %6692 = vmatprep.mubr.bf16.mxu0 %v4958
        %6693 = vmatmul.mubr.bf16.gmra.mrb[0].mxu0 %v4957
        %v6694 = vpop.f32.mrb[0].mxu0
        %v6695 = vadd.f32 %v5258, %v6694
        %v6696 = vpop.f32.mrb[0].mxu0
        %v6697 = vadd.f32 %v5262, %v6696
        %v6698 = vpop.f32.mrb[0].mxu0
        %v6699 = vadd.f32 %v5258, %v6698
        %v6700 = vpop.f32.mrb[0].mxu0
        %v6701 = vadd.f32 %v5262, %v6700
        %6702 = vmatprep.mubr.bf16.mxu0 %v4962
        %6703 = vmatmul.mubr.bf16.gmra.mrb[0].mxu0 %v4961
        %v6704 = vpop.f32.mrb[0].mxu0
        %v6705 = vadd.f32 %v5258, %v6704
        %v6706 = vpop.f32.mrb[0].mxu0
        %v6707 = vadd.f32 %v5262, %v6706
        %v6708 = vpop.f32.mrb[0].mxu0
        %v6709 = vadd.f32 %v5258, %v6708
        %v6710 = vpop.f32.mrb[0].mxu0
        %v6711 = vadd.f32 %v5262, %v6710
        %6712 = vmatprep.mubr.bf16.mxu0 %v4966
        %6713 = vmatmul.mubr.bf16.gmra.mrb[0].mxu0 %v4965
        %v6714 = vpop.f32.mrb[0].mxu0
        %v6715 = vadd.f32 %v5258, %v6714
        %v6716 = vpop.f32.mrb[0].mxu0
        %v6717 = vadd.f32 %v5262, %v6716
        %v6718 = vpop.f32.mrb[0].mxu0
        %v6719 = vadd.f32 %v5258, %v6718
        %v6720 = vpop.f32.mrb[0].mxu0
        %v6721 = vadd.f32 %v5262, %v6720
        %6722 = vmatprep.mubr.bf16.mxu0 %v4970
        %6723 = vmatmul.mubr.bf16.gmra.mrb[0].mxu0 %v4969
        %v6724 = vpop.f32.mrb[0].mxu0
        %v6725 = vadd.f32 %v5258, %v6724
        %v6726 = vpop.f32.mrb[0].mxu0
        %v6727 = vadd.f32 %v5262, %v6726
        %v6728 = vpop.f32.mrb[0].mxu0
        %v6729 = vadd.f32 %v5258, %v6728
        %v6730 = vpop.f32.mrb[0].mxu0
        %v6731 = vadd.f32 %v5262, %v6730
        %6732 = vmatprep.mubr.bf16.mxu0 %v4974
        %6733 = vmatmul.mubr.bf16.gmra.mrb[0].mxu0 %v4973
        %v6734 = vpop.f32.mrb[0].mxu0
        %v6735 = vadd.f32 %v5258, %v6734
        %v6736 = vpop.f32.mrb[0].mxu0
        %v6737 = vadd.f32 %v5262, %v6736
        %v6738 = vpop.f32.mrb[0].mxu0
        %v6739 = vadd.f32 %v5258, %v6738
        %v6740 = vpop.f32.mrb[0].mxu0
        %v6741 = vadd.f32 %v5262, %v6740
        %6742 = vmatprep.mubr.bf16.mxu0 %v4978
        %6743 = vmatmul.mubr.bf16.gmra.mrb[0].mxu0 %v4977
        %v6744 = vpop.f32.mrb[0].mxu0
        %v6745 = vadd.f32 %v5258, %v6744
        %v6746 = vpop.f32.mrb[0].mxu0
        %v6747 = vadd.f32 %v5262, %v6746
        %v6748 = vpop.f32.mrb[0].mxu0
        %v6749 = vadd.f32 %v5258, %v6748
        %v6750 = vpop.f32.mrb[0].mxu0
        %v6751 = vadd.f32 %v5262, %v6750
        %6752 = vmatprep.mubr.bf16.mxu0 %v4982
        %6753 = vmatmul.mubr.bf16.gmra.mrb[0].mxu0 %v4981
        %v6754 = vpop.f32.mrb[0].mxu0
        %v6755 = vadd.f32 %v5258, %v6754
        %v6756 = vpop.f32.mrb[0].mxu0
        %v6757 = vadd.f32 %v5262, %v6756
        %v6758 = vpop.f32.mrb[0].mxu0
        %v6759 = vadd.f32 %v5258, %v6758
        %v6760 = vpop.f32.mrb[0].mxu0
        %v6761 = vadd.f32 %v5262, %v6760
        %6762 = vmatprep.mubr.bf16.mxu0 %v4986
        %6763 = vmatmul.mubr.bf16.gmra.mrb[0].mxu0 %v4985
        %v6764 = vpop.f32.mrb[0].mxu0
        %v6765 = vadd.f32 %v5258, %v6764
        %v6766 = vpop.f32.mrb[0].mxu0
        %v6767 = vadd.f32 %v5262, %v6766
        %v6768 = vpop.f32.mrb[0].mxu0
        %v6769 = vadd.f32 %v5258, %v6768
        %v6770 = vpop.f32.mrb[0].mxu0
        %v6771 = vadd.f32 %v5262, %v6770
        %6772 = vdwg.mxu0
        %6773 = vmatprep.subr.bf16.mxu0 %v6101
        %6774 = vmatpush1.bf16.msra.mxu0 %v6100
        %6775 = vmatprep.subr.bf16.mxu0 %v6108
        %6776 = vmatpush1.bf16.msra.mxu0 %v6107
        %6777 = vmatprep.subr.bf16.mxu0 %v6115
        %6778 = vmatpush1.bf16.msra.mxu0 %v6114
        %6779 = vmatprep.subr.bf16.mxu0 %v6122
        %6780 = vmatpush1.bf16.msra.mxu0 %v6121
        %6781 = vmatprep.subr.bf16.mxu0 %v6129
        %6782 = vmatpush1.bf16.msra.mxu0 %v6128
        %6783 = vmatprep.subr.bf16.mxu0 %v6136
        %6784 = vmatpush1.bf16.msra.mxu0 %v6135
        %6785 = vmatprep.subr.bf16.mxu0 %v6143
        %6786 = vmatpush1.bf16.msra.mxu0 %v6142
        %6787 = vmatprep.subr.bf16.mxu0 %v6150
        %6788 = vmatpush1.bf16.msra.mxu0 %v6149
        %6789 = vmatprep.subr.bf16.mxu0 %v6157
        %6790 = vmatpush1.bf16.msra.mxu0 %v6156
        %6791 = vmatprep.subr.bf16.mxu0 %v6164
        %6792 = vmatpush1.bf16.msra.mxu0 %v6163
        %6793 = vmatprep.subr.bf16.mxu0 %v6171
        %6794 = vmatpush1.bf16.msra.mxu0 %v6170
        %6795 = vmatprep.subr.bf16.mxu0 %v6178
        %6796 = vmatpush1.bf16.msra.mxu0 %v6177
        %6797 = vmatprep.subr.bf16.mxu0 %v6185
        %6798 = vmatpush1.bf16.msra.mxu0 %v6184
        %6799 = vmatprep.subr.bf16.mxu0 %v6192
        %6800 = vmatpush1.bf16.msra.mxu0 %v6191
        %6801 = vmatprep.subr.bf16.mxu0 %v6199
        %6802 = vmatpush1.bf16.msra.mxu0 %v6198
        %6803 = vmatprep.subr.bf16.mxu0 %v6206
        %6804 = vmatpush1.bf16.msra.mxu0 %v6205
        %6805 = vmatprep.mubr.bf16.mxu0 %v4960
        %6806 = vmatmul.mubr.bf16.gmra.mrb[0].mxu0 %v4959
        %v6807 = vpop.f32.mrb[0].mxu0
        %v6808 = vadd.f32 %v6695, %v6807
        %v6809 = vpop.f32.mrb[0].mxu0
        %v6810 = vadd.f32 %v6697, %v6809
        %v6811 = vpop.f32.mrb[0].mxu0
        %v6812 = vadd.f32 %v6699, %v6811
        %v6813 = vpop.f32.mrb[0].mxu0
        %v6814 = vadd.f32 %v6701, %v6813
        %6815 = vmatprep.mubr.bf16.mxu0 %v4964
        %6816 = vmatmul.mubr.bf16.gmra.mrb[0].mxu0 %v4963
        %v6817 = vpop.f32.mrb[0].mxu0
        %v6818 = vadd.f32 %v6705, %v6817
        %v6819 = vpop.f32.mrb[0].mxu0
        %v6820 = vadd.f32 %v6707, %v6819
        %v6821 = vpop.f32.mrb[0].mxu0
        %v6822 = vadd.f32 %v6709, %v6821
        %v6823 = vpop.f32.mrb[0].mxu0
        %v6824 = vadd.f32 %v6711, %v6823
        %6825 = vmatprep.mubr.bf16.mxu0 %v4968
        %6826 = vmatmul.mubr.bf16.gmra.mrb[0].mxu0 %v4967
        %v6827 = vpop.f32.mrb[0].mxu0
        %v6828 = vadd.f32 %v6715, %v6827
        %v6829 = vpop.f32.mrb[0].mxu0
        %v6830 = vadd.f32 %v6717, %v6829
        %v6831 = vpop.f32.mrb[0].mxu0
        %v6832 = vadd.f32 %v6719, %v6831
        %v6833 = vpop.f32.mrb[0].mxu0
        %v6834 = vadd.f32 %v6721, %v6833
        %6835 = vmatprep.mubr.bf16.mxu0 %v4972
        %6836 = vmatmul.mubr.bf16.gmra.mrb[0].mxu0 %v4971
        %v6837 = vpop.f32.mrb[0].mxu0
        %v6838 = vadd.f32 %v6725, %v6837
        %v6839 = vpop.f32.mrb[0].mxu0
        %v6840 = vadd.f32 %v6727, %v6839
        %v6841 = vpop.f32.mrb[0].mxu0
        %v6842 = vadd.f32 %v6729, %v6841
        %v6843 = vpop.f32.mrb[0].mxu0
        %v6844 = vadd.f32 %v6731, %v6843
        %6845 = vmatprep.mubr.bf16.mxu0 %v4976
        %6846 = vmatmul.mubr.bf16.gmra.mrb[0].mxu0 %v4975
        %v6847 = vpop.f32.mrb[0].mxu0
        %v6848 = vadd.f32 %v6735, %v6847
        %v6849 = vpop.f32.mrb[0].mxu0
        %v6850 = vadd.f32 %v6737, %v6849
        %v6851 = vpop.f32.mrb[0].mxu0
        %v6852 = vadd.f32 %v6739, %v6851
        %v6853 = vpop.f32.mrb[0].mxu0
        %v6854 = vadd.f32 %v6741, %v6853
        %6855 = vmatprep.mubr.bf16.mxu0 %v4980
        %6856 = vmatmul.mubr.bf16.gmra.mrb[0].mxu0 %v4979
        %v6857 = vpop.f32.mrb[0].mxu0
        %v6858 = vadd.f32 %v6745, %v6857
        %v6859 = vpop.f32.mrb[0].mxu0
        %v6860 = vadd.f32 %v6747, %v6859
        %v6861 = vpop.f32.mrb[0].mxu0
        %v6862 = vadd.f32 %v6749, %v6861
        %v6863 = vpop.f32.mrb[0].mxu0
        %v6864 = vadd.f32 %v6751, %v6863
        %6865 = vmatprep.mubr.bf16.mxu0 %v4984
        %6866 = vmatmul.mubr.bf16.gmra.mrb[0].mxu0 %v4983
        %v6867 = vpop.f32.mrb[0].mxu0
        %v6868 = vadd.f32 %v6755, %v6867
        %v6869 = vpop.f32.mrb[0].mxu0
        %v6870 = vadd.f32 %v6757, %v6869
        %v6871 = vpop.f32.mrb[0].mxu0
        %v6872 = vadd.f32 %v6759, %v6871
        %v6873 = vpop.f32.mrb[0].mxu0
        %v6874 = vadd.f32 %v6761, %v6873
        %6875 = vmatprep.mubr.bf16.mxu0 %v4988
        %6876 = vmatmul.mubr.bf16.gmra.mrb[0].mxu0 %v4987
        %v6877 = vpop.f32.mrb[0].mxu0
        %v6878 = vadd.f32 %v6765, %v6877
        %v6879 = vpop.f32.mrb[0].mxu0
        %v6880 = vadd.f32 %v6767, %v6879
        %v6881 = vpop.f32.mrb[0].mxu0
        %v6882 = vadd.f32 %v6769, %v6881
        %v6883 = vpop.f32.mrb[0].mxu0
        %v6884 = vadd.f32 %v6771, %v6883
        %6885 = vdwg.mxu0
        %6886 = vmatprep.subr.bf16.mxu0 %v5991
        %6887 = vmatpush1.bf16.msra.mxu0 %v5990
        %6888 = vmatprep.subr.bf16.mxu0 %v5998
        %6889 = vmatpush1.bf16.msra.mxu0 %v5997
        %6890 = vmatprep.subr.bf16.mxu0 %v6005
        %6891 = vmatpush1.bf16.msra.mxu0 %v6004
        %6892 = vmatprep.subr.bf16.mxu0 %v6012
        %6893 = vmatpush1.bf16.msra.mxu0 %v6011
        %6894 = vmatprep.subr.bf16.mxu0 %v6019
        %6895 = vmatpush1.bf16.msra.mxu0 %v6018
        %6896 = vmatprep.subr.bf16.mxu0 %v6026
        %6897 = vmatpush1.bf16.msra.mxu0 %v6025
        %6898 = vmatprep.subr.bf16.mxu0 %v6033
        %6899 = vmatpush1.bf16.msra.mxu0 %v6032
        %6900 = vmatprep.subr.bf16.mxu0 %v6040
        %6901 = vmatpush1.bf16.msra.mxu0 %v6039
        %6902 = vmatprep.subr.bf16.mxu0 %v6047
        %6903 = vmatpush1.bf16.msra.mxu0 %v6046
        %6904 = vmatprep.subr.bf16.mxu0 %v6054
        %6905 = vmatpush1.bf16.msra.mxu0 %v6053
        %6906 = vmatprep.subr.bf16.mxu0 %v6061
        %6907 = vmatpush1.bf16.msra.mxu0 %v6060
        %6908 = vmatprep.subr.bf16.mxu0 %v6068
        %6909 = vmatpush1.bf16.msra.mxu0 %v6067
        %6910 = vmatprep.subr.bf16.mxu0 %v6075
        %6911 = vmatpush1.bf16.msra.mxu0 %v6074
        %6912 = vmatprep.subr.bf16.mxu0 %v6082
        %6913 = vmatpush1.bf16.msra.mxu0 %v6081
        %6914 = vmatprep.subr.bf16.mxu0 %v6089
        %6915 = vmatpush1.bf16.msra.mxu0 %v6088
        %6916 = vmatprep.subr.bf16.mxu0 %v6096
        %6917 = vmatpush1.bf16.msra.mxu0 %v6095
        %6918 = vmatprep.mubr.bf16.mxu0 %v4958
        %6919 = vmatmul.mubr.bf16.gmra.mrb[0].mxu0 %v4957
        %v6920 = vpop.f32.mrb[0].mxu0
        %v6921 = vadd.f32 %v5266, %v6920
        %v6922 = vpop.f32.mrb[0].mxu0
        %v6923 = vadd.f32 %v5270, %v6922
        %v6924 = vpop.f32.mrb[0].mxu0
        %v6925 = vadd.f32 %v5266, %v6924
        %v6926 = vpop.f32.mrb[0].mxu0
        %v6927 = vadd.f32 %v5270, %v6926
        %6928 = vmatprep.mubr.bf16.mxu0 %v4962
        %6929 = vmatmul.mubr.bf16.gmra.mrb[0].mxu0 %v4961
        %v6930 = vpop.f32.mrb[0].mxu0
        %v6931 = vadd.f32 %v5266, %v6930
        %v6932 = vpop.f32.mrb[0].mxu0
        %v6933 = vadd.f32 %v5270, %v6932
        %v6934 = vpop.f32.mrb[0].mxu0
        %v6935 = vadd.f32 %v5266, %v6934
        %v6936 = vpop.f32.mrb[0].mxu0
        %v6937 = vadd.f32 %v5270, %v6936
        %6938 = vmatprep.mubr.bf16.mxu0 %v4966
        %6939 = vmatmul.mubr.bf16.gmra.mrb[0].mxu0 %v4965
        %v6940 = vpop.f32.mrb[0].mxu0
        %v6941 = vadd.f32 %v5266, %v6940
        %v6942 = vpop.f32.mrb[0].mxu0
        %v6943 = vadd.f32 %v5270, %v6942
        %v6944 = vpop.f32.mrb[0].mxu0
        %v6945 = vadd.f32 %v5266, %v6944
        %v6946 = vpop.f32.mrb[0].mxu0
        %v6947 = vadd.f32 %v5270, %v6946
        %6948 = vmatprep.mubr.bf16.mxu0 %v4970
        %6949 = vmatmul.mubr.bf16.gmra.mrb[0].mxu0 %v4969
        %v6950 = vpop.f32.mrb[0].mxu0
        %v6951 = vadd.f32 %v5266, %v6950
        %v6952 = vpop.f32.mrb[0].mxu0
        %v6953 = vadd.f32 %v5270, %v6952
        %v6954 = vpop.f32.mrb[0].mxu0
        %v6955 = vadd.f32 %v5266, %v6954
        %v6956 = vpop.f32.mrb[0].mxu0
        %v6957 = vadd.f32 %v5270, %v6956
        %6958 = vmatprep.mubr.bf16.mxu0 %v4974
        %6959 = vmatmul.mubr.bf16.gmra.mrb[0].mxu0 %v4973
        %v6960 = vpop.f32.mrb[0].mxu0
        %v6961 = vadd.f32 %v5266, %v6960
        %v6962 = vpop.f32.mrb[0].mxu0
        %v6963 = vadd.f32 %v5270, %v6962
        %v6964 = vpop.f32.mrb[0].mxu0
        %v6965 = vadd.f32 %v5266, %v6964
        %v6966 = vpop.f32.mrb[0].mxu0
        %v6967 = vadd.f32 %v5270, %v6966
        %6968 = vmatprep.mubr.bf16.mxu0 %v4978
        %6969 = vmatmul.mubr.bf16.gmra.mrb[0].mxu0 %v4977
        %v6970 = vpop.f32.mrb[0].mxu0
        %v6971 = vadd.f32 %v5266, %v6970
        %v6972 = vpop.f32.mrb[0].mxu0
        %v6973 = vadd.f32 %v5270, %v6972
        %v6974 = vpop.f32.mrb[0].mxu0
        %v6975 = vadd.f32 %v5266, %v6974
        %v6976 = vpop.f32.mrb[0].mxu0
        %v6977 = vadd.f32 %v5270, %v6976
        %6978 = vmatprep.mubr.bf16.mxu0 %v4982
        %6979 = vmatmul.mubr.bf16.gmra.mrb[0].mxu0 %v4981
        %v6980 = vpop.f32.mrb[0].mxu0
        %v6981 = vadd.f32 %v5266, %v6980
        %v6982 = vpop.f32.mrb[0].mxu0
        %v6983 = vadd.f32 %v5270, %v6982
        %v6984 = vpop.f32.mrb[0].mxu0
        %v6985 = vadd.f32 %v5266, %v6984
        %v6986 = vpop.f32.mrb[0].mxu0
        %v6987 = vadd.f32 %v5270, %v6986
        %6988 = vmatprep.mubr.bf16.mxu0 %v4986
        %6989 = vmatmul.mubr.bf16.gmra.mrb[0].mxu0 %v4985
        %v6990 = vpop.f32.mrb[0].mxu0
        %v6991 = vadd.f32 %v5266, %v6990
        %v6992 = vpop.f32.mrb[0].mxu0
        %v6993 = vadd.f32 %v5270, %v6992
        %v6994 = vpop.f32.mrb[0].mxu0
        %v6995 = vadd.f32 %v5266, %v6994
        %v6996 = vpop.f32.mrb[0].mxu0
        %v6997 = vadd.f32 %v5270, %v6996
        %6998 = vdwg.mxu0
        %6999 = vmatprep.subr.bf16.mxu0 %v6103
        %7000 = vmatpush1.bf16.msra.mxu0 %v6102
        %7001 = vmatprep.subr.bf16.mxu0 %v6110
        %7002 = vmatpush1.bf16.msra.mxu0 %v6109
        %7003 = vmatprep.subr.bf16.mxu0 %v6117
        %7004 = vmatpush1.bf16.msra.mxu0 %v6116
        %7005 = vmatprep.subr.bf16.mxu0 %v6124
        %7006 = vmatpush1.bf16.msra.mxu0 %v6123
        %7007 = vmatprep.subr.bf16.mxu0 %v6131
        %7008 = vmatpush1.bf16.msra.mxu0 %v6130
        %7009 = vmatprep.subr.bf16.mxu0 %v6138
        %7010 = vmatpush1.bf16.msra.mxu0 %v6137
        %7011 = vmatprep.subr.bf16.mxu0 %v6145
        %7012 = vmatpush1.bf16.msra.mxu0 %v6144
        %7013 = vmatprep.subr.bf16.mxu0 %v6152
        %7014 = vmatpush1.bf16.msra.mxu0 %v6151
        %7015 = vmatprep.subr.bf16.mxu0 %v6159
        %7016 = vmatpush1.bf16.msra.mxu0 %v6158
        %7017 = vmatprep.subr.bf16.mxu0 %v6166
        %7018 = vmatpush1.bf16.msra.mxu0 %v6165
        %7019 = vmatprep.subr.bf16.mxu0 %v6173
        %7020 = vmatpush1.bf16.msra.mxu0 %v6172
        %7021 = vmatprep.subr.bf16.mxu0 %v6180
        %7022 = vmatpush1.bf16.msra.mxu0 %v6179
        %7023 = vmatprep.subr.bf16.mxu0 %v6187
        %7024 = vmatpush1.bf16.msra.mxu0 %v6186
        %7025 = vmatprep.subr.bf16.mxu0 %v6194
        %7026 = vmatpush1.bf16.msra.mxu0 %v6193
        %7027 = vmatprep.subr.bf16.mxu0 %v6201
        %7028 = vmatpush1.bf16.msra.mxu0 %v6200
        %7029 = vmatprep.subr.bf16.mxu0 %v6208
        %7030 = vmatpush1.bf16.msra.mxu0 %v6207
        %7031 = vmatprep.mubr.bf16.mxu0 %v4960
        %7032 = vmatmul.mubr.bf16.gmra.mrb[0].mxu0 %v4959
        %v7033 = vpop.f32.mrb[0].mxu0
        %v7034 = vadd.f32 %v6921, %v7033
        %v7035 = vpop.f32.mrb[0].mxu0
        %v7036 = vadd.f32 %v6923, %v7035
        %v7037 = vpop.f32.mrb[0].mxu0
        %v7038 = vadd.f32 %v6925, %v7037
        %v7039 = vpop.f32.mrb[0].mxu0
        %v7040 = vadd.f32 %v6927, %v7039
        %7041 = vmatprep.mubr.bf16.mxu0 %v4964
        %7042 = vmatmul.mubr.bf16.gmra.mrb[0].mxu0 %v4963
        %v7043 = vpop.f32.mrb[0].mxu0
        %v7044 = vadd.f32 %v6931, %v7043
        %v7045 = vpop.f32.mrb[0].mxu0
        %v7046 = vadd.f32 %v6933, %v7045
        %v7047 = vpop.f32.mrb[0].mxu0
        %v7048 = vadd.f32 %v6935, %v7047
        %v7049 = vpop.f32.mrb[0].mxu0
        %v7050 = vadd.f32 %v6937, %v7049
        %7051 = vmatprep.mubr.bf16.mxu0 %v4968
        %7052 = vmatmul.mubr.bf16.gmra.mrb[0].mxu0 %v4967
        %v7053 = vpop.f32.mrb[0].mxu0
        %v7054 = vadd.f32 %v6941, %v7053
        %v7055 = vpop.f32.mrb[0].mxu0
        %v7056 = vadd.f32 %v6943, %v7055
        %v7057 = vpop.f32.mrb[0].mxu0
        %v7058 = vadd.f32 %v6945, %v7057
        %v7059 = vpop.f32.mrb[0].mxu0
        %v7060 = vadd.f32 %v6947, %v7059
        %7061 = vmatprep.mubr.bf16.mxu0 %v4972
        %7062 = vmatmul.mubr.bf16.gmra.mrb[0].mxu0 %v4971
        %v7063 = vpop.f32.mrb[0].mxu0
        %v7064 = vadd.f32 %v6951, %v7063
        %v7065 = vpop.f32.mrb[0].mxu0
        %v7066 = vadd.f32 %v6953, %v7065
        %v7067 = vpop.f32.mrb[0].mxu0
        %v7068 = vadd.f32 %v6955, %v7067
        %v7069 = vpop.f32.mrb[0].mxu0
        %v7070 = vadd.f32 %v6957, %v7069
        %7071 = vmatprep.mubr.bf16.mxu0 %v4976
        %7072 = vmatmul.mubr.bf16.gmra.mrb[0].mxu0 %v4975
        %v7073 = vpop.f32.mrb[0].mxu0
        %v7074 = vadd.f32 %v6961, %v7073
        %v7075 = vpop.f32.mrb[0].mxu0
        %v7076 = vadd.f32 %v6963, %v7075
        %v7077 = vpop.f32.mrb[0].mxu0
        %v7078 = vadd.f32 %v6965, %v7077
        %v7079 = vpop.f32.mrb[0].mxu0
        %v7080 = vadd.f32 %v6967, %v7079
        %7081 = vmatprep.mubr.bf16.mxu0 %v4980
        %7082 = vmatmul.mubr.bf16.gmra.mrb[0].mxu0 %v4979
        %v7083 = vpop.f32.mrb[0].mxu0
        %v7084 = vadd.f32 %v6971, %v7083
        %v7085 = vpop.f32.mrb[0].mxu0
        %v7086 = vadd.f32 %v6973, %v7085
        %v7087 = vpop.f32.mrb[0].mxu0
        %v7088 = vadd.f32 %v6975, %v7087
        %v7089 = vpop.f32.mrb[0].mxu0
        %v7090 = vadd.f32 %v6977, %v7089
        %7091 = vmatprep.mubr.bf16.mxu0 %v4984
        %7092 = vmatmul.mubr.bf16.gmra.mrb[0].mxu0 %v4983
        %v7093 = vpop.f32.mrb[0].mxu0
        %v7094 = vadd.f32 %v6981, %v7093
        %v7095 = vpop.f32.mrb[0].mxu0
        %v7096 = vadd.f32 %v6983, %v7095
        %v7097 = vpop.f32.mrb[0].mxu0
        %v7098 = vadd.f32 %v6985, %v7097
        %v7099 = vpop.f32.mrb[0].mxu0
        %v7100 = vadd.f32 %v6987, %v7099
        %7101 = vmatprep.mubr.bf16.mxu0 %v4988
        %7102 = vmatmul.mubr.bf16.gmra.mrb[0].mxu0 %v4987
        %v7103 = vpop.f32.mrb[0].mxu0
        %v7104 = vadd.f32 %v6991, %v7103
        %v7105 = vpop.f32.mrb[0].mxu0
        %v7106 = vadd.f32 %v6993, %v7105
        %v7107 = vpop.f32.mrb[0].mxu0
        %v7108 = vadd.f32 %v6995, %v7107
        %v7109 = vpop.f32.mrb[0].mxu0
        %v7110 = vadd.f32 %v6997, %v7109
        %7111 = vdwg.mxu0
        %7112 = vmatprep.subr.bf16.mxu0 0
        %7113 = vmatpush1.bf16.msra.mxu0 %v5992
        %7114 = vmatprep.subr.bf16.mxu0 0
        %7115 = vmatpush1.bf16.msra.mxu0 %v5999
        %7116 = vmatprep.subr.bf16.mxu0 0
        %7117 = vmatpush1.bf16.msra.mxu0 %v6006
        %7118 = vmatprep.subr.bf16.mxu0 0
        %7119 = vmatpush1.bf16.msra.mxu0 %v6013
        %7120 = vmatprep.subr.bf16.mxu0 0
        %7121 = vmatpush1.bf16.msra.mxu0 %v6020
        %7122 = vmatprep.subr.bf16.mxu0 0
        %7123 = vmatpush1.bf16.msra.mxu0 %v6027
        %7124 = vmatprep.subr.bf16.mxu0 0
        %7125 = vmatpush1.bf16.msra.mxu0 %v6034
        %7126 = vmatprep.subr.bf16.mxu0 0
        %7127 = vmatpush1.bf16.msra.mxu0 %v6041
        %7128 = vmatprep.subr.bf16.mxu0 0
        %7129 = vmatpush1.bf16.msra.mxu0 %v6048
        %7130 = vmatprep.subr.bf16.mxu0 0
        %7131 = vmatpush1.bf16.msra.mxu0 %v6055
        %7132 = vmatprep.subr.bf16.mxu0 0
        %7133 = vmatpush1.bf16.msra.mxu0 %v6062
        %7134 = vmatprep.subr.bf16.mxu0 0
        %7135 = vmatpush1.bf16.msra.mxu0 %v6069
        %7136 = vmatprep.subr.bf16.mxu0 0
        %7137 = vmatpush1.bf16.msra.mxu0 %v6076
        %7138 = vmatprep.subr.bf16.mxu0 0
        %7139 = vmatpush1.bf16.msra.mxu0 %v6083
        %7140 = vmatprep.subr.bf16.mxu0 0
        %7141 = vmatpush1.bf16.msra.mxu0 %v6090
        %7142 = vmatprep.subr.bf16.mxu0 0
        %7143 = vmatpush1.bf16.msra.mxu0 %v6097
        %7144 = vmatprep.mubr.bf16.mxu0 %v4958
        %7145 = vmatmul.mubr.bf16.gmra.mrb[0].mxu0 %v4957
        %v7146 = vpop.f32.mrb[0].mxu0
        %v7147 = vadd.f32 %v5274, %v7146
        %v7148 = vpop.f32.mrb[0].mxu0
        %v7149 = vpop.f32.mrb[0].mxu0
        %v7150 = vadd.f32 %v5274, %v7149
        %v7151 = vpop.f32.mrb[0].mxu0
        %7152 = vmatprep.mubr.bf16.mxu0 %v4962
        %7153 = vmatmul.mubr.bf16.gmra.mrb[0].mxu0 %v4961
        %v7154 = vpop.f32.mrb[0].mxu0
        %v7155 = vadd.f32 %v5274, %v7154
        %v7156 = vpop.f32.mrb[0].mxu0
        %v7157 = vpop.f32.mrb[0].mxu0
        %v7158 = vadd.f32 %v5274, %v7157
        %v7159 = vpop.f32.mrb[0].mxu0
        %7160 = vmatprep.mubr.bf16.mxu0 %v4966
        %7161 = vmatmul.mubr.bf16.gmra.mrb[0].mxu0 %v4965
        %v7162 = vpop.f32.mrb[0].mxu0
        %v7163 = vadd.f32 %v5274, %v7162
        %v7164 = vpop.f32.mrb[0].mxu0
        %v7165 = vpop.f32.mrb[0].mxu0
        %v7166 = vadd.f32 %v5274, %v7165
        %v7167 = vpop.f32.mrb[0].mxu0
        %7168 = vmatprep.mubr.bf16.mxu0 %v4970
        %7169 = vmatmul.mubr.bf16.gmra.mrb[0].mxu0 %v4969
        %v7170 = vpop.f32.mrb[0].mxu0
        %v7171 = vadd.f32 %v5274, %v7170
        %v7172 = vpop.f32.mrb[0].mxu0
        %v7173 = vpop.f32.mrb[0].mxu0
        %v7174 = vadd.f32 %v5274, %v7173
        %v7175 = vpop.f32.mrb[0].mxu0
        %7176 = vmatprep.mubr.bf16.mxu0 %v4974
        %7177 = vmatmul.mubr.bf16.gmra.mrb[0].mxu0 %v4973
        %v7178 = vpop.f32.mrb[0].mxu0
        %v7179 = vadd.f32 %v5274, %v7178
        %v7180 = vpop.f32.mrb[0].mxu0
        %v7181 = vpop.f32.mrb[0].mxu0
        %v7182 = vadd.f32 %v5274, %v7181
        %v7183 = vpop.f32.mrb[0].mxu0
        %7184 = vmatprep.mubr.bf16.mxu0 %v4978
        %7185 = vmatmul.mubr.bf16.gmra.mrb[0].mxu0 %v4977
        %v7186 = vpop.f32.mrb[0].mxu0
        %v7187 = vadd.f32 %v5274, %v7186
        %v7188 = vpop.f32.mrb[0].mxu0
        %v7189 = vpop.f32.mrb[0].mxu0
        %v7190 = vadd.f32 %v5274, %v7189
        %v7191 = vpop.f32.mrb[0].mxu0
        %7192 = vmatprep.mubr.bf16.mxu0 %v4982
        %7193 = vmatmul.mubr.bf16.gmra.mrb[0].mxu0 %v4981
        %v7194 = vpop.f32.mrb[0].mxu0
        %v7195 = vadd.f32 %v5274, %v7194
        %v7196 = vpop.f32.mrb[0].mxu0
        %v7197 = vpop.f32.mrb[0].mxu0
        %v7198 = vadd.f32 %v5274, %v7197
        %v7199 = vpop.f32.mrb[0].mxu0
        %7200 = vmatprep.mubr.bf16.mxu0 %v4986
        %7201 = vmatmul.mubr.bf16.gmra.mrb[0].mxu0 %v4985
        %v7202 = vpop.f32.mrb[0].mxu0
        %v7203 = vadd.f32 %v5274, %v7202
        %v7204 = vpop.f32.mrb[0].mxu0
        %v7205 = vpop.f32.mrb[0].mxu0
        %v7206 = vadd.f32 %v5274, %v7205
        %v7207 = vpop.f32.mrb[0].mxu0
        %7208 = vdwg.mxu0
        %7209 = vmatprep.subr.bf16.mxu0 0
        %7210 = vmatpush1.bf16.msra.mxu0 %v6104
        %7211 = vmatprep.subr.bf16.mxu0 0
        %7212 = vmatpush1.bf16.msra.mxu0 %v6111
        %7213 = vmatprep.subr.bf16.mxu0 0
        %7214 = vmatpush1.bf16.msra.mxu0 %v6118
        %7215 = vmatprep.subr.bf16.mxu0 0
        %7216 = vmatpush1.bf16.msra.mxu0 %v6125
        %7217 = vmatprep.subr.bf16.mxu0 0
        %7218 = vmatpush1.bf16.msra.mxu0 %v6132
        %7219 = vmatprep.subr.bf16.mxu0 0
        %7220 = vmatpush1.bf16.msra.mxu0 %v6139
        %7221 = vmatprep.subr.bf16.mxu0 0
        %7222 = vmatpush1.bf16.msra.mxu0 %v6146
        %7223 = vmatprep.subr.bf16.mxu0 0
        %7224 = vmatpush1.bf16.msra.mxu0 %v6153
        %7225 = vmatprep.subr.bf16.mxu0 0
        %7226 = vmatpush1.bf16.msra.mxu0 %v6160
        %7227 = vmatprep.subr.bf16.mxu0 0
        %7228 = vmatpush1.bf16.msra.mxu0 %v6167
        %7229 = vmatprep.subr.bf16.mxu0 0
        %7230 = vmatpush1.bf16.msra.mxu0 %v6174
        %7231 = vmatprep.subr.bf16.mxu0 0
        %7232 = vmatpush1.bf16.msra.mxu0 %v6181
        %7233 = vmatprep.subr.bf16.mxu0 0
        %7234 = vmatpush1.bf16.msra.mxu0 %v6188
        %7235 = vmatprep.subr.bf16.mxu0 0
        %7236 = vmatpush1.bf16.msra.mxu0 %v6195
        %7237 = vmatprep.subr.bf16.mxu0 0
        %7238 = vmatpush1.bf16.msra.mxu0 %v6202
        %7239 = vmatprep.subr.bf16.mxu0 0
        %7240 = vmatpush1.bf16.msra.mxu0 %v6209
        %7241 = vmatprep.mubr.bf16.mxu0 %v4960
        %7242 = vmatmul.mubr.bf16.gmra.mrb[0].mxu0 %v4959
        %v7243 = vpop.f32.mrb[0].mxu0
        %v7244 = vadd.f32 %v7147, %v7243
        %v7245 = vpop.f32.mrb[0].mxu0
        %v7246 = vpop.f32.mrb[0].mxu0
        %v7247 = vadd.f32 %v7150, %v7246
        %v7248 = vpop.f32.mrb[0].mxu0
        %7249 = vmatprep.mubr.bf16.mxu0 %v4964
        %7250 = vmatmul.mubr.bf16.gmra.mrb[0].mxu0 %v4963
        %v7251 = vpop.f32.mrb[0].mxu0
        %v7252 = vadd.f32 %v7155, %v7251
        %v7253 = vpop.f32.mrb[0].mxu0
        %v7254 = vpop.f32.mrb[0].mxu0
        %v7255 = vadd.f32 %v7158, %v7254
        %v7256 = vpop.f32.mrb[0].mxu0
        %7257 = vmatprep.mubr.bf16.mxu0 %v4968
        %7258 = vmatmul.mubr.bf16.gmra.mrb[0].mxu0 %v4967
        %v7259 = vpop.f32.mrb[0].mxu0
        %v7260 = vadd.f32 %v7163, %v7259
        %v7261 = vpop.f32.mrb[0].mxu0
        %v7262 = vpop.f32.mrb[0].mxu0
        %v7263 = vadd.f32 %v7166, %v7262
        %v7264 = vpop.f32.mrb[0].mxu0
        %7265 = vmatprep.mubr.bf16.mxu0 %v4972
        %7266 = vmatmul.mubr.bf16.gmra.mrb[0].mxu0 %v4971
        %v7267 = vpop.f32.mrb[0].mxu0
        %v7268 = vadd.f32 %v7171, %v7267
        %v7269 = vpop.f32.mrb[0].mxu0
        %v7270 = vpop.f32.mrb[0].mxu0
        %v7271 = vadd.f32 %v7174, %v7270
        %v7272 = vpop.f32.mrb[0].mxu0
        %7273 = vmatprep.mubr.bf16.mxu0 %v4976
        %7274 = vmatmul.mubr.bf16.gmra.mrb[0].mxu0 %v4975
        %v7275 = vpop.f32.mrb[0].mxu0
        %v7276 = vadd.f32 %v7179, %v7275
        %v7277 = vpop.f32.mrb[0].mxu0
        %v7278 = vpop.f32.mrb[0].mxu0
        %v7279 = vadd.f32 %v7182, %v7278
        %v7280 = vpop.f32.mrb[0].mxu0
        %7281 = vmatprep.mubr.bf16.mxu0 %v4980
        %7282 = vmatmul.mubr.bf16.gmra.mrb[0].mxu0 %v4979
        %v7283 = vpop.f32.mrb[0].mxu0
        %v7284 = vadd.f32 %v7187, %v7283
        %v7285 = vpop.f32.mrb[0].mxu0
        %v7286 = vpop.f32.mrb[0].mxu0
        %v7287 = vadd.f32 %v7190, %v7286
        %v7288 = vpop.f32.mrb[0].mxu0
        %7289 = vmatprep.mubr.bf16.mxu0 %v4984
        %7290 = vmatmul.mubr.bf16.gmra.mrb[0].mxu0 %v4983
        %v7291 = vpop.f32.mrb[0].mxu0
        %v7292 = vadd.f32 %v7195, %v7291
        %v7293 = vpop.f32.mrb[0].mxu0
        %v7294 = vpop.f32.mrb[0].mxu0
        %v7295 = vadd.f32 %v7198, %v7294
        %v7296 = vpop.f32.mrb[0].mxu0
        %7297 = vmatprep.mubr.bf16.mxu0 %v4988
        %7298 = vmatmul.mubr.bf16.gmra.mrb[0].mxu0 %v4987
        %v7299 = vpop.f32.mrb[0].mxu0
        %v7300 = vadd.f32 %v7203, %v7299
        %v7301 = vpop.f32.mrb[0].mxu0
        %v7302 = vpop.f32.mrb[0].mxu0
        %v7303 = vadd.f32 %v7206, %v7302
        %v7304 = vpop.f32.mrb[0].mxu0
        %7305 = vdwg.mxu0
        %v7306 = vpack.c.bf16 %v6586, %v6582
        %v7307 = vpack.c.bf16 %v6588, %v6584
        %v7308 = vpack.c.bf16 %v6812, %v6808
        %v7309 = vpack.c.bf16 %v6814, %v6810
        %v7310 = vpack.c.bf16 %v7038, %v7034
        %v7311 = vpack.c.bf16 %v7040, %v7036
        %v7312 = vpack.c.bf16 %v7247, %v7244
        %v7313 = vpack.c.bf16 %v6596, %v6592
        %v7314 = vpack.c.bf16 %v6598, %v6594
        %v7315 = vpack.c.bf16 %v6822, %v6818
        %v7316 = vpack.c.bf16 %v6824, %v6820
        %v7317 = vpack.c.bf16 %v7048, %v7044
        %v7318 = vpack.c.bf16 %v7050, %v7046
        %v7319 = vpack.c.bf16 %v7255, %v7252
        %v7320 = vpack.c.bf16 %v6606, %v6602
        %v7321 = vpack.c.bf16 %v6608, %v6604
        %v7322 = vpack.c.bf16 %v6832, %v6828
        %v7323 = vpack.c.bf16 %v6834, %v6830
        %v7324 = vpack.c.bf16 %v7058, %v7054
        %v7325 = vpack.c.bf16 %v7060, %v7056
        %v7326 = vpack.c.bf16 %v7263, %v7260
        %v7327 = vpack.c.bf16 %v6616, %v6612
        %v7328 = vpack.c.bf16 %v6618, %v6614
        %v7329 = vpack.c.bf16 %v6842, %v6838
        %v7330 = vpack.c.bf16 %v6844, %v6840
        %v7331 = vpack.c.bf16 %v7068, %v7064
        %v7332 = vpack.c.bf16 %v7070, %v7066
        %v7333 = vpack.c.bf16 %v7271, %v7268
        %v7334 = vpack.c.bf16 %v6626, %v6622
        %v7335 = vpack.c.bf16 %v6628, %v6624
        %v7336 = vpack.c.bf16 %v6852, %v6848
        %v7337 = vpack.c.bf16 %v6854, %v6850
        %v7338 = vpack.c.bf16 %v7078, %v7074
        %v7339 = vpack.c.bf16 %v7080, %v7076
        %v7340 = vpack.c.bf16 %v7279, %v7276
        %v7341 = vpack.c.bf16 %v6636, %v6632
        %v7342 = vpack.c.bf16 %v6638, %v6634
        %v7343 = vpack.c.bf16 %v6862, %v6858
        %v7344 = vpack.c.bf16 %v6864, %v6860
        %v7345 = vpack.c.bf16 %v7088, %v7084
        %v7346 = vpack.c.bf16 %v7090, %v7086
        %v7347 = vpack.c.bf16 %v7287, %v7284
        %v7348 = vpack.c.bf16 %v6646, %v6642
        %v7349 = vpack.c.bf16 %v6648, %v6644
        %v7350 = vpack.c.bf16 %v6872, %v6868
        %v7351 = vpack.c.bf16 %v6874, %v6870
        %v7352 = vpack.c.bf16 %v7098, %v7094
        %v7353 = vpack.c.bf16 %v7100, %v7096
        %v7354 = vpack.c.bf16 %v7295, %v7292
        %v7355 = vpack.c.bf16 %v6656, %v6652
        %v7356 = vpack.c.bf16 %v6658, %v6654
        %v7357 = vpack.c.bf16 %v6882, %v6878
        %v7358 = vpack.c.bf16 %v6884, %v6880
        %v7359 = vpack.c.bf16 %v7108, %v7104
        %v7360 = vpack.c.bf16 %v7110, %v7106
        %v7361 = vpack.c.bf16 %v7303, %v7300
        %v7418 = vunpack.c.l.b16 %v7306
        %v7419 = vunpack.c.l.b16 %v7307
        %v7420 = vunpack.c.l.b16 %v7308
        %v7421 = vunpack.c.l.b16 %v7309
        %v7422 = vunpack.c.l.b16 %v7310
        %v7423 = vunpack.c.l.b16 %v7311
        %v7424 = vunpack.c.l.b16 %v7312
        %v7425 = vunpack.c.h.b16 %v7306
        %v7426 = vunpack.c.h.b16 %v7307
        %v7427 = vunpack.c.h.b16 %v7308
        %v7428 = vunpack.c.h.b16 %v7309
        %v7429 = vunpack.c.h.b16 %v7310
        %v7430 = vunpack.c.h.b16 %v7311
        %v7431 = vunpack.c.h.b16 %v7312
        %v7432 = vunpack.c.l.b16 %v7313
        %v7433 = vunpack.c.l.b16 %v7314
        %v7434 = vunpack.c.l.b16 %v7315
        %v7435 = vunpack.c.l.b16 %v7316
        %v7436 = vunpack.c.l.b16 %v7317
        %v7437 = vunpack.c.l.b16 %v7318
        %v7438 = vunpack.c.l.b16 %v7319
        %v7439 = vunpack.c.h.b16 %v7313
        %v7440 = vunpack.c.h.b16 %v7314
        %v7441 = vunpack.c.h.b16 %v7315
        %v7442 = vunpack.c.h.b16 %v7316
        %v7443 = vunpack.c.h.b16 %v7317
        %v7444 = vunpack.c.h.b16 %v7318
        %v7445 = vunpack.c.h.b16 %v7319
        %v7446 = vunpack.c.l.b16 %v7320
        %v7447 = vunpack.c.l.b16 %v7321
        %v7448 = vunpack.c.l.b16 %v7322
        %v7449 = vunpack.c.l.b16 %v7323
        %v7450 = vunpack.c.l.b16 %v7324
        %v7451 = vunpack.c.l.b16 %v7325
        %v7452 = vunpack.c.l.b16 %v7326
        %v7453 = vunpack.c.h.b16 %v7320
        %v7454 = vunpack.c.h.b16 %v7321
        %v7455 = vunpack.c.h.b16 %v7322
        %v7456 = vunpack.c.h.b16 %v7323
        %v7457 = vunpack.c.h.b16 %v7324
        %v7458 = vunpack.c.h.b16 %v7325
        %v7459 = vunpack.c.h.b16 %v7326
        %v7460 = vunpack.c.l.b16 %v7327
        %v7461 = vunpack.c.l.b16 %v7328
        %v7462 = vunpack.c.l.b16 %v7329
        %v7463 = vunpack.c.l.b16 %v7330
        %v7464 = vunpack.c.l.b16 %v7331
        %v7465 = vunpack.c.l.b16 %v7332
        %v7466 = vunpack.c.l.b16 %v7333
        %v7467 = vunpack.c.h.b16 %v7327
        %v7468 = vunpack.c.h.b16 %v7328
        %v7469 = vunpack.c.h.b16 %v7329
        %v7470 = vunpack.c.h.b16 %v7330
        %v7471 = vunpack.c.h.b16 %v7331
        %v7472 = vunpack.c.h.b16 %v7332
        %v7473 = vunpack.c.h.b16 %v7333
        %v7474 = vunpack.c.l.b16 %v7334
        %v7475 = vunpack.c.l.b16 %v7335
        %v7476 = vunpack.c.l.b16 %v7336
        %v7477 = vunpack.c.l.b16 %v7337
        %v7478 = vunpack.c.l.b16 %v7338
        %v7479 = vunpack.c.l.b16 %v7339
        %v7480 = vunpack.c.l.b16 %v7340
        %v7481 = vunpack.c.h.b16 %v7334
        %v7482 = vunpack.c.h.b16 %v7335
        %v7483 = vunpack.c.h.b16 %v7336
        %v7484 = vunpack.c.h.b16 %v7337
        %v7485 = vunpack.c.h.b16 %v7338
        %v7486 = vunpack.c.h.b16 %v7339
        %v7487 = vunpack.c.h.b16 %v7340
        %v7488 = vunpack.c.l.b16 %v7341
        %v7489 = vunpack.c.l.b16 %v7342
        %v7490 = vunpack.c.l.b16 %v7343
        %v7491 = vunpack.c.l.b16 %v7344
        %v7492 = vunpack.c.l.b16 %v7345
        %v7493 = vunpack.c.l.b16 %v7346
        %v7494 = vunpack.c.l.b16 %v7347
        %v7495 = vunpack.c.h.b16 %v7341
        %v7496 = vunpack.c.h.b16 %v7342
        %v7497 = vunpack.c.h.b16 %v7343
        %v7498 = vunpack.c.h.b16 %v7344
        %v7499 = vunpack.c.h.b16 %v7345
        %v7500 = vunpack.c.h.b16 %v7346
        %v7501 = vunpack.c.h.b16 %v7347
        %v7502 = vunpack.c.l.b16 %v7348
        %v7503 = vunpack.c.l.b16 %v7349
        %v7504 = vunpack.c.l.b16 %v7350
        %v7505 = vunpack.c.l.b16 %v7351
        %v7506 = vunpack.c.l.b16 %v7352
        %v7507 = vunpack.c.l.b16 %v7353
        %v7508 = vunpack.c.l.b16 %v7354
        %v7509 = vunpack.c.h.b16 %v7348
        %v7510 = vunpack.c.h.b16 %v7349
        %v7511 = vunpack.c.h.b16 %v7350
        %v7512 = vunpack.c.h.b16 %v7351
        %v7513 = vunpack.c.h.b16 %v7352
        %v7514 = vunpack.c.h.b16 %v7353
        %v7515 = vunpack.c.h.b16 %v7354
        %v7516 = vunpack.c.l.b16 %v7355
        %v7517 = vunpack.c.l.b16 %v7356
        %v7518 = vunpack.c.l.b16 %v7357
        %v7519 = vunpack.c.l.b16 %v7358
        %v7520 = vunpack.c.l.b16 %v7359
        %v7521 = vunpack.c.l.b16 %v7360
        %v7522 = vunpack.c.l.b16 %v7361
        %v7523 = vunpack.c.h.b16 %v7355
        %v7524 = vunpack.c.h.b16 %v7356
        %v7525 = vunpack.c.h.b16 %v7357
        %v7526 = vunpack.c.h.b16 %v7358
        %v7527 = vunpack.c.h.b16 %v7359
        %v7528 = vunpack.c.h.b16 %v7360
        %v7529 = vunpack.c.h.b16 %v7361
        %v7530 = vpack.c.b16 %v7419, %v7418
        %v7531 = vpack.c.b16 %v7421, %v7420
        %v7532 = vpack.c.b16 %v7423, %v7422
        %v7533 = vpack.c.b16 %v7424, %v7424
        %v7534 = vpack.c.b16 %v7426, %v7425
        %v7535 = vpack.c.b16 %v7428, %v7427
        %v7536 = vpack.c.b16 %v7430, %v7429
        %v7537 = vpack.c.b16 %v7431, %v7431
        %v7538 = vpack.c.b16 %v7433, %v7432
        %v7539 = vpack.c.b16 %v7435, %v7434
        %v7540 = vpack.c.b16 %v7437, %v7436
        %v7541 = vpack.c.b16 %v7438, %v7438
        %v7542 = vpack.c.b16 %v7440, %v7439
        %v7543 = vpack.c.b16 %v7442, %v7441
        %v7544 = vpack.c.b16 %v7444, %v7443
        %v7545 = vpack.c.b16 %v7445, %v7445
        %v7546 = vpack.c.b16 %v7447, %v7446
        %v7547 = vpack.c.b16 %v7449, %v7448
        %v7548 = vpack.c.b16 %v7451, %v7450
        %v7549 = vpack.c.b16 %v7452, %v7452
        %v7550 = vpack.c.b16 %v7454, %v7453
        %v7551 = vpack.c.b16 %v7456, %v7455
        %v7552 = vpack.c.b16 %v7458, %v7457
        %v7553 = vpack.c.b16 %v7459, %v7459
        %v7554 = vpack.c.b16 %v7461, %v7460
        %v7555 = vpack.c.b16 %v7463, %v7462
        %v7556 = vpack.c.b16 %v7465, %v7464
        %v7557 = vpack.c.b16 %v7466, %v7466
        %v7558 = vpack.c.b16 %v7468, %v7467
        %v7559 = vpack.c.b16 %v7470, %v7469
        %v7560 = vpack.c.b16 %v7472, %v7471
        %v7561 = vpack.c.b16 %v7473, %v7473
        %v7562 = vpack.c.b16 %v7475, %v7474
        %v7563 = vpack.c.b16 %v7477, %v7476
        %v7564 = vpack.c.b16 %v7479, %v7478
        %v7565 = vpack.c.b16 %v7480, %v7480
        %v7566 = vpack.c.b16 %v7482, %v7481
        %v7567 = vpack.c.b16 %v7484, %v7483
        %v7568 = vpack.c.b16 %v7486, %v7485
        %v7569 = vpack.c.b16 %v7487, %v7487
        %v7570 = vpack.c.b16 %v7489, %v7488
        %v7571 = vpack.c.b16 %v7491, %v7490
        %v7572 = vpack.c.b16 %v7493, %v7492
        %v7573 = vpack.c.b16 %v7494, %v7494
        %v7574 = vpack.c.b16 %v7496, %v7495
        %v7575 = vpack.c.b16 %v7498, %v7497
        %v7576 = vpack.c.b16 %v7500, %v7499
        %v7577 = vpack.c.b16 %v7501, %v7501
        %v7578 = vpack.c.b16 %v7503, %v7502
        %v7579 = vpack.c.b16 %v7505, %v7504
        %v7580 = vpack.c.b16 %v7507, %v7506
        %v7581 = vpack.c.b16 %v7508, %v7508
        %v7582 = vpack.c.b16 %v7510, %v7509
        %v7583 = vpack.c.b16 %v7512, %v7511
        %v7584 = vpack.c.b16 %v7514, %v7513
        %v7585 = vpack.c.b16 %v7515, %v7515
        %v7586 = vpack.c.b16 %v7517, %v7516
        %v7587 = vpack.c.b16 %v7519, %v7518
        %v7588 = vpack.c.b16 %v7521, %v7520
        %v7589 = vpack.c.b16 %v7522, %v7522
        %v7590 = vpack.c.b16 %v7524, %v7523
        %v7591 = vpack.c.b16 %v7526, %v7525
        %v7592 = vpack.c.b16 %v7528, %v7527
        %v7593 = vpack.c.b16 %v7529, %v7529
        %7658 = vst [vmem:[%s600] sm:$0xff] %v7530
        %7659 = vst [vmem:[%s600 + $0x8] sm:$0xff] %v7531
        %7660 = vst [vmem:[%s600 + $0x10] sm:$0xff] %v7532
        %7661 = vst [vmem:[%s600 + $0x18] sm:$0xf] %v7533
        %7662 = vst [vmem:[%s600 + $0x1c] sm:$0xff] %v7534
        %7663 = vst [vmem:[%s600 + $0x24] sm:$0xff] %v7535
        %7664 = vst [vmem:[%s600 + $0x2c] sm:$0xff] %v7536
        %7665 = vst [vmem:[%s600 + $0x34] sm:$0xf] %v7537
        %7666 = vst [vmem:[%s600 + $0x38] sm:$0xff] %v7538
        %7667 = vst [vmem:[%s600 + $0x40] sm:$0xff] %v7539
        %7668 = vst [vmem:[%s600 + $0x48] sm:$0xff] %v7540
        %7669 = vst [vmem:[%s600 + $0x50] sm:$0xf] %v7541
        %7670 = vst [vmem:[%s600 + $0x54] sm:$0xff] %v7542
        %7671 = vst [vmem:[%s600 + $0x5c] sm:$0xff] %v7543
        %7672 = vst [vmem:[%s600 + $0x64] sm:$0xff] %v7544
        %7673 = vst [vmem:[%s600 + $0x6c] sm:$0xf] %v7545
        %7674 = vst [vmem:[%s600 + $0x70] sm:$0xff] %v7546
        %7675 = vst [vmem:[%s600 + $0x78] sm:$0xff] %v7547
        %7676 = vst [vmem:[%s600 + $0x80] sm:$0xff] %v7548
        %7677 = vst [vmem:[%s600 + $0x88] sm:$0xf] %v7549
        %7678 = vst [vmem:[%s600 + $0x8c] sm:$0xff] %v7550
        %7679 = vst [vmem:[%s600 + $0x94] sm:$0xff] %v7551
        %7680 = vst [vmem:[%s600 + $0x9c] sm:$0xff] %v7552
        %7681 = vst [vmem:[%s600 + $0xa4] sm:$0xf] %v7553
        %7682 = vst [vmem:[%s600 + $0xa8] sm:$0xff] %v7554
        %7683 = vst [vmem:[%s600 + $0xb0] sm:$0xff] %v7555
        %7684 = vst [vmem:[%s600 + $0xb8] sm:$0xff] %v7556
        %7685 = vst [vmem:[%s600 + $0xc0] sm:$0xf] %v7557
        %7686 = vst [vmem:[%s600 + $0xc4] sm:$0xff] %v7558
        %7687 = vst [vmem:[%s600 + $0xcc] sm:$0xff] %v7559
        %7688 = vst [vmem:[%s600 + $0xd4] sm:$0xff] %v7560
        %7689 = vst [vmem:[%s600 + $0xdc] sm:$0xf] %v7561
        %7690 = vst [vmem:[%s600 + $0xe0] sm:$0xff] %v7562
        %7691 = vst [vmem:[%s600 + $0xe8] sm:$0xff] %v7563
        %7692 = vst [vmem:[%s600 + $0xf0] sm:$0xff] %v7564
        %7693 = vst [vmem:[%s600 + $0xf8] sm:$0xf] %v7565
        %7694 = vst [vmem:[%s600 + $0xfc] sm:$0xff] %v7566
        %7695 = vst [vmem:[%s600 + $0x104] sm:$0xff] %v7567
        %7696 = vst [vmem:[%s600 + $0x10c] sm:$0xff] %v7568
        %7697 = vst [vmem:[%s600 + $0x114] sm:$0xf] %v7569
        %7698 = vst [vmem:[%s600 + $0x118] sm:$0xff] %v7570
        %7699 = vst [vmem:[%s600 + $0x120] sm:$0xff] %v7571
        %7700 = vst [vmem:[%s600 + $0x128] sm:$0xff] %v7572
        %7701 = vst [vmem:[%s600 + $0x130] sm:$0xf] %v7573
        %7702 = vst [vmem:[%s600 + $0x134] sm:$0xff] %v7574
        %7703 = vst [vmem:[%s600 + $0x13c] sm:$0xff] %v7575
        %7704 = vst [vmem:[%s600 + $0x144] sm:$0xff] %v7576
        %7705 = vst [vmem:[%s600 + $0x14c] sm:$0xf] %v7577
        %7706 = vst [vmem:[%s600 + $0x150] sm:$0xff] %v7578
        %7707 = vst [vmem:[%s600 + $0x158] sm:$0xff] %v7579
        %7708 = vst [vmem:[%s600 + $0x160] sm:$0xff] %v7580
        %7709 = vst [vmem:[%s600 + $0x168] sm:$0xf] %v7581
        %7710 = vst [vmem:[%s600 + $0x16c] sm:$0xff] %v7582
        %7711 = vst [vmem:[%s600 + $0x174] sm:$0xff] %v7583
        %7712 = vst [vmem:[%s600 + $0x17c] sm:$0xff] %v7584
        %7713 = vst [vmem:[%s600 + $0x184] sm:$0xf] %v7585
        %7714 = vst [vmem:[%s600 + $0x188] sm:$0xff] %v7586
        %7715 = vst [vmem:[%s600 + $0x190] sm:$0xff] %v7587
        %7716 = vst [vmem:[%s600 + $0x198] sm:$0xff] %v7588
        %7717 = vst [vmem:[%s600 + $0x1a0] sm:$0xf] %v7589
        %7718 = vst [vmem:[%s600 + $0x1a4] sm:$0xff] %v7590
        %7719 = vst [vmem:[%s600 + $0x1ac] sm:$0xff] %v7591
        %7720 = vst [vmem:[%s600 + $0x1b4] sm:$0xff] %v7592
        %7721 = vst [vmem:[%s600 + $0x1bc] sm:$0xf] %v7593
        %s7722 = sand.u32 %s322, 1
        %s7723 = sand.u32 %s322, 1
        %s7724 = smul.addr %s7723, 64
        %s7725 = scalar_lea.vmem [#allocation16], %s7724
        %s7726 = sand.u32 %s348, 1
        %s7727 = scalar_lea.sflag [#allocation4], %s7726
        %s7728 = sand.u32 %s348, 1
        %s7729 = smul.addr %s7728, 448
        %s7730 = scalar_lea.vmem [#allocation17], %s7729
        // Predicated region
        $region105: #{ae_forward.1} parent=71 // pred_check
          %p7731 = pneg %p332
        $region106: #{ae_forward.1} parent=71 // pred_check_branch
          %7733 = sbr.rel (%p7731) target = $region108
        $region107: #{ae_forward.1} parent=71 // pred_region
          %s7734 = smul.u32 16, %s36
          %s7735 = ssub.s32 25, %s7734
          %p7736 = scmp.lt.s32.totalorder %s7735, 16
          %s7737 = scalar_select %p7736, %s7735, 16
          %s7738 = smul.u32 64, %s7737
          %p7739 = scmp.ne.s32.totalorder 0, %s7738
          %s7740 = smul.addr %s7734, 4
          %s7741 = scalar_lea.vmem %s13, %s7740
          // Predicated region
          $region109: #{ae_forward.1} parent=107 // pred_check
            %p7742 = pneg %p7739
          $region110: #{ae_forward.1} parent=107 // pred_check_branch
            %7744 = sbr.rel (%p7742) target = $region112
          $region111: #{ae_forward.1} parent=107 // pred_region
            // Predicated region
            $region113: #{ae_forward.1} parent=111 // pred_check
              _
            $region114: #{ae_forward.1} parent=111 // pred_check_branch
              %7746 = sbr.rel target = $region116
            $region115: #{ae_forward.1} parent=111 // pred_region
              // Predicated region
              $region135: #{ae_forward.1} parent=115 // pred_check
                _
              $region136: #{ae_forward.1} parent=115 // pred_check_branch
                %7825 = sbr.rel (0) target = $region138
              $region137: #{ae_forward.1} parent=115 // pred_region
                %s7827 = sshrl.u32 %s7737, 4
                // While loop
                $region139: #{ae_forward.1} parent=137 // loop_pre_header
                  _
                $region140: #{ae_forward.1} parent=137 // loop_header
                  %s7829 = sphi 0, %s7831
                  %p7830 = scmp.ge.s32.totalorder %s7829, %s7827
                  %s7834 = sphi 0, %s7871
                  %s7835 = sphi %s7725, %s7874
                  %s7836 = sphi %s7741, %s7875
                $region141: #{ae_forward.1} parent=137 // loop_header_branch
                  %7833 = sbr.rel (%p7830) target = $region145
                $region142: #{ae_forward.1} parent=137 // loop_body
                  %v7837 = vld [vmem:[%s7835] sm:$0xf]
                  %7838 = vst [vmem:[%s7836] sm:$0xf] %v7837
                  %v7839 = vld [vmem:[%s7835 + $0x4] sm:$0xf]
                  %7840 = vst [vmem:[%s7836 + $0x4] sm:$0xf] %v7839
                  %v7841 = vld [vmem:[%s7835 + $0x8] sm:$0xf]
                  %7842 = vst [vmem:[%s7836 + $0x8] sm:$0xf] %v7841
                  %v7843 = vld [vmem:[%s7835 + $0xc] sm:$0xf]
                  %7844 = vst [vmem:[%s7836 + $0xc] sm:$0xf] %v7843
                  %v7845 = vld [vmem:[%s7835 + $0x10] sm:$0xf]
                  %7846 = vst [vmem:[%s7836 + $0x10] sm:$0xf] %v7845
                  %v7847 = vld [vmem:[%s7835 + $0x14] sm:$0xf]
                  %7848 = vst [vmem:[%s7836 + $0x14] sm:$0xf] %v7847
                  %v7849 = vld [vmem:[%s7835 + $0x18] sm:$0xf]
                  %7850 = vst [vmem:[%s7836 + $0x18] sm:$0xf] %v7849
                  %v7851 = vld [vmem:[%s7835 + $0x1c] sm:$0xf]
                  %7852 = vst [vmem:[%s7836 + $0x1c] sm:$0xf] %v7851
                  %v7853 = vld [vmem:[%s7835 + $0x20] sm:$0xf]
                  %7854 = vst [vmem:[%s7836 + $0x20] sm:$0xf] %v7853
                  %v7855 = vld [vmem:[%s7835 + $0x24] sm:$0xf]
                  %7856 = vst [vmem:[%s7836 + $0x24] sm:$0xf] %v7855
                  %v7857 = vld [vmem:[%s7835 + $0x28] sm:$0xf]
                  %7858 = vst [vmem:[%s7836 + $0x28] sm:$0xf] %v7857
                  %v7859 = vld [vmem:[%s7835 + $0x2c] sm:$0xf]
                  %7860 = vst [vmem:[%s7836 + $0x2c] sm:$0xf] %v7859
                  %v7861 = vld [vmem:[%s7835 + $0x30] sm:$0xf]
                  %7862 = vst [vmem:[%s7836 + $0x30] sm:$0xf] %v7861
                  %v7863 = vld [vmem:[%s7835 + $0x34] sm:$0xf]
                  %7864 = vst [vmem:[%s7836 + $0x34] sm:$0xf] %v7863
                  %v7865 = vld [vmem:[%s7835 + $0x38] sm:$0xf]
                  %7866 = vst [vmem:[%s7836 + $0x38] sm:$0xf] %v7865
                  %v7867 = vld [vmem:[%s7835 + $0x3c] sm:$0xf]
                  %7868 = vst [vmem:[%s7836 + $0x3c] sm:$0xf] %v7867
                  %s7869 = sadd.s32 1, %s7834
                  %p7870 = scmp.ge.s32.totalorder %s7869, %s7827
                  %s7871 = scalar_select %p7870, 0, %s7869
                  %s7872 = smul.u32 %s7871, 64
                  %s7873 = smul.u32 %s7871, 64
                  %s7874 = scalar_lea.vmem %s7725, %s7872 [#allocation16]
                  %s7875 = scalar_lea.vmem %s7741, %s7873
                $region143: #{ae_forward.1} parent=137 // loop_footer
                  %s7831 = sadd.s32 %s7829, 1
                $region144: #{ae_forward.1} parent=137 // loop_footer_branch
                  %7828 = sbr.rel target = $region140
                $region145: #{ae_forward.1} parent=137 // loop_exit
                  _
                %s7876 = sshrl.u32 %s7737, 4
                %s7877 = sand.u32 %s7737, 15
                %s7878 = smul.u32 %s7876, 16
                %s7879 = smul.u32 4, %s7878
                %s7880 = scalar_lea.vmem %s7725, %s7879 [#allocation16]
                %s7881 = smul.u32 4, %s7878
                %s7882 = scalar_lea.vmem %s7741, %s7881
                // While loop
                $region146: #{ae_forward.1} parent=137 // loop_pre_header
                  _
                $region147: #{ae_forward.1} parent=137 // loop_header
                  %s7884 = sphi 0, %s7886
                  %p7885 = scmp.ge.s32.totalorder %s7884, %s7877
                  %s7889 = sphi 0, %s7896
                  %s7890 = sphi %s7880, %s7899
                  %s7891 = sphi %s7882, %s7900
                $region148: #{ae_forward.1} parent=137 // loop_header_branch
                  %7888 = sbr.rel (%p7885) target = $region152
                $region149: #{ae_forward.1} parent=137 // loop_body
                  %v7892 = vld [vmem:[%s7890] sm:$0xf]
                  %7893 = vst [vmem:[%s7891] sm:$0xf] %v7892
                  %s7894 = sadd.s32 1, %s7889
                  %p7895 = scmp.ge.s32.totalorder %s7894, %s7877
                  %s7896 = scalar_select %p7895, 0, %s7894
                  %s7897 = smul.u32 %s7896, 4
                  %s7898 = smul.u32 %s7896, 4
                  %s7899 = scalar_lea.vmem %s7880, %s7897 [#allocation16]
                  %s7900 = scalar_lea.vmem %s7882, %s7898
                $region150: #{ae_forward.1} parent=137 // loop_footer
                  %s7886 = sadd.s32 %s7884, 1
                $region151: #{ae_forward.1} parent=137 // loop_footer_branch
                  %7883 = sbr.rel target = $region147
                $region152: #{ae_forward.1} parent=137 // loop_exit
                  _
              $region138: #{ae_forward.1} parent=115 // pred_fallthru
                _
            $region116: #{ae_forward.1} parent=111 // pred_fallthru
              _
            // Predicated region
            $region117: #{ae_forward.1} parent=111 // pred_check
              _
            $region118: #{ae_forward.1} parent=111 // pred_check_branch
              %7748 = sbr.rel (0) target = $region120
            $region119: #{ae_forward.1} parent=111 // pred_region
              %s7750 = sshrl.u32 %s7737, 4
              // While loop
              $region121: #{ae_forward.1} parent=119 // loop_pre_header
                _
              $region122: #{ae_forward.1} parent=119 // loop_header
                %s7752 = sphi 0, %s7754
                %p7753 = scmp.ge.s32.totalorder %s7752, %s7750
                %s7757 = sphi 0, %s7794
                %s7758 = sphi %s7725, %s7797
                %s7759 = sphi %s7741, %s7798
              $region123: #{ae_forward.1} parent=119 // loop_header_branch
                %7756 = sbr.rel (%p7753) target = $region127
              $region124: #{ae_forward.1} parent=119 // loop_body
                %v7760 = vld [vmem:[%s7758] sm:$0xf]
                %7761 = vst [vmem:[%s7759] sm:$0xf] %v7760
                %v7762 = vld [vmem:[%s7758 + $0x4] sm:$0xf]
                %7763 = vst [vmem:[%s7759 + $0x4] sm:$0xf] %v7762
                %v7764 = vld [vmem:[%s7758 + $0x8] sm:$0xf]
                %7765 = vst [vmem:[%s7759 + $0x8] sm:$0xf] %v7764
                %v7766 = vld [vmem:[%s7758 + $0xc] sm:$0xf]
                %7767 = vst [vmem:[%s7759 + $0xc] sm:$0xf] %v7766
                %v7768 = vld [vmem:[%s7758 + $0x10] sm:$0xf]
                %7769 = vst [vmem:[%s7759 + $0x10] sm:$0xf] %v7768
                %v7770 = vld [vmem:[%s7758 + $0x14] sm:$0xf]
                %7771 = vst [vmem:[%s7759 + $0x14] sm:$0xf] %v7770
                %v7772 = vld [vmem:[%s7758 + $0x18] sm:$0xf]
                %7773 = vst [vmem:[%s7759 + $0x18] sm:$0xf] %v7772
                %v7774 = vld [vmem:[%s7758 + $0x1c] sm:$0xf]
                %7775 = vst [vmem:[%s7759 + $0x1c] sm:$0xf] %v7774
                %v7776 = vld [vmem:[%s7758 + $0x20] sm:$0xf]
                %7777 = vst [vmem:[%s7759 + $0x20] sm:$0xf] %v7776
                %v7778 = vld [vmem:[%s7758 + $0x24] sm:$0xf]
                %7779 = vst [vmem:[%s7759 + $0x24] sm:$0xf] %v7778
                %v7780 = vld [vmem:[%s7758 + $0x28] sm:$0xf]
                %7781 = vst [vmem:[%s7759 + $0x28] sm:$0xf] %v7780
                %v7782 = vld [vmem:[%s7758 + $0x2c] sm:$0xf]
                %7783 = vst [vmem:[%s7759 + $0x2c] sm:$0xf] %v7782
                %v7784 = vld [vmem:[%s7758 + $0x30] sm:$0xf]
                %7785 = vst [vmem:[%s7759 + $0x30] sm:$0xf] %v7784
                %v7786 = vld [vmem:[%s7758 + $0x34] sm:$0xf]
                %7787 = vst [vmem:[%s7759 + $0x34] sm:$0xf] %v7786
                %v7788 = vld [vmem:[%s7758 + $0x38] sm:$0xf]
                %7789 = vst [vmem:[%s7759 + $0x38] sm:$0xf] %v7788
                %v7790 = vld [vmem:[%s7758 + $0x3c] sm:$0xf]
                %7791 = vst [vmem:[%s7759 + $0x3c] sm:$0xf] %v7790
                %s7792 = sadd.s32 1, %s7757
                %p7793 = scmp.ge.s32.totalorder %s7792, %s7750
                %s7794 = scalar_select %p7793, 0, %s7792
                %s7795 = smul.u32 %s7794, 64
                %s7796 = smul.u32 %s7794, 64
                %s7797 = scalar_lea.vmem %s7725, %s7795 [#allocation16]
                %s7798 = scalar_lea.vmem %s7741, %s7796
              $region125: #{ae_forward.1} parent=119 // loop_footer
                %s7754 = sadd.s32 %s7752, 1
              $region126: #{ae_forward.1} parent=119 // loop_footer_branch
                %7751 = sbr.rel target = $region122
              $region127: #{ae_forward.1} parent=119 // loop_exit
                _
              %s7799 = sshrl.u32 %s7737, 4
              %s7800 = sand.u32 %s7737, 15
              %s7801 = smul.u32 %s7799, 16
              %s7802 = smul.u32 4, %s7801
              %s7803 = scalar_lea.vmem %s7725, %s7802 [#allocation16]
              %s7804 = smul.u32 4, %s7801
              %s7805 = scalar_lea.vmem %s7741, %s7804
              // While loop
              $region128: #{ae_forward.1} parent=119 // loop_pre_header
                _
              $region129: #{ae_forward.1} parent=119 // loop_header
                %s7807 = sphi 0, %s7809
                %p7808 = scmp.ge.s32.totalorder %s7807, %s7800
                %s7812 = sphi 0, %s7819
                %s7813 = sphi %s7803, %s7822
                %s7814 = sphi %s7805, %s7823
              $region130: #{ae_forward.1} parent=119 // loop_header_branch
                %7811 = sbr.rel (%p7808) target = $region134
              $region131: #{ae_forward.1} parent=119 // loop_body
                %v7815 = vld [vmem:[%s7813] sm:$0xf]
                %7816 = vst [vmem:[%s7814] sm:$0xf] %v7815
                %s7817 = sadd.s32 1, %s7812
                %p7818 = scmp.ge.s32.totalorder %s7817, %s7800
                %s7819 = scalar_select %p7818, 0, %s7817
                %s7820 = smul.u32 %s7819, 4
                %s7821 = smul.u32 %s7819, 4
                %s7822 = scalar_lea.vmem %s7803, %s7820 [#allocation16]
                %s7823 = scalar_lea.vmem %s7805, %s7821
              $region132: #{ae_forward.1} parent=119 // loop_footer
                %s7809 = sadd.s32 %s7807, 1
              $region133: #{ae_forward.1} parent=119 // loop_footer_branch
                %7806 = sbr.rel target = $region129
              $region134: #{ae_forward.1} parent=119 // loop_exit
                _
            $region120: #{ae_forward.1} parent=111 // pred_fallthru
              _
          $region112: #{ae_forward.1} parent=107 // pred_fallthru
            _
          %7901 = vnop
        $region108: #{ae_forward.1} parent=71 // pred_fallthru
          _
        // Predicated region
        $region153: #{ae_forward.1} parent=71 // pred_check
          %p7902 = pneg %p358
        $region154: #{ae_forward.1} parent=71 // pred_check_branch
          %7904 = sbr.rel (%p7902) target = $region156
        $region155: #{ae_forward.1} parent=71 // pred_region
          %s7905 = smul.u32 16, %s36
          %s7906 = ssub.s32 25, %s7905
          %p7907 = scmp.lt.s32.totalorder %s7906, 16
          %s7908 = scalar_select %p7907, %s7906, 16
          %s7909 = smul.u32 64, %s7908
          %s7910 = smul.u32 %s7909, 7
          %s7912 = ssub.s32 7168, %s7910
          %7913 = vsyncadd %s7727, %s7912
          %p7914 = scmp.ne.s32.totalorder 0, %s7910
          %s7915 = smul.addr %s7905, 7
          %s7916 = smul.addr %s7915, 64
          %s7917 = scalar_lea.hbm %s14, %s7916
          %s7918 = smul.u32 28, %s7908
          %s7919 = sshll.u32 %s7730, 4
          %s7920 = int_to_ptr.vmem [resolvable:$true] %s7919
          %s7921 = sshll.u32 %s7918, 4
          %7925 = dma.vmem_to_hbm [thread:$0]  (%p7914), %s7920, %s7921, %s7917, %s7727, 448, 448, 28
        $region156: #{ae_forward.1} parent=71 // pred_fallthru
          _
      $region72: #{ae_forward.1} parent=5 // pred_fallthru
        _
      %p7926 = scmp.le.s32.totalorder 2, %s31
      // Predicated region
      $region157: #{ae_forward.1} parent=5 // pred_check
        %p7927 = pneg %p7926
      $region158: #{ae_forward.1} parent=5 // pred_check_branch
        %7929 = sbr.rel (%p7927) target = $region160
      $region159: #{ae_forward.1} parent=5 // pred_region
        %s7930 = ssub.s32 %s31, 2
        // Predicated region
        $region161: #{ae_forward.1} parent=159 // pred_check
          %p7931 = pneg %p338
        $region162: #{ae_forward.1} parent=159 // pred_check_branch
          %7933 = sbr.rel (%p7931) target = $region164
        $region163: #{ae_forward.1} parent=159 // pred_region
          %s7934 = sand.u32 %s323, 1
          %s7935 = sand.u32 %s323, 1
          %s7936 = smul.addr %s7935, 64
          %s7937 = scalar_lea.vmem [#allocation16], %s7936
        $region164: #{ae_forward.1} parent=159 // pred_fallthru
          _
        // Predicated region
        $region165: #{ae_forward.1} parent=159 // pred_check
          %p7938 = pneg %p364
        $region166: #{ae_forward.1} parent=159 // pred_check_branch
          %7940 = sbr.rel (%p7938) target = $region168
        $region167: #{ae_forward.1} parent=159 // pred_region
          %s7941 = sand.u32 %s349, 1
          %s7942 = scalar_lea.sflag [#allocation4], %s7941
          %s7943 = sand.u32 %s349, 1
          %s7944 = smul.addr %s7943, 448
          %s7945 = scalar_lea.vmem [#allocation17], %s7944
          %7946 = dma.done %s7942, 7168
        $region168: #{ae_forward.1} parent=159 // pred_fallthru
          _
      $region160: #{ae_forward.1} parent=5 // pred_fallthru
        _
    $region6: #{ae_forward.1} parent=1 // loop_footer
      %s35 = sadd.s32 1, %s31
    $region7: #{ae_forward.1} parent=1 // loop_footer_branch
      %30 = sbr.rel target = $region3
    $region8: #{ae_forward.1} parent=1 // loop_exit
      _
    %7947 = vsyncpa [#allocation3], 1
    %s7948 = scalar_lea.sflag [#allocation3], 1
    %7949 = vsyncpa %s7948, 1
    %7950 = vsyncpa [#allocation6], 1
    %7951 = vsyncpa [#allocation9], 1
    %7952 = vsyncpa [#allocation12], 1
    %7953 = vsyncpa [#allocation15], 1
    %7954 = vsyncpa [#allocation4], 1
    %s7955 = scalar_lea.sflag [#allocation4], 1
    %7956 = vsyncpa %s7955, 1

</llo_original>
